<compile_context>
chip_gen: v6e
topology: v6e:2x2x1
jax: 0.10.0
libtpu: 0.0.40
codegen_flags: <defaults>
</compile_context>

<pallas_src>
import functools

import jax
import jax.numpy as jnp
from jax import lax
from jax.experimental import pallas as pl
from jax.experimental.pallas import tpu as pltpu

jax.config.update("jax_default_matmul_precision", "highest")


def _row_tile(rows):
    # Largest row tile <= 512 (divisible by 8) or the full row count.
    return rows if rows <= 512 else 512


# ------------------ fused RMSNorm + first-cell input projection ------------- #
def _norm_proj_kernel(x_ref, gamma_ref, wcat_ref, b_ref, xn_ref, nh_ref, if_ref):
    x = x_ref[...].astype(jnp.float32)
    d = x.shape[-1]
    norm = jnp.sqrt(jnp.sum(x * x, axis=-1, keepdims=True))
    norm = jnp.maximum(norm, 1e-12)                      # F.normalize eps
    xn = x / norm * (float(d) ** 0.5) * (gamma_ref[...] + 1.0)
    xn_ref[...] = xn.astype(xn_ref.dtype)
    cat = jnp.dot(xn, wcat_ref[...], preferred_element_type=jnp.float32)
    nh_ref[...] = jnp.tanh(cat[:, :d]).astype(nh_ref.dtype)
    if_ref[...] = (cat[:, d:] + b_ref[...]).astype(if_ref.dtype)   # b_hf folded in


def norm_and_first_proj(x_rows, gamma, w_cat, b_hf):
    rows, d = x_rows.shape
    tm = _row_tile(rows)
    row_spec = pl.BlockSpec((tm, d), lambda i: (i, 0))
    vec_spec = pl.BlockSpec((1, d), lambda i: (0, 0))
    wcat_spec = pl.BlockSpec((d, 2 * d), lambda i: (0, 0))
    return pl.pallas_call(
        _norm_proj_kernel,
        out_shape=(jax.ShapeDtypeStruct((rows, d), jnp.float32),) * 3,
        grid=(pl.cdiv(rows, tm),),
        in_specs=[row_spec, vec_spec, wcat_spec, vec_spec],
        out_specs=(row_spec, row_spec, row_spec),
        compiler_params=pltpu.CompilerParams(dimension_semantics=("parallel",)),
    )(x_rows, gamma.reshape(1, -1), w_cat, b_hf.reshape(1, -1))


# ------------------------- input projection (later cells) ------------------- #
def _proj_kernel(x_ref, wcat_ref, b_ref, nh_ref, if_ref):
    x = x_ref[...].astype(jnp.float32)
    d = x.shape[-1]
    cat = jnp.dot(x, wcat_ref[...], preferred_element_type=jnp.float32)
    nh_ref[...] = jnp.tanh(cat[:, :d]).astype(nh_ref.dtype)
    if_ref[...] = (cat[:, d:] + b_ref[...]).astype(if_ref.dtype)


def input_proj(x_rows, w_cat, b_hf):
    rows, d = x_rows.shape
    tm = _row_tile(rows)
    row_spec = pl.BlockSpec((tm, d), lambda i: (i, 0))
    vec_spec = pl.BlockSpec((1, d), lambda i: (0, 0))
    wcat_spec = pl.BlockSpec((d, 2 * d), lambda i: (0, 0))
    return pl.pallas_call(
        _proj_kernel,
        out_shape=(jax.ShapeDtypeStruct((rows, d), jnp.float32),) * 2,
        grid=(pl.cdiv(rows, tm),),
        in_specs=[row_spec, wcat_spec, vec_spec],
        out_specs=(row_spec, row_spec),
        compiler_params=pltpu.CompilerParams(dimension_semantics=("parallel",)),
    )(x_rows, w_cat, b_hf.reshape(1, -1))


# ------------------------ sequential LRU recurrence ------------------------- #
def _make_scan_kernel(unroll):
    def kernel(nh_ref, if_ref, whf_ref, h0_ref, o_ref, h_scr):
        tc, bc, d = nh_ref.shape

        @pl.when(pl.program_id(1) == 0)            # first time-chunk of this batch block
        def _():
            h_scr[...] = jnp.broadcast_to(h0_ref[...], (bc, d)).astype(jnp.float32)

        w = whf_ref[...]                            # hoisted; resident across steps

        def body(t, carry):
            h = h_scr[...]
            hidden_forget = jnp.dot(h, w, preferred_element_type=jnp.float32)
            forget_gate = jax.nn.sigmoid(hidden_forget + if_ref[t])   # b_hf already in if
            # hidden.lerp(next_hidden, gate) = hidden + gate*(next_hidden - hidden)
            h_new = h + forget_gate * (nh_ref[t] - h)
            h_scr[...] = h_new
            o_ref[t] = h_new.astype(o_ref.dtype)
            return carry

        lax.fori_loop(0, tc, body, 0, unroll=unroll)

    return kernel


def lru_scan(nh_tbd, if_tbd, w_hf, h0):
    """Recurrence over time.  nh/if: (T, B, D) time-major -> out (T, B, D)."""
    T, B, D = nh_tbd.shape
    # Split batch across a leading "parallel" grid axis when it stays sublane-full
    # (lets the two v7x TensorCores each run half the batch).
    bc = B // 2 if (B % 16 == 0) else B
    nb = B // bc
    tc = min(T, 64)                      # time chunk; bounds VMEM, enables prefetch
    nt = pl.cdiv(T, tc)
    unroll = tc if tc <= 16 else 8

    chunk_spec = pl.BlockSpec((tc, bc, D), lambda b, t: (t, b, 0))
    return pl.pallas_call(
        _make_scan_kernel(unroll),
        out_shape=jax.ShapeDtypeStruct((T, B, D), jnp.float32),
        grid=(nb, nt),
        in_specs=[
            chunk_spec,                                   # nh
            chunk_spec,                                   # if (+ b_hf)
            pl.BlockSpec((D, D), lambda b, t: (0, 0)),    # w_hf, DMA'd once
            pl.BlockSpec((1, D), lambda b, t: (0, 0)),    # h0
        ],
        out_specs=chunk_spec,
        scratch_shapes=[pltpu.VMEM((bc, D), jnp.float32)],  # persistent hidden state
        compiler_params=pltpu.CompilerParams(
            dimension_semantics=("parallel", "arbitrary")),
    )(nh_tbd, if_tbd, w_hf, h0.reshape(1, -1))


# -------------------- gate cell (+ optional fused residual) ----------------- #
def _gate_res_kernel(h_ref, cur_ref, res_ref, wcat_ref, whf_ref, b_ref, o_ref):
    h = h_ref[...].astype(jnp.float32)
    cur = cur_ref[...].astype(jnp.float32)
    d = h.shape[-1]
    cat = jnp.dot(h, wcat_ref[...], preferred_element_type=jnp.float32)
    nh = jnp.tanh(cat[:, :d])
    ig = cat[:, d:]
    hg = jnp.dot(cur, whf_ref[...], preferred_element_type=jnp.float32) + b_ref[...]
    gate = jax.nn.sigmoid(hg + ig)
    out = cur + gate * (nh - cur) + res_ref[...].astype(jnp.float32)
    o_ref[...] = out.astype(o_ref.dtype)


def _gate_kernel(h_ref, cur_ref, wcat_ref, whf_ref, b_ref, o_ref):
    h = h_ref[...].astype(jnp.float32)
    cur = cur_ref[...].astype(jnp.float32)
    d = h.shape[-1]
    cat = jnp.dot(h, wcat_ref[...], preferred_element_type=jnp.float32)
    nh = jnp.tanh(cat[:, :d])
    ig = cat[:, d:]
    hg = jnp.dot(cur, whf_ref[...], preferred_element_type=jnp.float32) + b_ref[...]
    gate = jax.nn.sigmoid(hg + ig)
    o_ref[...] = (cur + gate * (nh - cur)).astype(o_ref.dtype)


def gate_apply(h_rows, cur_rows, g, res_rows=None):
    rows, d = h_rows.shape
    tm = _row_tile(rows)
    row_spec = pl.BlockSpec((tm, d), lambda i: (i, 0))
    vec_spec = pl.BlockSpec((1, d), lambda i: (0, 0))
    wcat_spec = pl.BlockSpec((d, 2 * d), lambda i: (0, 0))
    w_spec = pl.BlockSpec((d, d), lambda i: (0, 0))
    cp = pltpu.CompilerParams(dimension_semantics=("parallel",))
    if res_rows is not None:
        return pl.pallas_call(
            _gate_res_kernel,
            out_shape=jax.ShapeDtypeStruct((rows, d), jnp.float32),
            grid=(pl.cdiv(rows, tm),),
            in_specs=[row_spec, row_spec, row_spec, wcat_spec, w_spec, vec_spec],
            out_specs=row_spec,
            compiler_params=cp,
        )(h_rows, cur_rows, res_rows, g["w_cat"], g["w_hf"], g["b_hf"].reshape(1, -1))
    return pl.pallas_call(
        _gate_kernel,
        out_shape=jax.ShapeDtypeStruct((rows, d), jnp.float32),
        grid=(pl.cdiv(rows, tm),),
        in_specs=[row_spec, row_spec, wcat_spec, w_spec, vec_spec],
        out_specs=row_spec,
        compiler_params=cp,
    )(h_rows, cur_rows, g["w_cat"], g["w_hf"], g["b_hf"].reshape(1, -1))


# ----------------------------- full block forward ---------------------------- #
def light_recurrent_unit_block(x, params):
    """x: (B, T, D) float32 -> (B, T, D)."""
    B, T, D = x.shape
    # single layout change to time-major; everything below runs time-major rows
    x_tbd = jnp.transpose(x, (1, 0, 2))
    x_rows = x_tbd.reshape(T * B, D)

    gls = params["gated_layers"]
    first_cell = gls[0]["lru_cells"][0]

    # fused RMSNorm + first cell's input projections
    xn_rows, nh0, if0 = norm_and_first_proj(
        x_rows, params["gamma"], first_cell["w_cat"], first_cell["b_hf"])

    cur_rows = xn_rows
    out_rows = None
    for gi, gl in enumerate(gls):
        h_rows = cur_rows
        for ci, cell in enumerate(gl["lru_cells"]):
            if gi == 0 and ci == 0:
                nh, ifb = nh0, if0
            else:
                nh, ifb = input_proj(h_rows, cell["w_cat"], cell["b_hf"])
            h_tbd = lru_scan(nh.reshape(T, B, D), ifb.reshape(T, B, D),
                             cell["w_hf"], cell["h0"])
            h_rows = h_tbd.reshape(T * B, D)
        if gi == len(gls) - 1:
            # fused gate cell + residual add (residual = original x)
            out_rows = gate_apply(h_rows, cur_rows, params["gate"], res_rows=x_rows)
        else:
            cur_rows = gate_apply(h_rows, cur_rows, params["gate"])

    out = jnp.transpose(out_rows.reshape(T, B, D), (1, 0, 2))
    # TODO(synk): has_ff_block=False (module default) so the FF branch is not built.
    return out


# --------------------------- parameter construction -------------------------- #
def init_params(key, dim, depth=1, num_layers_per_depth=2):
    # Weights stored as (in, out) so y = x @ W  (== PyTorch x @ W.T with W (out,in)).
    def linear_w(k, fan_in, fan_out):
        bound = 1.0 / (fan_in ** 0.5)
        return jax.random.uniform(k, (fan_in, fan_out), jnp.float32, -bound, bound)

    def linear_b(k, fan_in, fan_out):
        bound = 1.0 / (fan_in ** 0.5)
        return jax.random.uniform(k, (fan_out,), jnp.float32, -bound, bound)

    def make_cell(keys, with_h0):
        w_nh = linear_w(next(keys), dim, dim)
        w_if = linear_w(next(keys), dim, dim)
        c = dict(
            w_nh=w_nh, w_if=w_if,
            w_cat=jnp.concatenate([w_nh, w_if], axis=1),   # (D, 2D) fused projection
            w_hf=linear_w(next(keys), dim, dim),
            b_hf=linear_b(next(keys), dim, dim),
        )
        if with_h0:
            c["h0"] = jnp.zeros((dim,), jnp.float32)       # learned_init_hidden init
        return c

    keys = iter(jax.random.split(key, 128))
    gate = make_cell(keys, with_h0=False)
    gated_layers = []
    for _ in range(depth):
        cells = [make_cell(keys, with_h0=True) for _ in range(num_layers_per_depth)]
        gated_layers.append(dict(lru_cells=cells))
    return dict(
        gamma=jnp.zeros((dim,), jnp.float32),              # RMSNorm gamma init = zeros
        gate=gate,
        gated_layers=gated_layers,
    )


# ------------------------------ pure-JAX reference --------------------------- #
def _ref_cell(x, hidden, cell):
    nh = jnp.tanh(x @ cell["w_nh"])
    ig = x @ cell["w_if"]
    hg = hidden @ cell["w_hf"] + cell["b_hf"]
    gate = jax.nn.sigmoid(hg + ig)
    return hidden + gate * (nh - hidden)


def _ref_lru_layer(x, cell):
    B, T, D = x.shape
    h0 = jnp.broadcast_to(cell["h0"], (B, D))

    def step(h, xt):
        h = _ref_cell(xt, h, cell)
        return h, h

    _, ys = lax.scan(step, h0, jnp.transpose(x, (1, 0, 2)))
    return jnp.transpose(ys, (1, 0, 2))


def _ref_block(x, params):
    d = x.shape[-1]
    n = x / jnp.maximum(jnp.linalg.norm(x, axis=-1, keepdims=True), 1e-12)
    xn = n * (d ** 0.5) * (params["gamma"] + 1.0)
    cur = xn
    for gl in params["gated_layers"]:
        h = cur
        for cell in gl["lru_cells"]:
            h = _ref_lru_layer(h, cell)
        cur = _ref_cell(h, cur, params["gate"])
    return cur + x


# ------------------------------------ main ------------------------------------ #
if __name__ == "__main__":
    B, T, D = 2, 8, 32
    key = jax.random.PRNGKey(0)
    kx, kp = jax.random.split(key)
    x = jax.random.normal(kx, (B, T, D), jnp.float32)
    params = init_params(kp, D, depth=1, num_layers_per_depth=2)

    fwd = jax.jit(light_recurrent_unit_block)
    out = jax.block_until_ready(fwd(x, params))

    ref = _ref_block(x, params)
    assert out.shape == (B, T, D)
    err = float(jnp.max(jnp.abs(out - ref)))
    assert jnp.allclose(out, ref, atol=1e-3, rtol=1e-3), err
    print("KERNEL_OK")
</pallas_src>

<mosaic_0001>
module attributes {stable_mosaic.version = 11 : i64} {
  func.func @_norm_proj_kernel(%arg0: i32, %arg1: memref<16x32xf32, #tpu.memory_space<vmem>>, %arg2: memref<1x32xf32, #tpu.memory_space<vmem>>, %arg3: memref<32x64xf32, #tpu.memory_space<vmem>>, %arg4: memref<1x32xf32, #tpu.memory_space<vmem>>, %arg5: memref<16x32xf32, #tpu.memory_space<vmem>>, %arg6: memref<16x32xf32, #tpu.memory_space<vmem>>, %arg7: memref<16x32xf32, #tpu.memory_space<vmem>>) attributes {dimension_semantics = [#tpu.dimension_semantics<parallel>], iteration_bounds = array<i64: 1>, scalar_prefetch = 0 : i64, scratch_operands = 0 : i64, tpu.core_type = #tpu.core_type<tc>, window_params = [{transform_indices = @transform_0, window_bounds = array<i64: 16, 32>}, {pipeline_mode = #tpu.pipeline_mode<synchronous>, transform_indices = @transform_1, window_bounds = array<i64: 1, 32>}, {pipeline_mode = #tpu.pipeline_mode<synchronous>, transform_indices = @transform_2, window_bounds = array<i64: 32, 64>}, {pipeline_mode = #tpu.pipeline_mode<synchronous>, transform_indices = @transform_3, window_bounds = array<i64: 1, 32>}, {transform_indices = @transform_4, window_bounds = array<i64: 16, 32>}, {transform_indices = @transform_5, window_bounds = array<i64: 16, 32>}, {transform_indices = @transform_6, window_bounds = array<i64: 16, 32>}]} {
    %c0 = arith.constant 0 : index
    %c0_0 = arith.constant 0 : index
    %0 = vector.load %arg1[%c0, %c0_0] : memref<16x32xf32, #tpu.memory_space<vmem>>, vector<16x32xf32>
    %1 = arith.mulf %0, %0 : vector<16x32xf32>
    %cst = arith.constant dense<0.000000e+00> : vector<16xf32>
    %2 = vector.multi_reduction <add>, %1, %cst [1] : vector<16x32xf32> to vector<16xf32>
    %3 = vector.shape_cast %2 : vector<16xf32> to vector<16x1xf32>
    %4 = math.sqrt %3 : vector<16x1xf32>
    %cst_1 = arith.constant 9.99999996E-13 : f32
    %5 = vector.broadcast %cst_1 : f32 to vector<16x1xf32>
    %6 = arith.maximumf %4, %5 : vector<16x1xf32>
    %7 = vector.broadcast %6 : vector<16x1xf32> to vector<16x32xf32>
    %8 = arith.divf %0, %7 : vector<16x32xf32>
    %cst_2 = arith.constant 5.65685415 : f32
    %9 = vector.broadcast %cst_2 : f32 to vector<16x32xf32>
    %10 = arith.mulf %8, %9 : vector<16x32xf32>
    %c0_3 = arith.constant 0 : index
    %c0_4 = arith.constant 0 : index
    %11 = vector.load %arg2[%c0_3, %c0_4] : memref<1x32xf32, #tpu.memory_space<vmem>>, vector<1x32xf32>
    %cst_5 = arith.constant 1.000000e+00 : f32
    %12 = vector.broadcast %cst_5 : f32 to vector<1x32xf32>
    %13 = arith.addf %11, %12 : vector<1x32xf32>
    %14 = vector.broadcast %13 : vector<1x32xf32> to vector<16x32xf32>
    %15 = arith.mulf %10, %14 : vector<16x32xf32>
    %c0_6 = arith.constant 0 : index
    %c0_7 = arith.constant 0 : index
    %16 = vector.load %arg5[%c0_6, %c0_7] : memref<16x32xf32, #tpu.memory_space<vmem>>, vector<16x32xf32>
    tpu.vector_store %arg5[%c0_6, %c0_7], %15 {strides = array<i32>} : memref<16x32xf32, #tpu.memory_space<vmem>>, vector<16x32xf32>,
    %c0_8 = arith.constant 0 : index
    %c0_9 = arith.constant 0 : index
    %17 = vector.load %arg3[%c0_8, %c0_9] : memref<32x64xf32, #tpu.memory_space<vmem>>, vector<32x64xf32>
    %cst_10 = arith.constant dense<0.000000e+00> : vector<16x64xf32>
    %18 = tpu.matmul %15, %17, %cst_10 {dimension_numbers = #tpu.dot_dimension_numbers<[1], [0], [0], [1], [0, 0, 1, 1], [], []>, precision = #tpu.contract_precision<fp32>} : vector<16x32xf32>, vector<32x64xf32>, vector<16x64xf32> -> vector<16x64xf32>
    %19 = vector.extract_strided_slice %18 {offsets = [0, 0], sizes = [16, 32], strides = [1, 1]} : vector<16x64xf32> to vector<16x32xf32>
    %20 = math.tanh %19 : vector<16x32xf32>
    %c0_11 = arith.constant 0 : index
    %c0_12 = arith.constant 0 : index
    %21 = vector.load %arg6[%c0_11, %c0_12] : memref<16x32xf32, #tpu.memory_space<vmem>>, vector<16x32xf32>
    tpu.vector_store %arg6[%c0_11, %c0_12], %20 {strides = array<i32>} : memref<16x32xf32, #tpu.memory_space<vmem>>, vector<16x32xf32>,
    %22 = vector.extract_strided_slice %18 {offsets = [0, 32], sizes = [16, 32], strides = [1, 1]} : vector<16x64xf32> to vector<16x32xf32>
    %c0_13 = arith.constant 0 : index
    %c0_14 = arith.constant 0 : index
    %23 = vector.load %arg4[%c0_13, %c0_14] : memref<1x32xf32, #tpu.memory_space<vmem>>, vector<1x32xf32>
    %24 = vector.broadcast %23 : vector<1x32xf32> to vector<16x32xf32>
    %25 = arith.addf %22, %24 : vector<16x32xf32>
    %c0_15 = arith.constant 0 : index
    %c0_16 = arith.constant 0 : index
    %26 = vector.load %arg7[%c0_15, %c0_16] : memref<16x32xf32, #tpu.memory_space<vmem>>, vector<16x32xf32>
    tpu.vector_store %arg7[%c0_15, %c0_16], %25 {strides = array<i32>} : memref<16x32xf32, #tpu.memory_space<vmem>>, vector<16x32xf32>,
    return
  }
  func.func @transform_0(%arg0: i32) -> (i32, i32) {
    %c0_i32 = arith.constant 0 : i32
    %c0_i32_0 = arith.constant 0 : i32
    return %arg0, %c0_i32 : i32, i32
  }
  func.func @transform_1(%arg0: i32) -> (i32, i32) {
    %c0_i32 = arith.constant 0 : i32
    %c0_i32_0 = arith.constant 0 : i32
    %c0_i32_1 = arith.constant 0 : i32
    return %c0_i32, %c0_i32_0 : i32, i32
  }
  func.func @transform_2(%arg0: i32) -> (i32, i32) {
    %c0_i32 = arith.constant 0 : i32
    %c0_i32_0 = arith.constant 0 : i32
    %c0_i32_1 = arith.constant 0 : i32
    return %c0_i32, %c0_i32_0 : i32, i32
  }
  func.func @transform_3(%arg0: i32) -> (i32, i32) {
    %c0_i32 = arith.constant 0 : i32
    %c0_i32_0 = arith.constant 0 : i32
    %c0_i32_1 = arith.constant 0 : i32
    return %c0_i32, %c0_i32_0 : i32, i32
  }
  func.func @transform_4(%arg0: i32) -> (i32, i32) {
    %c0_i32 = arith.constant 0 : i32
    %c0_i32_0 = arith.constant 0 : i32
    return %arg0, %c0_i32 : i32, i32
  }
  func.func @transform_5(%arg0: i32) -> (i32, i32) {
    %c0_i32 = arith.constant 0 : i32
    %c0_i32_0 = arith.constant 0 : i32
    return %arg0, %c0_i32 : i32, i32
  }
  func.func @transform_6(%arg0: i32) -> (i32, i32) {
    %c0_i32 = arith.constant 0 : i32
    %c0_i32_0 = arith.constant 0 : i32
    return %arg0, %c0_i32 : i32, i32
  }
}

module attributes {stable_mosaic.version = 11 : i64} {
  func.func @kernel(%arg0: i32, %arg1: i32, %arg2: memref<8x2x32xf32, #tpu.memory_space<vmem>>, %arg3: memref<8x2x32xf32, #tpu.memory_space<vmem>>, %arg4: memref<32x32xf32, #tpu.memory_space<vmem>>, %arg5: memref<1x32xf32, #tpu.memory_space<vmem>>, %arg6: memref<8x2x32xf32, #tpu.memory_space<vmem>>, %arg7: memref<2x32xf32, #tpu.memory_space<vmem>>) attributes {dimension_semantics = [#tpu.dimension_semantics<parallel>, #tpu.dimension_semantics<arbitrary>], iteration_bounds = array<i64: 1, 1>, scalar_prefetch = 0 : i64, scratch_operands = 1 : i64, tpu.core_type = #tpu.core_type<tc>, window_params = [{transform_indices = @transform_0, window_bounds = array<i64: 8, 2, 32>}, {transform_indices = @transform_1, window_bounds = array<i64: 8, 2, 32>}, {pipeline_mode = #tpu.pipeline_mode<synchronous>, transform_indices = @transform_2, window_bounds = array<i64: 32, 32>}, {pipeline_mode = #tpu.pipeline_mode<synchronous>, transform_indices = @transform_3, window_bounds = array<i64: 1, 32>}, {transform_indices = @transform_4, window_bounds = array<i64: 8, 2, 32>}]} {
    %c0_i32 = arith.constant 0 : i32
    %0 = arith.cmpi eq, %arg1, %c0_i32 : i32
    %1 = arith.extui %0 : i1 to i32
    %c0_i32_0 = arith.constant 0 : i32
    %2 = arith.cmpi ne, %1, %c0_i32_0 : i32
    scf.if %2 {
      %c0_98 = arith.constant 0 : index
      %c0_99 = arith.constant 0 : index
      %180 = vector.load %arg5[%c0_98, %c0_99] : memref<1x32xf32, #tpu.memory_space<vmem>>, vector<1x32xf32>
      %181 = vector.shape_cast %180 : vector<1x32xf32> to vector<1x32xf32>
      %182 = vector.broadcast %181 : vector<1x32xf32> to vector<2x32xf32>
      %c0_100 = arith.constant 0 : index
      %c0_101 = arith.constant 0 : index
      %183 = vector.load %arg7[%c0_100, %c0_101] : memref<2x32xf32, #tpu.memory_space<vmem>>, vector<2x32xf32>
      tpu.vector_store %arg7[%c0_100, %c0_101], %182 {strides = array<i32>} : memref<2x32xf32, #tpu.memory_space<vmem>>, vector<2x32xf32>,
    } else {
    }
    %c0 = arith.constant 0 : index
    %c0_1 = arith.constant 0 : index
    %3 = vector.load %arg4[%c0, %c0_1] : memref<32x32xf32, #tpu.memory_space<vmem>>, vector<32x32xf32>
    %c0_i32_2 = arith.constant 0 : i32
    %c0_3 = arith.constant 0 : index
    %c0_4 = arith.constant 0 : index
    %4 = vector.load %arg7[%c0_3, %c0_4] : memref<2x32xf32, #tpu.memory_space<vmem>>, vector<2x32xf32>
    %cst = arith.constant dense<0.000000e+00> : vector<2x32xf32>
    %5 = tpu.matmul %4, %3, %cst {dimension_numbers = #tpu.dot_dimension_numbers<[1], [0], [0], [1], [0, 0, 1, 1], [], []>, precision = #tpu.contract_precision<fp32>} : vector<2x32xf32>, vector<32x32xf32>, vector<2x32xf32> -> vector<2x32xf32>
    %6 = arith.index_cast %c0_i32_2 : i32 to index
    %c0_5 = arith.constant 0 : index
    %c0_6 = arith.constant 0 : index
    %7 = vector.load %arg3[%6, %c0_5, %c0_6] : memref<8x2x32xf32, #tpu.memory_space<vmem>>, vector<1x2x32xf32>
    %8 = vector.shape_cast %7 : vector<1x2x32xf32> to vector<2x32xf32>
    %9 = arith.addf %5, %8 : vector<2x32xf32>
    %10 = arith.negf %9 : vector<2x32xf32>
    %11 = math.exp %10 : vector<2x32xf32>
    %cst_7 = arith.constant 1.000000e+00 : f32
    %12 = vector.broadcast %cst_7 : f32 to vector<2x32xf32>
    %13 = arith.addf %12, %11 : vector<2x32xf32>
    %14 = arith.divf %12, %13 : vector<2x32xf32>
    %15 = arith.index_cast %c0_i32_2 : i32 to index
    %c0_8 = arith.constant 0 : index
    %c0_9 = arith.constant 0 : index
    %16 = vector.load %arg2[%15, %c0_8, %c0_9] : memref<8x2x32xf32, #tpu.memory_space<vmem>>, vector<1x2x32xf32>
    %17 = vector.shape_cast %16 : vector<1x2x32xf32> to vector<2x32xf32>
    %18 = arith.subf %17, %4 : vector<2x32xf32>
    %19 = arith.mulf %14, %18 : vector<2x32xf32>
    %20 = arith.addf %4, %19 : vector<2x32xf32>
    %c0_10 = arith.constant 0 : index
    %c0_11 = arith.constant 0 : index
    %21 = vector.load %arg7[%c0_10, %c0_11] : memref<2x32xf32, #tpu.memory_space<vmem>>, vector<2x32xf32>
    tpu.vector_store %arg7[%c0_10, %c0_11], %20 {strides = array<i32>} : memref<2x32xf32, #tpu.memory_space<vmem>>, vector<2x32xf32>,
    %22 = arith.index_cast %c0_i32_2 : i32 to index
    %c0_12 = arith.constant 0 : index
    %c0_13 = arith.constant 0 : index
    %23 = vector.load %arg6[%22, %c0_12, %c0_13] : memref<8x2x32xf32, #tpu.memory_space<vmem>>, vector<1x2x32xf32>
    %24 = vector.shape_cast %23 : vector<1x2x32xf32> to vector<2x32xf32>
    %25 = vector.shape_cast %20 : vector<2x32xf32> to vector<1x2x32xf32>
    tpu.vector_store %arg6[%22, %c0_12, %c0_13], %25 {strides = array<i32>} : memref<8x2x32xf32, #tpu.memory_space<vmem>>, vector<1x2x32xf32>,
    %c1_i32 = arith.constant 1 : i32
    %c0_14 = arith.constant 0 : index
    %c0_15 = arith.constant 0 : index
    %26 = vector.load %arg7[%c0_14, %c0_15] : memref<2x32xf32, #tpu.memory_space<vmem>>, vector<2x32xf32>
    %cst_16 = arith.constant dense<0.000000e+00> : vector<2x32xf32>
    %27 = tpu.matmul %26, %3, %cst_16 {dimension_numbers = #tpu.dot_dimension_numbers<[1], [0], [0], [1], [0, 0, 1, 1], [], []>, precision = #tpu.contract_precision<fp32>} : vector<2x32xf32>, vector<32x32xf32>, vector<2x32xf32> -> vector<2x32xf32>
    %28 = arith.index_cast %c1_i32 : i32 to index
    %c0_17 = arith.constant 0 : index
    %c0_18 = arith.constant 0 : index
    %29 = vector.load %arg3[%28, %c0_17, %c0_18] : memref<8x2x32xf32, #tpu.memory_space<vmem>>, vector<1x2x32xf32>
    %30 = vector.shape_cast %29 : vector<1x2x32xf32> to vector<2x32xf32>
    %31 = arith.addf %27, %30 : vector<2x32xf32>
    %32 = arith.negf %31 : vector<2x32xf32>
    %33 = math.exp %32 : vector<2x32xf32>
    %cst_19 = arith.constant 1.000000e+00 : f32
    %34 = vector.broadcast %cst_19 : f32 to vector<2x32xf32>
    %35 = arith.addf %34, %33 : vector<2x32xf32>
    %36 = arith.divf %34, %35 : vector<2x32xf32>
    %37 = arith.index_cast %c1_i32 : i32 to index
    %c0_20 = arith.constant 0 : index
    %c0_21 = arith.constant 0 : index
    %38 = vector.load %arg2[%37, %c0_20, %c0_21] : memref<8x2x32xf32, #tpu.memory_space<vmem>>, vector<1x2x32xf32>
    %39 = vector.shape_cast %38 : vector<1x2x32xf32> to vector<2x32xf32>
    %40 = arith.subf %39, %26 : vector<2x32xf32>
    %41 = arith.mulf %36, %40 : vector<2x32xf32>
    %42 = arith.addf %26, %41 : vector<2x32xf32>
    %c0_22 = arith.constant 0 : index
    %c0_23 = arith.constant 0 : index
    %43 = vector.load %arg7[%c0_22, %c0_23] : memref<2x32xf32, #tpu.memory_space<vmem>>, vector<2x32xf32>
    tpu.vector_store %arg7[%c0_22, %c0_23], %42 {strides = array<i32>} : memref<2x32xf32, #tpu.memory_space<vmem>>, vector<2x32xf32>,
    %44 = arith.index_cast %c1_i32 : i32 to index
    %c0_24 = arith.constant 0 : index
    %c0_25 = arith.constant 0 : index
    %45 = vector.load %arg6[%44, %c0_24, %c0_25] : memref<8x2x32xf32, #tpu.memory_space<vmem>>, vector<1x2x32xf32>
    %46 = vector.shape_cast %45 : vector<1x2x32xf32> to vector<2x32xf32>
    %47 = vector.shape_cast %42 : vector<2x32xf32> to vector<1x2x32xf32>
    tpu.vector_store %arg6[%44, %c0_24, %c0_25], %47 {strides = array<i32>} : memref<8x2x32xf32, #tpu.memory_space<vmem>>, vector<1x2x32xf32>,
    %c2_i32 = arith.constant 2 : i32
    %c0_26 = arith.constant 0 : index
    %c0_27 = arith.constant 0 : index
    %48 = vector.load %arg7[%c0_26, %c0_27] : memref<2x32xf32, #tpu.memory_space<vmem>>, vector<2x32xf32>
    %cst_28 = arith.constant dense<0.000000e+00> : vector<2x32xf32>
    %49 = tpu.matmul %48, %3, %cst_28 {dimension_numbers = #tpu.dot_dimension_numbers<[1], [0], [0], [1], [0, 0, 1, 1], [], []>, precision = #tpu.contract_precision<fp32>} : vector<2x32xf32>, vector<32x32xf32>, vector<2x32xf32> -> vector<2x32xf32>
    %50 = arith.index_cast %c2_i32 : i32 to index
    %c0_29 = arith.constant 0 : index
    %c0_30 = arith.constant 0 : index
    %51 = vector.load %arg3[%50, %c0_29, %c0_30] : memref<8x2x32xf32, #tpu.memory_space<vmem>>, vector<1x2x32xf32>
    %52 = vector.shape_cast %51 : vector<1x2x32xf32> to vector<2x32xf32>
    %53 = arith.addf %49, %52 : vector<2x32xf32>
    %54 = arith.negf %53 : vector<2x32xf32>
    %55 = math.exp %54 : vector<2x32xf32>
    %cst_31 = arith.constant 1.000000e+00 : f32
    %56 = vector.broadcast %cst_31 : f32 to vector<2x32xf32>
    %57 = arith.addf %56, %55 : vector<2x32xf32>
    %58 = arith.divf %56, %57 : vector<2x32xf32>
    %59 = arith.index_cast %c2_i32 : i32 to index
    %c0_32 = arith.constant 0 : index
    %c0_33 = arith.constant 0 : index
    %60 = vector.load %arg2[%59, %c0_32, %c0_33] : memref<8x2x32xf32, #tpu.memory_space<vmem>>, vector<1x2x32xf32>
    %61 = vector.shape_cast %60 : vector<1x2x32xf32> to vector<2x32xf32>
    %62 = arith.subf %61, %48 : vector<2x32xf32>
    %63 = arith.mulf %58, %62 : vector<2x32xf32>
    %64 = arith.addf %48, %63 : vector<2x32xf32>
    %c0_34 = arith.constant 0 : index
    %c0_35 = arith.constant 0 : index
    %65 = vector.load %arg7[%c0_34, %c0_35] : memref<2x32xf32, #tpu.memory_space<vmem>>, vector<2x32xf32>
    tpu.vector_store %arg7[%c0_34, %c0_35], %64 {strides = array<i32>} : memref<2x32xf32, #tpu.memory_space<vmem>>, vector<2x32xf32>,
    %66 = arith.index_cast %c2_i32 : i32 to index
    %c0_36 = arith.constant 0 : index
    %c0_37 = arith.constant 0 : index
    %67 = vector.load %arg6[%66, %c0_36, %c0_37] : memref<8x2x32xf32, #tpu.memory_space<vmem>>, vector<1x2x32xf32>
    %68 = vector.shape_cast %67 : vector<1x2x32xf32> to vector<2x32xf32>
    %69 = vector.shape_cast %64 : vector<2x32xf32> to vector<1x2x32xf32>
    tpu.vector_store %arg6[%66, %c0_36, %c0_37], %69 {strides = array<i32>} : memref<8x2x32xf32, #tpu.memory_space<vmem>>, vector<1x2x32xf32>,
    %c3_i32 = arith.constant 3 : i32
    %c0_38 = arith.constant 0 : index
    %c0_39 = arith.constant 0 : index
    %70 = vector.load %arg7[%c0_38, %c0_39] : memref<2x32xf32, #tpu.memory_space<vmem>>, vector<2x32xf32>
    %cst_40 = arith.constant dense<0.000000e+00> : vector<2x32xf32>
    %71 = tpu.matmul %70, %3, %cst_40 {dimension_numbers = #tpu.dot_dimension_numbers<[1], [0], [0], [1], [0, 0, 1, 1], [], []>, precision = #tpu.contract_precision<fp32>} : vector<2x32xf32>, vector<32x32xf32>, vector<2x32xf32> -> vector<2x32xf32>
    %72 = arith.index_cast %c3_i32 : i32 to index
    %c0_41 = arith.constant 0 : index
    %c0_42 = arith.constant 0 : index
    %73 = vector.load %arg3[%72, %c0_41, %c0_42] : memref<8x2x32xf32, #tpu.memory_space<vmem>>, vector<1x2x32xf32>
    %74 = vector.shape_cast %73 : vector<1x2x32xf32> to vector<2x32xf32>
    %75 = arith.addf %71, %74 : vector<2x32xf32>
    %76 = arith.negf %75 : vector<2x32xf32>
    %77 = math.exp %76 : vector<2x32xf32>
    %cst_43 = arith.constant 1.000000e+00 : f32
    %78 = vector.broadcast %cst_43 : f32 to vector<2x32xf32>
    %79 = arith.addf %78, %77 : vector<2x32xf32>
    %80 = arith.divf %78, %79 : vector<2x32xf32>
    %81 = arith.index_cast %c3_i32 : i32 to index
    %c0_44 = arith.constant 0 : index
    %c0_45 = arith.constant 0 : index
    %82 = vector.load %arg2[%81, %c0_44, %c0_45] : memref<8x2x32xf32, #tpu.memory_space<vmem>>, vector<1x2x32xf32>
    %83 = vector.shape_cast %82 : vector<1x2x32xf32> to vector<2x32xf32>
    %84 = arith.subf %83, %70 : vector<2x32xf32>
    %85 = arith.mulf %80, %84 : vector<2x32xf32>
    %86 = arith.addf %70, %85 : vector<2x32xf32>
    %c0_46 = arith.constant 0 : index
    %c0_47 = arith.constant 0 : index
    %87 = vector.load %arg7[%c0_46, %c0_47] : memref<2x32xf32, #tpu.memory_space<vmem>>, vector<2x32xf32>
    tpu.vector_store %arg7[%c0_46, %c0_47], %86 {strides = array<i32>} : memref<2x32xf32, #tpu.memory_space<vmem>>, vector<2x32xf32>,
    %88 = arith.index_cast %c3_i32 : i32 to index
    %c0_48 = arith.constant 0 : index
    %c0_49 = arith.constant 0 : index
    %89 = vector.load %arg6[%88, %c0_48, %c0_49] : memref<8x2x32xf32, #tpu.memory_space<vmem>>, vector<1x2x32xf32>
    %90 = vector.shape_cast %89 : vector<1x2x32xf32> to vector<2x32xf32>
    %91 = vector.shape_cast %86 : vector<2x32xf32> to vector<1x2x32xf32>
    tpu.vector_store %arg6[%88, %c0_48, %c0_49], %91 {strides = array<i32>} : memref<8x2x32xf32, #tpu.memory_space<vmem>>, vector<1x2x32xf32>,
    %c4_i32 = arith.constant 4 : i32
    %c0_50 = arith.constant 0 : index
    %c0_51 = arith.constant 0 : index
    %92 = vector.load %arg7[%c0_50, %c0_51] : memref<2x32xf32, #tpu.memory_space<vmem>>, vector<2x32xf32>
    %cst_52 = arith.constant dense<0.000000e+00> : vector<2x32xf32>
    %93 = tpu.matmul %92, %3, %cst_52 {dimension_numbers = #tpu.dot_dimension_numbers<[1], [0], [0], [1], [0, 0, 1, 1], [], []>, precision = #tpu.contract_precision<fp32>} : vector<2x32xf32>, vector<32x32xf32>, vector<2x32xf32> -> vector<2x32xf32>
    %94 = arith.index_cast %c4_i32 : i32 to index
    %c0_53 = arith.constant 0 : index
    %c0_54 = arith.constant 0 : index
    %95 = vector.load %arg3[%94, %c0_53, %c0_54] : memref<8x2x32xf32, #tpu.memory_space<vmem>>, vector<1x2x32xf32>
    %96 = vector.shape_cast %95 : vector<1x2x32xf32> to vector<2x32xf32>
    %97 = arith.addf %93, %96 : vector<2x32xf32>
    %98 = arith.negf %97 : vector<2x32xf32>
    %99 = math.exp %98 : vector<2x32xf32>
    %cst_55 = arith.constant 1.000000e+00 : f32
    %100 = vector.broadcast %cst_55 : f32 to vector<2x32xf32>
    %101 = arith.addf %100, %99 : vector<2x32xf32>
    %102 = arith.divf %100, %101 : vector<2x32xf32>
    %103 = arith.index_cast %c4_i32 : i32 to index
    %c0_56 = arith.constant 0 : index
    %c0_57 = arith.constant 0 : index
    %104 = vector.load %arg2[%103, %c0_56, %c0_57] : memref<8x2x32xf32, #tpu.memory_space<vmem>>, vector<1x2x32xf32>
    %105 = vector.shape_cast %104 : vector<1x2x32xf32> to vector<2x32xf32>
    %106 = arith.subf %105, %92 : vector<2x32xf32>
    %107 = arith.mulf %102, %106 : vector<2x32xf32>
    %108 = arith.addf %92, %107 : vector<2x32xf32>
    %c0_58 = arith.constant 0 : index
    %c0_59 = arith.constant 0 : index
    %109 = vector.load %arg7[%c0_58, %c0_59] : memref<2x32xf32, #tpu.memory_space<vmem>>, vector<2x32xf32>
    tpu.vector_store %arg7[%c0_58, %c0_59], %108 {strides = array<i32>} : memref<2x32xf32, #tpu.memory_space<vmem>>, vector<2x32xf32>,
    %110 = arith.index_cast %c4_i32 : i32 to index
    %c0_60 = arith.constant 0 : index
    %c0_61 = arith.constant 0 : index
    %111 = vector.load %arg6[%110, %c0_60, %c0_61] : memref<8x2x32xf32, #tpu.memory_space<vmem>>, vector<1x2x32xf32>
    %112 = vector.shape_cast %111 : vector<1x2x32xf32> to vector<2x32xf32>
    %113 = vector.shape_cast %108 : vector<2x32xf32> to vector<1x2x32xf32>
    tpu.vector_store %arg6[%110, %c0_60, %c0_61], %113 {strides = array<i32>} : memref<8x2x32xf32, #tpu.memory_space<vmem>>, vector<1x2x32xf32>,
    %c5_i32 = arith.constant 5 : i32
    %c0_62 = arith.constant 0 : index
    %c0_63 = arith.constant 0 : index
    %114 = vector.load %arg7[%c0_62, %c0_63] : memref<2x32xf32, #tpu.memory_space<vmem>>, vector<2x32xf32>
    %cst_64 = arith.constant dense<0.000000e+00> : vector<2x32xf32>
    %115 = tpu.matmul %114, %3, %cst_64 {dimension_numbers = #tpu.dot_dimension_numbers<[1], [0], [0], [1], [0, 0, 1, 1], [], []>, precision = #tpu.contract_precision<fp32>} : vector<2x32xf32>, vector<32x32xf32>, vector<2x32xf32> -> vector<2x32xf32>
    %116 = arith.index_cast %c5_i32 : i32 to index
    %c0_65 = arith.constant 0 : index
    %c0_66 = arith.constant 0 : index
    %117 = vector.load %arg3[%116, %c0_65, %c0_66] : memref<8x2x32xf32, #tpu.memory_space<vmem>>, vector<1x2x32xf32>
    %118 = vector.shape_cast %117 : vector<1x2x32xf32> to vector<2x32xf32>
    %119 = arith.addf %115, %118 : vector<2x32xf32>
    %120 = arith.negf %119 : vector<2x32xf32>
    %121 = math.exp %120 : vector<2x32xf32>
    %cst_67 = arith.constant 1.000000e+00 : f32
    %122 = vector.broadcast %cst_67 : f32 to vector<2x32xf32>
    %123 = arith.addf %122, %121 : vector<2x32xf32>
    %124 = arith.divf %122, %123 : vector<2x32xf32>
    %125 = arith.index_cast %c5_i32 : i32 to index
    %c0_68 = arith.constant 0 : index
    %c0_69 = arith.constant 0 : index
    %126 = vector.load %arg2[%125, %c0_68, %c0_69] : memref<8x2x32xf32, #tpu.memory_space<vmem>>, vector<1x2x32xf32>
    %127 = vector.shape_cast %126 : vector<1x2x32xf32> to vector<2x32xf32>
    %128 = arith.subf %127, %114 : vector<2x32xf32>
    %129 = arith.mulf %124, %128 : vector<2x32xf32>
    %130 = arith.addf %114, %129 : vector<2x32xf32>
    %c0_70 = arith.constant 0 : index
    %c0_71 = arith.constant 0 : index
    %131 = vector.load %arg7[%c0_70, %c0_71] : memref<2x32xf32, #tpu.memory_space<vmem>>, vector<2x32xf32>
    tpu.vector_store %arg7[%c0_70, %c0_71], %130 {strides = array<i32>} : memref<2x32xf32, #tpu.memory_space<vmem>>, vector<2x32xf32>,
    %132 = arith.index_cast %c5_i32 : i32 to index
    %c0_72 = arith.constant 0 : index
    %c0_73 = arith.constant 0 : index
    %133 = vector.load %arg6[%132, %c0_72, %c0_73] : memref<8x2x32xf32, #tpu.memory_space<vmem>>, vector<1x2x32xf32>
    %134 = vector.shape_cast %133 : vector<1x2x32xf32> to vector<2x32xf32>
    %135 = vector.shape_cast %130 : vector<2x32xf32> to vector<1x2x32xf32>
    tpu.vector_store %arg6[%132, %c0_72, %c0_73], %135 {strides = array<i32>} : memref<8x2x32xf32, #tpu.memory_space<vmem>>, vector<1x2x32xf32>,
    %c6_i32 = arith.constant 6 : i32
    %c0_74 = arith.constant 0 : index
    %c0_75 = arith.constant 0 : index
    %136 = vector.load %arg7[%c0_74, %c0_75] : memref<2x32xf32, #tpu.memory_space<vmem>>, vector<2x32xf32>
    %cst_76 = arith.constant dense<0.000000e+00> : vector<2x32xf32>
    %137 = tpu.matmul %136, %3, %cst_76 {dimension_numbers = #tpu.dot_dimension_numbers<[1], [0], [0], [1], [0, 0, 1, 1], [], []>, precision = #tpu.contract_precision<fp32>} : vector<2x32xf32>, vector<32x32xf32>, vector<2x32xf32> -> vector<2x32xf32>
    %138 = arith.index_cast %c6_i32 : i32 to index
    %c0_77 = arith.constant 0 : index
    %c0_78 = arith.constant 0 : index
    %139 = vector.load %arg3[%138, %c0_77, %c0_78] : memref<8x2x32xf32, #tpu.memory_space<vmem>>, vector<1x2x32xf32>
    %140 = vector.shape_cast %139 : vector<1x2x32xf32> to vector<2x32xf32>
    %141 = arith.addf %137, %140 : vector<2x32xf32>
    %142 = arith.negf %141 : vector<2x32xf32>
    %143 = math.exp %142 : vector<2x32xf32>
    %cst_79 = arith.constant 1.000000e+00 : f32
    %144 = vector.broadcast %cst_79 : f32 to vector<2x32xf32>
    %145 = arith.addf %144, %143 : vector<2x32xf32>
    %146 = arith.divf %144, %145 : vector<2x32xf32>
    %147 = arith.index_cast %c6_i32 : i32 to index
    %c0_80 = arith.constant 0 : index
    %c0_81 = arith.constant 0 : index
    %148 = vector.load %arg2[%147, %c0_80, %c0_81] : memref<8x2x32xf32, #tpu.memory_space<vmem>>, vector<1x2x32xf32>
    %149 = vector.shape_cast %148 : vector<1x2x32xf32> to vector<2x32xf32>
    %150 = arith.subf %149, %136 : vector<2x32xf32>
    %151 = arith.mulf %146, %150 : vector<2x32xf32>
    %152 = arith.addf %136, %151 : vector<2x32xf32>
    %c0_82 = arith.constant 0 : index
    %c0_83 = arith.constant 0 : index
    %153 = vector.load %arg7[%c0_82, %c0_83] : memref<2x32xf32, #tpu.memory_space<vmem>>, vector<2x32xf32>
    tpu.vector_store %arg7[%c0_82, %c0_83], %152 {strides = array<i32>} : memref<2x32xf32, #tpu.memory_space<vmem>>, vector<2x32xf32>,
    %154 = arith.index_cast %c6_i32 : i32 to index
    %c0_84 = arith.constant 0 : index
    %c0_85 = arith.constant 0 : index
    %155 = vector.load %arg6[%154, %c0_84, %c0_85] : memref<8x2x32xf32, #tpu.memory_space<vmem>>, vector<1x2x32xf32>
    %156 = vector.shape_cast %155 : vector<1x2x32xf32> to vector<2x32xf32>
    %157 = vector.shape_cast %152 : vector<2x32xf32> to vector<1x2x32xf32>
    tpu.vector_store %arg6[%154, %c0_84, %c0_85], %157 {strides = array<i32>} : memref<8x2x32xf32, #tpu.memory_space<vmem>>, vector<1x2x32xf32>,
    %c7_i32 = arith.constant 7 : i32
    %c0_86 = arith.constant 0 : index
    %c0_87 = arith.constant 0 : index
    %158 = vector.load %arg7[%c0_86, %c0_87] : memref<2x32xf32, #tpu.memory_space<vmem>>, vector<2x32xf32>
    %cst_88 = arith.constant dense<0.000000e+00> : vector<2x32xf32>
    %159 = tpu.matmul %158, %3, %cst_88 {dimension_numbers = #tpu.dot_dimension_numbers<[1], [0], [0], [1], [0, 0, 1, 1], [], []>, precision = #tpu.contract_precision<fp32>} : vector<2x32xf32>, vector<32x32xf32>, vector<2x32xf32> -> vector<2x32xf32>
    %160 = arith.index_cast %c7_i32 : i32 to index
    %c0_89 = arith.constant 0 : index
    %c0_90 = arith.constant 0 : index
    %161 = vector.load %arg3[%160, %c0_89, %c0_90] : memref<8x2x32xf32, #tpu.memory_space<vmem>>, vector<1x2x32xf32>
    %162 = vector.shape_cast %161 : vector<1x2x32xf32> to vector<2x32xf32>
    %163 = arith.addf %159, %162 : vector<2x32xf32>
    %164 = arith.negf %163 : vector<2x32xf32>
    %165 = math.exp %164 : vector<2x32xf32>
    %cst_91 = arith.constant 1.000000e+00 : f32
    %166 = vector.broadcast %cst_91 : f32 to vector<2x32xf32>
    %167 = arith.addf %166, %165 : vector<2x32xf32>
    %168 = arith.divf %166, %167 : vector<2x32xf32>
    %169 = arith.index_cast %c7_i32 : i32 to index
    %c0_92 = arith.constant 0 : index
    %c0_93 = arith.constant 0 : index
    %170 = vector.load %arg2[%169, %c0_92, %c0_93] : memref<8x2x32xf32, #tpu.memory_space<vmem>>, vector<1x2x32xf32>
    %171 = vector.shape_cast %170 : vector<1x2x32xf32> to vector<2x32xf32>
    %172 = arith.subf %171, %158 : vector<2x32xf32>
    %173 = arith.mulf %168, %172 : vector<2x32xf32>
    %174 = arith.addf %158, %173 : vector<2x32xf32>
    %c0_94 = arith.constant 0 : index
    %c0_95 = arith.constant 0 : index
    %175 = vector.load %arg7[%c0_94, %c0_95] : memref<2x32xf32, #tpu.memory_space<vmem>>, vector<2x32xf32>
    tpu.vector_store %arg7[%c0_94, %c0_95], %174 {strides = array<i32>} : memref<2x32xf32, #tpu.memory_space<vmem>>, vector<2x32xf32>,
    %176 = arith.index_cast %c7_i32 : i32 to index
    %c0_96 = arith.constant 0 : index
    %c0_97 = arith.constant 0 : index
    %177 = vector.load %arg6[%176, %c0_96, %c0_97] : memref<8x2x32xf32, #tpu.memory_space<vmem>>, vector<1x2x32xf32>
    %178 = vector.shape_cast %177 : vector<1x2x32xf32> to vector<2x32xf32>
    %179 = vector.shape_cast %174 : vector<2x32xf32> to vector<1x2x32xf32>
    tpu.vector_store %arg6[%176, %c0_96, %c0_97], %179 {strides = array<i32>} : memref<8x2x32xf32, #tpu.memory_space<vmem>>, vector<1x2x32xf32>,
    %c8_i32 = arith.constant 8 : i32
    return
  }
  func.func @transform_0(%arg0: i32, %arg1: i32) -> (i32, i32, i32) {
    %c0_i32 = arith.constant 0 : i32
    %c0_i32_0 = arith.constant 0 : i32
    return %arg1, %arg0, %c0_i32 : i32, i32, i32
  }
  func.func @transform_1(%arg0: i32, %arg1: i32) -> (i32, i32, i32) {
    %c0_i32 = arith.constant 0 : i32
    %c0_i32_0 = arith.constant 0 : i32
    return %arg1, %arg0, %c0_i32 : i32, i32, i32
  }
  func.func @transform_2(%arg0: i32, %arg1: i32) -> (i32, i32) {
    %c0_i32 = arith.constant 0 : i32
    %c0_i32_0 = arith.constant 0 : i32
    %c0_i32_1 = arith.constant 0 : i32
    return %c0_i32, %c0_i32_0 : i32, i32
  }
  func.func @transform_3(%arg0: i32, %arg1: i32) -> (i32, i32) {
    %c0_i32 = arith.constant 0 : i32
    %c0_i32_0 = arith.constant 0 : i32
    %c0_i32_1 = arith.constant 0 : i32
    return %c0_i32, %c0_i32_0 : i32, i32
  }
  func.func @transform_4(%arg0: i32, %arg1: i32) -> (i32, i32, i32) {
    %c0_i32 = arith.constant 0 : i32
    %c0_i32_0 = arith.constant 0 : i32
    return %arg1, %arg0, %c0_i32 : i32, i32, i32
  }
}

module attributes {stable_mosaic.version = 11 : i64} {
  func.func @_proj_kernel(%arg0: i32, %arg1: memref<16x32xf32, #tpu.memory_space<vmem>>, %arg2: memref<32x64xf32, #tpu.memory_space<vmem>>, %arg3: memref<1x32xf32, #tpu.memory_space<vmem>>, %arg4: memref<16x32xf32, #tpu.memory_space<vmem>>, %arg5: memref<16x32xf32, #tpu.memory_space<vmem>>) attributes {dimension_semantics = [#tpu.dimension_semantics<parallel>], iteration_bounds = array<i64: 1>, scalar_prefetch = 0 : i64, scratch_operands = 0 : i64, tpu.core_type = #tpu.core_type<tc>, window_params = [{transform_indices = @transform_0, window_bounds = array<i64: 16, 32>}, {pipeline_mode = #tpu.pipeline_mode<synchronous>, transform_indices = @transform_1, window_bounds = array<i64: 32, 64>}, {pipeline_mode = #tpu.pipeline_mode<synchronous>, transform_indices = @transform_2, window_bounds = array<i64: 1, 32>}, {transform_indices = @transform_3, window_bounds = array<i64: 16, 32>}, {transform_indices = @transform_4, window_bounds = array<i64: 16, 32>}]} {
    %c0 = arith.constant 0 : index
    %c0_0 = arith.constant 0 : index
    %0 = vector.load %arg1[%c0, %c0_0] : memref<16x32xf32, #tpu.memory_space<vmem>>, vector<16x32xf32>
    %c0_1 = arith.constant 0 : index
    %c0_2 = arith.constant 0 : index
    %1 = vector.load %arg2[%c0_1, %c0_2] : memref<32x64xf32, #tpu.memory_space<vmem>>, vector<32x64xf32>
    %cst = arith.constant dense<0.000000e+00> : vector<16x64xf32>
    %2 = tpu.matmul %0, %1, %cst {dimension_numbers = #tpu.dot_dimension_numbers<[1], [0], [0], [1], [0, 0, 1, 1], [], []>, precision = #tpu.contract_precision<fp32>} : vector<16x32xf32>, vector<32x64xf32>, vector<16x64xf32> -> vector<16x64xf32>
    %3 = vector.extract_strided_slice %2 {offsets = [0, 0], sizes = [16, 32], strides = [1, 1]} : vector<16x64xf32> to vector<16x32xf32>
    %4 = math.tanh %3 : vector<16x32xf32>
    %c0_3 = arith.constant 0 : index
    %c0_4 = arith.constant 0 : index
    %5 = vector.load %arg4[%c0_3, %c0_4] : memref<16x32xf32, #tpu.memory_space<vmem>>, vector<16x32xf32>
    tpu.vector_store %arg4[%c0_3, %c0_4], %4 {strides = array<i32>} : memref<16x32xf32, #tpu.memory_space<vmem>>, vector<16x32xf32>,
    %6 = vector.extract_strided_slice %2 {offsets = [0, 32], sizes = [16, 32], strides = [1, 1]} : vector<16x64xf32> to vector<16x32xf32>
    %c0_5 = arith.constant 0 : index
    %c0_6 = arith.constant 0 : index
    %7 = vector.load %arg3[%c0_5, %c0_6] : memref<1x32xf32, #tpu.memory_space<vmem>>, vector<1x32xf32>
    %8 = vector.broadcast %7 : vector<1x32xf32> to vector<16x32xf32>
    %9 = arith.addf %6, %8 : vector<16x32xf32>
    %c0_7 = arith.constant 0 : index
    %c0_8 = arith.constant 0 : index
    %10 = vector.load %arg5[%c0_7, %c0_8] : memref<16x32xf32, #tpu.memory_space<vmem>>, vector<16x32xf32>
    tpu.vector_store %arg5[%c0_7, %c0_8], %9 {strides = array<i32>} : memref<16x32xf32, #tpu.memory_space<vmem>>, vector<16x32xf32>,
    return
  }
  func.func @transform_0(%arg0: i32) -> (i32, i32) {
    %c0_i32 = arith.constant 0 : i32
    %c0_i32_0 = arith.constant 0 : i32
    return %arg0, %c0_i32 : i32, i32
  }
  func.func @transform_1(%arg0: i32) -> (i32, i32) {
    %c0_i32 = arith.constant 0 : i32
    %c0_i32_0 = arith.constant 0 : i32
    %c0_i32_1 = arith.constant 0 : i32
    return %c0_i32, %c0_i32_0 : i32, i32
  }
  func.func @transform_2(%arg0: i32) -> (i32, i32) {
    %c0_i32 = arith.constant 0 : i32
    %c0_i32_0 = arith.constant 0 : i32
    %c0_i32_1 = arith.constant 0 : i32
    return %c0_i32, %c0_i32_0 : i32, i32
  }
  func.func @transform_3(%arg0: i32) -> (i32, i32) {
    %c0_i32 = arith.constant 0 : i32
    %c0_i32_0 = arith.constant 0 : i32
    return %arg0, %c0_i32 : i32, i32
  }
  func.func @transform_4(%arg0: i32) -> (i32, i32) {
    %c0_i32 = arith.constant 0 : i32
    %c0_i32_0 = arith.constant 0 : i32
    return %arg0, %c0_i32 : i32, i32
  }
}

module attributes {stable_mosaic.version = 11 : i64} {
  func.func @_gate_res_kernel(%arg0: i32, %arg1: memref<16x32xf32, #tpu.memory_space<vmem>>, %arg2: memref<16x32xf32, #tpu.memory_space<vmem>>, %arg3: memref<16x32xf32, #tpu.memory_space<vmem>>, %arg4: memref<32x64xf32, #tpu.memory_space<vmem>>, %arg5: memref<32x32xf32, #tpu.memory_space<vmem>>, %arg6: memref<1x32xf32, #tpu.memory_space<vmem>>, %arg7: memref<16x32xf32, #tpu.memory_space<vmem>>) attributes {dimension_semantics = [#tpu.dimension_semantics<parallel>], iteration_bounds = array<i64: 1>, scalar_prefetch = 0 : i64, scratch_operands = 0 : i64, tpu.core_type = #tpu.core_type<tc>, window_params = [{transform_indices = @transform_0, window_bounds = array<i64: 16, 32>}, {transform_indices = @transform_1, window_bounds = array<i64: 16, 32>}, {transform_indices = @transform_2, window_bounds = array<i64: 16, 32>}, {pipeline_mode = #tpu.pipeline_mode<synchronous>, transform_indices = @transform_3, window_bounds = array<i64: 32, 64>}, {pipeline_mode = #tpu.pipeline_mode<synchronous>, transform_indices = @transform_4, window_bounds = array<i64: 32, 32>}, {pipeline_mode = #tpu.pipeline_mode<synchronous>, transform_indices = @transform_5, window_bounds = array<i64: 1, 32>}, {transform_indices = @transform_6, window_bounds = array<i64: 16, 32>}]} {
    %c0 = arith.constant 0 : index
    %c0_0 = arith.constant 0 : index
    %0 = vector.load %arg1[%c0, %c0_0] : memref<16x32xf32, #tpu.memory_space<vmem>>, vector<16x32xf32>
    %c0_1 = arith.constant 0 : index
    %c0_2 = arith.constant 0 : index
    %1 = vector.load %arg2[%c0_1, %c0_2] : memref<16x32xf32, #tpu.memory_space<vmem>>, vector<16x32xf32>
    %c0_3 = arith.constant 0 : index
    %c0_4 = arith.constant 0 : index
    %2 = vector.load %arg4[%c0_3, %c0_4] : memref<32x64xf32, #tpu.memory_space<vmem>>, vector<32x64xf32>
    %cst = arith.constant dense<0.000000e+00> : vector<16x64xf32>
    %3 = tpu.matmul %0, %2, %cst {dimension_numbers = #tpu.dot_dimension_numbers<[1], [0], [0], [1], [0, 0, 1, 1], [], []>, precision = #tpu.contract_precision<fp32>} : vector<16x32xf32>, vector<32x64xf32>, vector<16x64xf32> -> vector<16x64xf32>
    %4 = vector.extract_strided_slice %3 {offsets = [0, 0], sizes = [16, 32], strides = [1, 1]} : vector<16x64xf32> to vector<16x32xf32>
    %5 = math.tanh %4 : vector<16x32xf32>
    %6 = vector.extract_strided_slice %3 {offsets = [0, 32], sizes = [16, 32], strides = [1, 1]} : vector<16x64xf32> to vector<16x32xf32>
    %c0_5 = arith.constant 0 : index
    %c0_6 = arith.constant 0 : index
    %7 = vector.load %arg5[%c0_5, %c0_6] : memref<32x32xf32, #tpu.memory_space<vmem>>, vector<32x32xf32>
    %cst_7 = arith.constant dense<0.000000e+00> : vector<16x32xf32>
    %8 = tpu.matmul %1, %7, %cst_7 {dimension_numbers = #tpu.dot_dimension_numbers<[1], [0], [0], [1], [0, 0, 1, 1], [], []>, precision = #tpu.contract_precision<fp32>} : vector<16x32xf32>, vector<32x32xf32>, vector<16x32xf32> -> vector<16x32xf32>
    %c0_8 = arith.constant 0 : index
    %c0_9 = arith.constant 0 : index
    %9 = vector.load %arg6[%c0_8, %c0_9] : memref<1x32xf32, #tpu.memory_space<vmem>>, vector<1x32xf32>
    %10 = vector.broadcast %9 : vector<1x32xf32> to vector<16x32xf32>
    %11 = arith.addf %8, %10 : vector<16x32xf32>
    %12 = arith.addf %11, %6 : vector<16x32xf32>
    %13 = arith.negf %12 : vector<16x32xf32>
    %14 = math.exp %13 : vector<16x32xf32>
    %cst_10 = arith.constant 1.000000e+00 : f32
    %15 = vector.broadcast %cst_10 : f32 to vector<16x32xf32>
    %16 = arith.addf %15, %14 : vector<16x32xf32>
    %17 = arith.divf %15, %16 : vector<16x32xf32>
    %18 = arith.subf %5, %1 : vector<16x32xf32>
    %19 = arith.mulf %17, %18 : vector<16x32xf32>
    %20 = arith.addf %1, %19 : vector<16x32xf32>
    %c0_11 = arith.constant 0 : index
    %c0_12 = arith.constant 0 : index
    %21 = vector.load %arg3[%c0_11, %c0_12] : memref<16x32xf32, #tpu.memory_space<vmem>>, vector<16x32xf32>
    %22 = arith.addf %20, %21 : vector<16x32xf32>
    %c0_13 = arith.constant 0 : index
    %c0_14 = arith.constant 0 : index
    %23 = vector.load %arg7[%c0_13, %c0_14] : memref<16x32xf32, #tpu.memory_space<vmem>>, vector<16x32xf32>
    tpu.vector_store %arg7[%c0_13, %c0_14], %22 {strides = array<i32>} : memref<16x32xf32, #tpu.memory_space<vmem>>, vector<16x32xf32>,
    return
  }
  func.func @transform_0(%arg0: i32) -> (i32, i32) {
    %c0_i32 = arith.constant 0 : i32
    %c0_i32_0 = arith.constant 0 : i32
    return %arg0, %c0_i32 : i32, i32
  }
  func.func @transform_1(%arg0: i32) -> (i32, i32) {
    %c0_i32 = arith.constant 0 : i32
    %c0_i32_0 = arith.constant 0 : i32
    return %arg0, %c0_i32 : i32, i32
  }
  func.func @transform_2(%arg0: i32) -> (i32, i32) {
    %c0_i32 = arith.constant 0 : i32
    %c0_i32_0 = arith.constant 0 : i32
    return %arg0, %c0_i32 : i32, i32
  }
  func.func @transform_3(%arg0: i32) -> (i32, i32) {
    %c0_i32 = arith.constant 0 : i32
    %c0_i32_0 = arith.constant 0 : i32
    %c0_i32_1 = arith.constant 0 : i32
    return %c0_i32, %c0_i32_0 : i32, i32
  }
  func.func @transform_4(%arg0: i32) -> (i32, i32) {
    %c0_i32 = arith.constant 0 : i32
    %c0_i32_0 = arith.constant 0 : i32
    %c0_i32_1 = arith.constant 0 : i32
    return %c0_i32, %c0_i32_0 : i32, i32
  }
  func.func @transform_5(%arg0: i32) -> (i32, i32) {
    %c0_i32 = arith.constant 0 : i32
    %c0_i32_0 = arith.constant 0 : i32
    %c0_i32_1 = arith.constant 0 : i32
    return %c0_i32, %c0_i32_0 : i32, i32
  }
  func.func @transform_6(%arg0: i32) -> (i32, i32) {
    %c0_i32 = arith.constant 0 : i32
    %c0_i32_0 = arith.constant 0 : i32
    return %arg0, %c0_i32 : i32, i32
  }
}

</mosaic_0001>

<llo_original>
// kernel: light_recurrent_unit_block.7
$region0: #{light_recurrent_unit_block.7}
  #allocation0 [shape = 'u32[]', space=smem, size = 0x4, offset = 0x4, fixed_abs, tag = 'smem constant byte address 0x4 - core index']
  #allocation1 [shape = 'u32[144,128]{1,0:T(1,128)}', space=vmem, size = 0x12000, scoped, tag = 'internal scratch']
  %s0 = inlined_call_operand.vmem [shape: f32[16,32], index: 0, kind: input, shape index: {}]
  %s1 = inlined_call_operand.vmem [shape: f32[32,64], index: 1, kind: input, shape index: {}]
  %s2 = inlined_call_operand.vmem [shape: f32[1,32], index: 2, kind: input, shape index: {}]
  %s3 = inlined_call_operand.vmem [shape: f32[16,32], index: 3, kind: output, shape index: {0}]
  %s4 = inlined_call_operand.vmem [shape: f32[16,32], index: 4, kind: output, shape index: {1}]
  %5 = xla_tuple %s3, %s4
  %s6 = sld [smem:[#allocation0]]
  $region30: #{light_recurrent_unit_block.7} parent=0
    _
  %s8 = ssub.s32 1, %s6
  %s9 = scalar_select 0, %s8, %s6
  // Predicated region
  $region2: #{light_recurrent_unit_block.7} parent=0 // pred_check
    _
  $region3: #{light_recurrent_unit_block.7} parent=0 // pred_check_branch
    %11 = sbr.rel (0) target = $region5
  $region4: #{light_recurrent_unit_block.7} parent=0 // pred_region
    _
  $region5: #{light_recurrent_unit_block.7} parent=0 // pred_fallthru
    _
  // Predicated region
  $region6: #{light_recurrent_unit_block.7} parent=0 // pred_check
    _
  $region7: #{light_recurrent_unit_block.7} parent=0 // pred_check_branch
    %13 = sbr.rel (0) target = $region9
  $region8: #{light_recurrent_unit_block.7} parent=0 // pred_region
    _
  $region9: #{light_recurrent_unit_block.7} parent=0 // pred_fallthru
    _
  // Predicated region
  $region10: #{light_recurrent_unit_block.7} parent=0 // pred_check
    _
  $region11: #{light_recurrent_unit_block.7} parent=0 // pred_check_branch
    %15 = sbr.rel (0) target = $region13
  $region12: #{light_recurrent_unit_block.7} parent=0 // pred_region
    _
  $region13: #{light_recurrent_unit_block.7} parent=0 // pred_fallthru
    _
  %v16 = vld [vmem:[%s0] sm:$0xff]
  %v17 = vld [vmem:[%s0 + $0x8] sm:$0xff]
  %v18 = vld [vmem:[%s1] sm:$0xff]
  %v19 = vld [vmem:[%s1 + $0x8] sm:$0xff]
  %v20 = vld [vmem:[%s1 + $0x10] sm:$0xff]
  %v21 = vld [vmem:[%s1 + $0x18] sm:$0xff]
  %vm22 = vcmask 261120
  %v24 = vsel %vm22, %v16, 0
  %v27 = vsel %vm22, %v17, 0
  %29 = vmatprep.subr.mxu0 0.0
  %30 = vmatpush1.msra.mxu0 0.0
  %31 = vmatprep.subr.mxu0 0.0
  %32 = vmatpush1.msra.mxu0 0.0
  %33 = vmatprep.subr.mxu0 0.0
  %34 = vmatpush1.msra.mxu0 0.0
  %35 = vmatprep.subr.mxu0 0.0
  %36 = vmatpush1.msra.mxu0 0.0
  %37 = vmatprep.subr.mxu0 0.0
  %38 = vmatpush1.msra.mxu0 0.0
  %39 = vmatprep.subr.mxu0 0.0
  %40 = vmatpush1.msra.mxu0 0.0
  %41 = vmatprep.subr.mxu0 0.0
  %42 = vmatpush1.msra.mxu0 0.0
  %43 = vmatprep.subr.mxu0 0.0
  %44 = vmatpush1.msra.mxu0 0.0
  %45 = vmatprep.subr.mxu0 0.0
  %46 = vmatpush1.msra.mxu0 0.0
  %47 = vmatprep.subr.mxu0 0.0
  %48 = vmatpush1.msra.mxu0 0.0
  %49 = vmatprep.subr.mxu0 0.0
  %50 = vmatpush1.msra.mxu0 0.0
  %51 = vmatprep.subr.mxu0 0.0
  %52 = vmatpush1.msra.mxu0 0.0
  %53 = vmatprep.subr.mxu0 0.0
  %v54 = vand.u32 %v21, 4294901760
  %55 = vmatpush1.msra.mxu0 %v54
  %56 = vmatprep.subr.mxu0 0.0
  %v57 = vand.u32 %v20, 4294901760
  %58 = vmatpush1.msra.mxu0 %v57
  %59 = vmatprep.subr.mxu0 0.0
  %v60 = vand.u32 %v19, 4294901760
  %61 = vmatpush1.msra.mxu0 %v60
  %62 = vmatprep.subr.mxu0 0.0
  %v63 = vand.u32 %v18, 4294901760
  %64 = vmatpush1.msra.mxu0 %v63
  %65 = vmatprep.subr.mxu0 0.0
  %66 = vmatpush2.msra.mxu0 0.0
  %67 = vmatprep.subr.mxu0 0.0
  %68 = vmatpush2.msra.mxu0 0.0
  %69 = vmatprep.subr.mxu0 0.0
  %70 = vmatpush2.msra.mxu0 0.0
  %71 = vmatprep.subr.mxu0 0.0
  %72 = vmatpush2.msra.mxu0 0.0
  %73 = vmatprep.subr.mxu0 0.0
  %74 = vmatpush2.msra.mxu0 0.0
  %75 = vmatprep.subr.mxu0 0.0
  %76 = vmatpush2.msra.mxu0 0.0
  %77 = vmatprep.subr.mxu0 0.0
  %78 = vmatpush2.msra.mxu0 0.0
  %79 = vmatprep.subr.mxu0 0.0
  %80 = vmatpush2.msra.mxu0 0.0
  %81 = vmatprep.subr.mxu0 0.0
  %82 = vmatpush2.msra.mxu0 0.0
  %83 = vmatprep.subr.mxu0 0.0
  %84 = vmatpush2.msra.mxu0 0.0
  %85 = vmatprep.subr.mxu0 0.0
  %86 = vmatpush2.msra.mxu0 0.0
  %87 = vmatprep.subr.mxu0 0.0
  %88 = vmatpush2.msra.mxu0 0.0
  %89 = vmatprep.subr.mxu0 0.0
  %90 = vmatpush2.msra.mxu0 0.0
  %91 = vmatprep.subr.mxu0 0.0
  %92 = vmatpush2.msra.mxu0 0.0
  %93 = vmatprep.subr.mxu0 0.0
  %94 = vmatpush2.msra.mxu0 0.0
  %95 = vmatprep.subr.mxu0 0.0
  %96 = vmatpush2.msra.mxu0 0.0
  %97 = vmatprep.mubr.f32.mxu0 0.0
  %v98 = vand.u32 %v24, 4294901760
  %v99 = vsub.f32 %v24, %v98
  %v100 = vand.u32 %v99, 4294901760
  %v101 = vsub.f32 %v99, %v100
  %v102 = vand.u32 %v101, 4294901760
  %103 = vmatmul.mubr.f32.gmra.mxu0 %v102
  %v104 = vpop.f32.mrf.mxu0
  %v105 = vadd.f32 0.0, %v104
  %v106 = vpop.f32.mrf.mxu0
  %107 = vmatprep.mubr.f32.mxu0 0.0
  %v108 = vand.u32 %v27, 4294901760
  %v109 = vsub.f32 %v27, %v108
  %v110 = vand.u32 %v109, 4294901760
  %v111 = vsub.f32 %v109, %v110
  %v112 = vand.u32 %v111, 4294901760
  %113 = vmatmul.mubr.f32.gmra.mxu0 %v112
  %v114 = vpop.f32.mrf.mxu0
  %v115 = vadd.f32 0.0, %v114
  %v116 = vpop.f32.mrf.mxu0
  %117 = vdwg.mxu0
  %118 = vmatprep.subr.mxu0 0.0
  %119 = vmatpush1.msra.mxu0 0.0
  %120 = vmatprep.subr.mxu0 0.0
  %121 = vmatpush1.msra.mxu0 0.0
  %122 = vmatprep.subr.mxu0 0.0
  %123 = vmatpush1.msra.mxu0 0.0
  %124 = vmatprep.subr.mxu0 0.0
  %125 = vmatpush1.msra.mxu0 0.0
  %126 = vmatprep.subr.mxu0 0.0
  %127 = vmatpush1.msra.mxu0 0.0
  %128 = vmatprep.subr.mxu0 0.0
  %129 = vmatpush1.msra.mxu0 0.0
  %130 = vmatprep.subr.mxu0 0.0
  %131 = vmatpush1.msra.mxu0 0.0
  %132 = vmatprep.subr.mxu0 0.0
  %133 = vmatpush1.msra.mxu0 0.0
  %134 = vmatprep.subr.mxu0 0.0
  %135 = vmatpush1.msra.mxu0 0.0
  %136 = vmatprep.subr.mxu0 0.0
  %137 = vmatpush1.msra.mxu0 0.0
  %138 = vmatprep.subr.mxu0 0.0
  %139 = vmatpush1.msra.mxu0 0.0
  %140 = vmatprep.subr.mxu0 0.0
  %141 = vmatpush1.msra.mxu0 0.0
  %142 = vmatprep.subr.mxu0 0.0
  %v143 = vand.u32 %v21, 4294901760
  %v144 = vsub.f32 %v21, %v143
  %v145 = vand.u32 %v144, 4294901760
  %v146 = vsub.f32 %v144, %v145
  %v147 = vand.u32 %v146, 4294901760
  %148 = vmatpush1.msra.mxu0 %v147
  %149 = vmatprep.subr.mxu0 0.0
  %v150 = vand.u32 %v20, 4294901760
  %v151 = vsub.f32 %v20, %v150
  %v152 = vand.u32 %v151, 4294901760
  %v153 = vsub.f32 %v151, %v152
  %v154 = vand.u32 %v153, 4294901760
  %155 = vmatpush1.msra.mxu0 %v154
  %156 = vmatprep.subr.mxu0 0.0
  %v157 = vand.u32 %v19, 4294901760
  %v158 = vsub.f32 %v19, %v157
  %v159 = vand.u32 %v158, 4294901760
  %v160 = vsub.f32 %v158, %v159
  %v161 = vand.u32 %v160, 4294901760
  %162 = vmatpush1.msra.mxu0 %v161
  %163 = vmatprep.subr.mxu0 0.0
  %v164 = vand.u32 %v18, 4294901760
  %v165 = vsub.f32 %v18, %v164
  %v166 = vand.u32 %v165, 4294901760
  %v167 = vsub.f32 %v165, %v166
  %v168 = vand.u32 %v167, 4294901760
  %169 = vmatpush1.msra.mxu0 %v168
  %170 = vmatprep.subr.mxu0 0.0
  %171 = vmatpush2.msra.mxu0 0.0
  %172 = vmatprep.subr.mxu0 0.0
  %173 = vmatpush2.msra.mxu0 0.0
  %174 = vmatprep.subr.mxu0 0.0
  %175 = vmatpush2.msra.mxu0 0.0
  %176 = vmatprep.subr.mxu0 0.0
  %177 = vmatpush2.msra.mxu0 0.0
  %178 = vmatprep.subr.mxu0 0.0
  %179 = vmatpush2.msra.mxu0 0.0
  %180 = vmatprep.subr.mxu0 0.0
  %181 = vmatpush2.msra.mxu0 0.0
  %182 = vmatprep.subr.mxu0 0.0
  %183 = vmatpush2.msra.mxu0 0.0
  %184 = vmatprep.subr.mxu0 0.0
  %185 = vmatpush2.msra.mxu0 0.0
  %186 = vmatprep.subr.mxu0 0.0
  %187 = vmatpush2.msra.mxu0 0.0
  %188 = vmatprep.subr.mxu0 0.0
  %189 = vmatpush2.msra.mxu0 0.0
  %190 = vmatprep.subr.mxu0 0.0
  %191 = vmatpush2.msra.mxu0 0.0
  %192 = vmatprep.subr.mxu0 0.0
  %193 = vmatpush2.msra.mxu0 0.0
  %194 = vmatprep.subr.mxu0 0.0
  %195 = vmatpush2.msra.mxu0 0.0
  %196 = vmatprep.subr.mxu0 0.0
  %197 = vmatpush2.msra.mxu0 0.0
  %198 = vmatprep.subr.mxu0 0.0
  %199 = vmatpush2.msra.mxu0 0.0
  %200 = vmatprep.subr.mxu0 0.0
  %201 = vmatpush2.msra.mxu0 0.0
  %202 = vmatprep.mubr.f32.mxu0 0.0
  %v203 = vand.u32 %v24, 4294901760
  %204 = vmatmul.mubr.f32.gmra.mxu0 %v203
  %v205 = vpop.f32.mrf.mxu0
  %v206 = vadd.f32 %v105, %v205
  %v207 = vpop.f32.mrf.mxu0
  %208 = vmatprep.mubr.f32.mxu0 0.0
  %v209 = vand.u32 %v27, 4294901760
  %210 = vmatmul.mubr.f32.gmra.mxu0 %v209
  %v211 = vpop.f32.mrf.mxu0
  %v212 = vadd.f32 %v115, %v211
  %v213 = vpop.f32.mrf.mxu0
  %214 = vdwg.mxu0
  %215 = vmatprep.subr.mxu0 0.0
  %216 = vmatpush1.msra.mxu0 0.0
  %217 = vmatprep.subr.mxu0 0.0
  %218 = vmatpush1.msra.mxu0 0.0
  %219 = vmatprep.subr.mxu0 0.0
  %220 = vmatpush1.msra.mxu0 0.0
  %221 = vmatprep.subr.mxu0 0.0
  %222 = vmatpush1.msra.mxu0 0.0
  %223 = vmatprep.subr.mxu0 0.0
  %224 = vmatpush1.msra.mxu0 0.0
  %225 = vmatprep.subr.mxu0 0.0
  %226 = vmatpush1.msra.mxu0 0.0
  %227 = vmatprep.subr.mxu0 0.0
  %228 = vmatpush1.msra.mxu0 0.0
  %229 = vmatprep.subr.mxu0 0.0
  %230 = vmatpush1.msra.mxu0 0.0
  %231 = vmatprep.subr.mxu0 0.0
  %232 = vmatpush1.msra.mxu0 0.0
  %233 = vmatprep.subr.mxu0 0.0
  %234 = vmatpush1.msra.mxu0 0.0
  %235 = vmatprep.subr.mxu0 0.0
  %236 = vmatpush1.msra.mxu0 0.0
  %237 = vmatprep.subr.mxu0 0.0
  %238 = vmatpush1.msra.mxu0 0.0
  %239 = vmatprep.subr.mxu0 0.0
  %v240 = vand.u32 %v21, 4294901760
  %v241 = vsub.f32 %v21, %v240
  %242 = vmatpush1.msra.mxu0 %v241
  %243 = vmatprep.subr.mxu0 0.0
  %v244 = vand.u32 %v20, 4294901760
  %v245 = vsub.f32 %v20, %v244
  %246 = vmatpush1.msra.mxu0 %v245
  %247 = vmatprep.subr.mxu0 0.0
  %v248 = vand.u32 %v19, 4294901760
  %v249 = vsub.f32 %v19, %v248
  %250 = vmatpush1.msra.mxu0 %v249
  %251 = vmatprep.subr.mxu0 0.0
  %v252 = vand.u32 %v18, 4294901760
  %v253 = vsub.f32 %v18, %v252
  %254 = vmatpush1.msra.mxu0 %v253
  %255 = vmatprep.subr.mxu0 0.0
  %256 = vmatpush2.msra.mxu0 0.0
  %257 = vmatprep.subr.mxu0 0.0
  %258 = vmatpush2.msra.mxu0 0.0
  %259 = vmatprep.subr.mxu0 0.0
  %260 = vmatpush2.msra.mxu0 0.0
  %261 = vmatprep.subr.mxu0 0.0
  %262 = vmatpush2.msra.mxu0 0.0
  %263 = vmatprep.subr.mxu0 0.0
  %264 = vmatpush2.msra.mxu0 0.0
  %265 = vmatprep.subr.mxu0 0.0
  %266 = vmatpush2.msra.mxu0 0.0
  %267 = vmatprep.subr.mxu0 0.0
  %268 = vmatpush2.msra.mxu0 0.0
  %269 = vmatprep.subr.mxu0 0.0
  %270 = vmatpush2.msra.mxu0 0.0
  %271 = vmatprep.subr.mxu0 0.0
  %272 = vmatpush2.msra.mxu0 0.0
  %273 = vmatprep.subr.mxu0 0.0
  %274 = vmatpush2.msra.mxu0 0.0
  %275 = vmatprep.subr.mxu0 0.0
  %276 = vmatpush2.msra.mxu0 0.0
  %277 = vmatprep.subr.mxu0 0.0
  %278 = vmatpush2.msra.mxu0 0.0
  %279 = vmatprep.subr.mxu0 0.0
  %280 = vmatpush2.msra.mxu0 0.0
  %281 = vmatprep.subr.mxu0 0.0
  %282 = vmatpush2.msra.mxu0 0.0
  %283 = vmatprep.subr.mxu0 0.0
  %284 = vmatpush2.msra.mxu0 0.0
  %285 = vmatprep.subr.mxu0 0.0
  %286 = vmatpush2.msra.mxu0 0.0
  %287 = vmatprep.mubr.f32.mxu0 0.0
  %v288 = vand.u32 %v24, 4294901760
  %v289 = vsub.f32 %v24, %v288
  %290 = vmatmul.mubr.f32.gmra.mxu0 %v289
  %v291 = vpop.f32.mrf.mxu0
  %v292 = vadd.f32 %v206, %v291
  %v293 = vpop.f32.mrf.mxu0
  %294 = vmatprep.mubr.f32.mxu0 0.0
  %v295 = vand.u32 %v27, 4294901760
  %v296 = vsub.f32 %v27, %v295
  %297 = vmatmul.mubr.f32.gmra.mxu0 %v296
  %v298 = vpop.f32.mrf.mxu0
  %v299 = vadd.f32 %v212, %v298
  %v300 = vpop.f32.mrf.mxu0
  %301 = vdwg.mxu0
  %302 = vmatprep.subr.mxu0 0.0
  %303 = vmatpush1.msra.mxu0 0.0
  %304 = vmatprep.subr.mxu0 0.0
  %305 = vmatpush1.msra.mxu0 0.0
  %306 = vmatprep.subr.mxu0 0.0
  %307 = vmatpush1.msra.mxu0 0.0
  %308 = vmatprep.subr.mxu0 0.0
  %309 = vmatpush1.msra.mxu0 0.0
  %310 = vmatprep.subr.mxu0 0.0
  %311 = vmatpush1.msra.mxu0 0.0
  %312 = vmatprep.subr.mxu0 0.0
  %313 = vmatpush1.msra.mxu0 0.0
  %314 = vmatprep.subr.mxu0 0.0
  %315 = vmatpush1.msra.mxu0 0.0
  %316 = vmatprep.subr.mxu0 0.0
  %317 = vmatpush1.msra.mxu0 0.0
  %318 = vmatprep.subr.mxu0 0.0
  %319 = vmatpush1.msra.mxu0 0.0
  %320 = vmatprep.subr.mxu0 0.0
  %321 = vmatpush1.msra.mxu0 0.0
  %322 = vmatprep.subr.mxu0 0.0
  %323 = vmatpush1.msra.mxu0 0.0
  %324 = vmatprep.subr.mxu0 0.0
  %325 = vmatpush1.msra.mxu0 0.0
  %326 = vmatprep.subr.mxu0 0.0
  %v327 = vand.u32 %v21, 4294901760
  %328 = vmatpush1.msra.mxu0 %v327
  %329 = vmatprep.subr.mxu0 0.0
  %v330 = vand.u32 %v20, 4294901760
  %331 = vmatpush1.msra.mxu0 %v330
  %332 = vmatprep.subr.mxu0 0.0
  %v333 = vand.u32 %v19, 4294901760
  %334 = vmatpush1.msra.mxu0 %v333
  %335 = vmatprep.subr.mxu0 0.0
  %v336 = vand.u32 %v18, 4294901760
  %337 = vmatpush1.msra.mxu0 %v336
  %338 = vmatprep.subr.mxu0 0.0
  %339 = vmatpush2.msra.mxu0 0.0
  %340 = vmatprep.subr.mxu0 0.0
  %341 = vmatpush2.msra.mxu0 0.0
  %342 = vmatprep.subr.mxu0 0.0
  %343 = vmatpush2.msra.mxu0 0.0
  %344 = vmatprep.subr.mxu0 0.0
  %345 = vmatpush2.msra.mxu0 0.0
  %346 = vmatprep.subr.mxu0 0.0
  %347 = vmatpush2.msra.mxu0 0.0
  %348 = vmatprep.subr.mxu0 0.0
  %349 = vmatpush2.msra.mxu0 0.0
  %350 = vmatprep.subr.mxu0 0.0
  %351 = vmatpush2.msra.mxu0 0.0
  %352 = vmatprep.subr.mxu0 0.0
  %353 = vmatpush2.msra.mxu0 0.0
  %354 = vmatprep.subr.mxu0 0.0
  %355 = vmatpush2.msra.mxu0 0.0
  %356 = vmatprep.subr.mxu0 0.0
  %357 = vmatpush2.msra.mxu0 0.0
  %358 = vmatprep.subr.mxu0 0.0
  %359 = vmatpush2.msra.mxu0 0.0
  %360 = vmatprep.subr.mxu0 0.0
  %361 = vmatpush2.msra.mxu0 0.0
  %362 = vmatprep.subr.mxu0 0.0
  %363 = vmatpush2.msra.mxu0 0.0
  %364 = vmatprep.subr.mxu0 0.0
  %365 = vmatpush2.msra.mxu0 0.0
  %366 = vmatprep.subr.mxu0 0.0
  %367 = vmatpush2.msra.mxu0 0.0
  %368 = vmatprep.subr.mxu0 0.0
  %369 = vmatpush2.msra.mxu0 0.0
  %370 = vmatprep.mubr.f32.mxu0 0.0
  %v371 = vand.u32 %v24, 4294901760
  %v372 = vsub.f32 %v24, %v371
  %v373 = vand.u32 %v372, 4294901760
  %374 = vmatmul.mubr.f32.gmra.mxu0 %v373
  %v375 = vpop.f32.mrf.mxu0
  %v376 = vadd.f32 %v292, %v375
  %v377 = vpop.f32.mrf.mxu0
  %378 = vmatprep.mubr.f32.mxu0 0.0
  %v379 = vand.u32 %v27, 4294901760
  %v380 = vsub.f32 %v27, %v379
  %v381 = vand.u32 %v380, 4294901760
  %382 = vmatmul.mubr.f32.gmra.mxu0 %v381
  %v383 = vpop.f32.mrf.mxu0
  %v384 = vadd.f32 %v299, %v383
  %v385 = vpop.f32.mrf.mxu0
  %386 = vdwg.mxu0
  %387 = vmatprep.subr.mxu0 0.0
  %388 = vmatpush1.msra.mxu0 0.0
  %389 = vmatprep.subr.mxu0 0.0
  %390 = vmatpush1.msra.mxu0 0.0
  %391 = vmatprep.subr.mxu0 0.0
  %392 = vmatpush1.msra.mxu0 0.0
  %393 = vmatprep.subr.mxu0 0.0
  %394 = vmatpush1.msra.mxu0 0.0
  %395 = vmatprep.subr.mxu0 0.0
  %396 = vmatpush1.msra.mxu0 0.0
  %397 = vmatprep.subr.mxu0 0.0
  %398 = vmatpush1.msra.mxu0 0.0
  %399 = vmatprep.subr.mxu0 0.0
  %400 = vmatpush1.msra.mxu0 0.0
  %401 = vmatprep.subr.mxu0 0.0
  %402 = vmatpush1.msra.mxu0 0.0
  %403 = vmatprep.subr.mxu0 0.0
  %404 = vmatpush1.msra.mxu0 0.0
  %405 = vmatprep.subr.mxu0 0.0
  %406 = vmatpush1.msra.mxu0 0.0
  %407 = vmatprep.subr.mxu0 0.0
  %408 = vmatpush1.msra.mxu0 0.0
  %409 = vmatprep.subr.mxu0 0.0
  %410 = vmatpush1.msra.mxu0 0.0
  %411 = vmatprep.subr.mxu0 0.0
  %v412 = vand.u32 %v21, 4294901760
  %v413 = vsub.f32 %v21, %v412
  %v414 = vand.u32 %v413, 4294901760
  %415 = vmatpush1.msra.mxu0 %v414
  %416 = vmatprep.subr.mxu0 0.0
  %v417 = vand.u32 %v20, 4294901760
  %v418 = vsub.f32 %v20, %v417
  %v419 = vand.u32 %v418, 4294901760
  %420 = vmatpush1.msra.mxu0 %v419
  %421 = vmatprep.subr.mxu0 0.0
  %v422 = vand.u32 %v19, 4294901760
  %v423 = vsub.f32 %v19, %v422
  %v424 = vand.u32 %v423, 4294901760
  %425 = vmatpush1.msra.mxu0 %v424
  %426 = vmatprep.subr.mxu0 0.0
  %v427 = vand.u32 %v18, 4294901760
  %v428 = vsub.f32 %v18, %v427
  %v429 = vand.u32 %v428, 4294901760
  %430 = vmatpush1.msra.mxu0 %v429
  %431 = vmatprep.subr.mxu0 0.0
  %432 = vmatpush2.msra.mxu0 0.0
  %433 = vmatprep.subr.mxu0 0.0
  %434 = vmatpush2.msra.mxu0 0.0
  %435 = vmatprep.subr.mxu0 0.0
  %436 = vmatpush2.msra.mxu0 0.0
  %437 = vmatprep.subr.mxu0 0.0
  %438 = vmatpush2.msra.mxu0 0.0
  %439 = vmatprep.subr.mxu0 0.0
  %440 = vmatpush2.msra.mxu0 0.0
  %441 = vmatprep.subr.mxu0 0.0
  %442 = vmatpush2.msra.mxu0 0.0
  %443 = vmatprep.subr.mxu0 0.0
  %444 = vmatpush2.msra.mxu0 0.0
  %445 = vmatprep.subr.mxu0 0.0
  %446 = vmatpush2.msra.mxu0 0.0
  %447 = vmatprep.subr.mxu0 0.0
  %448 = vmatpush2.msra.mxu0 0.0
  %449 = vmatprep.subr.mxu0 0.0
  %450 = vmatpush2.msra.mxu0 0.0
  %451 = vmatprep.subr.mxu0 0.0
  %452 = vmatpush2.msra.mxu0 0.0
  %453 = vmatprep.subr.mxu0 0.0
  %454 = vmatpush2.msra.mxu0 0.0
  %455 = vmatprep.subr.mxu0 0.0
  %456 = vmatpush2.msra.mxu0 0.0
  %457 = vmatprep.subr.mxu0 0.0
  %458 = vmatpush2.msra.mxu0 0.0
  %459 = vmatprep.subr.mxu0 0.0
  %460 = vmatpush2.msra.mxu0 0.0
  %461 = vmatprep.subr.mxu0 0.0
  %462 = vmatpush2.msra.mxu0 0.0
  %463 = vmatprep.mubr.f32.mxu0 0.0
  %v464 = vand.u32 %v24, 4294901760
  %465 = vmatmul.mubr.f32.gmra.mxu0 %v464
  %v466 = vpop.f32.mrf.mxu0
  %v467 = vadd.f32 %v376, %v466
  %v468 = vpop.f32.mrf.mxu0
  %469 = vmatprep.mubr.f32.mxu0 0.0
  %v470 = vand.u32 %v27, 4294901760
  %471 = vmatmul.mubr.f32.gmra.mxu0 %v470
  %v472 = vpop.f32.mrf.mxu0
  %v473 = vadd.f32 %v384, %v472
  %v474 = vpop.f32.mrf.mxu0
  %475 = vdwg.mxu0
  %476 = vmatprep.subr.mxu0 0.0
  %477 = vmatpush1.msra.mxu0 0.0
  %478 = vmatprep.subr.mxu0 0.0
  %479 = vmatpush1.msra.mxu0 0.0
  %480 = vmatprep.subr.mxu0 0.0
  %481 = vmatpush1.msra.mxu0 0.0
  %482 = vmatprep.subr.mxu0 0.0
  %483 = vmatpush1.msra.mxu0 0.0
  %484 = vmatprep.subr.mxu0 0.0
  %485 = vmatpush1.msra.mxu0 0.0
  %486 = vmatprep.subr.mxu0 0.0
  %487 = vmatpush1.msra.mxu0 0.0
  %488 = vmatprep.subr.mxu0 0.0
  %489 = vmatpush1.msra.mxu0 0.0
  %490 = vmatprep.subr.mxu0 0.0
  %491 = vmatpush1.msra.mxu0 0.0
  %492 = vmatprep.subr.mxu0 0.0
  %493 = vmatpush1.msra.mxu0 0.0
  %494 = vmatprep.subr.mxu0 0.0
  %495 = vmatpush1.msra.mxu0 0.0
  %496 = vmatprep.subr.mxu0 0.0
  %497 = vmatpush1.msra.mxu0 0.0
  %498 = vmatprep.subr.mxu0 0.0
  %499 = vmatpush1.msra.mxu0 0.0
  %500 = vmatprep.subr.mxu0 0.0
  %v501 = vand.u32 %v21, 4294901760
  %502 = vmatpush1.msra.mxu0 %v501
  %503 = vmatprep.subr.mxu0 0.0
  %v504 = vand.u32 %v20, 4294901760
  %505 = vmatpush1.msra.mxu0 %v504
  %506 = vmatprep.subr.mxu0 0.0
  %v507 = vand.u32 %v19, 4294901760
  %508 = vmatpush1.msra.mxu0 %v507
  %509 = vmatprep.subr.mxu0 0.0
  %v510 = vand.u32 %v18, 4294901760
  %511 = vmatpush1.msra.mxu0 %v510
  %512 = vmatprep.subr.mxu0 0.0
  %513 = vmatpush2.msra.mxu0 0.0
  %514 = vmatprep.subr.mxu0 0.0
  %515 = vmatpush2.msra.mxu0 0.0
  %516 = vmatprep.subr.mxu0 0.0
  %517 = vmatpush2.msra.mxu0 0.0
  %518 = vmatprep.subr.mxu0 0.0
  %519 = vmatpush2.msra.mxu0 0.0
  %520 = vmatprep.subr.mxu0 0.0
  %521 = vmatpush2.msra.mxu0 0.0
  %522 = vmatprep.subr.mxu0 0.0
  %523 = vmatpush2.msra.mxu0 0.0
  %524 = vmatprep.subr.mxu0 0.0
  %525 = vmatpush2.msra.mxu0 0.0
  %526 = vmatprep.subr.mxu0 0.0
  %527 = vmatpush2.msra.mxu0 0.0
  %528 = vmatprep.subr.mxu0 0.0
  %529 = vmatpush2.msra.mxu0 0.0
  %530 = vmatprep.subr.mxu0 0.0
  %531 = vmatpush2.msra.mxu0 0.0
  %532 = vmatprep.subr.mxu0 0.0
  %533 = vmatpush2.msra.mxu0 0.0
  %534 = vmatprep.subr.mxu0 0.0
  %535 = vmatpush2.msra.mxu0 0.0
  %536 = vmatprep.subr.mxu0 0.0
  %537 = vmatpush2.msra.mxu0 0.0
  %538 = vmatprep.subr.mxu0 0.0
  %539 = vmatpush2.msra.mxu0 0.0
  %540 = vmatprep.subr.mxu0 0.0
  %541 = vmatpush2.msra.mxu0 0.0
  %542 = vmatprep.subr.mxu0 0.0
  %543 = vmatpush2.msra.mxu0 0.0
  %544 = vmatprep.mubr.f32.mxu0 0.0
  %v545 = vand.u32 %v24, 4294901760
  %546 = vmatmul.mubr.f32.gmra.mxu0 %v545
  %v547 = vpop.f32.mrf.mxu0
  %v548 = vadd.f32 %v467, %v547
  %v549 = vpop.f32.mrf.mxu0
  %550 = vmatprep.mubr.f32.mxu0 0.0
  %v551 = vand.u32 %v27, 4294901760
  %552 = vmatmul.mubr.f32.gmra.mxu0 %v551
  %v553 = vpop.f32.mrf.mxu0
  %v554 = vadd.f32 %v473, %v553
  %v555 = vpop.f32.mrf.mxu0
  %556 = vdwg.mxu0
  %v557 = vtanh.pop %v548
  %v558 = vtanh.pop %v554
  %559 = vst.msk [vmem:[%s3] sm:$0xff] %vm22, %v557
  %560 = vst.msk [vmem:[%s3 + $0x8] sm:$0xff] %vm22, %v558
  %v561 = vld [vmem:[%s2] sm:$0x1]
  %v563 = vlaneseq
  %v564 = vshrl.u32 %v563, 7
  %v565 = vsub.s32 0, %v564
  %v566 = vrot.slane %v561, %v565
  %567 = vrot.lane.b32.xlu0 %v566, 32
  %v568 = vpop.permute.xlu0 %567
  %v570 = vadd.f32 %v548, %v568
  %v571 = vadd.f32 %v554, %v568
  %574 = vrot.lane.b32.xlu0 %v570, 96
  %v575 = vpop.permute.xlu0 %574
  %576 = vrot.lane.b32.xlu0 %v571, 96
  %v577 = vpop.permute.xlu0 %576
  %580 = vst.msk [vmem:[%s4] sm:$0xff] %vm22, %v575
  %581 = vst.msk [vmem:[%s4 + $0x8] sm:$0xff] %vm22, %v577
  // Predicated region
  $region14: #{light_recurrent_unit_block.7} parent=0 // pred_check
    _
  $region15: #{light_recurrent_unit_block.7} parent=0 // pred_check_branch
    %583 = sbr.rel (0) target = $region17
  $region16: #{light_recurrent_unit_block.7} parent=0 // pred_region
    _
  $region17: #{light_recurrent_unit_block.7} parent=0 // pred_fallthru
    _
  // Predicated region
  $region18: #{light_recurrent_unit_block.7} parent=0 // pred_check
    _
  $region19: #{light_recurrent_unit_block.7} parent=0 // pred_check_branch
    %585 = sbr.rel (0) target = $region21
  $region20: #{light_recurrent_unit_block.7} parent=0 // pred_region
    _
  $region21: #{light_recurrent_unit_block.7} parent=0 // pred_fallthru
    _
  // Predicated region
  $region22: #{light_recurrent_unit_block.7} parent=0 // pred_check
    _
  $region23: #{light_recurrent_unit_block.7} parent=0 // pred_check_branch
    %587 = sbr.rel (0) target = $region25
  $region24: #{light_recurrent_unit_block.7} parent=0 // pred_region
    _
  $region25: #{light_recurrent_unit_block.7} parent=0 // pred_fallthru
    _
  // Predicated region
  $region26: #{light_recurrent_unit_block.7} parent=0 // pred_check
    _
  $region27: #{light_recurrent_unit_block.7} parent=0 // pred_check_branch
    %589 = sbr.rel (0) target = $region29
  $region28: #{light_recurrent_unit_block.7} parent=0 // pred_region
    _
  $region29: #{light_recurrent_unit_block.7} parent=0 // pred_fallthru
    _

// kernel: light_recurrent_unit_block.5
$region0: #{light_recurrent_unit_block.5}
  #allocation0 [shape = 'u32[]', space=smem, size = 0x4, offset = 0x4, fixed_abs, tag = 'smem constant byte address 0x4 - core index']
  #allocation1 [shape = 'u32[144,128]{1,0:T(1,128)}', space=vmem, size = 0x12000, scoped, tag = 'internal scratch']
  %s0 = inlined_call_operand.vmem [shape: f32[16,32], index: 0, kind: input, shape index: {}]
  %s1 = inlined_call_operand.vmem [shape: f32[1,32], index: 1, kind: input, shape index: {}]
  %s2 = inlined_call_operand.vmem [shape: f32[32,64], index: 2, kind: input, shape index: {}]
  %s3 = inlined_call_operand.vmem [shape: f32[1,32], index: 3, kind: input, shape index: {}]
  %s4 = inlined_call_operand.vmem [shape: f32[16,32], index: 4, kind: output, shape index: {0}]
  %s5 = inlined_call_operand.vmem [shape: f32[16,32], index: 5, kind: output, shape index: {1}]
  %s6 = inlined_call_operand.vmem [shape: f32[16,32], index: 6, kind: output, shape index: {2}]
  %7 = xla_tuple %s4, %s5, %s6
  %s8 = sld [smem:[#allocation0]]
  $region42: #{light_recurrent_unit_block.5} parent=0
    _
  %s10 = ssub.s32 1, %s8
  %s11 = scalar_select 0, %s10, %s8
  // Predicated region
  $region2: #{light_recurrent_unit_block.5} parent=0 // pred_check
    _
  $region3: #{light_recurrent_unit_block.5} parent=0 // pred_check_branch
    %13 = sbr.rel (0) target = $region5
  $region4: #{light_recurrent_unit_block.5} parent=0 // pred_region
    _
  $region5: #{light_recurrent_unit_block.5} parent=0 // pred_fallthru
    _
  // Predicated region
  $region6: #{light_recurrent_unit_block.5} parent=0 // pred_check
    _
  $region7: #{light_recurrent_unit_block.5} parent=0 // pred_check_branch
    %15 = sbr.rel (0) target = $region9
  $region8: #{light_recurrent_unit_block.5} parent=0 // pred_region
    _
  $region9: #{light_recurrent_unit_block.5} parent=0 // pred_fallthru
    _
  // Predicated region
  $region10: #{light_recurrent_unit_block.5} parent=0 // pred_check
    _
  $region11: #{light_recurrent_unit_block.5} parent=0 // pred_check_branch
    %17 = sbr.rel (0) target = $region13
  $region12: #{light_recurrent_unit_block.5} parent=0 // pred_region
    _
  $region13: #{light_recurrent_unit_block.5} parent=0 // pred_fallthru
    _
  // Predicated region
  $region14: #{light_recurrent_unit_block.5} parent=0 // pred_check
    _
  $region15: #{light_recurrent_unit_block.5} parent=0 // pred_check_branch
    %19 = sbr.rel (0) target = $region17
  $region16: #{light_recurrent_unit_block.5} parent=0 // pred_region
    _
  $region17: #{light_recurrent_unit_block.5} parent=0 // pred_fallthru
    _
  %v20 = vld [vmem:[%s0] sm:$0xff]
  %v21 = vld [vmem:[%s0 + $0x8] sm:$0xff]
  %v22 = vmul.f32 %v20, %v20
  %v23 = vmul.f32 %v21, %v21
  %vm24 = vcmask 261120
  %v25 = vsel %vm24, %v22, 0.0
  %26 = vadd.xlane.f32.xlu0 %v25
  %v27 = vpop.xlane.xlu0 %26
  %v28 = vsel %vm24, %v23, 0.0
  %29 = vadd.xlane.f32.xlu0 %v28
  %v30 = vpop.xlane.xlu0 %29
  %v31 = vrsqrt.pop %v27
  %v32 = vmul.f32 %v27, %v31
  %vm33 = vcmp.eq.f32.partialorder %v27, inf
  %v34 = vsel %vm33, %v27, %v32
  %vm35 = vcmp.eq.f32.partialorder %v27, 0.0
  %v36 = vand.u32 %v27, 2147483648
  %v37 = vsel %vm35, %v36, %v34
  %v38 = vrsqrt.pop %v30
  %v39 = vmul.f32 %v30, %v38
  %vm40 = vcmp.eq.f32.partialorder %v30, inf
  %v41 = vsel %vm40, %v30, %v39
  %vm42 = vcmp.eq.f32.partialorder %v30, 0.0
  %v43 = vand.u32 %v30, 2147483648
  %v44 = vsel %vm42, %v43, %v41
  %v45 = vmax.f32 %v37, 1e-12
  %v46 = vmax.f32 %v44, 1e-12
  %v47 = vrcp.pop %v45
  %v48 = vmul.f32 %v20, %v47
  %v49 = vrcp.pop %v46
  %v50 = vmul.f32 %v21, %v49
  %v51 = vmul.f32 %v48, 5.656854
  %v52 = vmul.f32 %v50, 5.656854
  %v53 = vld [vmem:[%s1] sm:$0x1]
  %v54 = vadd.f32 %v53, 1.0
  %v56 = vlaneseq
  %v57 = vshrl.u32 %v56, 7
  %v58 = vsub.s32 0, %v57
  %v59 = vrot.slane %v54, %v58
  %v61 = vmul.f32 %v51, %v59
  %v62 = vmul.f32 %v52, %v59
  %63 = vst.msk [vmem:[%s4] sm:$0xff] %vm24, %v61
  %64 = vst.msk [vmem:[%s4 + $0x8] sm:$0xff] %vm24, %v62
  %v65 = vld [vmem:[%s2] sm:$0xff]
  %v66 = vld [vmem:[%s2 + $0x8] sm:$0xff]
  %v67 = vld [vmem:[%s2 + $0x10] sm:$0xff]
  %v68 = vld [vmem:[%s2 + $0x18] sm:$0xff]
  %v70 = vsel %vm24, %v61, 0
  %v73 = vsel %vm24, %v62, 0
  %75 = vmatprep.subr.mxu0 0.0
  %76 = vmatpush1.msra.mxu0 0.0
  %77 = vmatprep.subr.mxu0 0.0
  %78 = vmatpush1.msra.mxu0 0.0
  %79 = vmatprep.subr.mxu0 0.0
  %80 = vmatpush1.msra.mxu0 0.0
  %81 = vmatprep.subr.mxu0 0.0
  %82 = vmatpush1.msra.mxu0 0.0
  %83 = vmatprep.subr.mxu0 0.0
  %84 = vmatpush1.msra.mxu0 0.0
  %85 = vmatprep.subr.mxu0 0.0
  %86 = vmatpush1.msra.mxu0 0.0
  %87 = vmatprep.subr.mxu0 0.0
  %88 = vmatpush1.msra.mxu0 0.0
  %89 = vmatprep.subr.mxu0 0.0
  %90 = vmatpush1.msra.mxu0 0.0
  %91 = vmatprep.subr.mxu0 0.0
  %92 = vmatpush1.msra.mxu0 0.0
  %93 = vmatprep.subr.mxu0 0.0
  %94 = vmatpush1.msra.mxu0 0.0
  %95 = vmatprep.subr.mxu0 0.0
  %96 = vmatpush1.msra.mxu0 0.0
  %97 = vmatprep.subr.mxu0 0.0
  %98 = vmatpush1.msra.mxu0 0.0
  %99 = vmatprep.subr.mxu0 0.0
  %v100 = vand.u32 %v68, 4294901760
  %101 = vmatpush1.msra.mxu0 %v100
  %102 = vmatprep.subr.mxu0 0.0
  %v103 = vand.u32 %v67, 4294901760
  %104 = vmatpush1.msra.mxu0 %v103
  %105 = vmatprep.subr.mxu0 0.0
  %v106 = vand.u32 %v66, 4294901760
  %107 = vmatpush1.msra.mxu0 %v106
  %108 = vmatprep.subr.mxu0 0.0
  %v109 = vand.u32 %v65, 4294901760
  %110 = vmatpush1.msra.mxu0 %v109
  %111 = vmatprep.subr.mxu0 0.0
  %112 = vmatpush2.msra.mxu0 0.0
  %113 = vmatprep.subr.mxu0 0.0
  %114 = vmatpush2.msra.mxu0 0.0
  %115 = vmatprep.subr.mxu0 0.0
  %116 = vmatpush2.msra.mxu0 0.0
  %117 = vmatprep.subr.mxu0 0.0
  %118 = vmatpush2.msra.mxu0 0.0
  %119 = vmatprep.subr.mxu0 0.0
  %120 = vmatpush2.msra.mxu0 0.0
  %121 = vmatprep.subr.mxu0 0.0
  %122 = vmatpush2.msra.mxu0 0.0
  %123 = vmatprep.subr.mxu0 0.0
  %124 = vmatpush2.msra.mxu0 0.0
  %125 = vmatprep.subr.mxu0 0.0
  %126 = vmatpush2.msra.mxu0 0.0
  %127 = vmatprep.subr.mxu0 0.0
  %128 = vmatpush2.msra.mxu0 0.0
  %129 = vmatprep.subr.mxu0 0.0
  %130 = vmatpush2.msra.mxu0 0.0
  %131 = vmatprep.subr.mxu0 0.0
  %132 = vmatpush2.msra.mxu0 0.0
  %133 = vmatprep.subr.mxu0 0.0
  %134 = vmatpush2.msra.mxu0 0.0
  %135 = vmatprep.subr.mxu0 0.0
  %136 = vmatpush2.msra.mxu0 0.0
  %137 = vmatprep.subr.mxu0 0.0
  %138 = vmatpush2.msra.mxu0 0.0
  %139 = vmatprep.subr.mxu0 0.0
  %140 = vmatpush2.msra.mxu0 0.0
  %141 = vmatprep.subr.mxu0 0.0
  %142 = vmatpush2.msra.mxu0 0.0
  %143 = vmatprep.mubr.f32.mxu0 0.0
  %v144 = vand.u32 %v70, 4294901760
  %v145 = vsub.f32 %v70, %v144
  %v146 = vand.u32 %v145, 4294901760
  %v147 = vsub.f32 %v145, %v146
  %v148 = vand.u32 %v147, 4294901760
  %149 = vmatmul.mubr.f32.gmra.mxu0 %v148
  %v150 = vpop.f32.mrf.mxu0
  %v151 = vadd.f32 0.0, %v150
  %v152 = vpop.f32.mrf.mxu0
  %153 = vmatprep.mubr.f32.mxu0 0.0
  %v154 = vand.u32 %v73, 4294901760
  %v155 = vsub.f32 %v73, %v154
  %v156 = vand.u32 %v155, 4294901760
  %v157 = vsub.f32 %v155, %v156
  %v158 = vand.u32 %v157, 4294901760
  %159 = vmatmul.mubr.f32.gmra.mxu0 %v158
  %v160 = vpop.f32.mrf.mxu0
  %v161 = vadd.f32 0.0, %v160
  %v162 = vpop.f32.mrf.mxu0
  %163 = vdwg.mxu0
  %164 = vmatprep.subr.mxu0 0.0
  %165 = vmatpush1.msra.mxu0 0.0
  %166 = vmatprep.subr.mxu0 0.0
  %167 = vmatpush1.msra.mxu0 0.0
  %168 = vmatprep.subr.mxu0 0.0
  %169 = vmatpush1.msra.mxu0 0.0
  %170 = vmatprep.subr.mxu0 0.0
  %171 = vmatpush1.msra.mxu0 0.0
  %172 = vmatprep.subr.mxu0 0.0
  %173 = vmatpush1.msra.mxu0 0.0
  %174 = vmatprep.subr.mxu0 0.0
  %175 = vmatpush1.msra.mxu0 0.0
  %176 = vmatprep.subr.mxu0 0.0
  %177 = vmatpush1.msra.mxu0 0.0
  %178 = vmatprep.subr.mxu0 0.0
  %179 = vmatpush1.msra.mxu0 0.0
  %180 = vmatprep.subr.mxu0 0.0
  %181 = vmatpush1.msra.mxu0 0.0
  %182 = vmatprep.subr.mxu0 0.0
  %183 = vmatpush1.msra.mxu0 0.0
  %184 = vmatprep.subr.mxu0 0.0
  %185 = vmatpush1.msra.mxu0 0.0
  %186 = vmatprep.subr.mxu0 0.0
  %187 = vmatpush1.msra.mxu0 0.0
  %188 = vmatprep.subr.mxu0 0.0
  %v189 = vand.u32 %v68, 4294901760
  %v190 = vsub.f32 %v68, %v189
  %v191 = vand.u32 %v190, 4294901760
  %v192 = vsub.f32 %v190, %v191
  %v193 = vand.u32 %v192, 4294901760
  %194 = vmatpush1.msra.mxu0 %v193
  %195 = vmatprep.subr.mxu0 0.0
  %v196 = vand.u32 %v67, 4294901760
  %v197 = vsub.f32 %v67, %v196
  %v198 = vand.u32 %v197, 4294901760
  %v199 = vsub.f32 %v197, %v198
  %v200 = vand.u32 %v199, 4294901760
  %201 = vmatpush1.msra.mxu0 %v200
  %202 = vmatprep.subr.mxu0 0.0
  %v203 = vand.u32 %v66, 4294901760
  %v204 = vsub.f32 %v66, %v203
  %v205 = vand.u32 %v204, 4294901760
  %v206 = vsub.f32 %v204, %v205
  %v207 = vand.u32 %v206, 4294901760
  %208 = vmatpush1.msra.mxu0 %v207
  %209 = vmatprep.subr.mxu0 0.0
  %v210 = vand.u32 %v65, 4294901760
  %v211 = vsub.f32 %v65, %v210
  %v212 = vand.u32 %v211, 4294901760
  %v213 = vsub.f32 %v211, %v212
  %v214 = vand.u32 %v213, 4294901760
  %215 = vmatpush1.msra.mxu0 %v214
  %216 = vmatprep.subr.mxu0 0.0
  %217 = vmatpush2.msra.mxu0 0.0
  %218 = vmatprep.subr.mxu0 0.0
  %219 = vmatpush2.msra.mxu0 0.0
  %220 = vmatprep.subr.mxu0 0.0
  %221 = vmatpush2.msra.mxu0 0.0
  %222 = vmatprep.subr.mxu0 0.0
  %223 = vmatpush2.msra.mxu0 0.0
  %224 = vmatprep.subr.mxu0 0.0
  %225 = vmatpush2.msra.mxu0 0.0
  %226 = vmatprep.subr.mxu0 0.0
  %227 = vmatpush2.msra.mxu0 0.0
  %228 = vmatprep.subr.mxu0 0.0
  %229 = vmatpush2.msra.mxu0 0.0
  %230 = vmatprep.subr.mxu0 0.0
  %231 = vmatpush2.msra.mxu0 0.0
  %232 = vmatprep.subr.mxu0 0.0
  %233 = vmatpush2.msra.mxu0 0.0
  %234 = vmatprep.subr.mxu0 0.0
  %235 = vmatpush2.msra.mxu0 0.0
  %236 = vmatprep.subr.mxu0 0.0
  %237 = vmatpush2.msra.mxu0 0.0
  %238 = vmatprep.subr.mxu0 0.0
  %239 = vmatpush2.msra.mxu0 0.0
  %240 = vmatprep.subr.mxu0 0.0
  %241 = vmatpush2.msra.mxu0 0.0
  %242 = vmatprep.subr.mxu0 0.0
  %243 = vmatpush2.msra.mxu0 0.0
  %244 = vmatprep.subr.mxu0 0.0
  %245 = vmatpush2.msra.mxu0 0.0
  %246 = vmatprep.subr.mxu0 0.0
  %247 = vmatpush2.msra.mxu0 0.0
  %248 = vmatprep.mubr.f32.mxu0 0.0
  %v249 = vand.u32 %v70, 4294901760
  %250 = vmatmul.mubr.f32.gmra.mxu0 %v249
  %v251 = vpop.f32.mrf.mxu0
  %v252 = vadd.f32 %v151, %v251
  %v253 = vpop.f32.mrf.mxu0
  %254 = vmatprep.mubr.f32.mxu0 0.0
  %v255 = vand.u32 %v73, 4294901760
  %256 = vmatmul.mubr.f32.gmra.mxu0 %v255
  %v257 = vpop.f32.mrf.mxu0
  %v258 = vadd.f32 %v161, %v257
  %v259 = vpop.f32.mrf.mxu0
  %260 = vdwg.mxu0
  %261 = vmatprep.subr.mxu0 0.0
  %262 = vmatpush1.msra.mxu0 0.0
  %263 = vmatprep.subr.mxu0 0.0
  %264 = vmatpush1.msra.mxu0 0.0
  %265 = vmatprep.subr.mxu0 0.0
  %266 = vmatpush1.msra.mxu0 0.0
  %267 = vmatprep.subr.mxu0 0.0
  %268 = vmatpush1.msra.mxu0 0.0
  %269 = vmatprep.subr.mxu0 0.0
  %270 = vmatpush1.msra.mxu0 0.0
  %271 = vmatprep.subr.mxu0 0.0
  %272 = vmatpush1.msra.mxu0 0.0
  %273 = vmatprep.subr.mxu0 0.0
  %274 = vmatpush1.msra.mxu0 0.0
  %275 = vmatprep.subr.mxu0 0.0
  %276 = vmatpush1.msra.mxu0 0.0
  %277 = vmatprep.subr.mxu0 0.0
  %278 = vmatpush1.msra.mxu0 0.0
  %279 = vmatprep.subr.mxu0 0.0
  %280 = vmatpush1.msra.mxu0 0.0
  %281 = vmatprep.subr.mxu0 0.0
  %282 = vmatpush1.msra.mxu0 0.0
  %283 = vmatprep.subr.mxu0 0.0
  %284 = vmatpush1.msra.mxu0 0.0
  %285 = vmatprep.subr.mxu0 0.0
  %v286 = vand.u32 %v68, 4294901760
  %v287 = vsub.f32 %v68, %v286
  %288 = vmatpush1.msra.mxu0 %v287
  %289 = vmatprep.subr.mxu0 0.0
  %v290 = vand.u32 %v67, 4294901760
  %v291 = vsub.f32 %v67, %v290
  %292 = vmatpush1.msra.mxu0 %v291
  %293 = vmatprep.subr.mxu0 0.0
  %v294 = vand.u32 %v66, 4294901760
  %v295 = vsub.f32 %v66, %v294
  %296 = vmatpush1.msra.mxu0 %v295
  %297 = vmatprep.subr.mxu0 0.0
  %v298 = vand.u32 %v65, 4294901760
  %v299 = vsub.f32 %v65, %v298
  %300 = vmatpush1.msra.mxu0 %v299
  %301 = vmatprep.subr.mxu0 0.0
  %302 = vmatpush2.msra.mxu0 0.0
  %303 = vmatprep.subr.mxu0 0.0
  %304 = vmatpush2.msra.mxu0 0.0
  %305 = vmatprep.subr.mxu0 0.0
  %306 = vmatpush2.msra.mxu0 0.0
  %307 = vmatprep.subr.mxu0 0.0
  %308 = vmatpush2.msra.mxu0 0.0
  %309 = vmatprep.subr.mxu0 0.0
  %310 = vmatpush2.msra.mxu0 0.0
  %311 = vmatprep.subr.mxu0 0.0
  %312 = vmatpush2.msra.mxu0 0.0
  %313 = vmatprep.subr.mxu0 0.0
  %314 = vmatpush2.msra.mxu0 0.0
  %315 = vmatprep.subr.mxu0 0.0
  %316 = vmatpush2.msra.mxu0 0.0
  %317 = vmatprep.subr.mxu0 0.0
  %318 = vmatpush2.msra.mxu0 0.0
  %319 = vmatprep.subr.mxu0 0.0
  %320 = vmatpush2.msra.mxu0 0.0
  %321 = vmatprep.subr.mxu0 0.0
  %322 = vmatpush2.msra.mxu0 0.0
  %323 = vmatprep.subr.mxu0 0.0
  %324 = vmatpush2.msra.mxu0 0.0
  %325 = vmatprep.subr.mxu0 0.0
  %326 = vmatpush2.msra.mxu0 0.0
  %327 = vmatprep.subr.mxu0 0.0
  %328 = vmatpush2.msra.mxu0 0.0
  %329 = vmatprep.subr.mxu0 0.0
  %330 = vmatpush2.msra.mxu0 0.0
  %331 = vmatprep.subr.mxu0 0.0
  %332 = vmatpush2.msra.mxu0 0.0
  %333 = vmatprep.mubr.f32.mxu0 0.0
  %v334 = vand.u32 %v70, 4294901760
  %v335 = vsub.f32 %v70, %v334
  %336 = vmatmul.mubr.f32.gmra.mxu0 %v335
  %v337 = vpop.f32.mrf.mxu0
  %v338 = vadd.f32 %v252, %v337
  %v339 = vpop.f32.mrf.mxu0
  %340 = vmatprep.mubr.f32.mxu0 0.0
  %v341 = vand.u32 %v73, 4294901760
  %v342 = vsub.f32 %v73, %v341
  %343 = vmatmul.mubr.f32.gmra.mxu0 %v342
  %v344 = vpop.f32.mrf.mxu0
  %v345 = vadd.f32 %v258, %v344
  %v346 = vpop.f32.mrf.mxu0
  %347 = vdwg.mxu0
  %348 = vmatprep.subr.mxu0 0.0
  %349 = vmatpush1.msra.mxu0 0.0
  %350 = vmatprep.subr.mxu0 0.0
  %351 = vmatpush1.msra.mxu0 0.0
  %352 = vmatprep.subr.mxu0 0.0
  %353 = vmatpush1.msra.mxu0 0.0
  %354 = vmatprep.subr.mxu0 0.0
  %355 = vmatpush1.msra.mxu0 0.0
  %356 = vmatprep.subr.mxu0 0.0
  %357 = vmatpush1.msra.mxu0 0.0
  %358 = vmatprep.subr.mxu0 0.0
  %359 = vmatpush1.msra.mxu0 0.0
  %360 = vmatprep.subr.mxu0 0.0
  %361 = vmatpush1.msra.mxu0 0.0
  %362 = vmatprep.subr.mxu0 0.0
  %363 = vmatpush1.msra.mxu0 0.0
  %364 = vmatprep.subr.mxu0 0.0
  %365 = vmatpush1.msra.mxu0 0.0
  %366 = vmatprep.subr.mxu0 0.0
  %367 = vmatpush1.msra.mxu0 0.0
  %368 = vmatprep.subr.mxu0 0.0
  %369 = vmatpush1.msra.mxu0 0.0
  %370 = vmatprep.subr.mxu0 0.0
  %371 = vmatpush1.msra.mxu0 0.0
  %372 = vmatprep.subr.mxu0 0.0
  %v373 = vand.u32 %v68, 4294901760
  %374 = vmatpush1.msra.mxu0 %v373
  %375 = vmatprep.subr.mxu0 0.0
  %v376 = vand.u32 %v67, 4294901760
  %377 = vmatpush1.msra.mxu0 %v376
  %378 = vmatprep.subr.mxu0 0.0
  %v379 = vand.u32 %v66, 4294901760
  %380 = vmatpush1.msra.mxu0 %v379
  %381 = vmatprep.subr.mxu0 0.0
  %v382 = vand.u32 %v65, 4294901760
  %383 = vmatpush1.msra.mxu0 %v382
  %384 = vmatprep.subr.mxu0 0.0
  %385 = vmatpush2.msra.mxu0 0.0
  %386 = vmatprep.subr.mxu0 0.0
  %387 = vmatpush2.msra.mxu0 0.0
  %388 = vmatprep.subr.mxu0 0.0
  %389 = vmatpush2.msra.mxu0 0.0
  %390 = vmatprep.subr.mxu0 0.0
  %391 = vmatpush2.msra.mxu0 0.0
  %392 = vmatprep.subr.mxu0 0.0
  %393 = vmatpush2.msra.mxu0 0.0
  %394 = vmatprep.subr.mxu0 0.0
  %395 = vmatpush2.msra.mxu0 0.0
  %396 = vmatprep.subr.mxu0 0.0
  %397 = vmatpush2.msra.mxu0 0.0
  %398 = vmatprep.subr.mxu0 0.0
  %399 = vmatpush2.msra.mxu0 0.0
  %400 = vmatprep.subr.mxu0 0.0
  %401 = vmatpush2.msra.mxu0 0.0
  %402 = vmatprep.subr.mxu0 0.0
  %403 = vmatpush2.msra.mxu0 0.0
  %404 = vmatprep.subr.mxu0 0.0
  %405 = vmatpush2.msra.mxu0 0.0
  %406 = vmatprep.subr.mxu0 0.0
  %407 = vmatpush2.msra.mxu0 0.0
  %408 = vmatprep.subr.mxu0 0.0
  %409 = vmatpush2.msra.mxu0 0.0
  %410 = vmatprep.subr.mxu0 0.0
  %411 = vmatpush2.msra.mxu0 0.0
  %412 = vmatprep.subr.mxu0 0.0
  %413 = vmatpush2.msra.mxu0 0.0
  %414 = vmatprep.subr.mxu0 0.0
  %415 = vmatpush2.msra.mxu0 0.0
  %416 = vmatprep.mubr.f32.mxu0 0.0
  %v417 = vand.u32 %v70, 4294901760
  %v418 = vsub.f32 %v70, %v417
  %v419 = vand.u32 %v418, 4294901760
  %420 = vmatmul.mubr.f32.gmra.mxu0 %v419
  %v421 = vpop.f32.mrf.mxu0
  %v422 = vadd.f32 %v338, %v421
  %v423 = vpop.f32.mrf.mxu0
  %424 = vmatprep.mubr.f32.mxu0 0.0
  %v425 = vand.u32 %v73, 4294901760
  %v426 = vsub.f32 %v73, %v425
  %v427 = vand.u32 %v426, 4294901760
  %428 = vmatmul.mubr.f32.gmra.mxu0 %v427
  %v429 = vpop.f32.mrf.mxu0
  %v430 = vadd.f32 %v345, %v429
  %v431 = vpop.f32.mrf.mxu0
  %432 = vdwg.mxu0
  %433 = vmatprep.subr.mxu0 0.0
  %434 = vmatpush1.msra.mxu0 0.0
  %435 = vmatprep.subr.mxu0 0.0
  %436 = vmatpush1.msra.mxu0 0.0
  %437 = vmatprep.subr.mxu0 0.0
  %438 = vmatpush1.msra.mxu0 0.0
  %439 = vmatprep.subr.mxu0 0.0
  %440 = vmatpush1.msra.mxu0 0.0
  %441 = vmatprep.subr.mxu0 0.0
  %442 = vmatpush1.msra.mxu0 0.0
  %443 = vmatprep.subr.mxu0 0.0
  %444 = vmatpush1.msra.mxu0 0.0
  %445 = vmatprep.subr.mxu0 0.0
  %446 = vmatpush1.msra.mxu0 0.0
  %447 = vmatprep.subr.mxu0 0.0
  %448 = vmatpush1.msra.mxu0 0.0
  %449 = vmatprep.subr.mxu0 0.0
  %450 = vmatpush1.msra.mxu0 0.0
  %451 = vmatprep.subr.mxu0 0.0
  %452 = vmatpush1.msra.mxu0 0.0
  %453 = vmatprep.subr.mxu0 0.0
  %454 = vmatpush1.msra.mxu0 0.0
  %455 = vmatprep.subr.mxu0 0.0
  %456 = vmatpush1.msra.mxu0 0.0
  %457 = vmatprep.subr.mxu0 0.0
  %v458 = vand.u32 %v68, 4294901760
  %v459 = vsub.f32 %v68, %v458
  %v460 = vand.u32 %v459, 4294901760
  %461 = vmatpush1.msra.mxu0 %v460
  %462 = vmatprep.subr.mxu0 0.0
  %v463 = vand.u32 %v67, 4294901760
  %v464 = vsub.f32 %v67, %v463
  %v465 = vand.u32 %v464, 4294901760
  %466 = vmatpush1.msra.mxu0 %v465
  %467 = vmatprep.subr.mxu0 0.0
  %v468 = vand.u32 %v66, 4294901760
  %v469 = vsub.f32 %v66, %v468
  %v470 = vand.u32 %v469, 4294901760
  %471 = vmatpush1.msra.mxu0 %v470
  %472 = vmatprep.subr.mxu0 0.0
  %v473 = vand.u32 %v65, 4294901760
  %v474 = vsub.f32 %v65, %v473
  %v475 = vand.u32 %v474, 4294901760
  %476 = vmatpush1.msra.mxu0 %v475
  %477 = vmatprep.subr.mxu0 0.0
  %478 = vmatpush2.msra.mxu0 0.0
  %479 = vmatprep.subr.mxu0 0.0
  %480 = vmatpush2.msra.mxu0 0.0
  %481 = vmatprep.subr.mxu0 0.0
  %482 = vmatpush2.msra.mxu0 0.0
  %483 = vmatprep.subr.mxu0 0.0
  %484 = vmatpush2.msra.mxu0 0.0
  %485 = vmatprep.subr.mxu0 0.0
  %486 = vmatpush2.msra.mxu0 0.0
  %487 = vmatprep.subr.mxu0 0.0
  %488 = vmatpush2.msra.mxu0 0.0
  %489 = vmatprep.subr.mxu0 0.0
  %490 = vmatpush2.msra.mxu0 0.0
  %491 = vmatprep.subr.mxu0 0.0
  %492 = vmatpush2.msra.mxu0 0.0
  %493 = vmatprep.subr.mxu0 0.0
  %494 = vmatpush2.msra.mxu0 0.0
  %495 = vmatprep.subr.mxu0 0.0
  %496 = vmatpush2.msra.mxu0 0.0
  %497 = vmatprep.subr.mxu0 0.0
  %498 = vmatpush2.msra.mxu0 0.0
  %499 = vmatprep.subr.mxu0 0.0
  %500 = vmatpush2.msra.mxu0 0.0
  %501 = vmatprep.subr.mxu0 0.0
  %502 = vmatpush2.msra.mxu0 0.0
  %503 = vmatprep.subr.mxu0 0.0
  %504 = vmatpush2.msra.mxu0 0.0
  %505 = vmatprep.subr.mxu0 0.0
  %506 = vmatpush2.msra.mxu0 0.0
  %507 = vmatprep.subr.mxu0 0.0
  %508 = vmatpush2.msra.mxu0 0.0
  %509 = vmatprep.mubr.f32.mxu0 0.0
  %v510 = vand.u32 %v70, 4294901760
  %511 = vmatmul.mubr.f32.gmra.mxu0 %v510
  %v512 = vpop.f32.mrf.mxu0
  %v513 = vadd.f32 %v422, %v512
  %v514 = vpop.f32.mrf.mxu0
  %515 = vmatprep.mubr.f32.mxu0 0.0
  %v516 = vand.u32 %v73, 4294901760
  %517 = vmatmul.mubr.f32.gmra.mxu0 %v516
  %v518 = vpop.f32.mrf.mxu0
  %v519 = vadd.f32 %v430, %v518
  %v520 = vpop.f32.mrf.mxu0
  %521 = vdwg.mxu0
  %522 = vmatprep.subr.mxu0 0.0
  %523 = vmatpush1.msra.mxu0 0.0
  %524 = vmatprep.subr.mxu0 0.0
  %525 = vmatpush1.msra.mxu0 0.0
  %526 = vmatprep.subr.mxu0 0.0
  %527 = vmatpush1.msra.mxu0 0.0
  %528 = vmatprep.subr.mxu0 0.0
  %529 = vmatpush1.msra.mxu0 0.0
  %530 = vmatprep.subr.mxu0 0.0
  %531 = vmatpush1.msra.mxu0 0.0
  %532 = vmatprep.subr.mxu0 0.0
  %533 = vmatpush1.msra.mxu0 0.0
  %534 = vmatprep.subr.mxu0 0.0
  %535 = vmatpush1.msra.mxu0 0.0
  %536 = vmatprep.subr.mxu0 0.0
  %537 = vmatpush1.msra.mxu0 0.0
  %538 = vmatprep.subr.mxu0 0.0
  %539 = vmatpush1.msra.mxu0 0.0
  %540 = vmatprep.subr.mxu0 0.0
  %541 = vmatpush1.msra.mxu0 0.0
  %542 = vmatprep.subr.mxu0 0.0
  %543 = vmatpush1.msra.mxu0 0.0
  %544 = vmatprep.subr.mxu0 0.0
  %545 = vmatpush1.msra.mxu0 0.0
  %546 = vmatprep.subr.mxu0 0.0
  %v547 = vand.u32 %v68, 4294901760
  %548 = vmatpush1.msra.mxu0 %v547
  %549 = vmatprep.subr.mxu0 0.0
  %v550 = vand.u32 %v67, 4294901760
  %551 = vmatpush1.msra.mxu0 %v550
  %552 = vmatprep.subr.mxu0 0.0
  %v553 = vand.u32 %v66, 4294901760
  %554 = vmatpush1.msra.mxu0 %v553
  %555 = vmatprep.subr.mxu0 0.0
  %v556 = vand.u32 %v65, 4294901760
  %557 = vmatpush1.msra.mxu0 %v556
  %558 = vmatprep.subr.mxu0 0.0
  %559 = vmatpush2.msra.mxu0 0.0
  %560 = vmatprep.subr.mxu0 0.0
  %561 = vmatpush2.msra.mxu0 0.0
  %562 = vmatprep.subr.mxu0 0.0
  %563 = vmatpush2.msra.mxu0 0.0
  %564 = vmatprep.subr.mxu0 0.0
  %565 = vmatpush2.msra.mxu0 0.0
  %566 = vmatprep.subr.mxu0 0.0
  %567 = vmatpush2.msra.mxu0 0.0
  %568 = vmatprep.subr.mxu0 0.0
  %569 = vmatpush2.msra.mxu0 0.0
  %570 = vmatprep.subr.mxu0 0.0
  %571 = vmatpush2.msra.mxu0 0.0
  %572 = vmatprep.subr.mxu0 0.0
  %573 = vmatpush2.msra.mxu0 0.0
  %574 = vmatprep.subr.mxu0 0.0
  %575 = vmatpush2.msra.mxu0 0.0
  %576 = vmatprep.subr.mxu0 0.0
  %577 = vmatpush2.msra.mxu0 0.0
  %578 = vmatprep.subr.mxu0 0.0
  %579 = vmatpush2.msra.mxu0 0.0
  %580 = vmatprep.subr.mxu0 0.0
  %581 = vmatpush2.msra.mxu0 0.0
  %582 = vmatprep.subr.mxu0 0.0
  %583 = vmatpush2.msra.mxu0 0.0
  %584 = vmatprep.subr.mxu0 0.0
  %585 = vmatpush2.msra.mxu0 0.0
  %586 = vmatprep.subr.mxu0 0.0
  %587 = vmatpush2.msra.mxu0 0.0
  %588 = vmatprep.subr.mxu0 0.0
  %589 = vmatpush2.msra.mxu0 0.0
  %590 = vmatprep.mubr.f32.mxu0 0.0
  %v591 = vand.u32 %v70, 4294901760
  %592 = vmatmul.mubr.f32.gmra.mxu0 %v591
  %v593 = vpop.f32.mrf.mxu0
  %v594 = vadd.f32 %v513, %v593
  %v595 = vpop.f32.mrf.mxu0
  %596 = vmatprep.mubr.f32.mxu0 0.0
  %v597 = vand.u32 %v73, 4294901760
  %598 = vmatmul.mubr.f32.gmra.mxu0 %v597
  %v599 = vpop.f32.mrf.mxu0
  %v600 = vadd.f32 %v519, %v599
  %v601 = vpop.f32.mrf.mxu0
  %602 = vdwg.mxu0
  %v603 = vtanh.pop %v594
  %v604 = vtanh.pop %v600
  %605 = vst.msk [vmem:[%s5] sm:$0xff] %vm24, %v603
  %606 = vst.msk [vmem:[%s5 + $0x8] sm:$0xff] %vm24, %v604
  %v607 = vld [vmem:[%s3] sm:$0x1]
  %v609 = vlaneseq
  %v610 = vshrl.u32 %v609, 7
  %v611 = vsub.s32 0, %v610
  %v612 = vrot.slane %v607, %v611
  %613 = vrot.lane.b32.xlu0 %v612, 32
  %v614 = vpop.permute.xlu0 %613
  %v616 = vadd.f32 %v594, %v614
  %v617 = vadd.f32 %v600, %v614
  %620 = vrot.lane.b32.xlu0 %v616, 96
  %v621 = vpop.permute.xlu0 %620
  %622 = vrot.lane.b32.xlu0 %v617, 96
  %v623 = vpop.permute.xlu0 %622
  %626 = vst.msk [vmem:[%s6] sm:$0xff] %vm24, %v621
  %627 = vst.msk [vmem:[%s6 + $0x8] sm:$0xff] %vm24, %v623
  // Predicated region
  $region18: #{light_recurrent_unit_block.5} parent=0 // pred_check
    _
  $region19: #{light_recurrent_unit_block.5} parent=0 // pred_check_branch
    %629 = sbr.rel (0) target = $region21
  $region20: #{light_recurrent_unit_block.5} parent=0 // pred_region
    _
  $region21: #{light_recurrent_unit_block.5} parent=0 // pred_fallthru
    _
  // Predicated region
  $region22: #{light_recurrent_unit_block.5} parent=0 // pred_check
    _
  $region23: #{light_recurrent_unit_block.5} parent=0 // pred_check_branch
    %631 = sbr.rel (0) target = $region25
  $region24: #{light_recurrent_unit_block.5} parent=0 // pred_region
    _
  $region25: #{light_recurrent_unit_block.5} parent=0 // pred_fallthru
    _
  // Predicated region
  $region26: #{light_recurrent_unit_block.5} parent=0 // pred_check
    _
  $region27: #{light_recurrent_unit_block.5} parent=0 // pred_check_branch
    %633 = sbr.rel (0) target = $region29
  $region28: #{light_recurrent_unit_block.5} parent=0 // pred_region
    _
  $region29: #{light_recurrent_unit_block.5} parent=0 // pred_fallthru
    _
  // Predicated region
  $region30: #{light_recurrent_unit_block.5} parent=0 // pred_check
    _
  $region31: #{light_recurrent_unit_block.5} parent=0 // pred_check_branch
    %635 = sbr.rel (0) target = $region33
  $region32: #{light_recurrent_unit_block.5} parent=0 // pred_region
    _
  $region33: #{light_recurrent_unit_block.5} parent=0 // pred_fallthru
    _
  // Predicated region
  $region34: #{light_recurrent_unit_block.5} parent=0 // pred_check
    _
  $region35: #{light_recurrent_unit_block.5} parent=0 // pred_check_branch
    %637 = sbr.rel (0) target = $region37
  $region36: #{light_recurrent_unit_block.5} parent=0 // pred_region
    _
  $region37: #{light_recurrent_unit_block.5} parent=0 // pred_fallthru
    _
  // Predicated region
  $region38: #{light_recurrent_unit_block.5} parent=0 // pred_check
    _
  $region39: #{light_recurrent_unit_block.5} parent=0 // pred_check_branch
    %639 = sbr.rel (0) target = $region41
  $region40: #{light_recurrent_unit_block.5} parent=0 // pred_region
    _
  $region41: #{light_recurrent_unit_block.5} parent=0 // pred_fallthru
    _

// kernel: light_recurrent_unit_block.9
$region0: #{light_recurrent_unit_block.9}
  #allocation0 [shape = 'u32[]', space=smem, size = 0x4, offset = 0x4, fixed_abs, tag = 'smem constant byte address 0x4 - core index']
  #allocation1 [shape = 'u32[144,128]{1,0:T(1,128)}', space=vmem, size = 0x12000, scoped, tag = 'internal scratch']
  %s0 = inlined_call_operand.vmem [shape: f32[16,32], index: 0, kind: input, shape index: {}]
  %s1 = inlined_call_operand.vmem [shape: f32[16,32], index: 1, kind: input, shape index: {}]
  %s2 = inlined_call_operand.vmem [shape: f32[16,32], index: 2, kind: input, shape index: {}]
  %s3 = inlined_call_operand.vmem [shape: f32[32,64], index: 3, kind: input, shape index: {}]
  %s4 = inlined_call_operand.vmem [shape: f32[32,32], index: 4, kind: input, shape index: {}]
  %s5 = inlined_call_operand.vmem [shape: f32[1,32], index: 5, kind: input, shape index: {}]
  %s6 = inlined_call_operand.vmem [shape: f32[16,32], index: 6, kind: output, shape index: {}]
  %s7 = sld [smem:[#allocation0]]
  $region34: #{light_recurrent_unit_block.9} parent=0
    _
  %s9 = ssub.s32 1, %s7
  %s10 = scalar_select 0, %s9, %s7
  // Predicated region
  $region2: #{light_recurrent_unit_block.9} parent=0 // pred_check
    _
  $region3: #{light_recurrent_unit_block.9} parent=0 // pred_check_branch
    %12 = sbr.rel (0) target = $region5
  $region4: #{light_recurrent_unit_block.9} parent=0 // pred_region
    _
  $region5: #{light_recurrent_unit_block.9} parent=0 // pred_fallthru
    _
  // Predicated region
  $region6: #{light_recurrent_unit_block.9} parent=0 // pred_check
    _
  $region7: #{light_recurrent_unit_block.9} parent=0 // pred_check_branch
    %14 = sbr.rel (0) target = $region9
  $region8: #{light_recurrent_unit_block.9} parent=0 // pred_region
    _
  $region9: #{light_recurrent_unit_block.9} parent=0 // pred_fallthru
    _
  // Predicated region
  $region10: #{light_recurrent_unit_block.9} parent=0 // pred_check
    _
  $region11: #{light_recurrent_unit_block.9} parent=0 // pred_check_branch
    %16 = sbr.rel (0) target = $region13
  $region12: #{light_recurrent_unit_block.9} parent=0 // pred_region
    _
  $region13: #{light_recurrent_unit_block.9} parent=0 // pred_fallthru
    _
  // Predicated region
  $region14: #{light_recurrent_unit_block.9} parent=0 // pred_check
    _
  $region15: #{light_recurrent_unit_block.9} parent=0 // pred_check_branch
    %18 = sbr.rel (0) target = $region17
  $region16: #{light_recurrent_unit_block.9} parent=0 // pred_region
    _
  $region17: #{light_recurrent_unit_block.9} parent=0 // pred_fallthru
    _
  // Predicated region
  $region18: #{light_recurrent_unit_block.9} parent=0 // pred_check
    _
  $region19: #{light_recurrent_unit_block.9} parent=0 // pred_check_branch
    %20 = sbr.rel (0) target = $region21
  $region20: #{light_recurrent_unit_block.9} parent=0 // pred_region
    _
  $region21: #{light_recurrent_unit_block.9} parent=0 // pred_fallthru
    _
  // Predicated region
  $region22: #{light_recurrent_unit_block.9} parent=0 // pred_check
    _
  $region23: #{light_recurrent_unit_block.9} parent=0 // pred_check_branch
    %22 = sbr.rel (0) target = $region25
  $region24: #{light_recurrent_unit_block.9} parent=0 // pred_region
    _
  $region25: #{light_recurrent_unit_block.9} parent=0 // pred_fallthru
    _
  %v23 = vld [vmem:[%s0] sm:$0xff]
  %v24 = vld [vmem:[%s0 + $0x8] sm:$0xff]
  %v25 = vld [vmem:[%s1] sm:$0xff]
  %v26 = vld [vmem:[%s1 + $0x8] sm:$0xff]
  %v27 = vld [vmem:[%s3] sm:$0xff]
  %v28 = vld [vmem:[%s3 + $0x8] sm:$0xff]
  %v29 = vld [vmem:[%s3 + $0x10] sm:$0xff]
  %v30 = vld [vmem:[%s3 + $0x18] sm:$0xff]
  %vm31 = vcmask 261120
  %v33 = vsel %vm31, %v23, 0
  %v36 = vsel %vm31, %v24, 0
  %38 = vmatprep.subr.mxu0 0.0
  %39 = vmatpush1.msra.mxu0 0.0
  %40 = vmatprep.subr.mxu0 0.0
  %41 = vmatpush1.msra.mxu0 0.0
  %42 = vmatprep.subr.mxu0 0.0
  %43 = vmatpush1.msra.mxu0 0.0
  %44 = vmatprep.subr.mxu0 0.0
  %45 = vmatpush1.msra.mxu0 0.0
  %46 = vmatprep.subr.mxu0 0.0
  %47 = vmatpush1.msra.mxu0 0.0
  %48 = vmatprep.subr.mxu0 0.0
  %49 = vmatpush1.msra.mxu0 0.0
  %50 = vmatprep.subr.mxu0 0.0
  %51 = vmatpush1.msra.mxu0 0.0
  %52 = vmatprep.subr.mxu0 0.0
  %53 = vmatpush1.msra.mxu0 0.0
  %54 = vmatprep.subr.mxu0 0.0
  %55 = vmatpush1.msra.mxu0 0.0
  %56 = vmatprep.subr.mxu0 0.0
  %57 = vmatpush1.msra.mxu0 0.0
  %58 = vmatprep.subr.mxu0 0.0
  %59 = vmatpush1.msra.mxu0 0.0
  %60 = vmatprep.subr.mxu0 0.0
  %61 = vmatpush1.msra.mxu0 0.0
  %62 = vmatprep.subr.mxu0 0.0
  %v63 = vand.u32 %v30, 4294901760
  %64 = vmatpush1.msra.mxu0 %v63
  %65 = vmatprep.subr.mxu0 0.0
  %v66 = vand.u32 %v29, 4294901760
  %67 = vmatpush1.msra.mxu0 %v66
  %68 = vmatprep.subr.mxu0 0.0
  %v69 = vand.u32 %v28, 4294901760
  %70 = vmatpush1.msra.mxu0 %v69
  %71 = vmatprep.subr.mxu0 0.0
  %v72 = vand.u32 %v27, 4294901760
  %73 = vmatpush1.msra.mxu0 %v72
  %74 = vmatprep.subr.mxu0 0.0
  %75 = vmatpush2.msra.mxu0 0.0
  %76 = vmatprep.subr.mxu0 0.0
  %77 = vmatpush2.msra.mxu0 0.0
  %78 = vmatprep.subr.mxu0 0.0
  %79 = vmatpush2.msra.mxu0 0.0
  %80 = vmatprep.subr.mxu0 0.0
  %81 = vmatpush2.msra.mxu0 0.0
  %82 = vmatprep.subr.mxu0 0.0
  %83 = vmatpush2.msra.mxu0 0.0
  %84 = vmatprep.subr.mxu0 0.0
  %85 = vmatpush2.msra.mxu0 0.0
  %86 = vmatprep.subr.mxu0 0.0
  %87 = vmatpush2.msra.mxu0 0.0
  %88 = vmatprep.subr.mxu0 0.0
  %89 = vmatpush2.msra.mxu0 0.0
  %90 = vmatprep.subr.mxu0 0.0
  %91 = vmatpush2.msra.mxu0 0.0
  %92 = vmatprep.subr.mxu0 0.0
  %93 = vmatpush2.msra.mxu0 0.0
  %94 = vmatprep.subr.mxu0 0.0
  %95 = vmatpush2.msra.mxu0 0.0
  %96 = vmatprep.subr.mxu0 0.0
  %97 = vmatpush2.msra.mxu0 0.0
  %98 = vmatprep.subr.mxu0 0.0
  %99 = vmatpush2.msra.mxu0 0.0
  %100 = vmatprep.subr.mxu0 0.0
  %101 = vmatpush2.msra.mxu0 0.0
  %102 = vmatprep.subr.mxu0 0.0
  %103 = vmatpush2.msra.mxu0 0.0
  %104 = vmatprep.subr.mxu0 0.0
  %105 = vmatpush2.msra.mxu0 0.0
  %106 = vmatprep.mubr.f32.mxu0 0.0
  %v107 = vand.u32 %v33, 4294901760
  %v108 = vsub.f32 %v33, %v107
  %v109 = vand.u32 %v108, 4294901760
  %v110 = vsub.f32 %v108, %v109
  %v111 = vand.u32 %v110, 4294901760
  %112 = vmatmul.mubr.f32.gmra.mxu0 %v111
  %v113 = vpop.f32.mrf.mxu0
  %v114 = vadd.f32 0.0, %v113
  %v115 = vpop.f32.mrf.mxu0
  %116 = vmatprep.mubr.f32.mxu0 0.0
  %v117 = vand.u32 %v36, 4294901760
  %v118 = vsub.f32 %v36, %v117
  %v119 = vand.u32 %v118, 4294901760
  %v120 = vsub.f32 %v118, %v119
  %v121 = vand.u32 %v120, 4294901760
  %122 = vmatmul.mubr.f32.gmra.mxu0 %v121
  %v123 = vpop.f32.mrf.mxu0
  %v124 = vadd.f32 0.0, %v123
  %v125 = vpop.f32.mrf.mxu0
  %126 = vdwg.mxu0
  %127 = vmatprep.subr.mxu0 0.0
  %128 = vmatpush1.msra.mxu0 0.0
  %129 = vmatprep.subr.mxu0 0.0
  %130 = vmatpush1.msra.mxu0 0.0
  %131 = vmatprep.subr.mxu0 0.0
  %132 = vmatpush1.msra.mxu0 0.0
  %133 = vmatprep.subr.mxu0 0.0
  %134 = vmatpush1.msra.mxu0 0.0
  %135 = vmatprep.subr.mxu0 0.0
  %136 = vmatpush1.msra.mxu0 0.0
  %137 = vmatprep.subr.mxu0 0.0
  %138 = vmatpush1.msra.mxu0 0.0
  %139 = vmatprep.subr.mxu0 0.0
  %140 = vmatpush1.msra.mxu0 0.0
  %141 = vmatprep.subr.mxu0 0.0
  %142 = vmatpush1.msra.mxu0 0.0
  %143 = vmatprep.subr.mxu0 0.0
  %144 = vmatpush1.msra.mxu0 0.0
  %145 = vmatprep.subr.mxu0 0.0
  %146 = vmatpush1.msra.mxu0 0.0
  %147 = vmatprep.subr.mxu0 0.0
  %148 = vmatpush1.msra.mxu0 0.0
  %149 = vmatprep.subr.mxu0 0.0
  %150 = vmatpush1.msra.mxu0 0.0
  %151 = vmatprep.subr.mxu0 0.0
  %v152 = vand.u32 %v30, 4294901760
  %v153 = vsub.f32 %v30, %v152
  %v154 = vand.u32 %v153, 4294901760
  %v155 = vsub.f32 %v153, %v154
  %v156 = vand.u32 %v155, 4294901760
  %157 = vmatpush1.msra.mxu0 %v156
  %158 = vmatprep.subr.mxu0 0.0
  %v159 = vand.u32 %v29, 4294901760
  %v160 = vsub.f32 %v29, %v159
  %v161 = vand.u32 %v160, 4294901760
  %v162 = vsub.f32 %v160, %v161
  %v163 = vand.u32 %v162, 4294901760
  %164 = vmatpush1.msra.mxu0 %v163
  %165 = vmatprep.subr.mxu0 0.0
  %v166 = vand.u32 %v28, 4294901760
  %v167 = vsub.f32 %v28, %v166
  %v168 = vand.u32 %v167, 4294901760
  %v169 = vsub.f32 %v167, %v168
  %v170 = vand.u32 %v169, 4294901760
  %171 = vmatpush1.msra.mxu0 %v170
  %172 = vmatprep.subr.mxu0 0.0
  %v173 = vand.u32 %v27, 4294901760
  %v174 = vsub.f32 %v27, %v173
  %v175 = vand.u32 %v174, 4294901760
  %v176 = vsub.f32 %v174, %v175
  %v177 = vand.u32 %v176, 4294901760
  %178 = vmatpush1.msra.mxu0 %v177
  %179 = vmatprep.subr.mxu0 0.0
  %180 = vmatpush2.msra.mxu0 0.0
  %181 = vmatprep.subr.mxu0 0.0
  %182 = vmatpush2.msra.mxu0 0.0
  %183 = vmatprep.subr.mxu0 0.0
  %184 = vmatpush2.msra.mxu0 0.0
  %185 = vmatprep.subr.mxu0 0.0
  %186 = vmatpush2.msra.mxu0 0.0
  %187 = vmatprep.subr.mxu0 0.0
  %188 = vmatpush2.msra.mxu0 0.0
  %189 = vmatprep.subr.mxu0 0.0
  %190 = vmatpush2.msra.mxu0 0.0
  %191 = vmatprep.subr.mxu0 0.0
  %192 = vmatpush2.msra.mxu0 0.0
  %193 = vmatprep.subr.mxu0 0.0
  %194 = vmatpush2.msra.mxu0 0.0
  %195 = vmatprep.subr.mxu0 0.0
  %196 = vmatpush2.msra.mxu0 0.0
  %197 = vmatprep.subr.mxu0 0.0
  %198 = vmatpush2.msra.mxu0 0.0
  %199 = vmatprep.subr.mxu0 0.0
  %200 = vmatpush2.msra.mxu0 0.0
  %201 = vmatprep.subr.mxu0 0.0
  %202 = vmatpush2.msra.mxu0 0.0
  %203 = vmatprep.subr.mxu0 0.0
  %204 = vmatpush2.msra.mxu0 0.0
  %205 = vmatprep.subr.mxu0 0.0
  %206 = vmatpush2.msra.mxu0 0.0
  %207 = vmatprep.subr.mxu0 0.0
  %208 = vmatpush2.msra.mxu0 0.0
  %209 = vmatprep.subr.mxu0 0.0
  %210 = vmatpush2.msra.mxu0 0.0
  %211 = vmatprep.mubr.f32.mxu0 0.0
  %v212 = vand.u32 %v33, 4294901760
  %213 = vmatmul.mubr.f32.gmra.mxu0 %v212
  %v214 = vpop.f32.mrf.mxu0
  %v215 = vadd.f32 %v114, %v214
  %v216 = vpop.f32.mrf.mxu0
  %217 = vmatprep.mubr.f32.mxu0 0.0
  %v218 = vand.u32 %v36, 4294901760
  %219 = vmatmul.mubr.f32.gmra.mxu0 %v218
  %v220 = vpop.f32.mrf.mxu0
  %v221 = vadd.f32 %v124, %v220
  %v222 = vpop.f32.mrf.mxu0
  %223 = vdwg.mxu0
  %224 = vmatprep.subr.mxu0 0.0
  %225 = vmatpush1.msra.mxu0 0.0
  %226 = vmatprep.subr.mxu0 0.0
  %227 = vmatpush1.msra.mxu0 0.0
  %228 = vmatprep.subr.mxu0 0.0
  %229 = vmatpush1.msra.mxu0 0.0
  %230 = vmatprep.subr.mxu0 0.0
  %231 = vmatpush1.msra.mxu0 0.0
  %232 = vmatprep.subr.mxu0 0.0
  %233 = vmatpush1.msra.mxu0 0.0
  %234 = vmatprep.subr.mxu0 0.0
  %235 = vmatpush1.msra.mxu0 0.0
  %236 = vmatprep.subr.mxu0 0.0
  %237 = vmatpush1.msra.mxu0 0.0
  %238 = vmatprep.subr.mxu0 0.0
  %239 = vmatpush1.msra.mxu0 0.0
  %240 = vmatprep.subr.mxu0 0.0
  %241 = vmatpush1.msra.mxu0 0.0
  %242 = vmatprep.subr.mxu0 0.0
  %243 = vmatpush1.msra.mxu0 0.0
  %244 = vmatprep.subr.mxu0 0.0
  %245 = vmatpush1.msra.mxu0 0.0
  %246 = vmatprep.subr.mxu0 0.0
  %247 = vmatpush1.msra.mxu0 0.0
  %248 = vmatprep.subr.mxu0 0.0
  %v249 = vand.u32 %v30, 4294901760
  %v250 = vsub.f32 %v30, %v249
  %251 = vmatpush1.msra.mxu0 %v250
  %252 = vmatprep.subr.mxu0 0.0
  %v253 = vand.u32 %v29, 4294901760
  %v254 = vsub.f32 %v29, %v253
  %255 = vmatpush1.msra.mxu0 %v254
  %256 = vmatprep.subr.mxu0 0.0
  %v257 = vand.u32 %v28, 4294901760
  %v258 = vsub.f32 %v28, %v257
  %259 = vmatpush1.msra.mxu0 %v258
  %260 = vmatprep.subr.mxu0 0.0
  %v261 = vand.u32 %v27, 4294901760
  %v262 = vsub.f32 %v27, %v261
  %263 = vmatpush1.msra.mxu0 %v262
  %264 = vmatprep.subr.mxu0 0.0
  %265 = vmatpush2.msra.mxu0 0.0
  %266 = vmatprep.subr.mxu0 0.0
  %267 = vmatpush2.msra.mxu0 0.0
  %268 = vmatprep.subr.mxu0 0.0
  %269 = vmatpush2.msra.mxu0 0.0
  %270 = vmatprep.subr.mxu0 0.0
  %271 = vmatpush2.msra.mxu0 0.0
  %272 = vmatprep.subr.mxu0 0.0
  %273 = vmatpush2.msra.mxu0 0.0
  %274 = vmatprep.subr.mxu0 0.0
  %275 = vmatpush2.msra.mxu0 0.0
  %276 = vmatprep.subr.mxu0 0.0
  %277 = vmatpush2.msra.mxu0 0.0
  %278 = vmatprep.subr.mxu0 0.0
  %279 = vmatpush2.msra.mxu0 0.0
  %280 = vmatprep.subr.mxu0 0.0
  %281 = vmatpush2.msra.mxu0 0.0
  %282 = vmatprep.subr.mxu0 0.0
  %283 = vmatpush2.msra.mxu0 0.0
  %284 = vmatprep.subr.mxu0 0.0
  %285 = vmatpush2.msra.mxu0 0.0
  %286 = vmatprep.subr.mxu0 0.0
  %287 = vmatpush2.msra.mxu0 0.0
  %288 = vmatprep.subr.mxu0 0.0
  %289 = vmatpush2.msra.mxu0 0.0
  %290 = vmatprep.subr.mxu0 0.0
  %291 = vmatpush2.msra.mxu0 0.0
  %292 = vmatprep.subr.mxu0 0.0
  %293 = vmatpush2.msra.mxu0 0.0
  %294 = vmatprep.subr.mxu0 0.0
  %295 = vmatpush2.msra.mxu0 0.0
  %296 = vmatprep.mubr.f32.mxu0 0.0
  %v297 = vand.u32 %v33, 4294901760
  %v298 = vsub.f32 %v33, %v297
  %299 = vmatmul.mubr.f32.gmra.mxu0 %v298
  %v300 = vpop.f32.mrf.mxu0
  %v301 = vadd.f32 %v215, %v300
  %v302 = vpop.f32.mrf.mxu0
  %303 = vmatprep.mubr.f32.mxu0 0.0
  %v304 = vand.u32 %v36, 4294901760
  %v305 = vsub.f32 %v36, %v304
  %306 = vmatmul.mubr.f32.gmra.mxu0 %v305
  %v307 = vpop.f32.mrf.mxu0
  %v308 = vadd.f32 %v221, %v307
  %v309 = vpop.f32.mrf.mxu0
  %310 = vdwg.mxu0
  %311 = vmatprep.subr.mxu0 0.0
  %312 = vmatpush1.msra.mxu0 0.0
  %313 = vmatprep.subr.mxu0 0.0
  %314 = vmatpush1.msra.mxu0 0.0
  %315 = vmatprep.subr.mxu0 0.0
  %316 = vmatpush1.msra.mxu0 0.0
  %317 = vmatprep.subr.mxu0 0.0
  %318 = vmatpush1.msra.mxu0 0.0
  %319 = vmatprep.subr.mxu0 0.0
  %320 = vmatpush1.msra.mxu0 0.0
  %321 = vmatprep.subr.mxu0 0.0
  %322 = vmatpush1.msra.mxu0 0.0
  %323 = vmatprep.subr.mxu0 0.0
  %324 = vmatpush1.msra.mxu0 0.0
  %325 = vmatprep.subr.mxu0 0.0
  %326 = vmatpush1.msra.mxu0 0.0
  %327 = vmatprep.subr.mxu0 0.0
  %328 = vmatpush1.msra.mxu0 0.0
  %329 = vmatprep.subr.mxu0 0.0
  %330 = vmatpush1.msra.mxu0 0.0
  %331 = vmatprep.subr.mxu0 0.0
  %332 = vmatpush1.msra.mxu0 0.0
  %333 = vmatprep.subr.mxu0 0.0
  %334 = vmatpush1.msra.mxu0 0.0
  %335 = vmatprep.subr.mxu0 0.0
  %v336 = vand.u32 %v30, 4294901760
  %337 = vmatpush1.msra.mxu0 %v336
  %338 = vmatprep.subr.mxu0 0.0
  %v339 = vand.u32 %v29, 4294901760
  %340 = vmatpush1.msra.mxu0 %v339
  %341 = vmatprep.subr.mxu0 0.0
  %v342 = vand.u32 %v28, 4294901760
  %343 = vmatpush1.msra.mxu0 %v342
  %344 = vmatprep.subr.mxu0 0.0
  %v345 = vand.u32 %v27, 4294901760
  %346 = vmatpush1.msra.mxu0 %v345
  %347 = vmatprep.subr.mxu0 0.0
  %348 = vmatpush2.msra.mxu0 0.0
  %349 = vmatprep.subr.mxu0 0.0
  %350 = vmatpush2.msra.mxu0 0.0
  %351 = vmatprep.subr.mxu0 0.0
  %352 = vmatpush2.msra.mxu0 0.0
  %353 = vmatprep.subr.mxu0 0.0
  %354 = vmatpush2.msra.mxu0 0.0
  %355 = vmatprep.subr.mxu0 0.0
  %356 = vmatpush2.msra.mxu0 0.0
  %357 = vmatprep.subr.mxu0 0.0
  %358 = vmatpush2.msra.mxu0 0.0
  %359 = vmatprep.subr.mxu0 0.0
  %360 = vmatpush2.msra.mxu0 0.0
  %361 = vmatprep.subr.mxu0 0.0
  %362 = vmatpush2.msra.mxu0 0.0
  %363 = vmatprep.subr.mxu0 0.0
  %364 = vmatpush2.msra.mxu0 0.0
  %365 = vmatprep.subr.mxu0 0.0
  %366 = vmatpush2.msra.mxu0 0.0
  %367 = vmatprep.subr.mxu0 0.0
  %368 = vmatpush2.msra.mxu0 0.0
  %369 = vmatprep.subr.mxu0 0.0
  %370 = vmatpush2.msra.mxu0 0.0
  %371 = vmatprep.subr.mxu0 0.0
  %372 = vmatpush2.msra.mxu0 0.0
  %373 = vmatprep.subr.mxu0 0.0
  %374 = vmatpush2.msra.mxu0 0.0
  %375 = vmatprep.subr.mxu0 0.0
  %376 = vmatpush2.msra.mxu0 0.0
  %377 = vmatprep.subr.mxu0 0.0
  %378 = vmatpush2.msra.mxu0 0.0
  %379 = vmatprep.mubr.f32.mxu0 0.0
  %v380 = vand.u32 %v33, 4294901760
  %v381 = vsub.f32 %v33, %v380
  %v382 = vand.u32 %v381, 4294901760
  %383 = vmatmul.mubr.f32.gmra.mxu0 %v382
  %v384 = vpop.f32.mrf.mxu0
  %v385 = vadd.f32 %v301, %v384
  %v386 = vpop.f32.mrf.mxu0
  %387 = vmatprep.mubr.f32.mxu0 0.0
  %v388 = vand.u32 %v36, 4294901760
  %v389 = vsub.f32 %v36, %v388
  %v390 = vand.u32 %v389, 4294901760
  %391 = vmatmul.mubr.f32.gmra.mxu0 %v390
  %v392 = vpop.f32.mrf.mxu0
  %v393 = vadd.f32 %v308, %v392
  %v394 = vpop.f32.mrf.mxu0
  %395 = vdwg.mxu0
  %396 = vmatprep.subr.mxu0 0.0
  %397 = vmatpush1.msra.mxu0 0.0
  %398 = vmatprep.subr.mxu0 0.0
  %399 = vmatpush1.msra.mxu0 0.0
  %400 = vmatprep.subr.mxu0 0.0
  %401 = vmatpush1.msra.mxu0 0.0
  %402 = vmatprep.subr.mxu0 0.0
  %403 = vmatpush1.msra.mxu0 0.0
  %404 = vmatprep.subr.mxu0 0.0
  %405 = vmatpush1.msra.mxu0 0.0
  %406 = vmatprep.subr.mxu0 0.0
  %407 = vmatpush1.msra.mxu0 0.0
  %408 = vmatprep.subr.mxu0 0.0
  %409 = vmatpush1.msra.mxu0 0.0
  %410 = vmatprep.subr.mxu0 0.0
  %411 = vmatpush1.msra.mxu0 0.0
  %412 = vmatprep.subr.mxu0 0.0
  %413 = vmatpush1.msra.mxu0 0.0
  %414 = vmatprep.subr.mxu0 0.0
  %415 = vmatpush1.msra.mxu0 0.0
  %416 = vmatprep.subr.mxu0 0.0
  %417 = vmatpush1.msra.mxu0 0.0
  %418 = vmatprep.subr.mxu0 0.0
  %419 = vmatpush1.msra.mxu0 0.0
  %420 = vmatprep.subr.mxu0 0.0
  %v421 = vand.u32 %v30, 4294901760
  %v422 = vsub.f32 %v30, %v421
  %v423 = vand.u32 %v422, 4294901760
  %424 = vmatpush1.msra.mxu0 %v423
  %425 = vmatprep.subr.mxu0 0.0
  %v426 = vand.u32 %v29, 4294901760
  %v427 = vsub.f32 %v29, %v426
  %v428 = vand.u32 %v427, 4294901760
  %429 = vmatpush1.msra.mxu0 %v428
  %430 = vmatprep.subr.mxu0 0.0
  %v431 = vand.u32 %v28, 4294901760
  %v432 = vsub.f32 %v28, %v431
  %v433 = vand.u32 %v432, 4294901760
  %434 = vmatpush1.msra.mxu0 %v433
  %435 = vmatprep.subr.mxu0 0.0
  %v436 = vand.u32 %v27, 4294901760
  %v437 = vsub.f32 %v27, %v436
  %v438 = vand.u32 %v437, 4294901760
  %439 = vmatpush1.msra.mxu0 %v438
  %440 = vmatprep.subr.mxu0 0.0
  %441 = vmatpush2.msra.mxu0 0.0
  %442 = vmatprep.subr.mxu0 0.0
  %443 = vmatpush2.msra.mxu0 0.0
  %444 = vmatprep.subr.mxu0 0.0
  %445 = vmatpush2.msra.mxu0 0.0
  %446 = vmatprep.subr.mxu0 0.0
  %447 = vmatpush2.msra.mxu0 0.0
  %448 = vmatprep.subr.mxu0 0.0
  %449 = vmatpush2.msra.mxu0 0.0
  %450 = vmatprep.subr.mxu0 0.0
  %451 = vmatpush2.msra.mxu0 0.0
  %452 = vmatprep.subr.mxu0 0.0
  %453 = vmatpush2.msra.mxu0 0.0
  %454 = vmatprep.subr.mxu0 0.0
  %455 = vmatpush2.msra.mxu0 0.0
  %456 = vmatprep.subr.mxu0 0.0
  %457 = vmatpush2.msra.mxu0 0.0
  %458 = vmatprep.subr.mxu0 0.0
  %459 = vmatpush2.msra.mxu0 0.0
  %460 = vmatprep.subr.mxu0 0.0
  %461 = vmatpush2.msra.mxu0 0.0
  %462 = vmatprep.subr.mxu0 0.0
  %463 = vmatpush2.msra.mxu0 0.0
  %464 = vmatprep.subr.mxu0 0.0
  %465 = vmatpush2.msra.mxu0 0.0
  %466 = vmatprep.subr.mxu0 0.0
  %467 = vmatpush2.msra.mxu0 0.0
  %468 = vmatprep.subr.mxu0 0.0
  %469 = vmatpush2.msra.mxu0 0.0
  %470 = vmatprep.subr.mxu0 0.0
  %471 = vmatpush2.msra.mxu0 0.0
  %472 = vmatprep.mubr.f32.mxu0 0.0
  %v473 = vand.u32 %v33, 4294901760
  %474 = vmatmul.mubr.f32.gmra.mxu0 %v473
  %v475 = vpop.f32.mrf.mxu0
  %v476 = vadd.f32 %v385, %v475
  %v477 = vpop.f32.mrf.mxu0
  %478 = vmatprep.mubr.f32.mxu0 0.0
  %v479 = vand.u32 %v36, 4294901760
  %480 = vmatmul.mubr.f32.gmra.mxu0 %v479
  %v481 = vpop.f32.mrf.mxu0
  %v482 = vadd.f32 %v393, %v481
  %v483 = vpop.f32.mrf.mxu0
  %484 = vdwg.mxu0
  %485 = vmatprep.subr.mxu0 0.0
  %486 = vmatpush1.msra.mxu0 0.0
  %487 = vmatprep.subr.mxu0 0.0
  %488 = vmatpush1.msra.mxu0 0.0
  %489 = vmatprep.subr.mxu0 0.0
  %490 = vmatpush1.msra.mxu0 0.0
  %491 = vmatprep.subr.mxu0 0.0
  %492 = vmatpush1.msra.mxu0 0.0
  %493 = vmatprep.subr.mxu0 0.0
  %494 = vmatpush1.msra.mxu0 0.0
  %495 = vmatprep.subr.mxu0 0.0
  %496 = vmatpush1.msra.mxu0 0.0
  %497 = vmatprep.subr.mxu0 0.0
  %498 = vmatpush1.msra.mxu0 0.0
  %499 = vmatprep.subr.mxu0 0.0
  %500 = vmatpush1.msra.mxu0 0.0
  %501 = vmatprep.subr.mxu0 0.0
  %502 = vmatpush1.msra.mxu0 0.0
  %503 = vmatprep.subr.mxu0 0.0
  %504 = vmatpush1.msra.mxu0 0.0
  %505 = vmatprep.subr.mxu0 0.0
  %506 = vmatpush1.msra.mxu0 0.0
  %507 = vmatprep.subr.mxu0 0.0
  %508 = vmatpush1.msra.mxu0 0.0
  %509 = vmatprep.subr.mxu0 0.0
  %v510 = vand.u32 %v30, 4294901760
  %511 = vmatpush1.msra.mxu0 %v510
  %512 = vmatprep.subr.mxu0 0.0
  %v513 = vand.u32 %v29, 4294901760
  %514 = vmatpush1.msra.mxu0 %v513
  %515 = vmatprep.subr.mxu0 0.0
  %v516 = vand.u32 %v28, 4294901760
  %517 = vmatpush1.msra.mxu0 %v516
  %518 = vmatprep.subr.mxu0 0.0
  %v519 = vand.u32 %v27, 4294901760
  %520 = vmatpush1.msra.mxu0 %v519
  %521 = vmatprep.subr.mxu0 0.0
  %522 = vmatpush2.msra.mxu0 0.0
  %523 = vmatprep.subr.mxu0 0.0
  %524 = vmatpush2.msra.mxu0 0.0
  %525 = vmatprep.subr.mxu0 0.0
  %526 = vmatpush2.msra.mxu0 0.0
  %527 = vmatprep.subr.mxu0 0.0
  %528 = vmatpush2.msra.mxu0 0.0
  %529 = vmatprep.subr.mxu0 0.0
  %530 = vmatpush2.msra.mxu0 0.0
  %531 = vmatprep.subr.mxu0 0.0
  %532 = vmatpush2.msra.mxu0 0.0
  %533 = vmatprep.subr.mxu0 0.0
  %534 = vmatpush2.msra.mxu0 0.0
  %535 = vmatprep.subr.mxu0 0.0
  %536 = vmatpush2.msra.mxu0 0.0
  %537 = vmatprep.subr.mxu0 0.0
  %538 = vmatpush2.msra.mxu0 0.0
  %539 = vmatprep.subr.mxu0 0.0
  %540 = vmatpush2.msra.mxu0 0.0
  %541 = vmatprep.subr.mxu0 0.0
  %542 = vmatpush2.msra.mxu0 0.0
  %543 = vmatprep.subr.mxu0 0.0
  %544 = vmatpush2.msra.mxu0 0.0
  %545 = vmatprep.subr.mxu0 0.0
  %546 = vmatpush2.msra.mxu0 0.0
  %547 = vmatprep.subr.mxu0 0.0
  %548 = vmatpush2.msra.mxu0 0.0
  %549 = vmatprep.subr.mxu0 0.0
  %550 = vmatpush2.msra.mxu0 0.0
  %551 = vmatprep.subr.mxu0 0.0
  %552 = vmatpush2.msra.mxu0 0.0
  %553 = vmatprep.mubr.f32.mxu0 0.0
  %v554 = vand.u32 %v33, 4294901760
  %555 = vmatmul.mubr.f32.gmra.mxu0 %v554
  %v556 = vpop.f32.mrf.mxu0
  %v557 = vadd.f32 %v476, %v556
  %v558 = vpop.f32.mrf.mxu0
  %559 = vmatprep.mubr.f32.mxu0 0.0
  %v560 = vand.u32 %v36, 4294901760
  %561 = vmatmul.mubr.f32.gmra.mxu0 %v560
  %v562 = vpop.f32.mrf.mxu0
  %v563 = vadd.f32 %v482, %v562
  %v564 = vpop.f32.mrf.mxu0
  %565 = vdwg.mxu0
  %v566 = vtanh.pop %v557
  %v567 = vtanh.pop %v563
  %v568 = vld [vmem:[%s4] sm:$0xff]
  %v569 = vld [vmem:[%s4 + $0x8] sm:$0xff]
  %v570 = vld [vmem:[%s4 + $0x10] sm:$0xff]
  %v571 = vld [vmem:[%s4 + $0x18] sm:$0xff]
  %v572 = vld [vmem:[%s5] sm:$0x1]
  %v574 = vlaneseq
  %v575 = vshrl.u32 %v574, 7
  %v576 = vsub.s32 0, %v575
  %v577 = vrot.slane %v572, %v576
  %v580 = vsel %vm31, %v25, 0
  %v583 = vsel %vm31, %v26, 0
  %585 = vmatprep.subr.mxu0 0.0
  %586 = vmatpush1.msra.mxu0 0.0
  %587 = vmatprep.subr.mxu0 0.0
  %588 = vmatpush1.msra.mxu0 0.0
  %589 = vmatprep.subr.mxu0 0.0
  %590 = vmatpush1.msra.mxu0 0.0
  %591 = vmatprep.subr.mxu0 0.0
  %592 = vmatpush1.msra.mxu0 0.0
  %593 = vmatprep.subr.mxu0 0.0
  %594 = vmatpush1.msra.mxu0 0.0
  %595 = vmatprep.subr.mxu0 0.0
  %596 = vmatpush1.msra.mxu0 0.0
  %597 = vmatprep.subr.mxu0 0.0
  %598 = vmatpush1.msra.mxu0 0.0
  %599 = vmatprep.subr.mxu0 0.0
  %600 = vmatpush1.msra.mxu0 0.0
  %601 = vmatprep.subr.mxu0 0.0
  %602 = vmatpush1.msra.mxu0 0.0
  %603 = vmatprep.subr.mxu0 0.0
  %604 = vmatpush1.msra.mxu0 0.0
  %605 = vmatprep.subr.mxu0 0.0
  %606 = vmatpush1.msra.mxu0 0.0
  %607 = vmatprep.subr.mxu0 0.0
  %608 = vmatpush1.msra.mxu0 0.0
  %609 = vmatprep.subr.mxu0 0.0
  %v610 = vand.u32 %v571, 4294901760
  %611 = vmatpush1.msra.mxu0 %v610
  %612 = vmatprep.subr.mxu0 0.0
  %v613 = vand.u32 %v570, 4294901760
  %614 = vmatpush1.msra.mxu0 %v613
  %615 = vmatprep.subr.mxu0 0.0
  %v616 = vand.u32 %v569, 4294901760
  %617 = vmatpush1.msra.mxu0 %v616
  %618 = vmatprep.subr.mxu0 0.0
  %v619 = vand.u32 %v568, 4294901760
  %620 = vmatpush1.msra.mxu0 %v619
  %621 = vmatprep.subr.mxu0 0.0
  %622 = vmatpush2.msra.mxu0 0.0
  %623 = vmatprep.subr.mxu0 0.0
  %624 = vmatpush2.msra.mxu0 0.0
  %625 = vmatprep.subr.mxu0 0.0
  %626 = vmatpush2.msra.mxu0 0.0
  %627 = vmatprep.subr.mxu0 0.0
  %628 = vmatpush2.msra.mxu0 0.0
  %629 = vmatprep.subr.mxu0 0.0
  %630 = vmatpush2.msra.mxu0 0.0
  %631 = vmatprep.subr.mxu0 0.0
  %632 = vmatpush2.msra.mxu0 0.0
  %633 = vmatprep.subr.mxu0 0.0
  %634 = vmatpush2.msra.mxu0 0.0
  %635 = vmatprep.subr.mxu0 0.0
  %636 = vmatpush2.msra.mxu0 0.0
  %637 = vmatprep.subr.mxu0 0.0
  %638 = vmatpush2.msra.mxu0 0.0
  %639 = vmatprep.subr.mxu0 0.0
  %640 = vmatpush2.msra.mxu0 0.0
  %641 = vmatprep.subr.mxu0 0.0
  %642 = vmatpush2.msra.mxu0 0.0
  %643 = vmatprep.subr.mxu0 0.0
  %644 = vmatpush2.msra.mxu0 0.0
  %645 = vmatprep.subr.mxu0 0.0
  %646 = vmatpush2.msra.mxu0 0.0
  %647 = vmatprep.subr.mxu0 0.0
  %648 = vmatpush2.msra.mxu0 0.0
  %649 = vmatprep.subr.mxu0 0.0
  %650 = vmatpush2.msra.mxu0 0.0
  %651 = vmatprep.subr.mxu0 0.0
  %652 = vmatpush2.msra.mxu0 0.0
  %653 = vmatprep.mubr.f32.mxu0 0.0
  %v654 = vand.u32 %v580, 4294901760
  %v655 = vsub.f32 %v580, %v654
  %v656 = vand.u32 %v655, 4294901760
  %v657 = vsub.f32 %v655, %v656
  %v658 = vand.u32 %v657, 4294901760
  %659 = vmatmul.mubr.f32.gmra.mxu0 %v658
  %v660 = vpop.f32.mrf.mxu0
  %v661 = vadd.f32 %v577, %v660
  %v662 = vpop.f32.mrf.mxu0
  %663 = vmatprep.mubr.f32.mxu0 0.0
  %v664 = vand.u32 %v583, 4294901760
  %v665 = vsub.f32 %v583, %v664
  %v666 = vand.u32 %v665, 4294901760
  %v667 = vsub.f32 %v665, %v666
  %v668 = vand.u32 %v667, 4294901760
  %669 = vmatmul.mubr.f32.gmra.mxu0 %v668
  %v670 = vpop.f32.mrf.mxu0
  %v671 = vadd.f32 %v577, %v670
  %v672 = vpop.f32.mrf.mxu0
  %673 = vdwg.mxu0
  %674 = vmatprep.subr.mxu0 0.0
  %675 = vmatpush1.msra.mxu0 0.0
  %676 = vmatprep.subr.mxu0 0.0
  %677 = vmatpush1.msra.mxu0 0.0
  %678 = vmatprep.subr.mxu0 0.0
  %679 = vmatpush1.msra.mxu0 0.0
  %680 = vmatprep.subr.mxu0 0.0
  %681 = vmatpush1.msra.mxu0 0.0
  %682 = vmatprep.subr.mxu0 0.0
  %683 = vmatpush1.msra.mxu0 0.0
  %684 = vmatprep.subr.mxu0 0.0
  %685 = vmatpush1.msra.mxu0 0.0
  %686 = vmatprep.subr.mxu0 0.0
  %687 = vmatpush1.msra.mxu0 0.0
  %688 = vmatprep.subr.mxu0 0.0
  %689 = vmatpush1.msra.mxu0 0.0
  %690 = vmatprep.subr.mxu0 0.0
  %691 = vmatpush1.msra.mxu0 0.0
  %692 = vmatprep.subr.mxu0 0.0
  %693 = vmatpush1.msra.mxu0 0.0
  %694 = vmatprep.subr.mxu0 0.0
  %695 = vmatpush1.msra.mxu0 0.0
  %696 = vmatprep.subr.mxu0 0.0
  %697 = vmatpush1.msra.mxu0 0.0
  %698 = vmatprep.subr.mxu0 0.0
  %v699 = vand.u32 %v571, 4294901760
  %v700 = vsub.f32 %v571, %v699
  %v701 = vand.u32 %v700, 4294901760
  %v702 = vsub.f32 %v700, %v701
  %v703 = vand.u32 %v702, 4294901760
  %704 = vmatpush1.msra.mxu0 %v703
  %705 = vmatprep.subr.mxu0 0.0
  %v706 = vand.u32 %v570, 4294901760
  %v707 = vsub.f32 %v570, %v706
  %v708 = vand.u32 %v707, 4294901760
  %v709 = vsub.f32 %v707, %v708
  %v710 = vand.u32 %v709, 4294901760
  %711 = vmatpush1.msra.mxu0 %v710
  %712 = vmatprep.subr.mxu0 0.0
  %v713 = vand.u32 %v569, 4294901760
  %v714 = vsub.f32 %v569, %v713
  %v715 = vand.u32 %v714, 4294901760
  %v716 = vsub.f32 %v714, %v715
  %v717 = vand.u32 %v716, 4294901760
  %718 = vmatpush1.msra.mxu0 %v717
  %719 = vmatprep.subr.mxu0 0.0
  %v720 = vand.u32 %v568, 4294901760
  %v721 = vsub.f32 %v568, %v720
  %v722 = vand.u32 %v721, 4294901760
  %v723 = vsub.f32 %v721, %v722
  %v724 = vand.u32 %v723, 4294901760
  %725 = vmatpush1.msra.mxu0 %v724
  %726 = vmatprep.subr.mxu0 0.0
  %727 = vmatpush2.msra.mxu0 0.0
  %728 = vmatprep.subr.mxu0 0.0
  %729 = vmatpush2.msra.mxu0 0.0
  %730 = vmatprep.subr.mxu0 0.0
  %731 = vmatpush2.msra.mxu0 0.0
  %732 = vmatprep.subr.mxu0 0.0
  %733 = vmatpush2.msra.mxu0 0.0
  %734 = vmatprep.subr.mxu0 0.0
  %735 = vmatpush2.msra.mxu0 0.0
  %736 = vmatprep.subr.mxu0 0.0
  %737 = vmatpush2.msra.mxu0 0.0
  %738 = vmatprep.subr.mxu0 0.0
  %739 = vmatpush2.msra.mxu0 0.0
  %740 = vmatprep.subr.mxu0 0.0
  %741 = vmatpush2.msra.mxu0 0.0
  %742 = vmatprep.subr.mxu0 0.0
  %743 = vmatpush2.msra.mxu0 0.0
  %744 = vmatprep.subr.mxu0 0.0
  %745 = vmatpush2.msra.mxu0 0.0
  %746 = vmatprep.subr.mxu0 0.0
  %747 = vmatpush2.msra.mxu0 0.0
  %748 = vmatprep.subr.mxu0 0.0
  %749 = vmatpush2.msra.mxu0 0.0
  %750 = vmatprep.subr.mxu0 0.0
  %751 = vmatpush2.msra.mxu0 0.0
  %752 = vmatprep.subr.mxu0 0.0
  %753 = vmatpush2.msra.mxu0 0.0
  %754 = vmatprep.subr.mxu0 0.0
  %755 = vmatpush2.msra.mxu0 0.0
  %756 = vmatprep.subr.mxu0 0.0
  %757 = vmatpush2.msra.mxu0 0.0
  %758 = vmatprep.mubr.f32.mxu0 0.0
  %v759 = vand.u32 %v580, 4294901760
  %760 = vmatmul.mubr.f32.gmra.mxu0 %v759
  %v761 = vpop.f32.mrf.mxu0
  %v762 = vadd.f32 %v661, %v761
  %v763 = vpop.f32.mrf.mxu0
  %764 = vmatprep.mubr.f32.mxu0 0.0
  %v765 = vand.u32 %v583, 4294901760
  %766 = vmatmul.mubr.f32.gmra.mxu0 %v765
  %v767 = vpop.f32.mrf.mxu0
  %v768 = vadd.f32 %v671, %v767
  %v769 = vpop.f32.mrf.mxu0
  %770 = vdwg.mxu0
  %771 = vmatprep.subr.mxu0 0.0
  %772 = vmatpush1.msra.mxu0 0.0
  %773 = vmatprep.subr.mxu0 0.0
  %774 = vmatpush1.msra.mxu0 0.0
  %775 = vmatprep.subr.mxu0 0.0
  %776 = vmatpush1.msra.mxu0 0.0
  %777 = vmatprep.subr.mxu0 0.0
  %778 = vmatpush1.msra.mxu0 0.0
  %779 = vmatprep.subr.mxu0 0.0
  %780 = vmatpush1.msra.mxu0 0.0
  %781 = vmatprep.subr.mxu0 0.0
  %782 = vmatpush1.msra.mxu0 0.0
  %783 = vmatprep.subr.mxu0 0.0
  %784 = vmatpush1.msra.mxu0 0.0
  %785 = vmatprep.subr.mxu0 0.0
  %786 = vmatpush1.msra.mxu0 0.0
  %787 = vmatprep.subr.mxu0 0.0
  %788 = vmatpush1.msra.mxu0 0.0
  %789 = vmatprep.subr.mxu0 0.0
  %790 = vmatpush1.msra.mxu0 0.0
  %791 = vmatprep.subr.mxu0 0.0
  %792 = vmatpush1.msra.mxu0 0.0
  %793 = vmatprep.subr.mxu0 0.0
  %794 = vmatpush1.msra.mxu0 0.0
  %795 = vmatprep.subr.mxu0 0.0
  %v796 = vand.u32 %v571, 4294901760
  %v797 = vsub.f32 %v571, %v796
  %798 = vmatpush1.msra.mxu0 %v797
  %799 = vmatprep.subr.mxu0 0.0
  %v800 = vand.u32 %v570, 4294901760
  %v801 = vsub.f32 %v570, %v800
  %802 = vmatpush1.msra.mxu0 %v801
  %803 = vmatprep.subr.mxu0 0.0
  %v804 = vand.u32 %v569, 4294901760
  %v805 = vsub.f32 %v569, %v804
  %806 = vmatpush1.msra.mxu0 %v805
  %807 = vmatprep.subr.mxu0 0.0
  %v808 = vand.u32 %v568, 4294901760
  %v809 = vsub.f32 %v568, %v808
  %810 = vmatpush1.msra.mxu0 %v809
  %811 = vmatprep.subr.mxu0 0.0
  %812 = vmatpush2.msra.mxu0 0.0
  %813 = vmatprep.subr.mxu0 0.0
  %814 = vmatpush2.msra.mxu0 0.0
  %815 = vmatprep.subr.mxu0 0.0
  %816 = vmatpush2.msra.mxu0 0.0
  %817 = vmatprep.subr.mxu0 0.0
  %818 = vmatpush2.msra.mxu0 0.0
  %819 = vmatprep.subr.mxu0 0.0
  %820 = vmatpush2.msra.mxu0 0.0
  %821 = vmatprep.subr.mxu0 0.0
  %822 = vmatpush2.msra.mxu0 0.0
  %823 = vmatprep.subr.mxu0 0.0
  %824 = vmatpush2.msra.mxu0 0.0
  %825 = vmatprep.subr.mxu0 0.0
  %826 = vmatpush2.msra.mxu0 0.0
  %827 = vmatprep.subr.mxu0 0.0
  %828 = vmatpush2.msra.mxu0 0.0
  %829 = vmatprep.subr.mxu0 0.0
  %830 = vmatpush2.msra.mxu0 0.0
  %831 = vmatprep.subr.mxu0 0.0
  %832 = vmatpush2.msra.mxu0 0.0
  %833 = vmatprep.subr.mxu0 0.0
  %834 = vmatpush2.msra.mxu0 0.0
  %835 = vmatprep.subr.mxu0 0.0
  %836 = vmatpush2.msra.mxu0 0.0
  %837 = vmatprep.subr.mxu0 0.0
  %838 = vmatpush2.msra.mxu0 0.0
  %839 = vmatprep.subr.mxu0 0.0
  %840 = vmatpush2.msra.mxu0 0.0
  %841 = vmatprep.subr.mxu0 0.0
  %842 = vmatpush2.msra.mxu0 0.0
  %843 = vmatprep.mubr.f32.mxu0 0.0
  %v844 = vand.u32 %v580, 4294901760
  %v845 = vsub.f32 %v580, %v844
  %846 = vmatmul.mubr.f32.gmra.mxu0 %v845
  %v847 = vpop.f32.mrf.mxu0
  %v848 = vadd.f32 %v762, %v847
  %v849 = vpop.f32.mrf.mxu0
  %850 = vmatprep.mubr.f32.mxu0 0.0
  %v851 = vand.u32 %v583, 4294901760
  %v852 = vsub.f32 %v583, %v851
  %853 = vmatmul.mubr.f32.gmra.mxu0 %v852
  %v854 = vpop.f32.mrf.mxu0
  %v855 = vadd.f32 %v768, %v854
  %v856 = vpop.f32.mrf.mxu0
  %857 = vdwg.mxu0
  %858 = vmatprep.subr.mxu0 0.0
  %859 = vmatpush1.msra.mxu0 0.0
  %860 = vmatprep.subr.mxu0 0.0
  %861 = vmatpush1.msra.mxu0 0.0
  %862 = vmatprep.subr.mxu0 0.0
  %863 = vmatpush1.msra.mxu0 0.0
  %864 = vmatprep.subr.mxu0 0.0
  %865 = vmatpush1.msra.mxu0 0.0
  %866 = vmatprep.subr.mxu0 0.0
  %867 = vmatpush1.msra.mxu0 0.0
  %868 = vmatprep.subr.mxu0 0.0
  %869 = vmatpush1.msra.mxu0 0.0
  %870 = vmatprep.subr.mxu0 0.0
  %871 = vmatpush1.msra.mxu0 0.0
  %872 = vmatprep.subr.mxu0 0.0
  %873 = vmatpush1.msra.mxu0 0.0
  %874 = vmatprep.subr.mxu0 0.0
  %875 = vmatpush1.msra.mxu0 0.0
  %876 = vmatprep.subr.mxu0 0.0
  %877 = vmatpush1.msra.mxu0 0.0
  %878 = vmatprep.subr.mxu0 0.0
  %879 = vmatpush1.msra.mxu0 0.0
  %880 = vmatprep.subr.mxu0 0.0
  %881 = vmatpush1.msra.mxu0 0.0
  %882 = vmatprep.subr.mxu0 0.0
  %v883 = vand.u32 %v571, 4294901760
  %884 = vmatpush1.msra.mxu0 %v883
  %885 = vmatprep.subr.mxu0 0.0
  %v886 = vand.u32 %v570, 4294901760
  %887 = vmatpush1.msra.mxu0 %v886
  %888 = vmatprep.subr.mxu0 0.0
  %v889 = vand.u32 %v569, 4294901760
  %890 = vmatpush1.msra.mxu0 %v889
  %891 = vmatprep.subr.mxu0 0.0
  %v892 = vand.u32 %v568, 4294901760
  %893 = vmatpush1.msra.mxu0 %v892
  %894 = vmatprep.subr.mxu0 0.0
  %895 = vmatpush2.msra.mxu0 0.0
  %896 = vmatprep.subr.mxu0 0.0
  %897 = vmatpush2.msra.mxu0 0.0
  %898 = vmatprep.subr.mxu0 0.0
  %899 = vmatpush2.msra.mxu0 0.0
  %900 = vmatprep.subr.mxu0 0.0
  %901 = vmatpush2.msra.mxu0 0.0
  %902 = vmatprep.subr.mxu0 0.0
  %903 = vmatpush2.msra.mxu0 0.0
  %904 = vmatprep.subr.mxu0 0.0
  %905 = vmatpush2.msra.mxu0 0.0
  %906 = vmatprep.subr.mxu0 0.0
  %907 = vmatpush2.msra.mxu0 0.0
  %908 = vmatprep.subr.mxu0 0.0
  %909 = vmatpush2.msra.mxu0 0.0
  %910 = vmatprep.subr.mxu0 0.0
  %911 = vmatpush2.msra.mxu0 0.0
  %912 = vmatprep.subr.mxu0 0.0
  %913 = vmatpush2.msra.mxu0 0.0
  %914 = vmatprep.subr.mxu0 0.0
  %915 = vmatpush2.msra.mxu0 0.0
  %916 = vmatprep.subr.mxu0 0.0
  %917 = vmatpush2.msra.mxu0 0.0
  %918 = vmatprep.subr.mxu0 0.0
  %919 = vmatpush2.msra.mxu0 0.0
  %920 = vmatprep.subr.mxu0 0.0
  %921 = vmatpush2.msra.mxu0 0.0
  %922 = vmatprep.subr.mxu0 0.0
  %923 = vmatpush2.msra.mxu0 0.0
  %924 = vmatprep.subr.mxu0 0.0
  %925 = vmatpush2.msra.mxu0 0.0
  %926 = vmatprep.mubr.f32.mxu0 0.0
  %v927 = vand.u32 %v580, 4294901760
  %v928 = vsub.f32 %v580, %v927
  %v929 = vand.u32 %v928, 4294901760
  %930 = vmatmul.mubr.f32.gmra.mxu0 %v929
  %v931 = vpop.f32.mrf.mxu0
  %v932 = vadd.f32 %v848, %v931
  %v933 = vpop.f32.mrf.mxu0
  %934 = vmatprep.mubr.f32.mxu0 0.0
  %v935 = vand.u32 %v583, 4294901760
  %v936 = vsub.f32 %v583, %v935
  %v937 = vand.u32 %v936, 4294901760
  %938 = vmatmul.mubr.f32.gmra.mxu0 %v937
  %v939 = vpop.f32.mrf.mxu0
  %v940 = vadd.f32 %v855, %v939
  %v941 = vpop.f32.mrf.mxu0
  %942 = vdwg.mxu0
  %943 = vmatprep.subr.mxu0 0.0
  %944 = vmatpush1.msra.mxu0 0.0
  %945 = vmatprep.subr.mxu0 0.0
  %946 = vmatpush1.msra.mxu0 0.0
  %947 = vmatprep.subr.mxu0 0.0
  %948 = vmatpush1.msra.mxu0 0.0
  %949 = vmatprep.subr.mxu0 0.0
  %950 = vmatpush1.msra.mxu0 0.0
  %951 = vmatprep.subr.mxu0 0.0
  %952 = vmatpush1.msra.mxu0 0.0
  %953 = vmatprep.subr.mxu0 0.0
  %954 = vmatpush1.msra.mxu0 0.0
  %955 = vmatprep.subr.mxu0 0.0
  %956 = vmatpush1.msra.mxu0 0.0
  %957 = vmatprep.subr.mxu0 0.0
  %958 = vmatpush1.msra.mxu0 0.0
  %959 = vmatprep.subr.mxu0 0.0
  %960 = vmatpush1.msra.mxu0 0.0
  %961 = vmatprep.subr.mxu0 0.0
  %962 = vmatpush1.msra.mxu0 0.0
  %963 = vmatprep.subr.mxu0 0.0
  %964 = vmatpush1.msra.mxu0 0.0
  %965 = vmatprep.subr.mxu0 0.0
  %966 = vmatpush1.msra.mxu0 0.0
  %967 = vmatprep.subr.mxu0 0.0
  %v968 = vand.u32 %v571, 4294901760
  %v969 = vsub.f32 %v571, %v968
  %v970 = vand.u32 %v969, 4294901760
  %971 = vmatpush1.msra.mxu0 %v970
  %972 = vmatprep.subr.mxu0 0.0
  %v973 = vand.u32 %v570, 4294901760
  %v974 = vsub.f32 %v570, %v973
  %v975 = vand.u32 %v974, 4294901760
  %976 = vmatpush1.msra.mxu0 %v975
  %977 = vmatprep.subr.mxu0 0.0
  %v978 = vand.u32 %v569, 4294901760
  %v979 = vsub.f32 %v569, %v978
  %v980 = vand.u32 %v979, 4294901760
  %981 = vmatpush1.msra.mxu0 %v980
  %982 = vmatprep.subr.mxu0 0.0
  %v983 = vand.u32 %v568, 4294901760
  %v984 = vsub.f32 %v568, %v983
  %v985 = vand.u32 %v984, 4294901760
  %986 = vmatpush1.msra.mxu0 %v985
  %987 = vmatprep.subr.mxu0 0.0
  %988 = vmatpush2.msra.mxu0 0.0
  %989 = vmatprep.subr.mxu0 0.0
  %990 = vmatpush2.msra.mxu0 0.0
  %991 = vmatprep.subr.mxu0 0.0
  %992 = vmatpush2.msra.mxu0 0.0
  %993 = vmatprep.subr.mxu0 0.0
  %994 = vmatpush2.msra.mxu0 0.0
  %995 = vmatprep.subr.mxu0 0.0
  %996 = vmatpush2.msra.mxu0 0.0
  %997 = vmatprep.subr.mxu0 0.0
  %998 = vmatpush2.msra.mxu0 0.0
  %999 = vmatprep.subr.mxu0 0.0
  %1000 = vmatpush2.msra.mxu0 0.0
  %1001 = vmatprep.subr.mxu0 0.0
  %1002 = vmatpush2.msra.mxu0 0.0
  %1003 = vmatprep.subr.mxu0 0.0
  %1004 = vmatpush2.msra.mxu0 0.0
  %1005 = vmatprep.subr.mxu0 0.0
  %1006 = vmatpush2.msra.mxu0 0.0
  %1007 = vmatprep.subr.mxu0 0.0
  %1008 = vmatpush2.msra.mxu0 0.0
  %1009 = vmatprep.subr.mxu0 0.0
  %1010 = vmatpush2.msra.mxu0 0.0
  %1011 = vmatprep.subr.mxu0 0.0
  %1012 = vmatpush2.msra.mxu0 0.0
  %1013 = vmatprep.subr.mxu0 0.0
  %1014 = vmatpush2.msra.mxu0 0.0
  %1015 = vmatprep.subr.mxu0 0.0
  %1016 = vmatpush2.msra.mxu0 0.0
  %1017 = vmatprep.subr.mxu0 0.0
  %1018 = vmatpush2.msra.mxu0 0.0
  %1019 = vmatprep.mubr.f32.mxu0 0.0
  %v1020 = vand.u32 %v580, 4294901760
  %1021 = vmatmul.mubr.f32.gmra.mxu0 %v1020
  %v1022 = vpop.f32.mrf.mxu0
  %v1023 = vadd.f32 %v932, %v1022
  %v1024 = vpop.f32.mrf.mxu0
  %1025 = vmatprep.mubr.f32.mxu0 0.0
  %v1026 = vand.u32 %v583, 4294901760
  %1027 = vmatmul.mubr.f32.gmra.mxu0 %v1026
  %v1028 = vpop.f32.mrf.mxu0
  %v1029 = vadd.f32 %v940, %v1028
  %v1030 = vpop.f32.mrf.mxu0
  %1031 = vdwg.mxu0
  %1032 = vmatprep.subr.mxu0 0.0
  %1033 = vmatpush1.msra.mxu0 0.0
  %1034 = vmatprep.subr.mxu0 0.0
  %1035 = vmatpush1.msra.mxu0 0.0
  %1036 = vmatprep.subr.mxu0 0.0
  %1037 = vmatpush1.msra.mxu0 0.0
  %1038 = vmatprep.subr.mxu0 0.0
  %1039 = vmatpush1.msra.mxu0 0.0
  %1040 = vmatprep.subr.mxu0 0.0
  %1041 = vmatpush1.msra.mxu0 0.0
  %1042 = vmatprep.subr.mxu0 0.0
  %1043 = vmatpush1.msra.mxu0 0.0
  %1044 = vmatprep.subr.mxu0 0.0
  %1045 = vmatpush1.msra.mxu0 0.0
  %1046 = vmatprep.subr.mxu0 0.0
  %1047 = vmatpush1.msra.mxu0 0.0
  %1048 = vmatprep.subr.mxu0 0.0
  %1049 = vmatpush1.msra.mxu0 0.0
  %1050 = vmatprep.subr.mxu0 0.0
  %1051 = vmatpush1.msra.mxu0 0.0
  %1052 = vmatprep.subr.mxu0 0.0
  %1053 = vmatpush1.msra.mxu0 0.0
  %1054 = vmatprep.subr.mxu0 0.0
  %1055 = vmatpush1.msra.mxu0 0.0
  %1056 = vmatprep.subr.mxu0 0.0
  %v1057 = vand.u32 %v571, 4294901760
  %1058 = vmatpush1.msra.mxu0 %v1057
  %1059 = vmatprep.subr.mxu0 0.0
  %v1060 = vand.u32 %v570, 4294901760
  %1061 = vmatpush1.msra.mxu0 %v1060
  %1062 = vmatprep.subr.mxu0 0.0
  %v1063 = vand.u32 %v569, 4294901760
  %1064 = vmatpush1.msra.mxu0 %v1063
  %1065 = vmatprep.subr.mxu0 0.0
  %v1066 = vand.u32 %v568, 4294901760
  %1067 = vmatpush1.msra.mxu0 %v1066
  %1068 = vmatprep.subr.mxu0 0.0
  %1069 = vmatpush2.msra.mxu0 0.0
  %1070 = vmatprep.subr.mxu0 0.0
  %1071 = vmatpush2.msra.mxu0 0.0
  %1072 = vmatprep.subr.mxu0 0.0
  %1073 = vmatpush2.msra.mxu0 0.0
  %1074 = vmatprep.subr.mxu0 0.0
  %1075 = vmatpush2.msra.mxu0 0.0
  %1076 = vmatprep.subr.mxu0 0.0
  %1077 = vmatpush2.msra.mxu0 0.0
  %1078 = vmatprep.subr.mxu0 0.0
  %1079 = vmatpush2.msra.mxu0 0.0
  %1080 = vmatprep.subr.mxu0 0.0
  %1081 = vmatpush2.msra.mxu0 0.0
  %1082 = vmatprep.subr.mxu0 0.0
  %1083 = vmatpush2.msra.mxu0 0.0
  %1084 = vmatprep.subr.mxu0 0.0
  %1085 = vmatpush2.msra.mxu0 0.0
  %1086 = vmatprep.subr.mxu0 0.0
  %1087 = vmatpush2.msra.mxu0 0.0
  %1088 = vmatprep.subr.mxu0 0.0
  %1089 = vmatpush2.msra.mxu0 0.0
  %1090 = vmatprep.subr.mxu0 0.0
  %1091 = vmatpush2.msra.mxu0 0.0
  %1092 = vmatprep.subr.mxu0 0.0
  %1093 = vmatpush2.msra.mxu0 0.0
  %1094 = vmatprep.subr.mxu0 0.0
  %1095 = vmatpush2.msra.mxu0 0.0
  %1096 = vmatprep.subr.mxu0 0.0
  %1097 = vmatpush2.msra.mxu0 0.0
  %1098 = vmatprep.subr.mxu0 0.0
  %1099 = vmatpush2.msra.mxu0 0.0
  %1100 = vmatprep.mubr.f32.mxu0 0.0
  %v1101 = vand.u32 %v580, 4294901760
  %1102 = vmatmul.mubr.f32.gmra.mxu0 %v1101
  %v1103 = vpop.f32.mrf.mxu0
  %v1104 = vadd.f32 %v1023, %v1103
  %v1105 = vpop.f32.mrf.mxu0
  %1106 = vmatprep.mubr.f32.mxu0 0.0
  %v1107 = vand.u32 %v583, 4294901760
  %1108 = vmatmul.mubr.f32.gmra.mxu0 %v1107
  %v1109 = vpop.f32.mrf.mxu0
  %v1110 = vadd.f32 %v1029, %v1109
  %v1111 = vpop.f32.mrf.mxu0
  %1112 = vdwg.mxu0
  %1115 = vrot.lane.b32.xlu0 %v557, 96
  %v1116 = vpop.permute.xlu0 %1115
  %1117 = vrot.lane.b32.xlu0 %v563, 96
  %v1118 = vpop.permute.xlu0 %1117
  %v1121 = vadd.f32 %v1104, %v1116
  %v1122 = vadd.f32 %v1110, %v1118
  %v1123 = vxor.u32 %v1121, 2147483648
  %v1124 = vxor.u32 %v1122, 2147483648
  %v1125 = vmul.f32 %v1123, 1.442695
  %v1126 = vpow.pop %v1125
  %v1127 = vmul.f32 %v1124, 1.442695
  %v1128 = vpow.pop %v1127
  %v1129 = vadd.f32 %v1126, 1.0
  %v1130 = vadd.f32 %v1128, 1.0
  %v1131 = vrcp.pop %v1129
  %v1132 = vmul.f32 1.0, %v1131
  %v1133 = vrcp.pop %v1130
  %v1134 = vmul.f32 1.0, %v1133
  %v1135 = vsub.f32 %v566, %v25
  %v1136 = vsub.f32 %v567, %v26
  %v1137 = vmul.f32 %v1132, %v1135
  %v1138 = vmul.f32 %v1134, %v1136
  %v1139 = vadd.f32 %v25, %v1137
  %v1140 = vadd.f32 %v26, %v1138
  %v1141 = vld [vmem:[%s2] sm:$0xff]
  %v1142 = vld [vmem:[%s2 + $0x8] sm:$0xff]
  %v1143 = vadd.f32 %v1139, %v1141
  %v1144 = vadd.f32 %v1140, %v1142
  %1145 = vst.msk [vmem:[%s6] sm:$0xff] %vm31, %v1143
  %1146 = vst.msk [vmem:[%s6 + $0x8] sm:$0xff] %vm31, %v1144
  // Predicated region
  $region26: #{light_recurrent_unit_block.9} parent=0 // pred_check
    _
  $region27: #{light_recurrent_unit_block.9} parent=0 // pred_check_branch
    %1148 = sbr.rel (0) target = $region29
  $region28: #{light_recurrent_unit_block.9} parent=0 // pred_region
    _
  $region29: #{light_recurrent_unit_block.9} parent=0 // pred_fallthru
    _
  // Predicated region
  $region30: #{light_recurrent_unit_block.9} parent=0 // pred_check
    _
  $region31: #{light_recurrent_unit_block.9} parent=0 // pred_check_branch
    %1150 = sbr.rel (0) target = $region33
  $region32: #{light_recurrent_unit_block.9} parent=0 // pred_region
    _
  $region33: #{light_recurrent_unit_block.9} parent=0 // pred_fallthru
    _

// kernel: light_recurrent_unit_block.6
$region0: #{light_recurrent_unit_block.6}
  #allocation0 [shape = 'u32[]', space=smem, size = 0x4, offset = 0x4, fixed_abs, tag = 'smem constant byte address 0x4 - core index']
  #allocation1 [shape = 'u32[144,128]{1,0:T(1,128)}', space=vmem, size = 0x12000, scoped, tag = 'internal scratch']
  #allocation2 [shape = 'f32[2,32]{1,0:T(2,128)}', space=vmem, size = 0x400, scoped, tag = 'scratch operand']
  %s0 = inlined_call_operand.vmem [shape: f32[8,2,32], index: 0, kind: input, shape index: {}]
  %s1 = inlined_call_operand.vmem [shape: f32[8,2,32], index: 1, kind: input, shape index: {}]
  %s2 = inlined_call_operand.vmem [shape: f32[32,32], index: 2, kind: input, shape index: {}]
  %s3 = inlined_call_operand.vmem [shape: f32[1,32], index: 3, kind: input, shape index: {}]
  %s4 = inlined_call_operand.vmem [shape: f32[8,2,32], index: 4, kind: output, shape index: {}]
  %s5 = sld [smem:[#allocation0]]
  $region30: #{light_recurrent_unit_block.6} parent=0
    _
  %s7 = ssub.s32 1, %s5
  %s8 = scalar_select 0, %s7, %s5
  // Predicated region
  $region2: #{light_recurrent_unit_block.6} parent=0 // pred_check
    _
  $region3: #{light_recurrent_unit_block.6} parent=0 // pred_check_branch
    %10 = sbr.rel (0) target = $region5
  $region4: #{light_recurrent_unit_block.6} parent=0 // pred_region
    _
  $region5: #{light_recurrent_unit_block.6} parent=0 // pred_fallthru
    _
  // Predicated region
  $region6: #{light_recurrent_unit_block.6} parent=0 // pred_check
    _
  $region7: #{light_recurrent_unit_block.6} parent=0 // pred_check_branch
    %12 = sbr.rel (0) target = $region9
  $region8: #{light_recurrent_unit_block.6} parent=0 // pred_region
    _
  $region9: #{light_recurrent_unit_block.6} parent=0 // pred_fallthru
    _
  // Predicated region
  $region10: #{light_recurrent_unit_block.6} parent=0 // pred_check
    _
  $region11: #{light_recurrent_unit_block.6} parent=0 // pred_check_branch
    %14 = sbr.rel (0) target = $region13
  $region12: #{light_recurrent_unit_block.6} parent=0 // pred_region
    _
  $region13: #{light_recurrent_unit_block.6} parent=0 // pred_fallthru
    _
  // Predicated region
  $region14: #{light_recurrent_unit_block.6} parent=0 // pred_check
    _
  $region15: #{light_recurrent_unit_block.6} parent=0 // pred_check_branch
    %16 = sbr.rel (0) target = $region17
  $region16: #{light_recurrent_unit_block.6} parent=0 // pred_region
    _
  $region17: #{light_recurrent_unit_block.6} parent=0 // pred_fallthru
    _
  %p17 = scmp.eq.s32.totalorder 0, 0
  // Predicated region
  $region18: #{light_recurrent_unit_block.6} parent=0 // pred_check
    %p18 = pneg %p17
  $region19: #{light_recurrent_unit_block.6} parent=0 // pred_check_branch
    %20 = sbr.rel (%p18) target = $region21
  $region20: #{light_recurrent_unit_block.6} parent=0 // pred_region
    %v21 = vld [vmem:[%s3] sm:$0x1]
    %v23 = vlaneseq
    %v24 = vshrl.u32 %v23, 7
    %v25 = vsub.s32 0, %v24
    %v26 = vrot.slane %v21, %v25
    %vm28 = vcmask 254976
    %29 = vst.msk [vmem:[#allocation2] sm:$0x3] %vm28, %v26
  $region21: #{light_recurrent_unit_block.6} parent=0 // pred_fallthru
    _
  %v30 = vld [vmem:[%s2] sm:$0xff]
  %v31 = vld [vmem:[%s2 + $0x8] sm:$0xff]
  %v32 = vld [vmem:[%s2 + $0x10] sm:$0xff]
  %v33 = vld [vmem:[%s2 + $0x18] sm:$0xff]
  %v34 = vld [vmem:[#allocation2] sm:$0x3]
  %v35 = vld [vmem:[%s1] sm:$0x3]
  %vm36 = vcmask 261120
  %v38 = vsel %vm36, %v34, 0
  %40 = vmatprep.subr.mxu0 0.0
  %41 = vmatpush1.msra.mxu0 0.0
  %42 = vmatprep.subr.mxu0 0.0
  %43 = vmatpush1.msra.mxu0 0.0
  %44 = vmatprep.subr.mxu0 0.0
  %45 = vmatpush1.msra.mxu0 0.0
  %46 = vmatprep.subr.mxu0 0.0
  %47 = vmatpush1.msra.mxu0 0.0
  %48 = vmatprep.subr.mxu0 0.0
  %49 = vmatpush1.msra.mxu0 0.0
  %50 = vmatprep.subr.mxu0 0.0
  %51 = vmatpush1.msra.mxu0 0.0
  %52 = vmatprep.subr.mxu0 0.0
  %53 = vmatpush1.msra.mxu0 0.0
  %54 = vmatprep.subr.mxu0 0.0
  %55 = vmatpush1.msra.mxu0 0.0
  %56 = vmatprep.subr.mxu0 0.0
  %57 = vmatpush1.msra.mxu0 0.0
  %58 = vmatprep.subr.mxu0 0.0
  %59 = vmatpush1.msra.mxu0 0.0
  %60 = vmatprep.subr.mxu0 0.0
  %61 = vmatpush1.msra.mxu0 0.0
  %62 = vmatprep.subr.mxu0 0.0
  %63 = vmatpush1.msra.mxu0 0.0
  %64 = vmatprep.subr.mxu0 0.0
  %v65 = vand.u32 %v33, 4294901760
  %66 = vmatpush1.msra.mxu0 %v65
  %67 = vmatprep.subr.mxu0 0.0
  %v68 = vand.u32 %v32, 4294901760
  %69 = vmatpush1.msra.mxu0 %v68
  %70 = vmatprep.subr.mxu0 0.0
  %v71 = vand.u32 %v31, 4294901760
  %72 = vmatpush1.msra.mxu0 %v71
  %73 = vmatprep.subr.mxu0 0.0
  %v74 = vand.u32 %v30, 4294901760
  %75 = vmatpush1.msra.mxu0 %v74
  %76 = vmatprep.subr.mxu0 0.0
  %77 = vmatpush2.msra.mxu0 0.0
  %78 = vmatprep.subr.mxu0 0.0
  %79 = vmatpush2.msra.mxu0 0.0
  %80 = vmatprep.subr.mxu0 0.0
  %81 = vmatpush2.msra.mxu0 0.0
  %82 = vmatprep.subr.mxu0 0.0
  %83 = vmatpush2.msra.mxu0 0.0
  %84 = vmatprep.subr.mxu0 0.0
  %85 = vmatpush2.msra.mxu0 0.0
  %86 = vmatprep.subr.mxu0 0.0
  %87 = vmatpush2.msra.mxu0 0.0
  %88 = vmatprep.subr.mxu0 0.0
  %89 = vmatpush2.msra.mxu0 0.0
  %90 = vmatprep.subr.mxu0 0.0
  %91 = vmatpush2.msra.mxu0 0.0
  %92 = vmatprep.subr.mxu0 0.0
  %93 = vmatpush2.msra.mxu0 0.0
  %94 = vmatprep.subr.mxu0 0.0
  %95 = vmatpush2.msra.mxu0 0.0
  %96 = vmatprep.subr.mxu0 0.0
  %97 = vmatpush2.msra.mxu0 0.0
  %98 = vmatprep.subr.mxu0 0.0
  %99 = vmatpush2.msra.mxu0 0.0
  %100 = vmatprep.subr.mxu0 0.0
  %101 = vmatpush2.msra.mxu0 0.0
  %102 = vmatprep.subr.mxu0 0.0
  %103 = vmatpush2.msra.mxu0 0.0
  %104 = vmatprep.subr.mxu0 0.0
  %105 = vmatpush2.msra.mxu0 0.0
  %106 = vmatprep.subr.mxu0 0.0
  %107 = vmatpush2.msra.mxu0 0.0
  %108 = vmatprep.mubr.f32.mxu0 0.0
  %v109 = vand.u32 %v38, 4294901760
  %v110 = vsub.f32 %v38, %v109
  %v111 = vand.u32 %v110, 4294901760
  %v112 = vsub.f32 %v110, %v111
  %v113 = vand.u32 %v112, 4294901760
  %114 = vmatmul.mubr.f32.gmra.mxu0 %v113
  %v115 = vpop.f32.mrf.mxu0
  %v116 = vadd.f32 %v35, %v115
  %v117 = vpop.f32.mrf.mxu0
  %118 = vdwg.mxu0
  %119 = vmatprep.subr.mxu0 0.0
  %120 = vmatpush1.msra.mxu0 0.0
  %121 = vmatprep.subr.mxu0 0.0
  %122 = vmatpush1.msra.mxu0 0.0
  %123 = vmatprep.subr.mxu0 0.0
  %124 = vmatpush1.msra.mxu0 0.0
  %125 = vmatprep.subr.mxu0 0.0
  %126 = vmatpush1.msra.mxu0 0.0
  %127 = vmatprep.subr.mxu0 0.0
  %128 = vmatpush1.msra.mxu0 0.0
  %129 = vmatprep.subr.mxu0 0.0
  %130 = vmatpush1.msra.mxu0 0.0
  %131 = vmatprep.subr.mxu0 0.0
  %132 = vmatpush1.msra.mxu0 0.0
  %133 = vmatprep.subr.mxu0 0.0
  %134 = vmatpush1.msra.mxu0 0.0
  %135 = vmatprep.subr.mxu0 0.0
  %136 = vmatpush1.msra.mxu0 0.0
  %137 = vmatprep.subr.mxu0 0.0
  %138 = vmatpush1.msra.mxu0 0.0
  %139 = vmatprep.subr.mxu0 0.0
  %140 = vmatpush1.msra.mxu0 0.0
  %141 = vmatprep.subr.mxu0 0.0
  %142 = vmatpush1.msra.mxu0 0.0
  %143 = vmatprep.subr.mxu0 0.0
  %v144 = vand.u32 %v33, 4294901760
  %v145 = vsub.f32 %v33, %v144
  %v146 = vand.u32 %v145, 4294901760
  %v147 = vsub.f32 %v145, %v146
  %v148 = vand.u32 %v147, 4294901760
  %149 = vmatpush1.msra.mxu0 %v148
  %150 = vmatprep.subr.mxu0 0.0
  %v151 = vand.u32 %v32, 4294901760
  %v152 = vsub.f32 %v32, %v151
  %v153 = vand.u32 %v152, 4294901760
  %v154 = vsub.f32 %v152, %v153
  %v155 = vand.u32 %v154, 4294901760
  %156 = vmatpush1.msra.mxu0 %v155
  %157 = vmatprep.subr.mxu0 0.0
  %v158 = vand.u32 %v31, 4294901760
  %v159 = vsub.f32 %v31, %v158
  %v160 = vand.u32 %v159, 4294901760
  %v161 = vsub.f32 %v159, %v160
  %v162 = vand.u32 %v161, 4294901760
  %163 = vmatpush1.msra.mxu0 %v162
  %164 = vmatprep.subr.mxu0 0.0
  %v165 = vand.u32 %v30, 4294901760
  %v166 = vsub.f32 %v30, %v165
  %v167 = vand.u32 %v166, 4294901760
  %v168 = vsub.f32 %v166, %v167
  %v169 = vand.u32 %v168, 4294901760
  %170 = vmatpush1.msra.mxu0 %v169
  %171 = vmatprep.subr.mxu0 0.0
  %172 = vmatpush2.msra.mxu0 0.0
  %173 = vmatprep.subr.mxu0 0.0
  %174 = vmatpush2.msra.mxu0 0.0
  %175 = vmatprep.subr.mxu0 0.0
  %176 = vmatpush2.msra.mxu0 0.0
  %177 = vmatprep.subr.mxu0 0.0
  %178 = vmatpush2.msra.mxu0 0.0
  %179 = vmatprep.subr.mxu0 0.0
  %180 = vmatpush2.msra.mxu0 0.0
  %181 = vmatprep.subr.mxu0 0.0
  %182 = vmatpush2.msra.mxu0 0.0
  %183 = vmatprep.subr.mxu0 0.0
  %184 = vmatpush2.msra.mxu0 0.0
  %185 = vmatprep.subr.mxu0 0.0
  %186 = vmatpush2.msra.mxu0 0.0
  %187 = vmatprep.subr.mxu0 0.0
  %188 = vmatpush2.msra.mxu0 0.0
  %189 = vmatprep.subr.mxu0 0.0
  %190 = vmatpush2.msra.mxu0 0.0
  %191 = vmatprep.subr.mxu0 0.0
  %192 = vmatpush2.msra.mxu0 0.0
  %193 = vmatprep.subr.mxu0 0.0
  %194 = vmatpush2.msra.mxu0 0.0
  %195 = vmatprep.subr.mxu0 0.0
  %196 = vmatpush2.msra.mxu0 0.0
  %197 = vmatprep.subr.mxu0 0.0
  %198 = vmatpush2.msra.mxu0 0.0
  %199 = vmatprep.subr.mxu0 0.0
  %200 = vmatpush2.msra.mxu0 0.0
  %201 = vmatprep.subr.mxu0 0.0
  %202 = vmatpush2.msra.mxu0 0.0
  %203 = vmatprep.mubr.f32.mxu0 0.0
  %v204 = vand.u32 %v38, 4294901760
  %205 = vmatmul.mubr.f32.gmra.mxu0 %v204
  %v206 = vpop.f32.mrf.mxu0
  %v207 = vadd.f32 %v116, %v206
  %v208 = vpop.f32.mrf.mxu0
  %209 = vdwg.mxu0
  %210 = vmatprep.subr.mxu0 0.0
  %211 = vmatpush1.msra.mxu0 0.0
  %212 = vmatprep.subr.mxu0 0.0
  %213 = vmatpush1.msra.mxu0 0.0
  %214 = vmatprep.subr.mxu0 0.0
  %215 = vmatpush1.msra.mxu0 0.0
  %216 = vmatprep.subr.mxu0 0.0
  %217 = vmatpush1.msra.mxu0 0.0
  %218 = vmatprep.subr.mxu0 0.0
  %219 = vmatpush1.msra.mxu0 0.0
  %220 = vmatprep.subr.mxu0 0.0
  %221 = vmatpush1.msra.mxu0 0.0
  %222 = vmatprep.subr.mxu0 0.0
  %223 = vmatpush1.msra.mxu0 0.0
  %224 = vmatprep.subr.mxu0 0.0
  %225 = vmatpush1.msra.mxu0 0.0
  %226 = vmatprep.subr.mxu0 0.0
  %227 = vmatpush1.msra.mxu0 0.0
  %228 = vmatprep.subr.mxu0 0.0
  %229 = vmatpush1.msra.mxu0 0.0
  %230 = vmatprep.subr.mxu0 0.0
  %231 = vmatpush1.msra.mxu0 0.0
  %232 = vmatprep.subr.mxu0 0.0
  %233 = vmatpush1.msra.mxu0 0.0
  %234 = vmatprep.subr.mxu0 0.0
  %v235 = vand.u32 %v33, 4294901760
  %v236 = vsub.f32 %v33, %v235
  %237 = vmatpush1.msra.mxu0 %v236
  %238 = vmatprep.subr.mxu0 0.0
  %v239 = vand.u32 %v32, 4294901760
  %v240 = vsub.f32 %v32, %v239
  %241 = vmatpush1.msra.mxu0 %v240
  %242 = vmatprep.subr.mxu0 0.0
  %v243 = vand.u32 %v31, 4294901760
  %v244 = vsub.f32 %v31, %v243
  %245 = vmatpush1.msra.mxu0 %v244
  %246 = vmatprep.subr.mxu0 0.0
  %v247 = vand.u32 %v30, 4294901760
  %v248 = vsub.f32 %v30, %v247
  %249 = vmatpush1.msra.mxu0 %v248
  %250 = vmatprep.subr.mxu0 0.0
  %251 = vmatpush2.msra.mxu0 0.0
  %252 = vmatprep.subr.mxu0 0.0
  %253 = vmatpush2.msra.mxu0 0.0
  %254 = vmatprep.subr.mxu0 0.0
  %255 = vmatpush2.msra.mxu0 0.0
  %256 = vmatprep.subr.mxu0 0.0
  %257 = vmatpush2.msra.mxu0 0.0
  %258 = vmatprep.subr.mxu0 0.0
  %259 = vmatpush2.msra.mxu0 0.0
  %260 = vmatprep.subr.mxu0 0.0
  %261 = vmatpush2.msra.mxu0 0.0
  %262 = vmatprep.subr.mxu0 0.0
  %263 = vmatpush2.msra.mxu0 0.0
  %264 = vmatprep.subr.mxu0 0.0
  %265 = vmatpush2.msra.mxu0 0.0
  %266 = vmatprep.subr.mxu0 0.0
  %267 = vmatpush2.msra.mxu0 0.0
  %268 = vmatprep.subr.mxu0 0.0
  %269 = vmatpush2.msra.mxu0 0.0
  %270 = vmatprep.subr.mxu0 0.0
  %271 = vmatpush2.msra.mxu0 0.0
  %272 = vmatprep.subr.mxu0 0.0
  %273 = vmatpush2.msra.mxu0 0.0
  %274 = vmatprep.subr.mxu0 0.0
  %275 = vmatpush2.msra.mxu0 0.0
  %276 = vmatprep.subr.mxu0 0.0
  %277 = vmatpush2.msra.mxu0 0.0
  %278 = vmatprep.subr.mxu0 0.0
  %279 = vmatpush2.msra.mxu0 0.0
  %280 = vmatprep.subr.mxu0 0.0
  %281 = vmatpush2.msra.mxu0 0.0
  %282 = vmatprep.mubr.f32.mxu0 0.0
  %v283 = vand.u32 %v38, 4294901760
  %v284 = vsub.f32 %v38, %v283
  %285 = vmatmul.mubr.f32.gmra.mxu0 %v284
  %v286 = vpop.f32.mrf.mxu0
  %v287 = vadd.f32 %v207, %v286
  %v288 = vpop.f32.mrf.mxu0
  %289 = vdwg.mxu0
  %290 = vmatprep.subr.mxu0 0.0
  %291 = vmatpush1.msra.mxu0 0.0
  %292 = vmatprep.subr.mxu0 0.0
  %293 = vmatpush1.msra.mxu0 0.0
  %294 = vmatprep.subr.mxu0 0.0
  %295 = vmatpush1.msra.mxu0 0.0
  %296 = vmatprep.subr.mxu0 0.0
  %297 = vmatpush1.msra.mxu0 0.0
  %298 = vmatprep.subr.mxu0 0.0
  %299 = vmatpush1.msra.mxu0 0.0
  %300 = vmatprep.subr.mxu0 0.0
  %301 = vmatpush1.msra.mxu0 0.0
  %302 = vmatprep.subr.mxu0 0.0
  %303 = vmatpush1.msra.mxu0 0.0
  %304 = vmatprep.subr.mxu0 0.0
  %305 = vmatpush1.msra.mxu0 0.0
  %306 = vmatprep.subr.mxu0 0.0
  %307 = vmatpush1.msra.mxu0 0.0
  %308 = vmatprep.subr.mxu0 0.0
  %309 = vmatpush1.msra.mxu0 0.0
  %310 = vmatprep.subr.mxu0 0.0
  %311 = vmatpush1.msra.mxu0 0.0
  %312 = vmatprep.subr.mxu0 0.0
  %313 = vmatpush1.msra.mxu0 0.0
  %314 = vmatprep.subr.mxu0 0.0
  %v315 = vand.u32 %v33, 4294901760
  %316 = vmatpush1.msra.mxu0 %v315
  %317 = vmatprep.subr.mxu0 0.0
  %v318 = vand.u32 %v32, 4294901760
  %319 = vmatpush1.msra.mxu0 %v318
  %320 = vmatprep.subr.mxu0 0.0
  %v321 = vand.u32 %v31, 4294901760
  %322 = vmatpush1.msra.mxu0 %v321
  %323 = vmatprep.subr.mxu0 0.0
  %v324 = vand.u32 %v30, 4294901760
  %325 = vmatpush1.msra.mxu0 %v324
  %326 = vmatprep.subr.mxu0 0.0
  %327 = vmatpush2.msra.mxu0 0.0
  %328 = vmatprep.subr.mxu0 0.0
  %329 = vmatpush2.msra.mxu0 0.0
  %330 = vmatprep.subr.mxu0 0.0
  %331 = vmatpush2.msra.mxu0 0.0
  %332 = vmatprep.subr.mxu0 0.0
  %333 = vmatpush2.msra.mxu0 0.0
  %334 = vmatprep.subr.mxu0 0.0
  %335 = vmatpush2.msra.mxu0 0.0
  %336 = vmatprep.subr.mxu0 0.0
  %337 = vmatpush2.msra.mxu0 0.0
  %338 = vmatprep.subr.mxu0 0.0
  %339 = vmatpush2.msra.mxu0 0.0
  %340 = vmatprep.subr.mxu0 0.0
  %341 = vmatpush2.msra.mxu0 0.0
  %342 = vmatprep.subr.mxu0 0.0
  %343 = vmatpush2.msra.mxu0 0.0
  %344 = vmatprep.subr.mxu0 0.0
  %345 = vmatpush2.msra.mxu0 0.0
  %346 = vmatprep.subr.mxu0 0.0
  %347 = vmatpush2.msra.mxu0 0.0
  %348 = vmatprep.subr.mxu0 0.0
  %349 = vmatpush2.msra.mxu0 0.0
  %350 = vmatprep.subr.mxu0 0.0
  %351 = vmatpush2.msra.mxu0 0.0
  %352 = vmatprep.subr.mxu0 0.0
  %353 = vmatpush2.msra.mxu0 0.0
  %354 = vmatprep.subr.mxu0 0.0
  %355 = vmatpush2.msra.mxu0 0.0
  %356 = vmatprep.subr.mxu0 0.0
  %357 = vmatpush2.msra.mxu0 0.0
  %358 = vmatprep.mubr.f32.mxu0 0.0
  %v359 = vand.u32 %v38, 4294901760
  %v360 = vsub.f32 %v38, %v359
  %v361 = vand.u32 %v360, 4294901760
  %362 = vmatmul.mubr.f32.gmra.mxu0 %v361
  %v363 = vpop.f32.mrf.mxu0
  %v364 = vadd.f32 %v287, %v363
  %v365 = vpop.f32.mrf.mxu0
  %366 = vdwg.mxu0
  %367 = vmatprep.subr.mxu0 0.0
  %368 = vmatpush1.msra.mxu0 0.0
  %369 = vmatprep.subr.mxu0 0.0
  %370 = vmatpush1.msra.mxu0 0.0
  %371 = vmatprep.subr.mxu0 0.0
  %372 = vmatpush1.msra.mxu0 0.0
  %373 = vmatprep.subr.mxu0 0.0
  %374 = vmatpush1.msra.mxu0 0.0
  %375 = vmatprep.subr.mxu0 0.0
  %376 = vmatpush1.msra.mxu0 0.0
  %377 = vmatprep.subr.mxu0 0.0
  %378 = vmatpush1.msra.mxu0 0.0
  %379 = vmatprep.subr.mxu0 0.0
  %380 = vmatpush1.msra.mxu0 0.0
  %381 = vmatprep.subr.mxu0 0.0
  %382 = vmatpush1.msra.mxu0 0.0
  %383 = vmatprep.subr.mxu0 0.0
  %384 = vmatpush1.msra.mxu0 0.0
  %385 = vmatprep.subr.mxu0 0.0
  %386 = vmatpush1.msra.mxu0 0.0
  %387 = vmatprep.subr.mxu0 0.0
  %388 = vmatpush1.msra.mxu0 0.0
  %389 = vmatprep.subr.mxu0 0.0
  %390 = vmatpush1.msra.mxu0 0.0
  %391 = vmatprep.subr.mxu0 0.0
  %v392 = vand.u32 %v33, 4294901760
  %v393 = vsub.f32 %v33, %v392
  %v394 = vand.u32 %v393, 4294901760
  %395 = vmatpush1.msra.mxu0 %v394
  %396 = vmatprep.subr.mxu0 0.0
  %v397 = vand.u32 %v32, 4294901760
  %v398 = vsub.f32 %v32, %v397
  %v399 = vand.u32 %v398, 4294901760
  %400 = vmatpush1.msra.mxu0 %v399
  %401 = vmatprep.subr.mxu0 0.0
  %v402 = vand.u32 %v31, 4294901760
  %v403 = vsub.f32 %v31, %v402
  %v404 = vand.u32 %v403, 4294901760
  %405 = vmatpush1.msra.mxu0 %v404
  %406 = vmatprep.subr.mxu0 0.0
  %v407 = vand.u32 %v30, 4294901760
  %v408 = vsub.f32 %v30, %v407
  %v409 = vand.u32 %v408, 4294901760
  %410 = vmatpush1.msra.mxu0 %v409
  %411 = vmatprep.subr.mxu0 0.0
  %412 = vmatpush2.msra.mxu0 0.0
  %413 = vmatprep.subr.mxu0 0.0
  %414 = vmatpush2.msra.mxu0 0.0
  %415 = vmatprep.subr.mxu0 0.0
  %416 = vmatpush2.msra.mxu0 0.0
  %417 = vmatprep.subr.mxu0 0.0
  %418 = vmatpush2.msra.mxu0 0.0
  %419 = vmatprep.subr.mxu0 0.0
  %420 = vmatpush2.msra.mxu0 0.0
  %421 = vmatprep.subr.mxu0 0.0
  %422 = vmatpush2.msra.mxu0 0.0
  %423 = vmatprep.subr.mxu0 0.0
  %424 = vmatpush2.msra.mxu0 0.0
  %425 = vmatprep.subr.mxu0 0.0
  %426 = vmatpush2.msra.mxu0 0.0
  %427 = vmatprep.subr.mxu0 0.0
  %428 = vmatpush2.msra.mxu0 0.0
  %429 = vmatprep.subr.mxu0 0.0
  %430 = vmatpush2.msra.mxu0 0.0
  %431 = vmatprep.subr.mxu0 0.0
  %432 = vmatpush2.msra.mxu0 0.0
  %433 = vmatprep.subr.mxu0 0.0
  %434 = vmatpush2.msra.mxu0 0.0
  %435 = vmatprep.subr.mxu0 0.0
  %436 = vmatpush2.msra.mxu0 0.0
  %437 = vmatprep.subr.mxu0 0.0
  %438 = vmatpush2.msra.mxu0 0.0
  %439 = vmatprep.subr.mxu0 0.0
  %440 = vmatpush2.msra.mxu0 0.0
  %441 = vmatprep.subr.mxu0 0.0
  %442 = vmatpush2.msra.mxu0 0.0
  %443 = vmatprep.mubr.f32.mxu0 0.0
  %v444 = vand.u32 %v38, 4294901760
  %445 = vmatmul.mubr.f32.gmra.mxu0 %v444
  %v446 = vpop.f32.mrf.mxu0
  %v447 = vadd.f32 %v364, %v446
  %v448 = vpop.f32.mrf.mxu0
  %449 = vdwg.mxu0
  %450 = vmatprep.subr.mxu0 0.0
  %451 = vmatpush1.msra.mxu0 0.0
  %452 = vmatprep.subr.mxu0 0.0
  %453 = vmatpush1.msra.mxu0 0.0
  %454 = vmatprep.subr.mxu0 0.0
  %455 = vmatpush1.msra.mxu0 0.0
  %456 = vmatprep.subr.mxu0 0.0
  %457 = vmatpush1.msra.mxu0 0.0
  %458 = vmatprep.subr.mxu0 0.0
  %459 = vmatpush1.msra.mxu0 0.0
  %460 = vmatprep.subr.mxu0 0.0
  %461 = vmatpush1.msra.mxu0 0.0
  %462 = vmatprep.subr.mxu0 0.0
  %463 = vmatpush1.msra.mxu0 0.0
  %464 = vmatprep.subr.mxu0 0.0
  %465 = vmatpush1.msra.mxu0 0.0
  %466 = vmatprep.subr.mxu0 0.0
  %467 = vmatpush1.msra.mxu0 0.0
  %468 = vmatprep.subr.mxu0 0.0
  %469 = vmatpush1.msra.mxu0 0.0
  %470 = vmatprep.subr.mxu0 0.0
  %471 = vmatpush1.msra.mxu0 0.0
  %472 = vmatprep.subr.mxu0 0.0
  %473 = vmatpush1.msra.mxu0 0.0
  %474 = vmatprep.subr.mxu0 0.0
  %v475 = vand.u32 %v33, 4294901760
  %476 = vmatpush1.msra.mxu0 %v475
  %477 = vmatprep.subr.mxu0 0.0
  %v478 = vand.u32 %v32, 4294901760
  %479 = vmatpush1.msra.mxu0 %v478
  %480 = vmatprep.subr.mxu0 0.0
  %v481 = vand.u32 %v31, 4294901760
  %482 = vmatpush1.msra.mxu0 %v481
  %483 = vmatprep.subr.mxu0 0.0
  %v484 = vand.u32 %v30, 4294901760
  %485 = vmatpush1.msra.mxu0 %v484
  %486 = vmatprep.subr.mxu0 0.0
  %487 = vmatpush2.msra.mxu0 0.0
  %488 = vmatprep.subr.mxu0 0.0
  %489 = vmatpush2.msra.mxu0 0.0
  %490 = vmatprep.subr.mxu0 0.0
  %491 = vmatpush2.msra.mxu0 0.0
  %492 = vmatprep.subr.mxu0 0.0
  %493 = vmatpush2.msra.mxu0 0.0
  %494 = vmatprep.subr.mxu0 0.0
  %495 = vmatpush2.msra.mxu0 0.0
  %496 = vmatprep.subr.mxu0 0.0
  %497 = vmatpush2.msra.mxu0 0.0
  %498 = vmatprep.subr.mxu0 0.0
  %499 = vmatpush2.msra.mxu0 0.0
  %500 = vmatprep.subr.mxu0 0.0
  %501 = vmatpush2.msra.mxu0 0.0
  %502 = vmatprep.subr.mxu0 0.0
  %503 = vmatpush2.msra.mxu0 0.0
  %504 = vmatprep.subr.mxu0 0.0
  %505 = vmatpush2.msra.mxu0 0.0
  %506 = vmatprep.subr.mxu0 0.0
  %507 = vmatpush2.msra.mxu0 0.0
  %508 = vmatprep.subr.mxu0 0.0
  %509 = vmatpush2.msra.mxu0 0.0
  %510 = vmatprep.subr.mxu0 0.0
  %511 = vmatpush2.msra.mxu0 0.0
  %512 = vmatprep.subr.mxu0 0.0
  %513 = vmatpush2.msra.mxu0 0.0
  %514 = vmatprep.subr.mxu0 0.0
  %515 = vmatpush2.msra.mxu0 0.0
  %516 = vmatprep.subr.mxu0 0.0
  %517 = vmatpush2.msra.mxu0 0.0
  %518 = vmatprep.mubr.f32.mxu0 0.0
  %v519 = vand.u32 %v38, 4294901760
  %520 = vmatmul.mubr.f32.gmra.mxu0 %v519
  %v521 = vpop.f32.mrf.mxu0
  %v522 = vadd.f32 %v447, %v521
  %v523 = vpop.f32.mrf.mxu0
  %524 = vdwg.mxu0
  %v525 = vxor.u32 %v522, 2147483648
  %v526 = vmul.f32 %v525, 1.442695
  %v527 = vpow.pop %v526
  %v528 = vadd.f32 %v527, 1.0
  %v529 = vrcp.pop %v528
  %v530 = vmul.f32 1.0, %v529
  %v531 = vld [vmem:[%s0] sm:$0x3]
  %v532 = vsub.f32 %v531, %v34
  %v533 = vmul.f32 %v530, %v532
  %v534 = vadd.f32 %v34, %v533
  %vm535 = vcmask 254976
  %536 = vst.msk [vmem:[#allocation2] sm:$0x3] %vm535, %v534
  %537 = vst.msk [vmem:[%s4] sm:$0x3] %vm535, %v534
  %v538 = vld [vmem:[#allocation2] sm:$0x3]
  %s539 = scalar_lea.vmem %s1, 2
  %v540 = vld [vmem:[%s539] sm:$0x3]
  %v542 = vsel %vm36, %v538, 0
  %544 = vmatprep.subr.mxu0 0.0
  %545 = vmatpush1.msra.mxu0 0.0
  %546 = vmatprep.subr.mxu0 0.0
  %547 = vmatpush1.msra.mxu0 0.0
  %548 = vmatprep.subr.mxu0 0.0
  %549 = vmatpush1.msra.mxu0 0.0
  %550 = vmatprep.subr.mxu0 0.0
  %551 = vmatpush1.msra.mxu0 0.0
  %552 = vmatprep.subr.mxu0 0.0
  %553 = vmatpush1.msra.mxu0 0.0
  %554 = vmatprep.subr.mxu0 0.0
  %555 = vmatpush1.msra.mxu0 0.0
  %556 = vmatprep.subr.mxu0 0.0
  %557 = vmatpush1.msra.mxu0 0.0
  %558 = vmatprep.subr.mxu0 0.0
  %559 = vmatpush1.msra.mxu0 0.0
  %560 = vmatprep.subr.mxu0 0.0
  %561 = vmatpush1.msra.mxu0 0.0
  %562 = vmatprep.subr.mxu0 0.0
  %563 = vmatpush1.msra.mxu0 0.0
  %564 = vmatprep.subr.mxu0 0.0
  %565 = vmatpush1.msra.mxu0 0.0
  %566 = vmatprep.subr.mxu0 0.0
  %567 = vmatpush1.msra.mxu0 0.0
  %568 = vmatprep.subr.mxu0 0.0
  %v569 = vand.u32 %v33, 4294901760
  %570 = vmatpush1.msra.mxu0 %v569
  %571 = vmatprep.subr.mxu0 0.0
  %v572 = vand.u32 %v32, 4294901760
  %573 = vmatpush1.msra.mxu0 %v572
  %574 = vmatprep.subr.mxu0 0.0
  %v575 = vand.u32 %v31, 4294901760
  %576 = vmatpush1.msra.mxu0 %v575
  %577 = vmatprep.subr.mxu0 0.0
  %v578 = vand.u32 %v30, 4294901760
  %579 = vmatpush1.msra.mxu0 %v578
  %580 = vmatprep.subr.mxu0 0.0
  %581 = vmatpush2.msra.mxu0 0.0
  %582 = vmatprep.subr.mxu0 0.0
  %583 = vmatpush2.msra.mxu0 0.0
  %584 = vmatprep.subr.mxu0 0.0
  %585 = vmatpush2.msra.mxu0 0.0
  %586 = vmatprep.subr.mxu0 0.0
  %587 = vmatpush2.msra.mxu0 0.0
  %588 = vmatprep.subr.mxu0 0.0
  %589 = vmatpush2.msra.mxu0 0.0
  %590 = vmatprep.subr.mxu0 0.0
  %591 = vmatpush2.msra.mxu0 0.0
  %592 = vmatprep.subr.mxu0 0.0
  %593 = vmatpush2.msra.mxu0 0.0
  %594 = vmatprep.subr.mxu0 0.0
  %595 = vmatpush2.msra.mxu0 0.0
  %596 = vmatprep.subr.mxu0 0.0
  %597 = vmatpush2.msra.mxu0 0.0
  %598 = vmatprep.subr.mxu0 0.0
  %599 = vmatpush2.msra.mxu0 0.0
  %600 = vmatprep.subr.mxu0 0.0
  %601 = vmatpush2.msra.mxu0 0.0
  %602 = vmatprep.subr.mxu0 0.0
  %603 = vmatpush2.msra.mxu0 0.0
  %604 = vmatprep.subr.mxu0 0.0
  %605 = vmatpush2.msra.mxu0 0.0
  %606 = vmatprep.subr.mxu0 0.0
  %607 = vmatpush2.msra.mxu0 0.0
  %608 = vmatprep.subr.mxu0 0.0
  %609 = vmatpush2.msra.mxu0 0.0
  %610 = vmatprep.subr.mxu0 0.0
  %611 = vmatpush2.msra.mxu0 0.0
  %612 = vmatprep.mubr.f32.mxu0 0.0
  %v613 = vand.u32 %v542, 4294901760
  %v614 = vsub.f32 %v542, %v613
  %v615 = vand.u32 %v614, 4294901760
  %v616 = vsub.f32 %v614, %v615
  %v617 = vand.u32 %v616, 4294901760
  %618 = vmatmul.mubr.f32.gmra.mxu0 %v617
  %v619 = vpop.f32.mrf.mxu0
  %v620 = vadd.f32 %v540, %v619
  %v621 = vpop.f32.mrf.mxu0
  %622 = vdwg.mxu0
  %623 = vmatprep.subr.mxu0 0.0
  %624 = vmatpush1.msra.mxu0 0.0
  %625 = vmatprep.subr.mxu0 0.0
  %626 = vmatpush1.msra.mxu0 0.0
  %627 = vmatprep.subr.mxu0 0.0
  %628 = vmatpush1.msra.mxu0 0.0
  %629 = vmatprep.subr.mxu0 0.0
  %630 = vmatpush1.msra.mxu0 0.0
  %631 = vmatprep.subr.mxu0 0.0
  %632 = vmatpush1.msra.mxu0 0.0
  %633 = vmatprep.subr.mxu0 0.0
  %634 = vmatpush1.msra.mxu0 0.0
  %635 = vmatprep.subr.mxu0 0.0
  %636 = vmatpush1.msra.mxu0 0.0
  %637 = vmatprep.subr.mxu0 0.0
  %638 = vmatpush1.msra.mxu0 0.0
  %639 = vmatprep.subr.mxu0 0.0
  %640 = vmatpush1.msra.mxu0 0.0
  %641 = vmatprep.subr.mxu0 0.0
  %642 = vmatpush1.msra.mxu0 0.0
  %643 = vmatprep.subr.mxu0 0.0
  %644 = vmatpush1.msra.mxu0 0.0
  %645 = vmatprep.subr.mxu0 0.0
  %646 = vmatpush1.msra.mxu0 0.0
  %647 = vmatprep.subr.mxu0 0.0
  %v648 = vand.u32 %v33, 4294901760
  %v649 = vsub.f32 %v33, %v648
  %v650 = vand.u32 %v649, 4294901760
  %v651 = vsub.f32 %v649, %v650
  %v652 = vand.u32 %v651, 4294901760
  %653 = vmatpush1.msra.mxu0 %v652
  %654 = vmatprep.subr.mxu0 0.0
  %v655 = vand.u32 %v32, 4294901760
  %v656 = vsub.f32 %v32, %v655
  %v657 = vand.u32 %v656, 4294901760
  %v658 = vsub.f32 %v656, %v657
  %v659 = vand.u32 %v658, 4294901760
  %660 = vmatpush1.msra.mxu0 %v659
  %661 = vmatprep.subr.mxu0 0.0
  %v662 = vand.u32 %v31, 4294901760
  %v663 = vsub.f32 %v31, %v662
  %v664 = vand.u32 %v663, 4294901760
  %v665 = vsub.f32 %v663, %v664
  %v666 = vand.u32 %v665, 4294901760
  %667 = vmatpush1.msra.mxu0 %v666
  %668 = vmatprep.subr.mxu0 0.0
  %v669 = vand.u32 %v30, 4294901760
  %v670 = vsub.f32 %v30, %v669
  %v671 = vand.u32 %v670, 4294901760
  %v672 = vsub.f32 %v670, %v671
  %v673 = vand.u32 %v672, 4294901760
  %674 = vmatpush1.msra.mxu0 %v673
  %675 = vmatprep.subr.mxu0 0.0
  %676 = vmatpush2.msra.mxu0 0.0
  %677 = vmatprep.subr.mxu0 0.0
  %678 = vmatpush2.msra.mxu0 0.0
  %679 = vmatprep.subr.mxu0 0.0
  %680 = vmatpush2.msra.mxu0 0.0
  %681 = vmatprep.subr.mxu0 0.0
  %682 = vmatpush2.msra.mxu0 0.0
  %683 = vmatprep.subr.mxu0 0.0
  %684 = vmatpush2.msra.mxu0 0.0
  %685 = vmatprep.subr.mxu0 0.0
  %686 = vmatpush2.msra.mxu0 0.0
  %687 = vmatprep.subr.mxu0 0.0
  %688 = vmatpush2.msra.mxu0 0.0
  %689 = vmatprep.subr.mxu0 0.0
  %690 = vmatpush2.msra.mxu0 0.0
  %691 = vmatprep.subr.mxu0 0.0
  %692 = vmatpush2.msra.mxu0 0.0
  %693 = vmatprep.subr.mxu0 0.0
  %694 = vmatpush2.msra.mxu0 0.0
  %695 = vmatprep.subr.mxu0 0.0
  %696 = vmatpush2.msra.mxu0 0.0
  %697 = vmatprep.subr.mxu0 0.0
  %698 = vmatpush2.msra.mxu0 0.0
  %699 = vmatprep.subr.mxu0 0.0
  %700 = vmatpush2.msra.mxu0 0.0
  %701 = vmatprep.subr.mxu0 0.0
  %702 = vmatpush2.msra.mxu0 0.0
  %703 = vmatprep.subr.mxu0 0.0
  %704 = vmatpush2.msra.mxu0 0.0
  %705 = vmatprep.subr.mxu0 0.0
  %706 = vmatpush2.msra.mxu0 0.0
  %707 = vmatprep.mubr.f32.mxu0 0.0
  %v708 = vand.u32 %v542, 4294901760
  %709 = vmatmul.mubr.f32.gmra.mxu0 %v708
  %v710 = vpop.f32.mrf.mxu0
  %v711 = vadd.f32 %v620, %v710
  %v712 = vpop.f32.mrf.mxu0
  %713 = vdwg.mxu0
  %714 = vmatprep.subr.mxu0 0.0
  %715 = vmatpush1.msra.mxu0 0.0
  %716 = vmatprep.subr.mxu0 0.0
  %717 = vmatpush1.msra.mxu0 0.0
  %718 = vmatprep.subr.mxu0 0.0
  %719 = vmatpush1.msra.mxu0 0.0
  %720 = vmatprep.subr.mxu0 0.0
  %721 = vmatpush1.msra.mxu0 0.0
  %722 = vmatprep.subr.mxu0 0.0
  %723 = vmatpush1.msra.mxu0 0.0
  %724 = vmatprep.subr.mxu0 0.0
  %725 = vmatpush1.msra.mxu0 0.0
  %726 = vmatprep.subr.mxu0 0.0
  %727 = vmatpush1.msra.mxu0 0.0
  %728 = vmatprep.subr.mxu0 0.0
  %729 = vmatpush1.msra.mxu0 0.0
  %730 = vmatprep.subr.mxu0 0.0
  %731 = vmatpush1.msra.mxu0 0.0
  %732 = vmatprep.subr.mxu0 0.0
  %733 = vmatpush1.msra.mxu0 0.0
  %734 = vmatprep.subr.mxu0 0.0
  %735 = vmatpush1.msra.mxu0 0.0
  %736 = vmatprep.subr.mxu0 0.0
  %737 = vmatpush1.msra.mxu0 0.0
  %738 = vmatprep.subr.mxu0 0.0
  %v739 = vand.u32 %v33, 4294901760
  %v740 = vsub.f32 %v33, %v739
  %741 = vmatpush1.msra.mxu0 %v740
  %742 = vmatprep.subr.mxu0 0.0
  %v743 = vand.u32 %v32, 4294901760
  %v744 = vsub.f32 %v32, %v743
  %745 = vmatpush1.msra.mxu0 %v744
  %746 = vmatprep.subr.mxu0 0.0
  %v747 = vand.u32 %v31, 4294901760
  %v748 = vsub.f32 %v31, %v747
  %749 = vmatpush1.msra.mxu0 %v748
  %750 = vmatprep.subr.mxu0 0.0
  %v751 = vand.u32 %v30, 4294901760
  %v752 = vsub.f32 %v30, %v751
  %753 = vmatpush1.msra.mxu0 %v752
  %754 = vmatprep.subr.mxu0 0.0
  %755 = vmatpush2.msra.mxu0 0.0
  %756 = vmatprep.subr.mxu0 0.0
  %757 = vmatpush2.msra.mxu0 0.0
  %758 = vmatprep.subr.mxu0 0.0
  %759 = vmatpush2.msra.mxu0 0.0
  %760 = vmatprep.subr.mxu0 0.0
  %761 = vmatpush2.msra.mxu0 0.0
  %762 = vmatprep.subr.mxu0 0.0
  %763 = vmatpush2.msra.mxu0 0.0
  %764 = vmatprep.subr.mxu0 0.0
  %765 = vmatpush2.msra.mxu0 0.0
  %766 = vmatprep.subr.mxu0 0.0
  %767 = vmatpush2.msra.mxu0 0.0
  %768 = vmatprep.subr.mxu0 0.0
  %769 = vmatpush2.msra.mxu0 0.0
  %770 = vmatprep.subr.mxu0 0.0
  %771 = vmatpush2.msra.mxu0 0.0
  %772 = vmatprep.subr.mxu0 0.0
  %773 = vmatpush2.msra.mxu0 0.0
  %774 = vmatprep.subr.mxu0 0.0
  %775 = vmatpush2.msra.mxu0 0.0
  %776 = vmatprep.subr.mxu0 0.0
  %777 = vmatpush2.msra.mxu0 0.0
  %778 = vmatprep.subr.mxu0 0.0
  %779 = vmatpush2.msra.mxu0 0.0
  %780 = vmatprep.subr.mxu0 0.0
  %781 = vmatpush2.msra.mxu0 0.0
  %782 = vmatprep.subr.mxu0 0.0
  %783 = vmatpush2.msra.mxu0 0.0
  %784 = vmatprep.subr.mxu0 0.0
  %785 = vmatpush2.msra.mxu0 0.0
  %786 = vmatprep.mubr.f32.mxu0 0.0
  %v787 = vand.u32 %v542, 4294901760
  %v788 = vsub.f32 %v542, %v787
  %789 = vmatmul.mubr.f32.gmra.mxu0 %v788
  %v790 = vpop.f32.mrf.mxu0
  %v791 = vadd.f32 %v711, %v790
  %v792 = vpop.f32.mrf.mxu0
  %793 = vdwg.mxu0
  %794 = vmatprep.subr.mxu0 0.0
  %795 = vmatpush1.msra.mxu0 0.0
  %796 = vmatprep.subr.mxu0 0.0
  %797 = vmatpush1.msra.mxu0 0.0
  %798 = vmatprep.subr.mxu0 0.0
  %799 = vmatpush1.msra.mxu0 0.0
  %800 = vmatprep.subr.mxu0 0.0
  %801 = vmatpush1.msra.mxu0 0.0
  %802 = vmatprep.subr.mxu0 0.0
  %803 = vmatpush1.msra.mxu0 0.0
  %804 = vmatprep.subr.mxu0 0.0
  %805 = vmatpush1.msra.mxu0 0.0
  %806 = vmatprep.subr.mxu0 0.0
  %807 = vmatpush1.msra.mxu0 0.0
  %808 = vmatprep.subr.mxu0 0.0
  %809 = vmatpush1.msra.mxu0 0.0
  %810 = vmatprep.subr.mxu0 0.0
  %811 = vmatpush1.msra.mxu0 0.0
  %812 = vmatprep.subr.mxu0 0.0
  %813 = vmatpush1.msra.mxu0 0.0
  %814 = vmatprep.subr.mxu0 0.0
  %815 = vmatpush1.msra.mxu0 0.0
  %816 = vmatprep.subr.mxu0 0.0
  %817 = vmatpush1.msra.mxu0 0.0
  %818 = vmatprep.subr.mxu0 0.0
  %v819 = vand.u32 %v33, 4294901760
  %820 = vmatpush1.msra.mxu0 %v819
  %821 = vmatprep.subr.mxu0 0.0
  %v822 = vand.u32 %v32, 4294901760
  %823 = vmatpush1.msra.mxu0 %v822
  %824 = vmatprep.subr.mxu0 0.0
  %v825 = vand.u32 %v31, 4294901760
  %826 = vmatpush1.msra.mxu0 %v825
  %827 = vmatprep.subr.mxu0 0.0
  %v828 = vand.u32 %v30, 4294901760
  %829 = vmatpush1.msra.mxu0 %v828
  %830 = vmatprep.subr.mxu0 0.0
  %831 = vmatpush2.msra.mxu0 0.0
  %832 = vmatprep.subr.mxu0 0.0
  %833 = vmatpush2.msra.mxu0 0.0
  %834 = vmatprep.subr.mxu0 0.0
  %835 = vmatpush2.msra.mxu0 0.0
  %836 = vmatprep.subr.mxu0 0.0
  %837 = vmatpush2.msra.mxu0 0.0
  %838 = vmatprep.subr.mxu0 0.0
  %839 = vmatpush2.msra.mxu0 0.0
  %840 = vmatprep.subr.mxu0 0.0
  %841 = vmatpush2.msra.mxu0 0.0
  %842 = vmatprep.subr.mxu0 0.0
  %843 = vmatpush2.msra.mxu0 0.0
  %844 = vmatprep.subr.mxu0 0.0
  %845 = vmatpush2.msra.mxu0 0.0
  %846 = vmatprep.subr.mxu0 0.0
  %847 = vmatpush2.msra.mxu0 0.0
  %848 = vmatprep.subr.mxu0 0.0
  %849 = vmatpush2.msra.mxu0 0.0
  %850 = vmatprep.subr.mxu0 0.0
  %851 = vmatpush2.msra.mxu0 0.0
  %852 = vmatprep.subr.mxu0 0.0
  %853 = vmatpush2.msra.mxu0 0.0
  %854 = vmatprep.subr.mxu0 0.0
  %855 = vmatpush2.msra.mxu0 0.0
  %856 = vmatprep.subr.mxu0 0.0
  %857 = vmatpush2.msra.mxu0 0.0
  %858 = vmatprep.subr.mxu0 0.0
  %859 = vmatpush2.msra.mxu0 0.0
  %860 = vmatprep.subr.mxu0 0.0
  %861 = vmatpush2.msra.mxu0 0.0
  %862 = vmatprep.mubr.f32.mxu0 0.0
  %v863 = vand.u32 %v542, 4294901760
  %v864 = vsub.f32 %v542, %v863
  %v865 = vand.u32 %v864, 4294901760
  %866 = vmatmul.mubr.f32.gmra.mxu0 %v865
  %v867 = vpop.f32.mrf.mxu0
  %v868 = vadd.f32 %v791, %v867
  %v869 = vpop.f32.mrf.mxu0
  %870 = vdwg.mxu0
  %871 = vmatprep.subr.mxu0 0.0
  %872 = vmatpush1.msra.mxu0 0.0
  %873 = vmatprep.subr.mxu0 0.0
  %874 = vmatpush1.msra.mxu0 0.0
  %875 = vmatprep.subr.mxu0 0.0
  %876 = vmatpush1.msra.mxu0 0.0
  %877 = vmatprep.subr.mxu0 0.0
  %878 = vmatpush1.msra.mxu0 0.0
  %879 = vmatprep.subr.mxu0 0.0
  %880 = vmatpush1.msra.mxu0 0.0
  %881 = vmatprep.subr.mxu0 0.0
  %882 = vmatpush1.msra.mxu0 0.0
  %883 = vmatprep.subr.mxu0 0.0
  %884 = vmatpush1.msra.mxu0 0.0
  %885 = vmatprep.subr.mxu0 0.0
  %886 = vmatpush1.msra.mxu0 0.0
  %887 = vmatprep.subr.mxu0 0.0
  %888 = vmatpush1.msra.mxu0 0.0
  %889 = vmatprep.subr.mxu0 0.0
  %890 = vmatpush1.msra.mxu0 0.0
  %891 = vmatprep.subr.mxu0 0.0
  %892 = vmatpush1.msra.mxu0 0.0
  %893 = vmatprep.subr.mxu0 0.0
  %894 = vmatpush1.msra.mxu0 0.0
  %895 = vmatprep.subr.mxu0 0.0
  %v896 = vand.u32 %v33, 4294901760
  %v897 = vsub.f32 %v33, %v896
  %v898 = vand.u32 %v897, 4294901760
  %899 = vmatpush1.msra.mxu0 %v898
  %900 = vmatprep.subr.mxu0 0.0
  %v901 = vand.u32 %v32, 4294901760
  %v902 = vsub.f32 %v32, %v901
  %v903 = vand.u32 %v902, 4294901760
  %904 = vmatpush1.msra.mxu0 %v903
  %905 = vmatprep.subr.mxu0 0.0
  %v906 = vand.u32 %v31, 4294901760
  %v907 = vsub.f32 %v31, %v906
  %v908 = vand.u32 %v907, 4294901760
  %909 = vmatpush1.msra.mxu0 %v908
  %910 = vmatprep.subr.mxu0 0.0
  %v911 = vand.u32 %v30, 4294901760
  %v912 = vsub.f32 %v30, %v911
  %v913 = vand.u32 %v912, 4294901760
  %914 = vmatpush1.msra.mxu0 %v913
  %915 = vmatprep.subr.mxu0 0.0
  %916 = vmatpush2.msra.mxu0 0.0
  %917 = vmatprep.subr.mxu0 0.0
  %918 = vmatpush2.msra.mxu0 0.0
  %919 = vmatprep.subr.mxu0 0.0
  %920 = vmatpush2.msra.mxu0 0.0
  %921 = vmatprep.subr.mxu0 0.0
  %922 = vmatpush2.msra.mxu0 0.0
  %923 = vmatprep.subr.mxu0 0.0
  %924 = vmatpush2.msra.mxu0 0.0
  %925 = vmatprep.subr.mxu0 0.0
  %926 = vmatpush2.msra.mxu0 0.0
  %927 = vmatprep.subr.mxu0 0.0
  %928 = vmatpush2.msra.mxu0 0.0
  %929 = vmatprep.subr.mxu0 0.0
  %930 = vmatpush2.msra.mxu0 0.0
  %931 = vmatprep.subr.mxu0 0.0
  %932 = vmatpush2.msra.mxu0 0.0
  %933 = vmatprep.subr.mxu0 0.0
  %934 = vmatpush2.msra.mxu0 0.0
  %935 = vmatprep.subr.mxu0 0.0
  %936 = vmatpush2.msra.mxu0 0.0
  %937 = vmatprep.subr.mxu0 0.0
  %938 = vmatpush2.msra.mxu0 0.0
  %939 = vmatprep.subr.mxu0 0.0
  %940 = vmatpush2.msra.mxu0 0.0
  %941 = vmatprep.subr.mxu0 0.0
  %942 = vmatpush2.msra.mxu0 0.0
  %943 = vmatprep.subr.mxu0 0.0
  %944 = vmatpush2.msra.mxu0 0.0
  %945 = vmatprep.subr.mxu0 0.0
  %946 = vmatpush2.msra.mxu0 0.0
  %947 = vmatprep.mubr.f32.mxu0 0.0
  %v948 = vand.u32 %v542, 4294901760
  %949 = vmatmul.mubr.f32.gmra.mxu0 %v948
  %v950 = vpop.f32.mrf.mxu0
  %v951 = vadd.f32 %v868, %v950
  %v952 = vpop.f32.mrf.mxu0
  %953 = vdwg.mxu0
  %954 = vmatprep.subr.mxu0 0.0
  %955 = vmatpush1.msra.mxu0 0.0
  %956 = vmatprep.subr.mxu0 0.0
  %957 = vmatpush1.msra.mxu0 0.0
  %958 = vmatprep.subr.mxu0 0.0
  %959 = vmatpush1.msra.mxu0 0.0
  %960 = vmatprep.subr.mxu0 0.0
  %961 = vmatpush1.msra.mxu0 0.0
  %962 = vmatprep.subr.mxu0 0.0
  %963 = vmatpush1.msra.mxu0 0.0
  %964 = vmatprep.subr.mxu0 0.0
  %965 = vmatpush1.msra.mxu0 0.0
  %966 = vmatprep.subr.mxu0 0.0
  %967 = vmatpush1.msra.mxu0 0.0
  %968 = vmatprep.subr.mxu0 0.0
  %969 = vmatpush1.msra.mxu0 0.0
  %970 = vmatprep.subr.mxu0 0.0
  %971 = vmatpush1.msra.mxu0 0.0
  %972 = vmatprep.subr.mxu0 0.0
  %973 = vmatpush1.msra.mxu0 0.0
  %974 = vmatprep.subr.mxu0 0.0
  %975 = vmatpush1.msra.mxu0 0.0
  %976 = vmatprep.subr.mxu0 0.0
  %977 = vmatpush1.msra.mxu0 0.0
  %978 = vmatprep.subr.mxu0 0.0
  %v979 = vand.u32 %v33, 4294901760
  %980 = vmatpush1.msra.mxu0 %v979
  %981 = vmatprep.subr.mxu0 0.0
  %v982 = vand.u32 %v32, 4294901760
  %983 = vmatpush1.msra.mxu0 %v982
  %984 = vmatprep.subr.mxu0 0.0
  %v985 = vand.u32 %v31, 4294901760
  %986 = vmatpush1.msra.mxu0 %v985
  %987 = vmatprep.subr.mxu0 0.0
  %v988 = vand.u32 %v30, 4294901760
  %989 = vmatpush1.msra.mxu0 %v988
  %990 = vmatprep.subr.mxu0 0.0
  %991 = vmatpush2.msra.mxu0 0.0
  %992 = vmatprep.subr.mxu0 0.0
  %993 = vmatpush2.msra.mxu0 0.0
  %994 = vmatprep.subr.mxu0 0.0
  %995 = vmatpush2.msra.mxu0 0.0
  %996 = vmatprep.subr.mxu0 0.0
  %997 = vmatpush2.msra.mxu0 0.0
  %998 = vmatprep.subr.mxu0 0.0
  %999 = vmatpush2.msra.mxu0 0.0
  %1000 = vmatprep.subr.mxu0 0.0
  %1001 = vmatpush2.msra.mxu0 0.0
  %1002 = vmatprep.subr.mxu0 0.0
  %1003 = vmatpush2.msra.mxu0 0.0
  %1004 = vmatprep.subr.mxu0 0.0
  %1005 = vmatpush2.msra.mxu0 0.0
  %1006 = vmatprep.subr.mxu0 0.0
  %1007 = vmatpush2.msra.mxu0 0.0
  %1008 = vmatprep.subr.mxu0 0.0
  %1009 = vmatpush2.msra.mxu0 0.0
  %1010 = vmatprep.subr.mxu0 0.0
  %1011 = vmatpush2.msra.mxu0 0.0
  %1012 = vmatprep.subr.mxu0 0.0
  %1013 = vmatpush2.msra.mxu0 0.0
  %1014 = vmatprep.subr.mxu0 0.0
  %1015 = vmatpush2.msra.mxu0 0.0
  %1016 = vmatprep.subr.mxu0 0.0
  %1017 = vmatpush2.msra.mxu0 0.0
  %1018 = vmatprep.subr.mxu0 0.0
  %1019 = vmatpush2.msra.mxu0 0.0
  %1020 = vmatprep.subr.mxu0 0.0
  %1021 = vmatpush2.msra.mxu0 0.0
  %1022 = vmatprep.mubr.f32.mxu0 0.0
  %v1023 = vand.u32 %v542, 4294901760
  %1024 = vmatmul.mubr.f32.gmra.mxu0 %v1023
  %v1025 = vpop.f32.mrf.mxu0
  %v1026 = vadd.f32 %v951, %v1025
  %v1027 = vpop.f32.mrf.mxu0
  %1028 = vdwg.mxu0
  %v1029 = vxor.u32 %v1026, 2147483648
  %v1030 = vmul.f32 %v1029, 1.442695
  %v1031 = vpow.pop %v1030
  %v1032 = vadd.f32 %v1031, 1.0
  %v1033 = vrcp.pop %v1032
  %v1034 = vmul.f32 1.0, %v1033
  %s1035 = scalar_lea.vmem %s0, 2
  %v1036 = vld [vmem:[%s1035] sm:$0x3]
  %v1037 = vsub.f32 %v1036, %v538
  %v1038 = vmul.f32 %v1034, %v1037
  %v1039 = vadd.f32 %v538, %v1038
  %1040 = vst.msk [vmem:[#allocation2] sm:$0x3] %vm535, %v1039
  %s1041 = scalar_lea.vmem %s4, 2
  %1042 = vst.msk [vmem:[%s1041] sm:$0x3] %vm535, %v1039
  %v1043 = vld [vmem:[#allocation2] sm:$0x3]
  %s1044 = scalar_lea.vmem %s1, 4
  %v1045 = vld [vmem:[%s1044] sm:$0x3]
  %v1047 = vsel %vm36, %v1043, 0
  %1049 = vmatprep.subr.mxu0 0.0
  %1050 = vmatpush1.msra.mxu0 0.0
  %1051 = vmatprep.subr.mxu0 0.0
  %1052 = vmatpush1.msra.mxu0 0.0
  %1053 = vmatprep.subr.mxu0 0.0
  %1054 = vmatpush1.msra.mxu0 0.0
  %1055 = vmatprep.subr.mxu0 0.0
  %1056 = vmatpush1.msra.mxu0 0.0
  %1057 = vmatprep.subr.mxu0 0.0
  %1058 = vmatpush1.msra.mxu0 0.0
  %1059 = vmatprep.subr.mxu0 0.0
  %1060 = vmatpush1.msra.mxu0 0.0
  %1061 = vmatprep.subr.mxu0 0.0
  %1062 = vmatpush1.msra.mxu0 0.0
  %1063 = vmatprep.subr.mxu0 0.0
  %1064 = vmatpush1.msra.mxu0 0.0
  %1065 = vmatprep.subr.mxu0 0.0
  %1066 = vmatpush1.msra.mxu0 0.0
  %1067 = vmatprep.subr.mxu0 0.0
  %1068 = vmatpush1.msra.mxu0 0.0
  %1069 = vmatprep.subr.mxu0 0.0
  %1070 = vmatpush1.msra.mxu0 0.0
  %1071 = vmatprep.subr.mxu0 0.0
  %1072 = vmatpush1.msra.mxu0 0.0
  %1073 = vmatprep.subr.mxu0 0.0
  %v1074 = vand.u32 %v33, 4294901760
  %1075 = vmatpush1.msra.mxu0 %v1074
  %1076 = vmatprep.subr.mxu0 0.0
  %v1077 = vand.u32 %v32, 4294901760
  %1078 = vmatpush1.msra.mxu0 %v1077
  %1079 = vmatprep.subr.mxu0 0.0
  %v1080 = vand.u32 %v31, 4294901760
  %1081 = vmatpush1.msra.mxu0 %v1080
  %1082 = vmatprep.subr.mxu0 0.0
  %v1083 = vand.u32 %v30, 4294901760
  %1084 = vmatpush1.msra.mxu0 %v1083
  %1085 = vmatprep.subr.mxu0 0.0
  %1086 = vmatpush2.msra.mxu0 0.0
  %1087 = vmatprep.subr.mxu0 0.0
  %1088 = vmatpush2.msra.mxu0 0.0
  %1089 = vmatprep.subr.mxu0 0.0
  %1090 = vmatpush2.msra.mxu0 0.0
  %1091 = vmatprep.subr.mxu0 0.0
  %1092 = vmatpush2.msra.mxu0 0.0
  %1093 = vmatprep.subr.mxu0 0.0
  %1094 = vmatpush2.msra.mxu0 0.0
  %1095 = vmatprep.subr.mxu0 0.0
  %1096 = vmatpush2.msra.mxu0 0.0
  %1097 = vmatprep.subr.mxu0 0.0
  %1098 = vmatpush2.msra.mxu0 0.0
  %1099 = vmatprep.subr.mxu0 0.0
  %1100 = vmatpush2.msra.mxu0 0.0
  %1101 = vmatprep.subr.mxu0 0.0
  %1102 = vmatpush2.msra.mxu0 0.0
  %1103 = vmatprep.subr.mxu0 0.0
  %1104 = vmatpush2.msra.mxu0 0.0
  %1105 = vmatprep.subr.mxu0 0.0
  %1106 = vmatpush2.msra.mxu0 0.0
  %1107 = vmatprep.subr.mxu0 0.0
  %1108 = vmatpush2.msra.mxu0 0.0
  %1109 = vmatprep.subr.mxu0 0.0
  %1110 = vmatpush2.msra.mxu0 0.0
  %1111 = vmatprep.subr.mxu0 0.0
  %1112 = vmatpush2.msra.mxu0 0.0
  %1113 = vmatprep.subr.mxu0 0.0
  %1114 = vmatpush2.msra.mxu0 0.0
  %1115 = vmatprep.subr.mxu0 0.0
  %1116 = vmatpush2.msra.mxu0 0.0
  %1117 = vmatprep.mubr.f32.mxu0 0.0
  %v1118 = vand.u32 %v1047, 4294901760
  %v1119 = vsub.f32 %v1047, %v1118
  %v1120 = vand.u32 %v1119, 4294901760
  %v1121 = vsub.f32 %v1119, %v1120
  %v1122 = vand.u32 %v1121, 4294901760
  %1123 = vmatmul.mubr.f32.gmra.mxu0 %v1122
  %v1124 = vpop.f32.mrf.mxu0
  %v1125 = vadd.f32 %v1045, %v1124
  %v1126 = vpop.f32.mrf.mxu0
  %1127 = vdwg.mxu0
  %1128 = vmatprep.subr.mxu0 0.0
  %1129 = vmatpush1.msra.mxu0 0.0
  %1130 = vmatprep.subr.mxu0 0.0
  %1131 = vmatpush1.msra.mxu0 0.0
  %1132 = vmatprep.subr.mxu0 0.0
  %1133 = vmatpush1.msra.mxu0 0.0
  %1134 = vmatprep.subr.mxu0 0.0
  %1135 = vmatpush1.msra.mxu0 0.0
  %1136 = vmatprep.subr.mxu0 0.0
  %1137 = vmatpush1.msra.mxu0 0.0
  %1138 = vmatprep.subr.mxu0 0.0
  %1139 = vmatpush1.msra.mxu0 0.0
  %1140 = vmatprep.subr.mxu0 0.0
  %1141 = vmatpush1.msra.mxu0 0.0
  %1142 = vmatprep.subr.mxu0 0.0
  %1143 = vmatpush1.msra.mxu0 0.0
  %1144 = vmatprep.subr.mxu0 0.0
  %1145 = vmatpush1.msra.mxu0 0.0
  %1146 = vmatprep.subr.mxu0 0.0
  %1147 = vmatpush1.msra.mxu0 0.0
  %1148 = vmatprep.subr.mxu0 0.0
  %1149 = vmatpush1.msra.mxu0 0.0
  %1150 = vmatprep.subr.mxu0 0.0
  %1151 = vmatpush1.msra.mxu0 0.0
  %1152 = vmatprep.subr.mxu0 0.0
  %v1153 = vand.u32 %v33, 4294901760
  %v1154 = vsub.f32 %v33, %v1153
  %v1155 = vand.u32 %v1154, 4294901760
  %v1156 = vsub.f32 %v1154, %v1155
  %v1157 = vand.u32 %v1156, 4294901760
  %1158 = vmatpush1.msra.mxu0 %v1157
  %1159 = vmatprep.subr.mxu0 0.0
  %v1160 = vand.u32 %v32, 4294901760
  %v1161 = vsub.f32 %v32, %v1160
  %v1162 = vand.u32 %v1161, 4294901760
  %v1163 = vsub.f32 %v1161, %v1162
  %v1164 = vand.u32 %v1163, 4294901760
  %1165 = vmatpush1.msra.mxu0 %v1164
  %1166 = vmatprep.subr.mxu0 0.0
  %v1167 = vand.u32 %v31, 4294901760
  %v1168 = vsub.f32 %v31, %v1167
  %v1169 = vand.u32 %v1168, 4294901760
  %v1170 = vsub.f32 %v1168, %v1169
  %v1171 = vand.u32 %v1170, 4294901760
  %1172 = vmatpush1.msra.mxu0 %v1171
  %1173 = vmatprep.subr.mxu0 0.0
  %v1174 = vand.u32 %v30, 4294901760
  %v1175 = vsub.f32 %v30, %v1174
  %v1176 = vand.u32 %v1175, 4294901760
  %v1177 = vsub.f32 %v1175, %v1176
  %v1178 = vand.u32 %v1177, 4294901760
  %1179 = vmatpush1.msra.mxu0 %v1178
  %1180 = vmatprep.subr.mxu0 0.0
  %1181 = vmatpush2.msra.mxu0 0.0
  %1182 = vmatprep.subr.mxu0 0.0
  %1183 = vmatpush2.msra.mxu0 0.0
  %1184 = vmatprep.subr.mxu0 0.0
  %1185 = vmatpush2.msra.mxu0 0.0
  %1186 = vmatprep.subr.mxu0 0.0
  %1187 = vmatpush2.msra.mxu0 0.0
  %1188 = vmatprep.subr.mxu0 0.0
  %1189 = vmatpush2.msra.mxu0 0.0
  %1190 = vmatprep.subr.mxu0 0.0
  %1191 = vmatpush2.msra.mxu0 0.0
  %1192 = vmatprep.subr.mxu0 0.0
  %1193 = vmatpush2.msra.mxu0 0.0
  %1194 = vmatprep.subr.mxu0 0.0
  %1195 = vmatpush2.msra.mxu0 0.0
  %1196 = vmatprep.subr.mxu0 0.0
  %1197 = vmatpush2.msra.mxu0 0.0
  %1198 = vmatprep.subr.mxu0 0.0
  %1199 = vmatpush2.msra.mxu0 0.0
  %1200 = vmatprep.subr.mxu0 0.0
  %1201 = vmatpush2.msra.mxu0 0.0
  %1202 = vmatprep.subr.mxu0 0.0
  %1203 = vmatpush2.msra.mxu0 0.0
  %1204 = vmatprep.subr.mxu0 0.0
  %1205 = vmatpush2.msra.mxu0 0.0
  %1206 = vmatprep.subr.mxu0 0.0
  %1207 = vmatpush2.msra.mxu0 0.0
  %1208 = vmatprep.subr.mxu0 0.0
  %1209 = vmatpush2.msra.mxu0 0.0
  %1210 = vmatprep.subr.mxu0 0.0
  %1211 = vmatpush2.msra.mxu0 0.0
  %1212 = vmatprep.mubr.f32.mxu0 0.0
  %v1213 = vand.u32 %v1047, 4294901760
  %1214 = vmatmul.mubr.f32.gmra.mxu0 %v1213
  %v1215 = vpop.f32.mrf.mxu0
  %v1216 = vadd.f32 %v1125, %v1215
  %v1217 = vpop.f32.mrf.mxu0
  %1218 = vdwg.mxu0
  %1219 = vmatprep.subr.mxu0 0.0
  %1220 = vmatpush1.msra.mxu0 0.0
  %1221 = vmatprep.subr.mxu0 0.0
  %1222 = vmatpush1.msra.mxu0 0.0
  %1223 = vmatprep.subr.mxu0 0.0
  %1224 = vmatpush1.msra.mxu0 0.0
  %1225 = vmatprep.subr.mxu0 0.0
  %1226 = vmatpush1.msra.mxu0 0.0
  %1227 = vmatprep.subr.mxu0 0.0
  %1228 = vmatpush1.msra.mxu0 0.0
  %1229 = vmatprep.subr.mxu0 0.0
  %1230 = vmatpush1.msra.mxu0 0.0
  %1231 = vmatprep.subr.mxu0 0.0
  %1232 = vmatpush1.msra.mxu0 0.0
  %1233 = vmatprep.subr.mxu0 0.0
  %1234 = vmatpush1.msra.mxu0 0.0
  %1235 = vmatprep.subr.mxu0 0.0
  %1236 = vmatpush1.msra.mxu0 0.0
  %1237 = vmatprep.subr.mxu0 0.0
  %1238 = vmatpush1.msra.mxu0 0.0
  %1239 = vmatprep.subr.mxu0 0.0
  %1240 = vmatpush1.msra.mxu0 0.0
  %1241 = vmatprep.subr.mxu0 0.0
  %1242 = vmatpush1.msra.mxu0 0.0
  %1243 = vmatprep.subr.mxu0 0.0
  %v1244 = vand.u32 %v33, 4294901760
  %v1245 = vsub.f32 %v33, %v1244
  %1246 = vmatpush1.msra.mxu0 %v1245
  %1247 = vmatprep.subr.mxu0 0.0
  %v1248 = vand.u32 %v32, 4294901760
  %v1249 = vsub.f32 %v32, %v1248
  %1250 = vmatpush1.msra.mxu0 %v1249
  %1251 = vmatprep.subr.mxu0 0.0
  %v1252 = vand.u32 %v31, 4294901760
  %v1253 = vsub.f32 %v31, %v1252
  %1254 = vmatpush1.msra.mxu0 %v1253
  %1255 = vmatprep.subr.mxu0 0.0
  %v1256 = vand.u32 %v30, 4294901760
  %v1257 = vsub.f32 %v30, %v1256
  %1258 = vmatpush1.msra.mxu0 %v1257
  %1259 = vmatprep.subr.mxu0 0.0
  %1260 = vmatpush2.msra.mxu0 0.0
  %1261 = vmatprep.subr.mxu0 0.0
  %1262 = vmatpush2.msra.mxu0 0.0
  %1263 = vmatprep.subr.mxu0 0.0
  %1264 = vmatpush2.msra.mxu0 0.0
  %1265 = vmatprep.subr.mxu0 0.0
  %1266 = vmatpush2.msra.mxu0 0.0
  %1267 = vmatprep.subr.mxu0 0.0
  %1268 = vmatpush2.msra.mxu0 0.0
  %1269 = vmatprep.subr.mxu0 0.0
  %1270 = vmatpush2.msra.mxu0 0.0
  %1271 = vmatprep.subr.mxu0 0.0
  %1272 = vmatpush2.msra.mxu0 0.0
  %1273 = vmatprep.subr.mxu0 0.0
  %1274 = vmatpush2.msra.mxu0 0.0
  %1275 = vmatprep.subr.mxu0 0.0
  %1276 = vmatpush2.msra.mxu0 0.0
  %1277 = vmatprep.subr.mxu0 0.0
  %1278 = vmatpush2.msra.mxu0 0.0
  %1279 = vmatprep.subr.mxu0 0.0
  %1280 = vmatpush2.msra.mxu0 0.0
  %1281 = vmatprep.subr.mxu0 0.0
  %1282 = vmatpush2.msra.mxu0 0.0
  %1283 = vmatprep.subr.mxu0 0.0
  %1284 = vmatpush2.msra.mxu0 0.0
  %1285 = vmatprep.subr.mxu0 0.0
  %1286 = vmatpush2.msra.mxu0 0.0
  %1287 = vmatprep.subr.mxu0 0.0
  %1288 = vmatpush2.msra.mxu0 0.0
  %1289 = vmatprep.subr.mxu0 0.0
  %1290 = vmatpush2.msra.mxu0 0.0
  %1291 = vmatprep.mubr.f32.mxu0 0.0
  %v1292 = vand.u32 %v1047, 4294901760
  %v1293 = vsub.f32 %v1047, %v1292
  %1294 = vmatmul.mubr.f32.gmra.mxu0 %v1293
  %v1295 = vpop.f32.mrf.mxu0
  %v1296 = vadd.f32 %v1216, %v1295
  %v1297 = vpop.f32.mrf.mxu0
  %1298 = vdwg.mxu0
  %1299 = vmatprep.subr.mxu0 0.0
  %1300 = vmatpush1.msra.mxu0 0.0
  %1301 = vmatprep.subr.mxu0 0.0
  %1302 = vmatpush1.msra.mxu0 0.0
  %1303 = vmatprep.subr.mxu0 0.0
  %1304 = vmatpush1.msra.mxu0 0.0
  %1305 = vmatprep.subr.mxu0 0.0
  %1306 = vmatpush1.msra.mxu0 0.0
  %1307 = vmatprep.subr.mxu0 0.0
  %1308 = vmatpush1.msra.mxu0 0.0
  %1309 = vmatprep.subr.mxu0 0.0
  %1310 = vmatpush1.msra.mxu0 0.0
  %1311 = vmatprep.subr.mxu0 0.0
  %1312 = vmatpush1.msra.mxu0 0.0
  %1313 = vmatprep.subr.mxu0 0.0
  %1314 = vmatpush1.msra.mxu0 0.0
  %1315 = vmatprep.subr.mxu0 0.0
  %1316 = vmatpush1.msra.mxu0 0.0
  %1317 = vmatprep.subr.mxu0 0.0
  %1318 = vmatpush1.msra.mxu0 0.0
  %1319 = vmatprep.subr.mxu0 0.0
  %1320 = vmatpush1.msra.mxu0 0.0
  %1321 = vmatprep.subr.mxu0 0.0
  %1322 = vmatpush1.msra.mxu0 0.0
  %1323 = vmatprep.subr.mxu0 0.0
  %v1324 = vand.u32 %v33, 4294901760
  %1325 = vmatpush1.msra.mxu0 %v1324
  %1326 = vmatprep.subr.mxu0 0.0
  %v1327 = vand.u32 %v32, 4294901760
  %1328 = vmatpush1.msra.mxu0 %v1327
  %1329 = vmatprep.subr.mxu0 0.0
  %v1330 = vand.u32 %v31, 4294901760
  %1331 = vmatpush1.msra.mxu0 %v1330
  %1332 = vmatprep.subr.mxu0 0.0
  %v1333 = vand.u32 %v30, 4294901760
  %1334 = vmatpush1.msra.mxu0 %v1333
  %1335 = vmatprep.subr.mxu0 0.0
  %1336 = vmatpush2.msra.mxu0 0.0
  %1337 = vmatprep.subr.mxu0 0.0
  %1338 = vmatpush2.msra.mxu0 0.0
  %1339 = vmatprep.subr.mxu0 0.0
  %1340 = vmatpush2.msra.mxu0 0.0
  %1341 = vmatprep.subr.mxu0 0.0
  %1342 = vmatpush2.msra.mxu0 0.0
  %1343 = vmatprep.subr.mxu0 0.0
  %1344 = vmatpush2.msra.mxu0 0.0
  %1345 = vmatprep.subr.mxu0 0.0
  %1346 = vmatpush2.msra.mxu0 0.0
  %1347 = vmatprep.subr.mxu0 0.0
  %1348 = vmatpush2.msra.mxu0 0.0
  %1349 = vmatprep.subr.mxu0 0.0
  %1350 = vmatpush2.msra.mxu0 0.0
  %1351 = vmatprep.subr.mxu0 0.0
  %1352 = vmatpush2.msra.mxu0 0.0
  %1353 = vmatprep.subr.mxu0 0.0
  %1354 = vmatpush2.msra.mxu0 0.0
  %1355 = vmatprep.subr.mxu0 0.0
  %1356 = vmatpush2.msra.mxu0 0.0
  %1357 = vmatprep.subr.mxu0 0.0
  %1358 = vmatpush2.msra.mxu0 0.0
  %1359 = vmatprep.subr.mxu0 0.0
  %1360 = vmatpush2.msra.mxu0 0.0
  %1361 = vmatprep.subr.mxu0 0.0
  %1362 = vmatpush2.msra.mxu0 0.0
  %1363 = vmatprep.subr.mxu0 0.0
  %1364 = vmatpush2.msra.mxu0 0.0
  %1365 = vmatprep.subr.mxu0 0.0
  %1366 = vmatpush2.msra.mxu0 0.0
  %1367 = vmatprep.mubr.f32.mxu0 0.0
  %v1368 = vand.u32 %v1047, 4294901760
  %v1369 = vsub.f32 %v1047, %v1368
  %v1370 = vand.u32 %v1369, 4294901760
  %1371 = vmatmul.mubr.f32.gmra.mxu0 %v1370
  %v1372 = vpop.f32.mrf.mxu0
  %v1373 = vadd.f32 %v1296, %v1372
  %v1374 = vpop.f32.mrf.mxu0
  %1375 = vdwg.mxu0
  %1376 = vmatprep.subr.mxu0 0.0
  %1377 = vmatpush1.msra.mxu0 0.0
  %1378 = vmatprep.subr.mxu0 0.0
  %1379 = vmatpush1.msra.mxu0 0.0
  %1380 = vmatprep.subr.mxu0 0.0
  %1381 = vmatpush1.msra.mxu0 0.0
  %1382 = vmatprep.subr.mxu0 0.0
  %1383 = vmatpush1.msra.mxu0 0.0
  %1384 = vmatprep.subr.mxu0 0.0
  %1385 = vmatpush1.msra.mxu0 0.0
  %1386 = vmatprep.subr.mxu0 0.0
  %1387 = vmatpush1.msra.mxu0 0.0
  %1388 = vmatprep.subr.mxu0 0.0
  %1389 = vmatpush1.msra.mxu0 0.0
  %1390 = vmatprep.subr.mxu0 0.0
  %1391 = vmatpush1.msra.mxu0 0.0
  %1392 = vmatprep.subr.mxu0 0.0
  %1393 = vmatpush1.msra.mxu0 0.0
  %1394 = vmatprep.subr.mxu0 0.0
  %1395 = vmatpush1.msra.mxu0 0.0
  %1396 = vmatprep.subr.mxu0 0.0
  %1397 = vmatpush1.msra.mxu0 0.0
  %1398 = vmatprep.subr.mxu0 0.0
  %1399 = vmatpush1.msra.mxu0 0.0
  %1400 = vmatprep.subr.mxu0 0.0
  %v1401 = vand.u32 %v33, 4294901760
  %v1402 = vsub.f32 %v33, %v1401
  %v1403 = vand.u32 %v1402, 4294901760
  %1404 = vmatpush1.msra.mxu0 %v1403
  %1405 = vmatprep.subr.mxu0 0.0
  %v1406 = vand.u32 %v32, 4294901760
  %v1407 = vsub.f32 %v32, %v1406
  %v1408 = vand.u32 %v1407, 4294901760
  %1409 = vmatpush1.msra.mxu0 %v1408
  %1410 = vmatprep.subr.mxu0 0.0
  %v1411 = vand.u32 %v31, 4294901760
  %v1412 = vsub.f32 %v31, %v1411
  %v1413 = vand.u32 %v1412, 4294901760
  %1414 = vmatpush1.msra.mxu0 %v1413
  %1415 = vmatprep.subr.mxu0 0.0
  %v1416 = vand.u32 %v30, 4294901760
  %v1417 = vsub.f32 %v30, %v1416
  %v1418 = vand.u32 %v1417, 4294901760
  %1419 = vmatpush1.msra.mxu0 %v1418
  %1420 = vmatprep.subr.mxu0 0.0
  %1421 = vmatpush2.msra.mxu0 0.0
  %1422 = vmatprep.subr.mxu0 0.0
  %1423 = vmatpush2.msra.mxu0 0.0
  %1424 = vmatprep.subr.mxu0 0.0
  %1425 = vmatpush2.msra.mxu0 0.0
  %1426 = vmatprep.subr.mxu0 0.0
  %1427 = vmatpush2.msra.mxu0 0.0
  %1428 = vmatprep.subr.mxu0 0.0
  %1429 = vmatpush2.msra.mxu0 0.0
  %1430 = vmatprep.subr.mxu0 0.0
  %1431 = vmatpush2.msra.mxu0 0.0
  %1432 = vmatprep.subr.mxu0 0.0
  %1433 = vmatpush2.msra.mxu0 0.0
  %1434 = vmatprep.subr.mxu0 0.0
  %1435 = vmatpush2.msra.mxu0 0.0
  %1436 = vmatprep.subr.mxu0 0.0
  %1437 = vmatpush2.msra.mxu0 0.0
  %1438 = vmatprep.subr.mxu0 0.0
  %1439 = vmatpush2.msra.mxu0 0.0
  %1440 = vmatprep.subr.mxu0 0.0
  %1441 = vmatpush2.msra.mxu0 0.0
  %1442 = vmatprep.subr.mxu0 0.0
  %1443 = vmatpush2.msra.mxu0 0.0
  %1444 = vmatprep.subr.mxu0 0.0
  %1445 = vmatpush2.msra.mxu0 0.0
  %1446 = vmatprep.subr.mxu0 0.0
  %1447 = vmatpush2.msra.mxu0 0.0
  %1448 = vmatprep.subr.mxu0 0.0
  %1449 = vmatpush2.msra.mxu0 0.0
  %1450 = vmatprep.subr.mxu0 0.0
  %1451 = vmatpush2.msra.mxu0 0.0
  %1452 = vmatprep.mubr.f32.mxu0 0.0
  %v1453 = vand.u32 %v1047, 4294901760
  %1454 = vmatmul.mubr.f32.gmra.mxu0 %v1453
  %v1455 = vpop.f32.mrf.mxu0
  %v1456 = vadd.f32 %v1373, %v1455
  %v1457 = vpop.f32.mrf.mxu0
  %1458 = vdwg.mxu0
  %1459 = vmatprep.subr.mxu0 0.0
  %1460 = vmatpush1.msra.mxu0 0.0
  %1461 = vmatprep.subr.mxu0 0.0
  %1462 = vmatpush1.msra.mxu0 0.0
  %1463 = vmatprep.subr.mxu0 0.0
  %1464 = vmatpush1.msra.mxu0 0.0
  %1465 = vmatprep.subr.mxu0 0.0
  %1466 = vmatpush1.msra.mxu0 0.0
  %1467 = vmatprep.subr.mxu0 0.0
  %1468 = vmatpush1.msra.mxu0 0.0
  %1469 = vmatprep.subr.mxu0 0.0
  %1470 = vmatpush1.msra.mxu0 0.0
  %1471 = vmatprep.subr.mxu0 0.0
  %1472 = vmatpush1.msra.mxu0 0.0
  %1473 = vmatprep.subr.mxu0 0.0
  %1474 = vmatpush1.msra.mxu0 0.0
  %1475 = vmatprep.subr.mxu0 0.0
  %1476 = vmatpush1.msra.mxu0 0.0
  %1477 = vmatprep.subr.mxu0 0.0
  %1478 = vmatpush1.msra.mxu0 0.0
  %1479 = vmatprep.subr.mxu0 0.0
  %1480 = vmatpush1.msra.mxu0 0.0
  %1481 = vmatprep.subr.mxu0 0.0
  %1482 = vmatpush1.msra.mxu0 0.0
  %1483 = vmatprep.subr.mxu0 0.0
  %v1484 = vand.u32 %v33, 4294901760
  %1485 = vmatpush1.msra.mxu0 %v1484
  %1486 = vmatprep.subr.mxu0 0.0
  %v1487 = vand.u32 %v32, 4294901760
  %1488 = vmatpush1.msra.mxu0 %v1487
  %1489 = vmatprep.subr.mxu0 0.0
  %v1490 = vand.u32 %v31, 4294901760
  %1491 = vmatpush1.msra.mxu0 %v1490
  %1492 = vmatprep.subr.mxu0 0.0
  %v1493 = vand.u32 %v30, 4294901760
  %1494 = vmatpush1.msra.mxu0 %v1493
  %1495 = vmatprep.subr.mxu0 0.0
  %1496 = vmatpush2.msra.mxu0 0.0
  %1497 = vmatprep.subr.mxu0 0.0
  %1498 = vmatpush2.msra.mxu0 0.0
  %1499 = vmatprep.subr.mxu0 0.0
  %1500 = vmatpush2.msra.mxu0 0.0
  %1501 = vmatprep.subr.mxu0 0.0
  %1502 = vmatpush2.msra.mxu0 0.0
  %1503 = vmatprep.subr.mxu0 0.0
  %1504 = vmatpush2.msra.mxu0 0.0
  %1505 = vmatprep.subr.mxu0 0.0
  %1506 = vmatpush2.msra.mxu0 0.0
  %1507 = vmatprep.subr.mxu0 0.0
  %1508 = vmatpush2.msra.mxu0 0.0
  %1509 = vmatprep.subr.mxu0 0.0
  %1510 = vmatpush2.msra.mxu0 0.0
  %1511 = vmatprep.subr.mxu0 0.0
  %1512 = vmatpush2.msra.mxu0 0.0
  %1513 = vmatprep.subr.mxu0 0.0
  %1514 = vmatpush2.msra.mxu0 0.0
  %1515 = vmatprep.subr.mxu0 0.0
  %1516 = vmatpush2.msra.mxu0 0.0
  %1517 = vmatprep.subr.mxu0 0.0
  %1518 = vmatpush2.msra.mxu0 0.0
  %1519 = vmatprep.subr.mxu0 0.0
  %1520 = vmatpush2.msra.mxu0 0.0
  %1521 = vmatprep.subr.mxu0 0.0
  %1522 = vmatpush2.msra.mxu0 0.0
  %1523 = vmatprep.subr.mxu0 0.0
  %1524 = vmatpush2.msra.mxu0 0.0
  %1525 = vmatprep.subr.mxu0 0.0
  %1526 = vmatpush2.msra.mxu0 0.0
  %1527 = vmatprep.mubr.f32.mxu0 0.0
  %v1528 = vand.u32 %v1047, 4294901760
  %1529 = vmatmul.mubr.f32.gmra.mxu0 %v1528
  %v1530 = vpop.f32.mrf.mxu0
  %v1531 = vadd.f32 %v1456, %v1530
  %v1532 = vpop.f32.mrf.mxu0
  %1533 = vdwg.mxu0
  %v1534 = vxor.u32 %v1531, 2147483648
  %v1535 = vmul.f32 %v1534, 1.442695
  %v1536 = vpow.pop %v1535
  %v1537 = vadd.f32 %v1536, 1.0
  %v1538 = vrcp.pop %v1537
  %v1539 = vmul.f32 1.0, %v1538
  %s1540 = scalar_lea.vmem %s0, 4
  %v1541 = vld [vmem:[%s1540] sm:$0x3]
  %v1542 = vsub.f32 %v1541, %v1043
  %v1543 = vmul.f32 %v1539, %v1542
  %v1544 = vadd.f32 %v1043, %v1543
  %1545 = vst.msk [vmem:[#allocation2] sm:$0x3] %vm535, %v1544
  %s1546 = scalar_lea.vmem %s4, 4
  %1547 = vst.msk [vmem:[%s1546] sm:$0x3] %vm535, %v1544
  %v1548 = vld [vmem:[#allocation2] sm:$0x3]
  %s1549 = scalar_lea.vmem %s1, 6
  %v1550 = vld [vmem:[%s1549] sm:$0x3]
  %v1552 = vsel %vm36, %v1548, 0
  %1554 = vmatprep.subr.mxu0 0.0
  %1555 = vmatpush1.msra.mxu0 0.0
  %1556 = vmatprep.subr.mxu0 0.0
  %1557 = vmatpush1.msra.mxu0 0.0
  %1558 = vmatprep.subr.mxu0 0.0
  %1559 = vmatpush1.msra.mxu0 0.0
  %1560 = vmatprep.subr.mxu0 0.0
  %1561 = vmatpush1.msra.mxu0 0.0
  %1562 = vmatprep.subr.mxu0 0.0
  %1563 = vmatpush1.msra.mxu0 0.0
  %1564 = vmatprep.subr.mxu0 0.0
  %1565 = vmatpush1.msra.mxu0 0.0
  %1566 = vmatprep.subr.mxu0 0.0
  %1567 = vmatpush1.msra.mxu0 0.0
  %1568 = vmatprep.subr.mxu0 0.0
  %1569 = vmatpush1.msra.mxu0 0.0
  %1570 = vmatprep.subr.mxu0 0.0
  %1571 = vmatpush1.msra.mxu0 0.0
  %1572 = vmatprep.subr.mxu0 0.0
  %1573 = vmatpush1.msra.mxu0 0.0
  %1574 = vmatprep.subr.mxu0 0.0
  %1575 = vmatpush1.msra.mxu0 0.0
  %1576 = vmatprep.subr.mxu0 0.0
  %1577 = vmatpush1.msra.mxu0 0.0
  %1578 = vmatprep.subr.mxu0 0.0
  %v1579 = vand.u32 %v33, 4294901760
  %1580 = vmatpush1.msra.mxu0 %v1579
  %1581 = vmatprep.subr.mxu0 0.0
  %v1582 = vand.u32 %v32, 4294901760
  %1583 = vmatpush1.msra.mxu0 %v1582
  %1584 = vmatprep.subr.mxu0 0.0
  %v1585 = vand.u32 %v31, 4294901760
  %1586 = vmatpush1.msra.mxu0 %v1585
  %1587 = vmatprep.subr.mxu0 0.0
  %v1588 = vand.u32 %v30, 4294901760
  %1589 = vmatpush1.msra.mxu0 %v1588
  %1590 = vmatprep.subr.mxu0 0.0
  %1591 = vmatpush2.msra.mxu0 0.0
  %1592 = vmatprep.subr.mxu0 0.0
  %1593 = vmatpush2.msra.mxu0 0.0
  %1594 = vmatprep.subr.mxu0 0.0
  %1595 = vmatpush2.msra.mxu0 0.0
  %1596 = vmatprep.subr.mxu0 0.0
  %1597 = vmatpush2.msra.mxu0 0.0
  %1598 = vmatprep.subr.mxu0 0.0
  %1599 = vmatpush2.msra.mxu0 0.0
  %1600 = vmatprep.subr.mxu0 0.0
  %1601 = vmatpush2.msra.mxu0 0.0
  %1602 = vmatprep.subr.mxu0 0.0
  %1603 = vmatpush2.msra.mxu0 0.0
  %1604 = vmatprep.subr.mxu0 0.0
  %1605 = vmatpush2.msra.mxu0 0.0
  %1606 = vmatprep.subr.mxu0 0.0
  %1607 = vmatpush2.msra.mxu0 0.0
  %1608 = vmatprep.subr.mxu0 0.0
  %1609 = vmatpush2.msra.mxu0 0.0
  %1610 = vmatprep.subr.mxu0 0.0
  %1611 = vmatpush2.msra.mxu0 0.0
  %1612 = vmatprep.subr.mxu0 0.0
  %1613 = vmatpush2.msra.mxu0 0.0
  %1614 = vmatprep.subr.mxu0 0.0
  %1615 = vmatpush2.msra.mxu0 0.0
  %1616 = vmatprep.subr.mxu0 0.0
  %1617 = vmatpush2.msra.mxu0 0.0
  %1618 = vmatprep.subr.mxu0 0.0
  %1619 = vmatpush2.msra.mxu0 0.0
  %1620 = vmatprep.subr.mxu0 0.0
  %1621 = vmatpush2.msra.mxu0 0.0
  %1622 = vmatprep.mubr.f32.mxu0 0.0
  %v1623 = vand.u32 %v1552, 4294901760
  %v1624 = vsub.f32 %v1552, %v1623
  %v1625 = vand.u32 %v1624, 4294901760
  %v1626 = vsub.f32 %v1624, %v1625
  %v1627 = vand.u32 %v1626, 4294901760
  %1628 = vmatmul.mubr.f32.gmra.mxu0 %v1627
  %v1629 = vpop.f32.mrf.mxu0
  %v1630 = vadd.f32 %v1550, %v1629
  %v1631 = vpop.f32.mrf.mxu0
  %1632 = vdwg.mxu0
  %1633 = vmatprep.subr.mxu0 0.0
  %1634 = vmatpush1.msra.mxu0 0.0
  %1635 = vmatprep.subr.mxu0 0.0
  %1636 = vmatpush1.msra.mxu0 0.0
  %1637 = vmatprep.subr.mxu0 0.0
  %1638 = vmatpush1.msra.mxu0 0.0
  %1639 = vmatprep.subr.mxu0 0.0
  %1640 = vmatpush1.msra.mxu0 0.0
  %1641 = vmatprep.subr.mxu0 0.0
  %1642 = vmatpush1.msra.mxu0 0.0
  %1643 = vmatprep.subr.mxu0 0.0
  %1644 = vmatpush1.msra.mxu0 0.0
  %1645 = vmatprep.subr.mxu0 0.0
  %1646 = vmatpush1.msra.mxu0 0.0
  %1647 = vmatprep.subr.mxu0 0.0
  %1648 = vmatpush1.msra.mxu0 0.0
  %1649 = vmatprep.subr.mxu0 0.0
  %1650 = vmatpush1.msra.mxu0 0.0
  %1651 = vmatprep.subr.mxu0 0.0
  %1652 = vmatpush1.msra.mxu0 0.0
  %1653 = vmatprep.subr.mxu0 0.0
  %1654 = vmatpush1.msra.mxu0 0.0
  %1655 = vmatprep.subr.mxu0 0.0
  %1656 = vmatpush1.msra.mxu0 0.0
  %1657 = vmatprep.subr.mxu0 0.0
  %v1658 = vand.u32 %v33, 4294901760
  %v1659 = vsub.f32 %v33, %v1658
  %v1660 = vand.u32 %v1659, 4294901760
  %v1661 = vsub.f32 %v1659, %v1660
  %v1662 = vand.u32 %v1661, 4294901760
  %1663 = vmatpush1.msra.mxu0 %v1662
  %1664 = vmatprep.subr.mxu0 0.0
  %v1665 = vand.u32 %v32, 4294901760
  %v1666 = vsub.f32 %v32, %v1665
  %v1667 = vand.u32 %v1666, 4294901760
  %v1668 = vsub.f32 %v1666, %v1667
  %v1669 = vand.u32 %v1668, 4294901760
  %1670 = vmatpush1.msra.mxu0 %v1669
  %1671 = vmatprep.subr.mxu0 0.0
  %v1672 = vand.u32 %v31, 4294901760
  %v1673 = vsub.f32 %v31, %v1672
  %v1674 = vand.u32 %v1673, 4294901760
  %v1675 = vsub.f32 %v1673, %v1674
  %v1676 = vand.u32 %v1675, 4294901760
  %1677 = vmatpush1.msra.mxu0 %v1676
  %1678 = vmatprep.subr.mxu0 0.0
  %v1679 = vand.u32 %v30, 4294901760
  %v1680 = vsub.f32 %v30, %v1679
  %v1681 = vand.u32 %v1680, 4294901760
  %v1682 = vsub.f32 %v1680, %v1681
  %v1683 = vand.u32 %v1682, 4294901760
  %1684 = vmatpush1.msra.mxu0 %v1683
  %1685 = vmatprep.subr.mxu0 0.0
  %1686 = vmatpush2.msra.mxu0 0.0
  %1687 = vmatprep.subr.mxu0 0.0
  %1688 = vmatpush2.msra.mxu0 0.0
  %1689 = vmatprep.subr.mxu0 0.0
  %1690 = vmatpush2.msra.mxu0 0.0
  %1691 = vmatprep.subr.mxu0 0.0
  %1692 = vmatpush2.msra.mxu0 0.0
  %1693 = vmatprep.subr.mxu0 0.0
  %1694 = vmatpush2.msra.mxu0 0.0
  %1695 = vmatprep.subr.mxu0 0.0
  %1696 = vmatpush2.msra.mxu0 0.0
  %1697 = vmatprep.subr.mxu0 0.0
  %1698 = vmatpush2.msra.mxu0 0.0
  %1699 = vmatprep.subr.mxu0 0.0
  %1700 = vmatpush2.msra.mxu0 0.0
  %1701 = vmatprep.subr.mxu0 0.0
  %1702 = vmatpush2.msra.mxu0 0.0
  %1703 = vmatprep.subr.mxu0 0.0
  %1704 = vmatpush2.msra.mxu0 0.0
  %1705 = vmatprep.subr.mxu0 0.0
  %1706 = vmatpush2.msra.mxu0 0.0
  %1707 = vmatprep.subr.mxu0 0.0
  %1708 = vmatpush2.msra.mxu0 0.0
  %1709 = vmatprep.subr.mxu0 0.0
  %1710 = vmatpush2.msra.mxu0 0.0
  %1711 = vmatprep.subr.mxu0 0.0
  %1712 = vmatpush2.msra.mxu0 0.0
  %1713 = vmatprep.subr.mxu0 0.0
  %1714 = vmatpush2.msra.mxu0 0.0
  %1715 = vmatprep.subr.mxu0 0.0
  %1716 = vmatpush2.msra.mxu0 0.0
  %1717 = vmatprep.mubr.f32.mxu0 0.0
  %v1718 = vand.u32 %v1552, 4294901760
  %1719 = vmatmul.mubr.f32.gmra.mxu0 %v1718
  %v1720 = vpop.f32.mrf.mxu0
  %v1721 = vadd.f32 %v1630, %v1720
  %v1722 = vpop.f32.mrf.mxu0
  %1723 = vdwg.mxu0
  %1724 = vmatprep.subr.mxu0 0.0
  %1725 = vmatpush1.msra.mxu0 0.0
  %1726 = vmatprep.subr.mxu0 0.0
  %1727 = vmatpush1.msra.mxu0 0.0
  %1728 = vmatprep.subr.mxu0 0.0
  %1729 = vmatpush1.msra.mxu0 0.0
  %1730 = vmatprep.subr.mxu0 0.0
  %1731 = vmatpush1.msra.mxu0 0.0
  %1732 = vmatprep.subr.mxu0 0.0
  %1733 = vmatpush1.msra.mxu0 0.0
  %1734 = vmatprep.subr.mxu0 0.0
  %1735 = vmatpush1.msra.mxu0 0.0
  %1736 = vmatprep.subr.mxu0 0.0
  %1737 = vmatpush1.msra.mxu0 0.0
  %1738 = vmatprep.subr.mxu0 0.0
  %1739 = vmatpush1.msra.mxu0 0.0
  %1740 = vmatprep.subr.mxu0 0.0
  %1741 = vmatpush1.msra.mxu0 0.0
  %1742 = vmatprep.subr.mxu0 0.0
  %1743 = vmatpush1.msra.mxu0 0.0
  %1744 = vmatprep.subr.mxu0 0.0
  %1745 = vmatpush1.msra.mxu0 0.0
  %1746 = vmatprep.subr.mxu0 0.0
  %1747 = vmatpush1.msra.mxu0 0.0
  %1748 = vmatprep.subr.mxu0 0.0
  %v1749 = vand.u32 %v33, 4294901760
  %v1750 = vsub.f32 %v33, %v1749
  %1751 = vmatpush1.msra.mxu0 %v1750
  %1752 = vmatprep.subr.mxu0 0.0
  %v1753 = vand.u32 %v32, 4294901760
  %v1754 = vsub.f32 %v32, %v1753
  %1755 = vmatpush1.msra.mxu0 %v1754
  %1756 = vmatprep.subr.mxu0 0.0
  %v1757 = vand.u32 %v31, 4294901760
  %v1758 = vsub.f32 %v31, %v1757
  %1759 = vmatpush1.msra.mxu0 %v1758
  %1760 = vmatprep.subr.mxu0 0.0
  %v1761 = vand.u32 %v30, 4294901760
  %v1762 = vsub.f32 %v30, %v1761
  %1763 = vmatpush1.msra.mxu0 %v1762
  %1764 = vmatprep.subr.mxu0 0.0
  %1765 = vmatpush2.msra.mxu0 0.0
  %1766 = vmatprep.subr.mxu0 0.0
  %1767 = vmatpush2.msra.mxu0 0.0
  %1768 = vmatprep.subr.mxu0 0.0
  %1769 = vmatpush2.msra.mxu0 0.0
  %1770 = vmatprep.subr.mxu0 0.0
  %1771 = vmatpush2.msra.mxu0 0.0
  %1772 = vmatprep.subr.mxu0 0.0
  %1773 = vmatpush2.msra.mxu0 0.0
  %1774 = vmatprep.subr.mxu0 0.0
  %1775 = vmatpush2.msra.mxu0 0.0
  %1776 = vmatprep.subr.mxu0 0.0
  %1777 = vmatpush2.msra.mxu0 0.0
  %1778 = vmatprep.subr.mxu0 0.0
  %1779 = vmatpush2.msra.mxu0 0.0
  %1780 = vmatprep.subr.mxu0 0.0
  %1781 = vmatpush2.msra.mxu0 0.0
  %1782 = vmatprep.subr.mxu0 0.0
  %1783 = vmatpush2.msra.mxu0 0.0
  %1784 = vmatprep.subr.mxu0 0.0
  %1785 = vmatpush2.msra.mxu0 0.0
  %1786 = vmatprep.subr.mxu0 0.0
  %1787 = vmatpush2.msra.mxu0 0.0
  %1788 = vmatprep.subr.mxu0 0.0
  %1789 = vmatpush2.msra.mxu0 0.0
  %1790 = vmatprep.subr.mxu0 0.0
  %1791 = vmatpush2.msra.mxu0 0.0
  %1792 = vmatprep.subr.mxu0 0.0
  %1793 = vmatpush2.msra.mxu0 0.0
  %1794 = vmatprep.subr.mxu0 0.0
  %1795 = vmatpush2.msra.mxu0 0.0
  %1796 = vmatprep.mubr.f32.mxu0 0.0
  %v1797 = vand.u32 %v1552, 4294901760
  %v1798 = vsub.f32 %v1552, %v1797
  %1799 = vmatmul.mubr.f32.gmra.mxu0 %v1798
  %v1800 = vpop.f32.mrf.mxu0
  %v1801 = vadd.f32 %v1721, %v1800
  %v1802 = vpop.f32.mrf.mxu0
  %1803 = vdwg.mxu0
  %1804 = vmatprep.subr.mxu0 0.0
  %1805 = vmatpush1.msra.mxu0 0.0
  %1806 = vmatprep.subr.mxu0 0.0
  %1807 = vmatpush1.msra.mxu0 0.0
  %1808 = vmatprep.subr.mxu0 0.0
  %1809 = vmatpush1.msra.mxu0 0.0
  %1810 = vmatprep.subr.mxu0 0.0
  %1811 = vmatpush1.msra.mxu0 0.0
  %1812 = vmatprep.subr.mxu0 0.0
  %1813 = vmatpush1.msra.mxu0 0.0
  %1814 = vmatprep.subr.mxu0 0.0
  %1815 = vmatpush1.msra.mxu0 0.0
  %1816 = vmatprep.subr.mxu0 0.0
  %1817 = vmatpush1.msra.mxu0 0.0
  %1818 = vmatprep.subr.mxu0 0.0
  %1819 = vmatpush1.msra.mxu0 0.0
  %1820 = vmatprep.subr.mxu0 0.0
  %1821 = vmatpush1.msra.mxu0 0.0
  %1822 = vmatprep.subr.mxu0 0.0
  %1823 = vmatpush1.msra.mxu0 0.0
  %1824 = vmatprep.subr.mxu0 0.0
  %1825 = vmatpush1.msra.mxu0 0.0
  %1826 = vmatprep.subr.mxu0 0.0
  %1827 = vmatpush1.msra.mxu0 0.0
  %1828 = vmatprep.subr.mxu0 0.0
  %v1829 = vand.u32 %v33, 4294901760
  %1830 = vmatpush1.msra.mxu0 %v1829
  %1831 = vmatprep.subr.mxu0 0.0
  %v1832 = vand.u32 %v32, 4294901760
  %1833 = vmatpush1.msra.mxu0 %v1832
  %1834 = vmatprep.subr.mxu0 0.0
  %v1835 = vand.u32 %v31, 4294901760
  %1836 = vmatpush1.msra.mxu0 %v1835
  %1837 = vmatprep.subr.mxu0 0.0
  %v1838 = vand.u32 %v30, 4294901760
  %1839 = vmatpush1.msra.mxu0 %v1838
  %1840 = vmatprep.subr.mxu0 0.0
  %1841 = vmatpush2.msra.mxu0 0.0
  %1842 = vmatprep.subr.mxu0 0.0
  %1843 = vmatpush2.msra.mxu0 0.0
  %1844 = vmatprep.subr.mxu0 0.0
  %1845 = vmatpush2.msra.mxu0 0.0
  %1846 = vmatprep.subr.mxu0 0.0
  %1847 = vmatpush2.msra.mxu0 0.0
  %1848 = vmatprep.subr.mxu0 0.0
  %1849 = vmatpush2.msra.mxu0 0.0
  %1850 = vmatprep.subr.mxu0 0.0
  %1851 = vmatpush2.msra.mxu0 0.0
  %1852 = vmatprep.subr.mxu0 0.0
  %1853 = vmatpush2.msra.mxu0 0.0
  %1854 = vmatprep.subr.mxu0 0.0
  %1855 = vmatpush2.msra.mxu0 0.0
  %1856 = vmatprep.subr.mxu0 0.0
  %1857 = vmatpush2.msra.mxu0 0.0
  %1858 = vmatprep.subr.mxu0 0.0
  %1859 = vmatpush2.msra.mxu0 0.0
  %1860 = vmatprep.subr.mxu0 0.0
  %1861 = vmatpush2.msra.mxu0 0.0
  %1862 = vmatprep.subr.mxu0 0.0
  %1863 = vmatpush2.msra.mxu0 0.0
  %1864 = vmatprep.subr.mxu0 0.0
  %1865 = vmatpush2.msra.mxu0 0.0
  %1866 = vmatprep.subr.mxu0 0.0
  %1867 = vmatpush2.msra.mxu0 0.0
  %1868 = vmatprep.subr.mxu0 0.0
  %1869 = vmatpush2.msra.mxu0 0.0
  %1870 = vmatprep.subr.mxu0 0.0
  %1871 = vmatpush2.msra.mxu0 0.0
  %1872 = vmatprep.mubr.f32.mxu0 0.0
  %v1873 = vand.u32 %v1552, 4294901760
  %v1874 = vsub.f32 %v1552, %v1873
  %v1875 = vand.u32 %v1874, 4294901760
  %1876 = vmatmul.mubr.f32.gmra.mxu0 %v1875
  %v1877 = vpop.f32.mrf.mxu0
  %v1878 = vadd.f32 %v1801, %v1877
  %v1879 = vpop.f32.mrf.mxu0
  %1880 = vdwg.mxu0
  %1881 = vmatprep.subr.mxu0 0.0
  %1882 = vmatpush1.msra.mxu0 0.0
  %1883 = vmatprep.subr.mxu0 0.0
  %1884 = vmatpush1.msra.mxu0 0.0
  %1885 = vmatprep.subr.mxu0 0.0
  %1886 = vmatpush1.msra.mxu0 0.0
  %1887 = vmatprep.subr.mxu0 0.0
  %1888 = vmatpush1.msra.mxu0 0.0
  %1889 = vmatprep.subr.mxu0 0.0
  %1890 = vmatpush1.msra.mxu0 0.0
  %1891 = vmatprep.subr.mxu0 0.0
  %1892 = vmatpush1.msra.mxu0 0.0
  %1893 = vmatprep.subr.mxu0 0.0
  %1894 = vmatpush1.msra.mxu0 0.0
  %1895 = vmatprep.subr.mxu0 0.0
  %1896 = vmatpush1.msra.mxu0 0.0
  %1897 = vmatprep.subr.mxu0 0.0
  %1898 = vmatpush1.msra.mxu0 0.0
  %1899 = vmatprep.subr.mxu0 0.0
  %1900 = vmatpush1.msra.mxu0 0.0
  %1901 = vmatprep.subr.mxu0 0.0
  %1902 = vmatpush1.msra.mxu0 0.0
  %1903 = vmatprep.subr.mxu0 0.0
  %1904 = vmatpush1.msra.mxu0 0.0
  %1905 = vmatprep.subr.mxu0 0.0
  %v1906 = vand.u32 %v33, 4294901760
  %v1907 = vsub.f32 %v33, %v1906
  %v1908 = vand.u32 %v1907, 4294901760
  %1909 = vmatpush1.msra.mxu0 %v1908
  %1910 = vmatprep.subr.mxu0 0.0
  %v1911 = vand.u32 %v32, 4294901760
  %v1912 = vsub.f32 %v32, %v1911
  %v1913 = vand.u32 %v1912, 4294901760
  %1914 = vmatpush1.msra.mxu0 %v1913
  %1915 = vmatprep.subr.mxu0 0.0
  %v1916 = vand.u32 %v31, 4294901760
  %v1917 = vsub.f32 %v31, %v1916
  %v1918 = vand.u32 %v1917, 4294901760
  %1919 = vmatpush1.msra.mxu0 %v1918
  %1920 = vmatprep.subr.mxu0 0.0
  %v1921 = vand.u32 %v30, 4294901760
  %v1922 = vsub.f32 %v30, %v1921
  %v1923 = vand.u32 %v1922, 4294901760
  %1924 = vmatpush1.msra.mxu0 %v1923
  %1925 = vmatprep.subr.mxu0 0.0
  %1926 = vmatpush2.msra.mxu0 0.0
  %1927 = vmatprep.subr.mxu0 0.0
  %1928 = vmatpush2.msra.mxu0 0.0
  %1929 = vmatprep.subr.mxu0 0.0
  %1930 = vmatpush2.msra.mxu0 0.0
  %1931 = vmatprep.subr.mxu0 0.0
  %1932 = vmatpush2.msra.mxu0 0.0
  %1933 = vmatprep.subr.mxu0 0.0
  %1934 = vmatpush2.msra.mxu0 0.0
  %1935 = vmatprep.subr.mxu0 0.0
  %1936 = vmatpush2.msra.mxu0 0.0
  %1937 = vmatprep.subr.mxu0 0.0
  %1938 = vmatpush2.msra.mxu0 0.0
  %1939 = vmatprep.subr.mxu0 0.0
  %1940 = vmatpush2.msra.mxu0 0.0
  %1941 = vmatprep.subr.mxu0 0.0
  %1942 = vmatpush2.msra.mxu0 0.0
  %1943 = vmatprep.subr.mxu0 0.0
  %1944 = vmatpush2.msra.mxu0 0.0
  %1945 = vmatprep.subr.mxu0 0.0
  %1946 = vmatpush2.msra.mxu0 0.0
  %1947 = vmatprep.subr.mxu0 0.0
  %1948 = vmatpush2.msra.mxu0 0.0
  %1949 = vmatprep.subr.mxu0 0.0
  %1950 = vmatpush2.msra.mxu0 0.0
  %1951 = vmatprep.subr.mxu0 0.0
  %1952 = vmatpush2.msra.mxu0 0.0
  %1953 = vmatprep.subr.mxu0 0.0
  %1954 = vmatpush2.msra.mxu0 0.0
  %1955 = vmatprep.subr.mxu0 0.0
  %1956 = vmatpush2.msra.mxu0 0.0
  %1957 = vmatprep.mubr.f32.mxu0 0.0
  %v1958 = vand.u32 %v1552, 4294901760
  %1959 = vmatmul.mubr.f32.gmra.mxu0 %v1958
  %v1960 = vpop.f32.mrf.mxu0
  %v1961 = vadd.f32 %v1878, %v1960
  %v1962 = vpop.f32.mrf.mxu0
  %1963 = vdwg.mxu0
  %1964 = vmatprep.subr.mxu0 0.0
  %1965 = vmatpush1.msra.mxu0 0.0
  %1966 = vmatprep.subr.mxu0 0.0
  %1967 = vmatpush1.msra.mxu0 0.0
  %1968 = vmatprep.subr.mxu0 0.0
  %1969 = vmatpush1.msra.mxu0 0.0
  %1970 = vmatprep.subr.mxu0 0.0
  %1971 = vmatpush1.msra.mxu0 0.0
  %1972 = vmatprep.subr.mxu0 0.0
  %1973 = vmatpush1.msra.mxu0 0.0
  %1974 = vmatprep.subr.mxu0 0.0
  %1975 = vmatpush1.msra.mxu0 0.0
  %1976 = vmatprep.subr.mxu0 0.0
  %1977 = vmatpush1.msra.mxu0 0.0
  %1978 = vmatprep.subr.mxu0 0.0
  %1979 = vmatpush1.msra.mxu0 0.0
  %1980 = vmatprep.subr.mxu0 0.0
  %1981 = vmatpush1.msra.mxu0 0.0
  %1982 = vmatprep.subr.mxu0 0.0
  %1983 = vmatpush1.msra.mxu0 0.0
  %1984 = vmatprep.subr.mxu0 0.0
  %1985 = vmatpush1.msra.mxu0 0.0
  %1986 = vmatprep.subr.mxu0 0.0
  %1987 = vmatpush1.msra.mxu0 0.0
  %1988 = vmatprep.subr.mxu0 0.0
  %v1989 = vand.u32 %v33, 4294901760
  %1990 = vmatpush1.msra.mxu0 %v1989
  %1991 = vmatprep.subr.mxu0 0.0
  %v1992 = vand.u32 %v32, 4294901760
  %1993 = vmatpush1.msra.mxu0 %v1992
  %1994 = vmatprep.subr.mxu0 0.0
  %v1995 = vand.u32 %v31, 4294901760
  %1996 = vmatpush1.msra.mxu0 %v1995
  %1997 = vmatprep.subr.mxu0 0.0
  %v1998 = vand.u32 %v30, 4294901760
  %1999 = vmatpush1.msra.mxu0 %v1998
  %2000 = vmatprep.subr.mxu0 0.0
  %2001 = vmatpush2.msra.mxu0 0.0
  %2002 = vmatprep.subr.mxu0 0.0
  %2003 = vmatpush2.msra.mxu0 0.0
  %2004 = vmatprep.subr.mxu0 0.0
  %2005 = vmatpush2.msra.mxu0 0.0
  %2006 = vmatprep.subr.mxu0 0.0
  %2007 = vmatpush2.msra.mxu0 0.0
  %2008 = vmatprep.subr.mxu0 0.0
  %2009 = vmatpush2.msra.mxu0 0.0
  %2010 = vmatprep.subr.mxu0 0.0
  %2011 = vmatpush2.msra.mxu0 0.0
  %2012 = vmatprep.subr.mxu0 0.0
  %2013 = vmatpush2.msra.mxu0 0.0
  %2014 = vmatprep.subr.mxu0 0.0
  %2015 = vmatpush2.msra.mxu0 0.0
  %2016 = vmatprep.subr.mxu0 0.0
  %2017 = vmatpush2.msra.mxu0 0.0
  %2018 = vmatprep.subr.mxu0 0.0
  %2019 = vmatpush2.msra.mxu0 0.0
  %2020 = vmatprep.subr.mxu0 0.0
  %2021 = vmatpush2.msra.mxu0 0.0
  %2022 = vmatprep.subr.mxu0 0.0
  %2023 = vmatpush2.msra.mxu0 0.0
  %2024 = vmatprep.subr.mxu0 0.0
  %2025 = vmatpush2.msra.mxu0 0.0
  %2026 = vmatprep.subr.mxu0 0.0
  %2027 = vmatpush2.msra.mxu0 0.0
  %2028 = vmatprep.subr.mxu0 0.0
  %2029 = vmatpush2.msra.mxu0 0.0
  %2030 = vmatprep.subr.mxu0 0.0
  %2031 = vmatpush2.msra.mxu0 0.0
  %2032 = vmatprep.mubr.f32.mxu0 0.0
  %v2033 = vand.u32 %v1552, 4294901760
  %2034 = vmatmul.mubr.f32.gmra.mxu0 %v2033
  %v2035 = vpop.f32.mrf.mxu0
  %v2036 = vadd.f32 %v1961, %v2035
  %v2037 = vpop.f32.mrf.mxu0
  %2038 = vdwg.mxu0
  %v2039 = vxor.u32 %v2036, 2147483648
  %v2040 = vmul.f32 %v2039, 1.442695
  %v2041 = vpow.pop %v2040
  %v2042 = vadd.f32 %v2041, 1.0
  %v2043 = vrcp.pop %v2042
  %v2044 = vmul.f32 1.0, %v2043
  %s2045 = scalar_lea.vmem %s0, 6
  %v2046 = vld [vmem:[%s2045] sm:$0x3]
  %v2047 = vsub.f32 %v2046, %v1548
  %v2048 = vmul.f32 %v2044, %v2047
  %v2049 = vadd.f32 %v1548, %v2048
  %2050 = vst.msk [vmem:[#allocation2] sm:$0x3] %vm535, %v2049
  %s2051 = scalar_lea.vmem %s4, 6
  %2052 = vst.msk [vmem:[%s2051] sm:$0x3] %vm535, %v2049
  %v2053 = vld [vmem:[#allocation2] sm:$0x3]
  %s2054 = scalar_lea.vmem %s1, 8
  %v2055 = vld [vmem:[%s2054] sm:$0x3]
  %v2057 = vsel %vm36, %v2053, 0
  %2059 = vmatprep.subr.mxu0 0.0
  %2060 = vmatpush1.msra.mxu0 0.0
  %2061 = vmatprep.subr.mxu0 0.0
  %2062 = vmatpush1.msra.mxu0 0.0
  %2063 = vmatprep.subr.mxu0 0.0
  %2064 = vmatpush1.msra.mxu0 0.0
  %2065 = vmatprep.subr.mxu0 0.0
  %2066 = vmatpush1.msra.mxu0 0.0
  %2067 = vmatprep.subr.mxu0 0.0
  %2068 = vmatpush1.msra.mxu0 0.0
  %2069 = vmatprep.subr.mxu0 0.0
  %2070 = vmatpush1.msra.mxu0 0.0
  %2071 = vmatprep.subr.mxu0 0.0
  %2072 = vmatpush1.msra.mxu0 0.0
  %2073 = vmatprep.subr.mxu0 0.0
  %2074 = vmatpush1.msra.mxu0 0.0
  %2075 = vmatprep.subr.mxu0 0.0
  %2076 = vmatpush1.msra.mxu0 0.0
  %2077 = vmatprep.subr.mxu0 0.0
  %2078 = vmatpush1.msra.mxu0 0.0
  %2079 = vmatprep.subr.mxu0 0.0
  %2080 = vmatpush1.msra.mxu0 0.0
  %2081 = vmatprep.subr.mxu0 0.0
  %2082 = vmatpush1.msra.mxu0 0.0
  %2083 = vmatprep.subr.mxu0 0.0
  %v2084 = vand.u32 %v33, 4294901760
  %2085 = vmatpush1.msra.mxu0 %v2084
  %2086 = vmatprep.subr.mxu0 0.0
  %v2087 = vand.u32 %v32, 4294901760
  %2088 = vmatpush1.msra.mxu0 %v2087
  %2089 = vmatprep.subr.mxu0 0.0
  %v2090 = vand.u32 %v31, 4294901760
  %2091 = vmatpush1.msra.mxu0 %v2090
  %2092 = vmatprep.subr.mxu0 0.0
  %v2093 = vand.u32 %v30, 4294901760
  %2094 = vmatpush1.msra.mxu0 %v2093
  %2095 = vmatprep.subr.mxu0 0.0
  %2096 = vmatpush2.msra.mxu0 0.0
  %2097 = vmatprep.subr.mxu0 0.0
  %2098 = vmatpush2.msra.mxu0 0.0
  %2099 = vmatprep.subr.mxu0 0.0
  %2100 = vmatpush2.msra.mxu0 0.0
  %2101 = vmatprep.subr.mxu0 0.0
  %2102 = vmatpush2.msra.mxu0 0.0
  %2103 = vmatprep.subr.mxu0 0.0
  %2104 = vmatpush2.msra.mxu0 0.0
  %2105 = vmatprep.subr.mxu0 0.0
  %2106 = vmatpush2.msra.mxu0 0.0
  %2107 = vmatprep.subr.mxu0 0.0
  %2108 = vmatpush2.msra.mxu0 0.0
  %2109 = vmatprep.subr.mxu0 0.0
  %2110 = vmatpush2.msra.mxu0 0.0
  %2111 = vmatprep.subr.mxu0 0.0
  %2112 = vmatpush2.msra.mxu0 0.0
  %2113 = vmatprep.subr.mxu0 0.0
  %2114 = vmatpush2.msra.mxu0 0.0
  %2115 = vmatprep.subr.mxu0 0.0
  %2116 = vmatpush2.msra.mxu0 0.0
  %2117 = vmatprep.subr.mxu0 0.0
  %2118 = vmatpush2.msra.mxu0 0.0
  %2119 = vmatprep.subr.mxu0 0.0
  %2120 = vmatpush2.msra.mxu0 0.0
  %2121 = vmatprep.subr.mxu0 0.0
  %2122 = vmatpush2.msra.mxu0 0.0
  %2123 = vmatprep.subr.mxu0 0.0
  %2124 = vmatpush2.msra.mxu0 0.0
  %2125 = vmatprep.subr.mxu0 0.0
  %2126 = vmatpush2.msra.mxu0 0.0
  %2127 = vmatprep.mubr.f32.mxu0 0.0
  %v2128 = vand.u32 %v2057, 4294901760
  %v2129 = vsub.f32 %v2057, %v2128
  %v2130 = vand.u32 %v2129, 4294901760
  %v2131 = vsub.f32 %v2129, %v2130
  %v2132 = vand.u32 %v2131, 4294901760
  %2133 = vmatmul.mubr.f32.gmra.mxu0 %v2132
  %v2134 = vpop.f32.mrf.mxu0
  %v2135 = vadd.f32 %v2055, %v2134
  %v2136 = vpop.f32.mrf.mxu0
  %2137 = vdwg.mxu0
  %2138 = vmatprep.subr.mxu0 0.0
  %2139 = vmatpush1.msra.mxu0 0.0
  %2140 = vmatprep.subr.mxu0 0.0
  %2141 = vmatpush1.msra.mxu0 0.0
  %2142 = vmatprep.subr.mxu0 0.0
  %2143 = vmatpush1.msra.mxu0 0.0
  %2144 = vmatprep.subr.mxu0 0.0
  %2145 = vmatpush1.msra.mxu0 0.0
  %2146 = vmatprep.subr.mxu0 0.0
  %2147 = vmatpush1.msra.mxu0 0.0
  %2148 = vmatprep.subr.mxu0 0.0
  %2149 = vmatpush1.msra.mxu0 0.0
  %2150 = vmatprep.subr.mxu0 0.0
  %2151 = vmatpush1.msra.mxu0 0.0
  %2152 = vmatprep.subr.mxu0 0.0
  %2153 = vmatpush1.msra.mxu0 0.0
  %2154 = vmatprep.subr.mxu0 0.0
  %2155 = vmatpush1.msra.mxu0 0.0
  %2156 = vmatprep.subr.mxu0 0.0
  %2157 = vmatpush1.msra.mxu0 0.0
  %2158 = vmatprep.subr.mxu0 0.0
  %2159 = vmatpush1.msra.mxu0 0.0
  %2160 = vmatprep.subr.mxu0 0.0
  %2161 = vmatpush1.msra.mxu0 0.0
  %2162 = vmatprep.subr.mxu0 0.0
  %v2163 = vand.u32 %v33, 4294901760
  %v2164 = vsub.f32 %v33, %v2163
  %v2165 = vand.u32 %v2164, 4294901760
  %v2166 = vsub.f32 %v2164, %v2165
  %v2167 = vand.u32 %v2166, 4294901760
  %2168 = vmatpush1.msra.mxu0 %v2167
  %2169 = vmatprep.subr.mxu0 0.0
  %v2170 = vand.u32 %v32, 4294901760
  %v2171 = vsub.f32 %v32, %v2170
  %v2172 = vand.u32 %v2171, 4294901760
  %v2173 = vsub.f32 %v2171, %v2172
  %v2174 = vand.u32 %v2173, 4294901760
  %2175 = vmatpush1.msra.mxu0 %v2174
  %2176 = vmatprep.subr.mxu0 0.0
  %v2177 = vand.u32 %v31, 4294901760
  %v2178 = vsub.f32 %v31, %v2177
  %v2179 = vand.u32 %v2178, 4294901760
  %v2180 = vsub.f32 %v2178, %v2179
  %v2181 = vand.u32 %v2180, 4294901760
  %2182 = vmatpush1.msra.mxu0 %v2181
  %2183 = vmatprep.subr.mxu0 0.0
  %v2184 = vand.u32 %v30, 4294901760
  %v2185 = vsub.f32 %v30, %v2184
  %v2186 = vand.u32 %v2185, 4294901760
  %v2187 = vsub.f32 %v2185, %v2186
  %v2188 = vand.u32 %v2187, 4294901760
  %2189 = vmatpush1.msra.mxu0 %v2188
  %2190 = vmatprep.subr.mxu0 0.0
  %2191 = vmatpush2.msra.mxu0 0.0
  %2192 = vmatprep.subr.mxu0 0.0
  %2193 = vmatpush2.msra.mxu0 0.0
  %2194 = vmatprep.subr.mxu0 0.0
  %2195 = vmatpush2.msra.mxu0 0.0
  %2196 = vmatprep.subr.mxu0 0.0
  %2197 = vmatpush2.msra.mxu0 0.0
  %2198 = vmatprep.subr.mxu0 0.0
  %2199 = vmatpush2.msra.mxu0 0.0
  %2200 = vmatprep.subr.mxu0 0.0
  %2201 = vmatpush2.msra.mxu0 0.0
  %2202 = vmatprep.subr.mxu0 0.0
  %2203 = vmatpush2.msra.mxu0 0.0
  %2204 = vmatprep.subr.mxu0 0.0
  %2205 = vmatpush2.msra.mxu0 0.0
  %2206 = vmatprep.subr.mxu0 0.0
  %2207 = vmatpush2.msra.mxu0 0.0
  %2208 = vmatprep.subr.mxu0 0.0
  %2209 = vmatpush2.msra.mxu0 0.0
  %2210 = vmatprep.subr.mxu0 0.0
  %2211 = vmatpush2.msra.mxu0 0.0
  %2212 = vmatprep.subr.mxu0 0.0
  %2213 = vmatpush2.msra.mxu0 0.0
  %2214 = vmatprep.subr.mxu0 0.0
  %2215 = vmatpush2.msra.mxu0 0.0
  %2216 = vmatprep.subr.mxu0 0.0
  %2217 = vmatpush2.msra.mxu0 0.0
  %2218 = vmatprep.subr.mxu0 0.0
  %2219 = vmatpush2.msra.mxu0 0.0
  %2220 = vmatprep.subr.mxu0 0.0
  %2221 = vmatpush2.msra.mxu0 0.0
  %2222 = vmatprep.mubr.f32.mxu0 0.0
  %v2223 = vand.u32 %v2057, 4294901760
  %2224 = vmatmul.mubr.f32.gmra.mxu0 %v2223
  %v2225 = vpop.f32.mrf.mxu0
  %v2226 = vadd.f32 %v2135, %v2225
  %v2227 = vpop.f32.mrf.mxu0
  %2228 = vdwg.mxu0
  %2229 = vmatprep.subr.mxu0 0.0
  %2230 = vmatpush1.msra.mxu0 0.0
  %2231 = vmatprep.subr.mxu0 0.0
  %2232 = vmatpush1.msra.mxu0 0.0
  %2233 = vmatprep.subr.mxu0 0.0
  %2234 = vmatpush1.msra.mxu0 0.0
  %2235 = vmatprep.subr.mxu0 0.0
  %2236 = vmatpush1.msra.mxu0 0.0
  %2237 = vmatprep.subr.mxu0 0.0
  %2238 = vmatpush1.msra.mxu0 0.0
  %2239 = vmatprep.subr.mxu0 0.0
  %2240 = vmatpush1.msra.mxu0 0.0
  %2241 = vmatprep.subr.mxu0 0.0
  %2242 = vmatpush1.msra.mxu0 0.0
  %2243 = vmatprep.subr.mxu0 0.0
  %2244 = vmatpush1.msra.mxu0 0.0
  %2245 = vmatprep.subr.mxu0 0.0
  %2246 = vmatpush1.msra.mxu0 0.0
  %2247 = vmatprep.subr.mxu0 0.0
  %2248 = vmatpush1.msra.mxu0 0.0
  %2249 = vmatprep.subr.mxu0 0.0
  %2250 = vmatpush1.msra.mxu0 0.0
  %2251 = vmatprep.subr.mxu0 0.0
  %2252 = vmatpush1.msra.mxu0 0.0
  %2253 = vmatprep.subr.mxu0 0.0
  %v2254 = vand.u32 %v33, 4294901760
  %v2255 = vsub.f32 %v33, %v2254
  %2256 = vmatpush1.msra.mxu0 %v2255
  %2257 = vmatprep.subr.mxu0 0.0
  %v2258 = vand.u32 %v32, 4294901760
  %v2259 = vsub.f32 %v32, %v2258
  %2260 = vmatpush1.msra.mxu0 %v2259
  %2261 = vmatprep.subr.mxu0 0.0
  %v2262 = vand.u32 %v31, 4294901760
  %v2263 = vsub.f32 %v31, %v2262
  %2264 = vmatpush1.msra.mxu0 %v2263
  %2265 = vmatprep.subr.mxu0 0.0
  %v2266 = vand.u32 %v30, 4294901760
  %v2267 = vsub.f32 %v30, %v2266
  %2268 = vmatpush1.msra.mxu0 %v2267
  %2269 = vmatprep.subr.mxu0 0.0
  %2270 = vmatpush2.msra.mxu0 0.0
  %2271 = vmatprep.subr.mxu0 0.0
  %2272 = vmatpush2.msra.mxu0 0.0
  %2273 = vmatprep.subr.mxu0 0.0
  %2274 = vmatpush2.msra.mxu0 0.0
  %2275 = vmatprep.subr.mxu0 0.0
  %2276 = vmatpush2.msra.mxu0 0.0
  %2277 = vmatprep.subr.mxu0 0.0
  %2278 = vmatpush2.msra.mxu0 0.0
  %2279 = vmatprep.subr.mxu0 0.0
  %2280 = vmatpush2.msra.mxu0 0.0
  %2281 = vmatprep.subr.mxu0 0.0
  %2282 = vmatpush2.msra.mxu0 0.0
  %2283 = vmatprep.subr.mxu0 0.0
  %2284 = vmatpush2.msra.mxu0 0.0
  %2285 = vmatprep.subr.mxu0 0.0
  %2286 = vmatpush2.msra.mxu0 0.0
  %2287 = vmatprep.subr.mxu0 0.0
  %2288 = vmatpush2.msra.mxu0 0.0
  %2289 = vmatprep.subr.mxu0 0.0
  %2290 = vmatpush2.msra.mxu0 0.0
  %2291 = vmatprep.subr.mxu0 0.0
  %2292 = vmatpush2.msra.mxu0 0.0
  %2293 = vmatprep.subr.mxu0 0.0
  %2294 = vmatpush2.msra.mxu0 0.0
  %2295 = vmatprep.subr.mxu0 0.0
  %2296 = vmatpush2.msra.mxu0 0.0
  %2297 = vmatprep.subr.mxu0 0.0
  %2298 = vmatpush2.msra.mxu0 0.0
  %2299 = vmatprep.subr.mxu0 0.0
  %2300 = vmatpush2.msra.mxu0 0.0
  %2301 = vmatprep.mubr.f32.mxu0 0.0
  %v2302 = vand.u32 %v2057, 4294901760
  %v2303 = vsub.f32 %v2057, %v2302
  %2304 = vmatmul.mubr.f32.gmra.mxu0 %v2303
  %v2305 = vpop.f32.mrf.mxu0
  %v2306 = vadd.f32 %v2226, %v2305
  %v2307 = vpop.f32.mrf.mxu0
  %2308 = vdwg.mxu0
  %2309 = vmatprep.subr.mxu0 0.0
  %2310 = vmatpush1.msra.mxu0 0.0
  %2311 = vmatprep.subr.mxu0 0.0
  %2312 = vmatpush1.msra.mxu0 0.0
  %2313 = vmatprep.subr.mxu0 0.0
  %2314 = vmatpush1.msra.mxu0 0.0
  %2315 = vmatprep.subr.mxu0 0.0
  %2316 = vmatpush1.msra.mxu0 0.0
  %2317 = vmatprep.subr.mxu0 0.0
  %2318 = vmatpush1.msra.mxu0 0.0
  %2319 = vmatprep.subr.mxu0 0.0
  %2320 = vmatpush1.msra.mxu0 0.0
  %2321 = vmatprep.subr.mxu0 0.0
  %2322 = vmatpush1.msra.mxu0 0.0
  %2323 = vmatprep.subr.mxu0 0.0
  %2324 = vmatpush1.msra.mxu0 0.0
  %2325 = vmatprep.subr.mxu0 0.0
  %2326 = vmatpush1.msra.mxu0 0.0
  %2327 = vmatprep.subr.mxu0 0.0
  %2328 = vmatpush1.msra.mxu0 0.0
  %2329 = vmatprep.subr.mxu0 0.0
  %2330 = vmatpush1.msra.mxu0 0.0
  %2331 = vmatprep.subr.mxu0 0.0
  %2332 = vmatpush1.msra.mxu0 0.0
  %2333 = vmatprep.subr.mxu0 0.0
  %v2334 = vand.u32 %v33, 4294901760
  %2335 = vmatpush1.msra.mxu0 %v2334
  %2336 = vmatprep.subr.mxu0 0.0
  %v2337 = vand.u32 %v32, 4294901760
  %2338 = vmatpush1.msra.mxu0 %v2337
  %2339 = vmatprep.subr.mxu0 0.0
  %v2340 = vand.u32 %v31, 4294901760
  %2341 = vmatpush1.msra.mxu0 %v2340
  %2342 = vmatprep.subr.mxu0 0.0
  %v2343 = vand.u32 %v30, 4294901760
  %2344 = vmatpush1.msra.mxu0 %v2343
  %2345 = vmatprep.subr.mxu0 0.0
  %2346 = vmatpush2.msra.mxu0 0.0
  %2347 = vmatprep.subr.mxu0 0.0
  %2348 = vmatpush2.msra.mxu0 0.0
  %2349 = vmatprep.subr.mxu0 0.0
  %2350 = vmatpush2.msra.mxu0 0.0
  %2351 = vmatprep.subr.mxu0 0.0
  %2352 = vmatpush2.msra.mxu0 0.0
  %2353 = vmatprep.subr.mxu0 0.0
  %2354 = vmatpush2.msra.mxu0 0.0
  %2355 = vmatprep.subr.mxu0 0.0
  %2356 = vmatpush2.msra.mxu0 0.0
  %2357 = vmatprep.subr.mxu0 0.0
  %2358 = vmatpush2.msra.mxu0 0.0
  %2359 = vmatprep.subr.mxu0 0.0
  %2360 = vmatpush2.msra.mxu0 0.0
  %2361 = vmatprep.subr.mxu0 0.0
  %2362 = vmatpush2.msra.mxu0 0.0
  %2363 = vmatprep.subr.mxu0 0.0
  %2364 = vmatpush2.msra.mxu0 0.0
  %2365 = vmatprep.subr.mxu0 0.0
  %2366 = vmatpush2.msra.mxu0 0.0
  %2367 = vmatprep.subr.mxu0 0.0
  %2368 = vmatpush2.msra.mxu0 0.0
  %2369 = vmatprep.subr.mxu0 0.0
  %2370 = vmatpush2.msra.mxu0 0.0
  %2371 = vmatprep.subr.mxu0 0.0
  %2372 = vmatpush2.msra.mxu0 0.0
  %2373 = vmatprep.subr.mxu0 0.0
  %2374 = vmatpush2.msra.mxu0 0.0
  %2375 = vmatprep.subr.mxu0 0.0
  %2376 = vmatpush2.msra.mxu0 0.0
  %2377 = vmatprep.mubr.f32.mxu0 0.0
  %v2378 = vand.u32 %v2057, 4294901760
  %v2379 = vsub.f32 %v2057, %v2378
  %v2380 = vand.u32 %v2379, 4294901760
  %2381 = vmatmul.mubr.f32.gmra.mxu0 %v2380
  %v2382 = vpop.f32.mrf.mxu0
  %v2383 = vadd.f32 %v2306, %v2382
  %v2384 = vpop.f32.mrf.mxu0
  %2385 = vdwg.mxu0
  %2386 = vmatprep.subr.mxu0 0.0
  %2387 = vmatpush1.msra.mxu0 0.0
  %2388 = vmatprep.subr.mxu0 0.0
  %2389 = vmatpush1.msra.mxu0 0.0
  %2390 = vmatprep.subr.mxu0 0.0
  %2391 = vmatpush1.msra.mxu0 0.0
  %2392 = vmatprep.subr.mxu0 0.0
  %2393 = vmatpush1.msra.mxu0 0.0
  %2394 = vmatprep.subr.mxu0 0.0
  %2395 = vmatpush1.msra.mxu0 0.0
  %2396 = vmatprep.subr.mxu0 0.0
  %2397 = vmatpush1.msra.mxu0 0.0
  %2398 = vmatprep.subr.mxu0 0.0
  %2399 = vmatpush1.msra.mxu0 0.0
  %2400 = vmatprep.subr.mxu0 0.0
  %2401 = vmatpush1.msra.mxu0 0.0
  %2402 = vmatprep.subr.mxu0 0.0
  %2403 = vmatpush1.msra.mxu0 0.0
  %2404 = vmatprep.subr.mxu0 0.0
  %2405 = vmatpush1.msra.mxu0 0.0
  %2406 = vmatprep.subr.mxu0 0.0
  %2407 = vmatpush1.msra.mxu0 0.0
  %2408 = vmatprep.subr.mxu0 0.0
  %2409 = vmatpush1.msra.mxu0 0.0
  %2410 = vmatprep.subr.mxu0 0.0
  %v2411 = vand.u32 %v33, 4294901760
  %v2412 = vsub.f32 %v33, %v2411
  %v2413 = vand.u32 %v2412, 4294901760
  %2414 = vmatpush1.msra.mxu0 %v2413
  %2415 = vmatprep.subr.mxu0 0.0
  %v2416 = vand.u32 %v32, 4294901760
  %v2417 = vsub.f32 %v32, %v2416
  %v2418 = vand.u32 %v2417, 4294901760
  %2419 = vmatpush1.msra.mxu0 %v2418
  %2420 = vmatprep.subr.mxu0 0.0
  %v2421 = vand.u32 %v31, 4294901760
  %v2422 = vsub.f32 %v31, %v2421
  %v2423 = vand.u32 %v2422, 4294901760
  %2424 = vmatpush1.msra.mxu0 %v2423
  %2425 = vmatprep.subr.mxu0 0.0
  %v2426 = vand.u32 %v30, 4294901760
  %v2427 = vsub.f32 %v30, %v2426
  %v2428 = vand.u32 %v2427, 4294901760
  %2429 = vmatpush1.msra.mxu0 %v2428
  %2430 = vmatprep.subr.mxu0 0.0
  %2431 = vmatpush2.msra.mxu0 0.0
  %2432 = vmatprep.subr.mxu0 0.0
  %2433 = vmatpush2.msra.mxu0 0.0
  %2434 = vmatprep.subr.mxu0 0.0
  %2435 = vmatpush2.msra.mxu0 0.0
  %2436 = vmatprep.subr.mxu0 0.0
  %2437 = vmatpush2.msra.mxu0 0.0
  %2438 = vmatprep.subr.mxu0 0.0
  %2439 = vmatpush2.msra.mxu0 0.0
  %2440 = vmatprep.subr.mxu0 0.0
  %2441 = vmatpush2.msra.mxu0 0.0
  %2442 = vmatprep.subr.mxu0 0.0
  %2443 = vmatpush2.msra.mxu0 0.0
  %2444 = vmatprep.subr.mxu0 0.0
  %2445 = vmatpush2.msra.mxu0 0.0
  %2446 = vmatprep.subr.mxu0 0.0
  %2447 = vmatpush2.msra.mxu0 0.0
  %2448 = vmatprep.subr.mxu0 0.0
  %2449 = vmatpush2.msra.mxu0 0.0
  %2450 = vmatprep.subr.mxu0 0.0
  %2451 = vmatpush2.msra.mxu0 0.0
  %2452 = vmatprep.subr.mxu0 0.0
  %2453 = vmatpush2.msra.mxu0 0.0
  %2454 = vmatprep.subr.mxu0 0.0
  %2455 = vmatpush2.msra.mxu0 0.0
  %2456 = vmatprep.subr.mxu0 0.0
  %2457 = vmatpush2.msra.mxu0 0.0
  %2458 = vmatprep.subr.mxu0 0.0
  %2459 = vmatpush2.msra.mxu0 0.0
  %2460 = vmatprep.subr.mxu0 0.0
  %2461 = vmatpush2.msra.mxu0 0.0
  %2462 = vmatprep.mubr.f32.mxu0 0.0
  %v2463 = vand.u32 %v2057, 4294901760
  %2464 = vmatmul.mubr.f32.gmra.mxu0 %v2463
  %v2465 = vpop.f32.mrf.mxu0
  %v2466 = vadd.f32 %v2383, %v2465
  %v2467 = vpop.f32.mrf.mxu0
  %2468 = vdwg.mxu0
  %2469 = vmatprep.subr.mxu0 0.0
  %2470 = vmatpush1.msra.mxu0 0.0
  %2471 = vmatprep.subr.mxu0 0.0
  %2472 = vmatpush1.msra.mxu0 0.0
  %2473 = vmatprep.subr.mxu0 0.0
  %2474 = vmatpush1.msra.mxu0 0.0
  %2475 = vmatprep.subr.mxu0 0.0
  %2476 = vmatpush1.msra.mxu0 0.0
  %2477 = vmatprep.subr.mxu0 0.0
  %2478 = vmatpush1.msra.mxu0 0.0
  %2479 = vmatprep.subr.mxu0 0.0
  %2480 = vmatpush1.msra.mxu0 0.0
  %2481 = vmatprep.subr.mxu0 0.0
  %2482 = vmatpush1.msra.mxu0 0.0
  %2483 = vmatprep.subr.mxu0 0.0
  %2484 = vmatpush1.msra.mxu0 0.0
  %2485 = vmatprep.subr.mxu0 0.0
  %2486 = vmatpush1.msra.mxu0 0.0
  %2487 = vmatprep.subr.mxu0 0.0
  %2488 = vmatpush1.msra.mxu0 0.0
  %2489 = vmatprep.subr.mxu0 0.0
  %2490 = vmatpush1.msra.mxu0 0.0
  %2491 = vmatprep.subr.mxu0 0.0
  %2492 = vmatpush1.msra.mxu0 0.0
  %2493 = vmatprep.subr.mxu0 0.0
  %v2494 = vand.u32 %v33, 4294901760
  %2495 = vmatpush1.msra.mxu0 %v2494
  %2496 = vmatprep.subr.mxu0 0.0
  %v2497 = vand.u32 %v32, 4294901760
  %2498 = vmatpush1.msra.mxu0 %v2497
  %2499 = vmatprep.subr.mxu0 0.0
  %v2500 = vand.u32 %v31, 4294901760
  %2501 = vmatpush1.msra.mxu0 %v2500
  %2502 = vmatprep.subr.mxu0 0.0
  %v2503 = vand.u32 %v30, 4294901760
  %2504 = vmatpush1.msra.mxu0 %v2503
  %2505 = vmatprep.subr.mxu0 0.0
  %2506 = vmatpush2.msra.mxu0 0.0
  %2507 = vmatprep.subr.mxu0 0.0
  %2508 = vmatpush2.msra.mxu0 0.0
  %2509 = vmatprep.subr.mxu0 0.0
  %2510 = vmatpush2.msra.mxu0 0.0
  %2511 = vmatprep.subr.mxu0 0.0
  %2512 = vmatpush2.msra.mxu0 0.0
  %2513 = vmatprep.subr.mxu0 0.0
  %2514 = vmatpush2.msra.mxu0 0.0
  %2515 = vmatprep.subr.mxu0 0.0
  %2516 = vmatpush2.msra.mxu0 0.0
  %2517 = vmatprep.subr.mxu0 0.0
  %2518 = vmatpush2.msra.mxu0 0.0
  %2519 = vmatprep.subr.mxu0 0.0
  %2520 = vmatpush2.msra.mxu0 0.0
  %2521 = vmatprep.subr.mxu0 0.0
  %2522 = vmatpush2.msra.mxu0 0.0
  %2523 = vmatprep.subr.mxu0 0.0
  %2524 = vmatpush2.msra.mxu0 0.0
  %2525 = vmatprep.subr.mxu0 0.0
  %2526 = vmatpush2.msra.mxu0 0.0
  %2527 = vmatprep.subr.mxu0 0.0
  %2528 = vmatpush2.msra.mxu0 0.0
  %2529 = vmatprep.subr.mxu0 0.0
  %2530 = vmatpush2.msra.mxu0 0.0
  %2531 = vmatprep.subr.mxu0 0.0
  %2532 = vmatpush2.msra.mxu0 0.0
  %2533 = vmatprep.subr.mxu0 0.0
  %2534 = vmatpush2.msra.mxu0 0.0
  %2535 = vmatprep.subr.mxu0 0.0
  %2536 = vmatpush2.msra.mxu0 0.0
  %2537 = vmatprep.mubr.f32.mxu0 0.0
  %v2538 = vand.u32 %v2057, 4294901760
  %2539 = vmatmul.mubr.f32.gmra.mxu0 %v2538
  %v2540 = vpop.f32.mrf.mxu0
  %v2541 = vadd.f32 %v2466, %v2540
  %v2542 = vpop.f32.mrf.mxu0
  %2543 = vdwg.mxu0
  %v2544 = vxor.u32 %v2541, 2147483648
  %v2545 = vmul.f32 %v2544, 1.442695
  %v2546 = vpow.pop %v2545
  %v2547 = vadd.f32 %v2546, 1.0
  %v2548 = vrcp.pop %v2547
  %v2549 = vmul.f32 1.0, %v2548
  %s2550 = scalar_lea.vmem %s0, 8
  %v2551 = vld [vmem:[%s2550] sm:$0x3]
  %v2552 = vsub.f32 %v2551, %v2053
  %v2553 = vmul.f32 %v2549, %v2552
  %v2554 = vadd.f32 %v2053, %v2553
  %2555 = vst.msk [vmem:[#allocation2] sm:$0x3] %vm535, %v2554
  %s2556 = scalar_lea.vmem %s4, 8
  %2557 = vst.msk [vmem:[%s2556] sm:$0x3] %vm535, %v2554
  %v2558 = vld [vmem:[#allocation2] sm:$0x3]
  %s2559 = scalar_lea.vmem %s1, 10
  %v2560 = vld [vmem:[%s2559] sm:$0x3]
  %v2562 = vsel %vm36, %v2558, 0
  %2564 = vmatprep.subr.mxu0 0.0
  %2565 = vmatpush1.msra.mxu0 0.0
  %2566 = vmatprep.subr.mxu0 0.0
  %2567 = vmatpush1.msra.mxu0 0.0
  %2568 = vmatprep.subr.mxu0 0.0
  %2569 = vmatpush1.msra.mxu0 0.0
  %2570 = vmatprep.subr.mxu0 0.0
  %2571 = vmatpush1.msra.mxu0 0.0
  %2572 = vmatprep.subr.mxu0 0.0
  %2573 = vmatpush1.msra.mxu0 0.0
  %2574 = vmatprep.subr.mxu0 0.0
  %2575 = vmatpush1.msra.mxu0 0.0
  %2576 = vmatprep.subr.mxu0 0.0
  %2577 = vmatpush1.msra.mxu0 0.0
  %2578 = vmatprep.subr.mxu0 0.0
  %2579 = vmatpush1.msra.mxu0 0.0
  %2580 = vmatprep.subr.mxu0 0.0
  %2581 = vmatpush1.msra.mxu0 0.0
  %2582 = vmatprep.subr.mxu0 0.0
  %2583 = vmatpush1.msra.mxu0 0.0
  %2584 = vmatprep.subr.mxu0 0.0
  %2585 = vmatpush1.msra.mxu0 0.0
  %2586 = vmatprep.subr.mxu0 0.0
  %2587 = vmatpush1.msra.mxu0 0.0
  %2588 = vmatprep.subr.mxu0 0.0
  %v2589 = vand.u32 %v33, 4294901760
  %2590 = vmatpush1.msra.mxu0 %v2589
  %2591 = vmatprep.subr.mxu0 0.0
  %v2592 = vand.u32 %v32, 4294901760
  %2593 = vmatpush1.msra.mxu0 %v2592
  %2594 = vmatprep.subr.mxu0 0.0
  %v2595 = vand.u32 %v31, 4294901760
  %2596 = vmatpush1.msra.mxu0 %v2595
  %2597 = vmatprep.subr.mxu0 0.0
  %v2598 = vand.u32 %v30, 4294901760
  %2599 = vmatpush1.msra.mxu0 %v2598
  %2600 = vmatprep.subr.mxu0 0.0
  %2601 = vmatpush2.msra.mxu0 0.0
  %2602 = vmatprep.subr.mxu0 0.0
  %2603 = vmatpush2.msra.mxu0 0.0
  %2604 = vmatprep.subr.mxu0 0.0
  %2605 = vmatpush2.msra.mxu0 0.0
  %2606 = vmatprep.subr.mxu0 0.0
  %2607 = vmatpush2.msra.mxu0 0.0
  %2608 = vmatprep.subr.mxu0 0.0
  %2609 = vmatpush2.msra.mxu0 0.0
  %2610 = vmatprep.subr.mxu0 0.0
  %2611 = vmatpush2.msra.mxu0 0.0
  %2612 = vmatprep.subr.mxu0 0.0
  %2613 = vmatpush2.msra.mxu0 0.0
  %2614 = vmatprep.subr.mxu0 0.0
  %2615 = vmatpush2.msra.mxu0 0.0
  %2616 = vmatprep.subr.mxu0 0.0
  %2617 = vmatpush2.msra.mxu0 0.0
  %2618 = vmatprep.subr.mxu0 0.0
  %2619 = vmatpush2.msra.mxu0 0.0
  %2620 = vmatprep.subr.mxu0 0.0
  %2621 = vmatpush2.msra.mxu0 0.0
  %2622 = vmatprep.subr.mxu0 0.0
  %2623 = vmatpush2.msra.mxu0 0.0
  %2624 = vmatprep.subr.mxu0 0.0
  %2625 = vmatpush2.msra.mxu0 0.0
  %2626 = vmatprep.subr.mxu0 0.0
  %2627 = vmatpush2.msra.mxu0 0.0
  %2628 = vmatprep.subr.mxu0 0.0
  %2629 = vmatpush2.msra.mxu0 0.0
  %2630 = vmatprep.subr.mxu0 0.0
  %2631 = vmatpush2.msra.mxu0 0.0
  %2632 = vmatprep.mubr.f32.mxu0 0.0
  %v2633 = vand.u32 %v2562, 4294901760
  %v2634 = vsub.f32 %v2562, %v2633
  %v2635 = vand.u32 %v2634, 4294901760
  %v2636 = vsub.f32 %v2634, %v2635
  %v2637 = vand.u32 %v2636, 4294901760
  %2638 = vmatmul.mubr.f32.gmra.mxu0 %v2637
  %v2639 = vpop.f32.mrf.mxu0
  %v2640 = vadd.f32 %v2560, %v2639
  %v2641 = vpop.f32.mrf.mxu0
  %2642 = vdwg.mxu0
  %2643 = vmatprep.subr.mxu0 0.0
  %2644 = vmatpush1.msra.mxu0 0.0
  %2645 = vmatprep.subr.mxu0 0.0
  %2646 = vmatpush1.msra.mxu0 0.0
  %2647 = vmatprep.subr.mxu0 0.0
  %2648 = vmatpush1.msra.mxu0 0.0
  %2649 = vmatprep.subr.mxu0 0.0
  %2650 = vmatpush1.msra.mxu0 0.0
  %2651 = vmatprep.subr.mxu0 0.0
  %2652 = vmatpush1.msra.mxu0 0.0
  %2653 = vmatprep.subr.mxu0 0.0
  %2654 = vmatpush1.msra.mxu0 0.0
  %2655 = vmatprep.subr.mxu0 0.0
  %2656 = vmatpush1.msra.mxu0 0.0
  %2657 = vmatprep.subr.mxu0 0.0
  %2658 = vmatpush1.msra.mxu0 0.0
  %2659 = vmatprep.subr.mxu0 0.0
  %2660 = vmatpush1.msra.mxu0 0.0
  %2661 = vmatprep.subr.mxu0 0.0
  %2662 = vmatpush1.msra.mxu0 0.0
  %2663 = vmatprep.subr.mxu0 0.0
  %2664 = vmatpush1.msra.mxu0 0.0
  %2665 = vmatprep.subr.mxu0 0.0
  %2666 = vmatpush1.msra.mxu0 0.0
  %2667 = vmatprep.subr.mxu0 0.0
  %v2668 = vand.u32 %v33, 4294901760
  %v2669 = vsub.f32 %v33, %v2668
  %v2670 = vand.u32 %v2669, 4294901760
  %v2671 = vsub.f32 %v2669, %v2670
  %v2672 = vand.u32 %v2671, 4294901760
  %2673 = vmatpush1.msra.mxu0 %v2672
  %2674 = vmatprep.subr.mxu0 0.0
  %v2675 = vand.u32 %v32, 4294901760
  %v2676 = vsub.f32 %v32, %v2675
  %v2677 = vand.u32 %v2676, 4294901760
  %v2678 = vsub.f32 %v2676, %v2677
  %v2679 = vand.u32 %v2678, 4294901760
  %2680 = vmatpush1.msra.mxu0 %v2679
  %2681 = vmatprep.subr.mxu0 0.0
  %v2682 = vand.u32 %v31, 4294901760
  %v2683 = vsub.f32 %v31, %v2682
  %v2684 = vand.u32 %v2683, 4294901760
  %v2685 = vsub.f32 %v2683, %v2684
  %v2686 = vand.u32 %v2685, 4294901760
  %2687 = vmatpush1.msra.mxu0 %v2686
  %2688 = vmatprep.subr.mxu0 0.0
  %v2689 = vand.u32 %v30, 4294901760
  %v2690 = vsub.f32 %v30, %v2689
  %v2691 = vand.u32 %v2690, 4294901760
  %v2692 = vsub.f32 %v2690, %v2691
  %v2693 = vand.u32 %v2692, 4294901760
  %2694 = vmatpush1.msra.mxu0 %v2693
  %2695 = vmatprep.subr.mxu0 0.0
  %2696 = vmatpush2.msra.mxu0 0.0
  %2697 = vmatprep.subr.mxu0 0.0
  %2698 = vmatpush2.msra.mxu0 0.0
  %2699 = vmatprep.subr.mxu0 0.0
  %2700 = vmatpush2.msra.mxu0 0.0
  %2701 = vmatprep.subr.mxu0 0.0
  %2702 = vmatpush2.msra.mxu0 0.0
  %2703 = vmatprep.subr.mxu0 0.0
  %2704 = vmatpush2.msra.mxu0 0.0
  %2705 = vmatprep.subr.mxu0 0.0
  %2706 = vmatpush2.msra.mxu0 0.0
  %2707 = vmatprep.subr.mxu0 0.0
  %2708 = vmatpush2.msra.mxu0 0.0
  %2709 = vmatprep.subr.mxu0 0.0
  %2710 = vmatpush2.msra.mxu0 0.0
  %2711 = vmatprep.subr.mxu0 0.0
  %2712 = vmatpush2.msra.mxu0 0.0
  %2713 = vmatprep.subr.mxu0 0.0
  %2714 = vmatpush2.msra.mxu0 0.0
  %2715 = vmatprep.subr.mxu0 0.0
  %2716 = vmatpush2.msra.mxu0 0.0
  %2717 = vmatprep.subr.mxu0 0.0
  %2718 = vmatpush2.msra.mxu0 0.0
  %2719 = vmatprep.subr.mxu0 0.0
  %2720 = vmatpush2.msra.mxu0 0.0
  %2721 = vmatprep.subr.mxu0 0.0
  %2722 = vmatpush2.msra.mxu0 0.0
  %2723 = vmatprep.subr.mxu0 0.0
  %2724 = vmatpush2.msra.mxu0 0.0
  %2725 = vmatprep.subr.mxu0 0.0
  %2726 = vmatpush2.msra.mxu0 0.0
  %2727 = vmatprep.mubr.f32.mxu0 0.0
  %v2728 = vand.u32 %v2562, 4294901760
  %2729 = vmatmul.mubr.f32.gmra.mxu0 %v2728
  %v2730 = vpop.f32.mrf.mxu0
  %v2731 = vadd.f32 %v2640, %v2730
  %v2732 = vpop.f32.mrf.mxu0
  %2733 = vdwg.mxu0
  %2734 = vmatprep.subr.mxu0 0.0
  %2735 = vmatpush1.msra.mxu0 0.0
  %2736 = vmatprep.subr.mxu0 0.0
  %2737 = vmatpush1.msra.mxu0 0.0
  %2738 = vmatprep.subr.mxu0 0.0
  %2739 = vmatpush1.msra.mxu0 0.0
  %2740 = vmatprep.subr.mxu0 0.0
  %2741 = vmatpush1.msra.mxu0 0.0
  %2742 = vmatprep.subr.mxu0 0.0
  %2743 = vmatpush1.msra.mxu0 0.0
  %2744 = vmatprep.subr.mxu0 0.0
  %2745 = vmatpush1.msra.mxu0 0.0
  %2746 = vmatprep.subr.mxu0 0.0
  %2747 = vmatpush1.msra.mxu0 0.0
  %2748 = vmatprep.subr.mxu0 0.0
  %2749 = vmatpush1.msra.mxu0 0.0
  %2750 = vmatprep.subr.mxu0 0.0
  %2751 = vmatpush1.msra.mxu0 0.0
  %2752 = vmatprep.subr.mxu0 0.0
  %2753 = vmatpush1.msra.mxu0 0.0
  %2754 = vmatprep.subr.mxu0 0.0
  %2755 = vmatpush1.msra.mxu0 0.0
  %2756 = vmatprep.subr.mxu0 0.0
  %2757 = vmatpush1.msra.mxu0 0.0
  %2758 = vmatprep.subr.mxu0 0.0
  %v2759 = vand.u32 %v33, 4294901760
  %v2760 = vsub.f32 %v33, %v2759
  %2761 = vmatpush1.msra.mxu0 %v2760
  %2762 = vmatprep.subr.mxu0 0.0
  %v2763 = vand.u32 %v32, 4294901760
  %v2764 = vsub.f32 %v32, %v2763
  %2765 = vmatpush1.msra.mxu0 %v2764
  %2766 = vmatprep.subr.mxu0 0.0
  %v2767 = vand.u32 %v31, 4294901760
  %v2768 = vsub.f32 %v31, %v2767
  %2769 = vmatpush1.msra.mxu0 %v2768
  %2770 = vmatprep.subr.mxu0 0.0
  %v2771 = vand.u32 %v30, 4294901760
  %v2772 = vsub.f32 %v30, %v2771
  %2773 = vmatpush1.msra.mxu0 %v2772
  %2774 = vmatprep.subr.mxu0 0.0
  %2775 = vmatpush2.msra.mxu0 0.0
  %2776 = vmatprep.subr.mxu0 0.0
  %2777 = vmatpush2.msra.mxu0 0.0
  %2778 = vmatprep.subr.mxu0 0.0
  %2779 = vmatpush2.msra.mxu0 0.0
  %2780 = vmatprep.subr.mxu0 0.0
  %2781 = vmatpush2.msra.mxu0 0.0
  %2782 = vmatprep.subr.mxu0 0.0
  %2783 = vmatpush2.msra.mxu0 0.0
  %2784 = vmatprep.subr.mxu0 0.0
  %2785 = vmatpush2.msra.mxu0 0.0
  %2786 = vmatprep.subr.mxu0 0.0
  %2787 = vmatpush2.msra.mxu0 0.0
  %2788 = vmatprep.subr.mxu0 0.0
  %2789 = vmatpush2.msra.mxu0 0.0
  %2790 = vmatprep.subr.mxu0 0.0
  %2791 = vmatpush2.msra.mxu0 0.0
  %2792 = vmatprep.subr.mxu0 0.0
  %2793 = vmatpush2.msra.mxu0 0.0
  %2794 = vmatprep.subr.mxu0 0.0
  %2795 = vmatpush2.msra.mxu0 0.0
  %2796 = vmatprep.subr.mxu0 0.0
  %2797 = vmatpush2.msra.mxu0 0.0
  %2798 = vmatprep.subr.mxu0 0.0
  %2799 = vmatpush2.msra.mxu0 0.0
  %2800 = vmatprep.subr.mxu0 0.0
  %2801 = vmatpush2.msra.mxu0 0.0
  %2802 = vmatprep.subr.mxu0 0.0
  %2803 = vmatpush2.msra.mxu0 0.0
  %2804 = vmatprep.subr.mxu0 0.0
  %2805 = vmatpush2.msra.mxu0 0.0
  %2806 = vmatprep.mubr.f32.mxu0 0.0
  %v2807 = vand.u32 %v2562, 4294901760
  %v2808 = vsub.f32 %v2562, %v2807
  %2809 = vmatmul.mubr.f32.gmra.mxu0 %v2808
  %v2810 = vpop.f32.mrf.mxu0
  %v2811 = vadd.f32 %v2731, %v2810
  %v2812 = vpop.f32.mrf.mxu0
  %2813 = vdwg.mxu0
  %2814 = vmatprep.subr.mxu0 0.0
  %2815 = vmatpush1.msra.mxu0 0.0
  %2816 = vmatprep.subr.mxu0 0.0
  %2817 = vmatpush1.msra.mxu0 0.0
  %2818 = vmatprep.subr.mxu0 0.0
  %2819 = vmatpush1.msra.mxu0 0.0
  %2820 = vmatprep.subr.mxu0 0.0
  %2821 = vmatpush1.msra.mxu0 0.0
  %2822 = vmatprep.subr.mxu0 0.0
  %2823 = vmatpush1.msra.mxu0 0.0
  %2824 = vmatprep.subr.mxu0 0.0
  %2825 = vmatpush1.msra.mxu0 0.0
  %2826 = vmatprep.subr.mxu0 0.0
  %2827 = vmatpush1.msra.mxu0 0.0
  %2828 = vmatprep.subr.mxu0 0.0
  %2829 = vmatpush1.msra.mxu0 0.0
  %2830 = vmatprep.subr.mxu0 0.0
  %2831 = vmatpush1.msra.mxu0 0.0
  %2832 = vmatprep.subr.mxu0 0.0
  %2833 = vmatpush1.msra.mxu0 0.0
  %2834 = vmatprep.subr.mxu0 0.0
  %2835 = vmatpush1.msra.mxu0 0.0
  %2836 = vmatprep.subr.mxu0 0.0
  %2837 = vmatpush1.msra.mxu0 0.0
  %2838 = vmatprep.subr.mxu0 0.0
  %v2839 = vand.u32 %v33, 4294901760
  %2840 = vmatpush1.msra.mxu0 %v2839
  %2841 = vmatprep.subr.mxu0 0.0
  %v2842 = vand.u32 %v32, 4294901760
  %2843 = vmatpush1.msra.mxu0 %v2842
  %2844 = vmatprep.subr.mxu0 0.0
  %v2845 = vand.u32 %v31, 4294901760
  %2846 = vmatpush1.msra.mxu0 %v2845
  %2847 = vmatprep.subr.mxu0 0.0
  %v2848 = vand.u32 %v30, 4294901760
  %2849 = vmatpush1.msra.mxu0 %v2848
  %2850 = vmatprep.subr.mxu0 0.0
  %2851 = vmatpush2.msra.mxu0 0.0
  %2852 = vmatprep.subr.mxu0 0.0
  %2853 = vmatpush2.msra.mxu0 0.0
  %2854 = vmatprep.subr.mxu0 0.0
  %2855 = vmatpush2.msra.mxu0 0.0
  %2856 = vmatprep.subr.mxu0 0.0
  %2857 = vmatpush2.msra.mxu0 0.0
  %2858 = vmatprep.subr.mxu0 0.0
  %2859 = vmatpush2.msra.mxu0 0.0
  %2860 = vmatprep.subr.mxu0 0.0
  %2861 = vmatpush2.msra.mxu0 0.0
  %2862 = vmatprep.subr.mxu0 0.0
  %2863 = vmatpush2.msra.mxu0 0.0
  %2864 = vmatprep.subr.mxu0 0.0
  %2865 = vmatpush2.msra.mxu0 0.0
  %2866 = vmatprep.subr.mxu0 0.0
  %2867 = vmatpush2.msra.mxu0 0.0
  %2868 = vmatprep.subr.mxu0 0.0
  %2869 = vmatpush2.msra.mxu0 0.0
  %2870 = vmatprep.subr.mxu0 0.0
  %2871 = vmatpush2.msra.mxu0 0.0
  %2872 = vmatprep.subr.mxu0 0.0
  %2873 = vmatpush2.msra.mxu0 0.0
  %2874 = vmatprep.subr.mxu0 0.0
  %2875 = vmatpush2.msra.mxu0 0.0
  %2876 = vmatprep.subr.mxu0 0.0
  %2877 = vmatpush2.msra.mxu0 0.0
  %2878 = vmatprep.subr.mxu0 0.0
  %2879 = vmatpush2.msra.mxu0 0.0
  %2880 = vmatprep.subr.mxu0 0.0
  %2881 = vmatpush2.msra.mxu0 0.0
  %2882 = vmatprep.mubr.f32.mxu0 0.0
  %v2883 = vand.u32 %v2562, 4294901760
  %v2884 = vsub.f32 %v2562, %v2883
  %v2885 = vand.u32 %v2884, 4294901760
  %2886 = vmatmul.mubr.f32.gmra.mxu0 %v2885
  %v2887 = vpop.f32.mrf.mxu0
  %v2888 = vadd.f32 %v2811, %v2887
  %v2889 = vpop.f32.mrf.mxu0
  %2890 = vdwg.mxu0
  %2891 = vmatprep.subr.mxu0 0.0
  %2892 = vmatpush1.msra.mxu0 0.0
  %2893 = vmatprep.subr.mxu0 0.0
  %2894 = vmatpush1.msra.mxu0 0.0
  %2895 = vmatprep.subr.mxu0 0.0
  %2896 = vmatpush1.msra.mxu0 0.0
  %2897 = vmatprep.subr.mxu0 0.0
  %2898 = vmatpush1.msra.mxu0 0.0
  %2899 = vmatprep.subr.mxu0 0.0
  %2900 = vmatpush1.msra.mxu0 0.0
  %2901 = vmatprep.subr.mxu0 0.0
  %2902 = vmatpush1.msra.mxu0 0.0
  %2903 = vmatprep.subr.mxu0 0.0
  %2904 = vmatpush1.msra.mxu0 0.0
  %2905 = vmatprep.subr.mxu0 0.0
  %2906 = vmatpush1.msra.mxu0 0.0
  %2907 = vmatprep.subr.mxu0 0.0
  %2908 = vmatpush1.msra.mxu0 0.0
  %2909 = vmatprep.subr.mxu0 0.0
  %2910 = vmatpush1.msra.mxu0 0.0
  %2911 = vmatprep.subr.mxu0 0.0
  %2912 = vmatpush1.msra.mxu0 0.0
  %2913 = vmatprep.subr.mxu0 0.0
  %2914 = vmatpush1.msra.mxu0 0.0
  %2915 = vmatprep.subr.mxu0 0.0
  %v2916 = vand.u32 %v33, 4294901760
  %v2917 = vsub.f32 %v33, %v2916
  %v2918 = vand.u32 %v2917, 4294901760
  %2919 = vmatpush1.msra.mxu0 %v2918
  %2920 = vmatprep.subr.mxu0 0.0
  %v2921 = vand.u32 %v32, 4294901760
  %v2922 = vsub.f32 %v32, %v2921
  %v2923 = vand.u32 %v2922, 4294901760
  %2924 = vmatpush1.msra.mxu0 %v2923
  %2925 = vmatprep.subr.mxu0 0.0
  %v2926 = vand.u32 %v31, 4294901760
  %v2927 = vsub.f32 %v31, %v2926
  %v2928 = vand.u32 %v2927, 4294901760
  %2929 = vmatpush1.msra.mxu0 %v2928
  %2930 = vmatprep.subr.mxu0 0.0
  %v2931 = vand.u32 %v30, 4294901760
  %v2932 = vsub.f32 %v30, %v2931
  %v2933 = vand.u32 %v2932, 4294901760
  %2934 = vmatpush1.msra.mxu0 %v2933
  %2935 = vmatprep.subr.mxu0 0.0
  %2936 = vmatpush2.msra.mxu0 0.0
  %2937 = vmatprep.subr.mxu0 0.0
  %2938 = vmatpush2.msra.mxu0 0.0
  %2939 = vmatprep.subr.mxu0 0.0
  %2940 = vmatpush2.msra.mxu0 0.0
  %2941 = vmatprep.subr.mxu0 0.0
  %2942 = vmatpush2.msra.mxu0 0.0
  %2943 = vmatprep.subr.mxu0 0.0
  %2944 = vmatpush2.msra.mxu0 0.0
  %2945 = vmatprep.subr.mxu0 0.0
  %2946 = vmatpush2.msra.mxu0 0.0
  %2947 = vmatprep.subr.mxu0 0.0
  %2948 = vmatpush2.msra.mxu0 0.0
  %2949 = vmatprep.subr.mxu0 0.0
  %2950 = vmatpush2.msra.mxu0 0.0
  %2951 = vmatprep.subr.mxu0 0.0
  %2952 = vmatpush2.msra.mxu0 0.0
  %2953 = vmatprep.subr.mxu0 0.0
  %2954 = vmatpush2.msra.mxu0 0.0
  %2955 = vmatprep.subr.mxu0 0.0
  %2956 = vmatpush2.msra.mxu0 0.0
  %2957 = vmatprep.subr.mxu0 0.0
  %2958 = vmatpush2.msra.mxu0 0.0
  %2959 = vmatprep.subr.mxu0 0.0
  %2960 = vmatpush2.msra.mxu0 0.0
  %2961 = vmatprep.subr.mxu0 0.0
  %2962 = vmatpush2.msra.mxu0 0.0
  %2963 = vmatprep.subr.mxu0 0.0
  %2964 = vmatpush2.msra.mxu0 0.0
  %2965 = vmatprep.subr.mxu0 0.0
  %2966 = vmatpush2.msra.mxu0 0.0
  %2967 = vmatprep.mubr.f32.mxu0 0.0
  %v2968 = vand.u32 %v2562, 4294901760
  %2969 = vmatmul.mubr.f32.gmra.mxu0 %v2968
  %v2970 = vpop.f32.mrf.mxu0
  %v2971 = vadd.f32 %v2888, %v2970
  %v2972 = vpop.f32.mrf.mxu0
  %2973 = vdwg.mxu0
  %2974 = vmatprep.subr.mxu0 0.0
  %2975 = vmatpush1.msra.mxu0 0.0
  %2976 = vmatprep.subr.mxu0 0.0
  %2977 = vmatpush1.msra.mxu0 0.0
  %2978 = vmatprep.subr.mxu0 0.0
  %2979 = vmatpush1.msra.mxu0 0.0
  %2980 = vmatprep.subr.mxu0 0.0
  %2981 = vmatpush1.msra.mxu0 0.0
  %2982 = vmatprep.subr.mxu0 0.0
  %2983 = vmatpush1.msra.mxu0 0.0
  %2984 = vmatprep.subr.mxu0 0.0
  %2985 = vmatpush1.msra.mxu0 0.0
  %2986 = vmatprep.subr.mxu0 0.0
  %2987 = vmatpush1.msra.mxu0 0.0
  %2988 = vmatprep.subr.mxu0 0.0
  %2989 = vmatpush1.msra.mxu0 0.0
  %2990 = vmatprep.subr.mxu0 0.0
  %2991 = vmatpush1.msra.mxu0 0.0
  %2992 = vmatprep.subr.mxu0 0.0
  %2993 = vmatpush1.msra.mxu0 0.0
  %2994 = vmatprep.subr.mxu0 0.0
  %2995 = vmatpush1.msra.mxu0 0.0
  %2996 = vmatprep.subr.mxu0 0.0
  %2997 = vmatpush1.msra.mxu0 0.0
  %2998 = vmatprep.subr.mxu0 0.0
  %v2999 = vand.u32 %v33, 4294901760
  %3000 = vmatpush1.msra.mxu0 %v2999
  %3001 = vmatprep.subr.mxu0 0.0
  %v3002 = vand.u32 %v32, 4294901760
  %3003 = vmatpush1.msra.mxu0 %v3002
  %3004 = vmatprep.subr.mxu0 0.0
  %v3005 = vand.u32 %v31, 4294901760
  %3006 = vmatpush1.msra.mxu0 %v3005
  %3007 = vmatprep.subr.mxu0 0.0
  %v3008 = vand.u32 %v30, 4294901760
  %3009 = vmatpush1.msra.mxu0 %v3008
  %3010 = vmatprep.subr.mxu0 0.0
  %3011 = vmatpush2.msra.mxu0 0.0
  %3012 = vmatprep.subr.mxu0 0.0
  %3013 = vmatpush2.msra.mxu0 0.0
  %3014 = vmatprep.subr.mxu0 0.0
  %3015 = vmatpush2.msra.mxu0 0.0
  %3016 = vmatprep.subr.mxu0 0.0
  %3017 = vmatpush2.msra.mxu0 0.0
  %3018 = vmatprep.subr.mxu0 0.0
  %3019 = vmatpush2.msra.mxu0 0.0
  %3020 = vmatprep.subr.mxu0 0.0
  %3021 = vmatpush2.msra.mxu0 0.0
  %3022 = vmatprep.subr.mxu0 0.0
  %3023 = vmatpush2.msra.mxu0 0.0
  %3024 = vmatprep.subr.mxu0 0.0
  %3025 = vmatpush2.msra.mxu0 0.0
  %3026 = vmatprep.subr.mxu0 0.0
  %3027 = vmatpush2.msra.mxu0 0.0
  %3028 = vmatprep.subr.mxu0 0.0
  %3029 = vmatpush2.msra.mxu0 0.0
  %3030 = vmatprep.subr.mxu0 0.0
  %3031 = vmatpush2.msra.mxu0 0.0
  %3032 = vmatprep.subr.mxu0 0.0
  %3033 = vmatpush2.msra.mxu0 0.0
  %3034 = vmatprep.subr.mxu0 0.0
  %3035 = vmatpush2.msra.mxu0 0.0
  %3036 = vmatprep.subr.mxu0 0.0
  %3037 = vmatpush2.msra.mxu0 0.0
  %3038 = vmatprep.subr.mxu0 0.0
  %3039 = vmatpush2.msra.mxu0 0.0
  %3040 = vmatprep.subr.mxu0 0.0
  %3041 = vmatpush2.msra.mxu0 0.0
  %3042 = vmatprep.mubr.f32.mxu0 0.0
  %v3043 = vand.u32 %v2562, 4294901760
  %3044 = vmatmul.mubr.f32.gmra.mxu0 %v3043
  %v3045 = vpop.f32.mrf.mxu0
  %v3046 = vadd.f32 %v2971, %v3045
  %v3047 = vpop.f32.mrf.mxu0
  %3048 = vdwg.mxu0
  %v3049 = vxor.u32 %v3046, 2147483648
  %v3050 = vmul.f32 %v3049, 1.442695
  %v3051 = vpow.pop %v3050
  %v3052 = vadd.f32 %v3051, 1.0
  %v3053 = vrcp.pop %v3052
  %v3054 = vmul.f32 1.0, %v3053
  %s3055 = scalar_lea.vmem %s0, 10
  %v3056 = vld [vmem:[%s3055] sm:$0x3]
  %v3057 = vsub.f32 %v3056, %v2558
  %v3058 = vmul.f32 %v3054, %v3057
  %v3059 = vadd.f32 %v2558, %v3058
  %3060 = vst.msk [vmem:[#allocation2] sm:$0x3] %vm535, %v3059
  %s3061 = scalar_lea.vmem %s4, 10
  %3062 = vst.msk [vmem:[%s3061] sm:$0x3] %vm535, %v3059
  %v3063 = vld [vmem:[#allocation2] sm:$0x3]
  %s3064 = scalar_lea.vmem %s1, 12
  %v3065 = vld [vmem:[%s3064] sm:$0x3]
  %v3067 = vsel %vm36, %v3063, 0
  %3069 = vmatprep.subr.mxu0 0.0
  %3070 = vmatpush1.msra.mxu0 0.0
  %3071 = vmatprep.subr.mxu0 0.0
  %3072 = vmatpush1.msra.mxu0 0.0
  %3073 = vmatprep.subr.mxu0 0.0
  %3074 = vmatpush1.msra.mxu0 0.0
  %3075 = vmatprep.subr.mxu0 0.0
  %3076 = vmatpush1.msra.mxu0 0.0
  %3077 = vmatprep.subr.mxu0 0.0
  %3078 = vmatpush1.msra.mxu0 0.0
  %3079 = vmatprep.subr.mxu0 0.0
  %3080 = vmatpush1.msra.mxu0 0.0
  %3081 = vmatprep.subr.mxu0 0.0
  %3082 = vmatpush1.msra.mxu0 0.0
  %3083 = vmatprep.subr.mxu0 0.0
  %3084 = vmatpush1.msra.mxu0 0.0
  %3085 = vmatprep.subr.mxu0 0.0
  %3086 = vmatpush1.msra.mxu0 0.0
  %3087 = vmatprep.subr.mxu0 0.0
  %3088 = vmatpush1.msra.mxu0 0.0
  %3089 = vmatprep.subr.mxu0 0.0
  %3090 = vmatpush1.msra.mxu0 0.0
  %3091 = vmatprep.subr.mxu0 0.0
  %3092 = vmatpush1.msra.mxu0 0.0
  %3093 = vmatprep.subr.mxu0 0.0
  %v3094 = vand.u32 %v33, 4294901760
  %3095 = vmatpush1.msra.mxu0 %v3094
  %3096 = vmatprep.subr.mxu0 0.0
  %v3097 = vand.u32 %v32, 4294901760
  %3098 = vmatpush1.msra.mxu0 %v3097
  %3099 = vmatprep.subr.mxu0 0.0
  %v3100 = vand.u32 %v31, 4294901760
  %3101 = vmatpush1.msra.mxu0 %v3100
  %3102 = vmatprep.subr.mxu0 0.0
  %v3103 = vand.u32 %v30, 4294901760
  %3104 = vmatpush1.msra.mxu0 %v3103
  %3105 = vmatprep.subr.mxu0 0.0
  %3106 = vmatpush2.msra.mxu0 0.0
  %3107 = vmatprep.subr.mxu0 0.0
  %3108 = vmatpush2.msra.mxu0 0.0
  %3109 = vmatprep.subr.mxu0 0.0
  %3110 = vmatpush2.msra.mxu0 0.0
  %3111 = vmatprep.subr.mxu0 0.0
  %3112 = vmatpush2.msra.mxu0 0.0
  %3113 = vmatprep.subr.mxu0 0.0
  %3114 = vmatpush2.msra.mxu0 0.0
  %3115 = vmatprep.subr.mxu0 0.0
  %3116 = vmatpush2.msra.mxu0 0.0
  %3117 = vmatprep.subr.mxu0 0.0
  %3118 = vmatpush2.msra.mxu0 0.0
  %3119 = vmatprep.subr.mxu0 0.0
  %3120 = vmatpush2.msra.mxu0 0.0
  %3121 = vmatprep.subr.mxu0 0.0
  %3122 = vmatpush2.msra.mxu0 0.0
  %3123 = vmatprep.subr.mxu0 0.0
  %3124 = vmatpush2.msra.mxu0 0.0
  %3125 = vmatprep.subr.mxu0 0.0
  %3126 = vmatpush2.msra.mxu0 0.0
  %3127 = vmatprep.subr.mxu0 0.0
  %3128 = vmatpush2.msra.mxu0 0.0
  %3129 = vmatprep.subr.mxu0 0.0
  %3130 = vmatpush2.msra.mxu0 0.0
  %3131 = vmatprep.subr.mxu0 0.0
  %3132 = vmatpush2.msra.mxu0 0.0
  %3133 = vmatprep.subr.mxu0 0.0
  %3134 = vmatpush2.msra.mxu0 0.0
  %3135 = vmatprep.subr.mxu0 0.0
  %3136 = vmatpush2.msra.mxu0 0.0
  %3137 = vmatprep.mubr.f32.mxu0 0.0
  %v3138 = vand.u32 %v3067, 4294901760
  %v3139 = vsub.f32 %v3067, %v3138
  %v3140 = vand.u32 %v3139, 4294901760
  %v3141 = vsub.f32 %v3139, %v3140
  %v3142 = vand.u32 %v3141, 4294901760
  %3143 = vmatmul.mubr.f32.gmra.mxu0 %v3142
  %v3144 = vpop.f32.mrf.mxu0
  %v3145 = vadd.f32 %v3065, %v3144
  %v3146 = vpop.f32.mrf.mxu0
  %3147 = vdwg.mxu0
  %3148 = vmatprep.subr.mxu0 0.0
  %3149 = vmatpush1.msra.mxu0 0.0
  %3150 = vmatprep.subr.mxu0 0.0
  %3151 = vmatpush1.msra.mxu0 0.0
  %3152 = vmatprep.subr.mxu0 0.0
  %3153 = vmatpush1.msra.mxu0 0.0
  %3154 = vmatprep.subr.mxu0 0.0
  %3155 = vmatpush1.msra.mxu0 0.0
  %3156 = vmatprep.subr.mxu0 0.0
  %3157 = vmatpush1.msra.mxu0 0.0
  %3158 = vmatprep.subr.mxu0 0.0
  %3159 = vmatpush1.msra.mxu0 0.0
  %3160 = vmatprep.subr.mxu0 0.0
  %3161 = vmatpush1.msra.mxu0 0.0
  %3162 = vmatprep.subr.mxu0 0.0
  %3163 = vmatpush1.msra.mxu0 0.0
  %3164 = vmatprep.subr.mxu0 0.0
  %3165 = vmatpush1.msra.mxu0 0.0
  %3166 = vmatprep.subr.mxu0 0.0
  %3167 = vmatpush1.msra.mxu0 0.0
  %3168 = vmatprep.subr.mxu0 0.0
  %3169 = vmatpush1.msra.mxu0 0.0
  %3170 = vmatprep.subr.mxu0 0.0
  %3171 = vmatpush1.msra.mxu0 0.0
  %3172 = vmatprep.subr.mxu0 0.0
  %v3173 = vand.u32 %v33, 4294901760
  %v3174 = vsub.f32 %v33, %v3173
  %v3175 = vand.u32 %v3174, 4294901760
  %v3176 = vsub.f32 %v3174, %v3175
  %v3177 = vand.u32 %v3176, 4294901760
  %3178 = vmatpush1.msra.mxu0 %v3177
  %3179 = vmatprep.subr.mxu0 0.0
  %v3180 = vand.u32 %v32, 4294901760
  %v3181 = vsub.f32 %v32, %v3180
  %v3182 = vand.u32 %v3181, 4294901760
  %v3183 = vsub.f32 %v3181, %v3182
  %v3184 = vand.u32 %v3183, 4294901760
  %3185 = vmatpush1.msra.mxu0 %v3184
  %3186 = vmatprep.subr.mxu0 0.0
  %v3187 = vand.u32 %v31, 4294901760
  %v3188 = vsub.f32 %v31, %v3187
  %v3189 = vand.u32 %v3188, 4294901760
  %v3190 = vsub.f32 %v3188, %v3189
  %v3191 = vand.u32 %v3190, 4294901760
  %3192 = vmatpush1.msra.mxu0 %v3191
  %3193 = vmatprep.subr.mxu0 0.0
  %v3194 = vand.u32 %v30, 4294901760
  %v3195 = vsub.f32 %v30, %v3194
  %v3196 = vand.u32 %v3195, 4294901760
  %v3197 = vsub.f32 %v3195, %v3196
  %v3198 = vand.u32 %v3197, 4294901760
  %3199 = vmatpush1.msra.mxu0 %v3198
  %3200 = vmatprep.subr.mxu0 0.0
  %3201 = vmatpush2.msra.mxu0 0.0
  %3202 = vmatprep.subr.mxu0 0.0
  %3203 = vmatpush2.msra.mxu0 0.0
  %3204 = vmatprep.subr.mxu0 0.0
  %3205 = vmatpush2.msra.mxu0 0.0
  %3206 = vmatprep.subr.mxu0 0.0
  %3207 = vmatpush2.msra.mxu0 0.0
  %3208 = vmatprep.subr.mxu0 0.0
  %3209 = vmatpush2.msra.mxu0 0.0
  %3210 = vmatprep.subr.mxu0 0.0
  %3211 = vmatpush2.msra.mxu0 0.0
  %3212 = vmatprep.subr.mxu0 0.0
  %3213 = vmatpush2.msra.mxu0 0.0
  %3214 = vmatprep.subr.mxu0 0.0
  %3215 = vmatpush2.msra.mxu0 0.0
  %3216 = vmatprep.subr.mxu0 0.0
  %3217 = vmatpush2.msra.mxu0 0.0
  %3218 = vmatprep.subr.mxu0 0.0
  %3219 = vmatpush2.msra.mxu0 0.0
  %3220 = vmatprep.subr.mxu0 0.0
  %3221 = vmatpush2.msra.mxu0 0.0
  %3222 = vmatprep.subr.mxu0 0.0
  %3223 = vmatpush2.msra.mxu0 0.0
  %3224 = vmatprep.subr.mxu0 0.0
  %3225 = vmatpush2.msra.mxu0 0.0
  %3226 = vmatprep.subr.mxu0 0.0
  %3227 = vmatpush2.msra.mxu0 0.0
  %3228 = vmatprep.subr.mxu0 0.0
  %3229 = vmatpush2.msra.mxu0 0.0
  %3230 = vmatprep.subr.mxu0 0.0
  %3231 = vmatpush2.msra.mxu0 0.0
  %3232 = vmatprep.mubr.f32.mxu0 0.0
  %v3233 = vand.u32 %v3067, 4294901760
  %3234 = vmatmul.mubr.f32.gmra.mxu0 %v3233
  %v3235 = vpop.f32.mrf.mxu0
  %v3236 = vadd.f32 %v3145, %v3235
  %v3237 = vpop.f32.mrf.mxu0
  %3238 = vdwg.mxu0
  %3239 = vmatprep.subr.mxu0 0.0
  %3240 = vmatpush1.msra.mxu0 0.0
  %3241 = vmatprep.subr.mxu0 0.0
  %3242 = vmatpush1.msra.mxu0 0.0
  %3243 = vmatprep.subr.mxu0 0.0
  %3244 = vmatpush1.msra.mxu0 0.0
  %3245 = vmatprep.subr.mxu0 0.0
  %3246 = vmatpush1.msra.mxu0 0.0
  %3247 = vmatprep.subr.mxu0 0.0
  %3248 = vmatpush1.msra.mxu0 0.0
  %3249 = vmatprep.subr.mxu0 0.0
  %3250 = vmatpush1.msra.mxu0 0.0
  %3251 = vmatprep.subr.mxu0 0.0
  %3252 = vmatpush1.msra.mxu0 0.0
  %3253 = vmatprep.subr.mxu0 0.0
  %3254 = vmatpush1.msra.mxu0 0.0
  %3255 = vmatprep.subr.mxu0 0.0
  %3256 = vmatpush1.msra.mxu0 0.0
  %3257 = vmatprep.subr.mxu0 0.0
  %3258 = vmatpush1.msra.mxu0 0.0
  %3259 = vmatprep.subr.mxu0 0.0
  %3260 = vmatpush1.msra.mxu0 0.0
  %3261 = vmatprep.subr.mxu0 0.0
  %3262 = vmatpush1.msra.mxu0 0.0
  %3263 = vmatprep.subr.mxu0 0.0
  %v3264 = vand.u32 %v33, 4294901760
  %v3265 = vsub.f32 %v33, %v3264
  %3266 = vmatpush1.msra.mxu0 %v3265
  %3267 = vmatprep.subr.mxu0 0.0
  %v3268 = vand.u32 %v32, 4294901760
  %v3269 = vsub.f32 %v32, %v3268
  %3270 = vmatpush1.msra.mxu0 %v3269
  %3271 = vmatprep.subr.mxu0 0.0
  %v3272 = vand.u32 %v31, 4294901760
  %v3273 = vsub.f32 %v31, %v3272
  %3274 = vmatpush1.msra.mxu0 %v3273
  %3275 = vmatprep.subr.mxu0 0.0
  %v3276 = vand.u32 %v30, 4294901760
  %v3277 = vsub.f32 %v30, %v3276
  %3278 = vmatpush1.msra.mxu0 %v3277
  %3279 = vmatprep.subr.mxu0 0.0
  %3280 = vmatpush2.msra.mxu0 0.0
  %3281 = vmatprep.subr.mxu0 0.0
  %3282 = vmatpush2.msra.mxu0 0.0
  %3283 = vmatprep.subr.mxu0 0.0
  %3284 = vmatpush2.msra.mxu0 0.0
  %3285 = vmatprep.subr.mxu0 0.0
  %3286 = vmatpush2.msra.mxu0 0.0
  %3287 = vmatprep.subr.mxu0 0.0
  %3288 = vmatpush2.msra.mxu0 0.0
  %3289 = vmatprep.subr.mxu0 0.0
  %3290 = vmatpush2.msra.mxu0 0.0
  %3291 = vmatprep.subr.mxu0 0.0
  %3292 = vmatpush2.msra.mxu0 0.0
  %3293 = vmatprep.subr.mxu0 0.0
  %3294 = vmatpush2.msra.mxu0 0.0
  %3295 = vmatprep.subr.mxu0 0.0
  %3296 = vmatpush2.msra.mxu0 0.0
  %3297 = vmatprep.subr.mxu0 0.0
  %3298 = vmatpush2.msra.mxu0 0.0
  %3299 = vmatprep.subr.mxu0 0.0
  %3300 = vmatpush2.msra.mxu0 0.0
  %3301 = vmatprep.subr.mxu0 0.0
  %3302 = vmatpush2.msra.mxu0 0.0
  %3303 = vmatprep.subr.mxu0 0.0
  %3304 = vmatpush2.msra.mxu0 0.0
  %3305 = vmatprep.subr.mxu0 0.0
  %3306 = vmatpush2.msra.mxu0 0.0
  %3307 = vmatprep.subr.mxu0 0.0
  %3308 = vmatpush2.msra.mxu0 0.0
  %3309 = vmatprep.subr.mxu0 0.0
  %3310 = vmatpush2.msra.mxu0 0.0
  %3311 = vmatprep.mubr.f32.mxu0 0.0
  %v3312 = vand.u32 %v3067, 4294901760
  %v3313 = vsub.f32 %v3067, %v3312
  %3314 = vmatmul.mubr.f32.gmra.mxu0 %v3313
  %v3315 = vpop.f32.mrf.mxu0
  %v3316 = vadd.f32 %v3236, %v3315
  %v3317 = vpop.f32.mrf.mxu0
  %3318 = vdwg.mxu0
  %3319 = vmatprep.subr.mxu0 0.0
  %3320 = vmatpush1.msra.mxu0 0.0
  %3321 = vmatprep.subr.mxu0 0.0
  %3322 = vmatpush1.msra.mxu0 0.0
  %3323 = vmatprep.subr.mxu0 0.0
  %3324 = vmatpush1.msra.mxu0 0.0
  %3325 = vmatprep.subr.mxu0 0.0
  %3326 = vmatpush1.msra.mxu0 0.0
  %3327 = vmatprep.subr.mxu0 0.0
  %3328 = vmatpush1.msra.mxu0 0.0
  %3329 = vmatprep.subr.mxu0 0.0
  %3330 = vmatpush1.msra.mxu0 0.0
  %3331 = vmatprep.subr.mxu0 0.0
  %3332 = vmatpush1.msra.mxu0 0.0
  %3333 = vmatprep.subr.mxu0 0.0
  %3334 = vmatpush1.msra.mxu0 0.0
  %3335 = vmatprep.subr.mxu0 0.0
  %3336 = vmatpush1.msra.mxu0 0.0
  %3337 = vmatprep.subr.mxu0 0.0
  %3338 = vmatpush1.msra.mxu0 0.0
  %3339 = vmatprep.subr.mxu0 0.0
  %3340 = vmatpush1.msra.mxu0 0.0
  %3341 = vmatprep.subr.mxu0 0.0
  %3342 = vmatpush1.msra.mxu0 0.0
  %3343 = vmatprep.subr.mxu0 0.0
  %v3344 = vand.u32 %v33, 4294901760
  %3345 = vmatpush1.msra.mxu0 %v3344
  %3346 = vmatprep.subr.mxu0 0.0
  %v3347 = vand.u32 %v32, 4294901760
  %3348 = vmatpush1.msra.mxu0 %v3347
  %3349 = vmatprep.subr.mxu0 0.0
  %v3350 = vand.u32 %v31, 4294901760
  %3351 = vmatpush1.msra.mxu0 %v3350
  %3352 = vmatprep.subr.mxu0 0.0
  %v3353 = vand.u32 %v30, 4294901760
  %3354 = vmatpush1.msra.mxu0 %v3353
  %3355 = vmatprep.subr.mxu0 0.0
  %3356 = vmatpush2.msra.mxu0 0.0
  %3357 = vmatprep.subr.mxu0 0.0
  %3358 = vmatpush2.msra.mxu0 0.0
  %3359 = vmatprep.subr.mxu0 0.0
  %3360 = vmatpush2.msra.mxu0 0.0
  %3361 = vmatprep.subr.mxu0 0.0
  %3362 = vmatpush2.msra.mxu0 0.0
  %3363 = vmatprep.subr.mxu0 0.0
  %3364 = vmatpush2.msra.mxu0 0.0
  %3365 = vmatprep.subr.mxu0 0.0
  %3366 = vmatpush2.msra.mxu0 0.0
  %3367 = vmatprep.subr.mxu0 0.0
  %3368 = vmatpush2.msra.mxu0 0.0
  %3369 = vmatprep.subr.mxu0 0.0
  %3370 = vmatpush2.msra.mxu0 0.0
  %3371 = vmatprep.subr.mxu0 0.0
  %3372 = vmatpush2.msra.mxu0 0.0
  %3373 = vmatprep.subr.mxu0 0.0
  %3374 = vmatpush2.msra.mxu0 0.0
  %3375 = vmatprep.subr.mxu0 0.0
  %3376 = vmatpush2.msra.mxu0 0.0
  %3377 = vmatprep.subr.mxu0 0.0
  %3378 = vmatpush2.msra.mxu0 0.0
  %3379 = vmatprep.subr.mxu0 0.0
  %3380 = vmatpush2.msra.mxu0 0.0
  %3381 = vmatprep.subr.mxu0 0.0
  %3382 = vmatpush2.msra.mxu0 0.0
  %3383 = vmatprep.subr.mxu0 0.0
  %3384 = vmatpush2.msra.mxu0 0.0
  %3385 = vmatprep.subr.mxu0 0.0
  %3386 = vmatpush2.msra.mxu0 0.0
  %3387 = vmatprep.mubr.f32.mxu0 0.0
  %v3388 = vand.u32 %v3067, 4294901760
  %v3389 = vsub.f32 %v3067, %v3388
  %v3390 = vand.u32 %v3389, 4294901760
  %3391 = vmatmul.mubr.f32.gmra.mxu0 %v3390
  %v3392 = vpop.f32.mrf.mxu0
  %v3393 = vadd.f32 %v3316, %v3392
  %v3394 = vpop.f32.mrf.mxu0
  %3395 = vdwg.mxu0
  %3396 = vmatprep.subr.mxu0 0.0
  %3397 = vmatpush1.msra.mxu0 0.0
  %3398 = vmatprep.subr.mxu0 0.0
  %3399 = vmatpush1.msra.mxu0 0.0
  %3400 = vmatprep.subr.mxu0 0.0
  %3401 = vmatpush1.msra.mxu0 0.0
  %3402 = vmatprep.subr.mxu0 0.0
  %3403 = vmatpush1.msra.mxu0 0.0
  %3404 = vmatprep.subr.mxu0 0.0
  %3405 = vmatpush1.msra.mxu0 0.0
  %3406 = vmatprep.subr.mxu0 0.0
  %3407 = vmatpush1.msra.mxu0 0.0
  %3408 = vmatprep.subr.mxu0 0.0
  %3409 = vmatpush1.msra.mxu0 0.0
  %3410 = vmatprep.subr.mxu0 0.0
  %3411 = vmatpush1.msra.mxu0 0.0
  %3412 = vmatprep.subr.mxu0 0.0
  %3413 = vmatpush1.msra.mxu0 0.0
  %3414 = vmatprep.subr.mxu0 0.0
  %3415 = vmatpush1.msra.mxu0 0.0
  %3416 = vmatprep.subr.mxu0 0.0
  %3417 = vmatpush1.msra.mxu0 0.0
  %3418 = vmatprep.subr.mxu0 0.0
  %3419 = vmatpush1.msra.mxu0 0.0
  %3420 = vmatprep.subr.mxu0 0.0
  %v3421 = vand.u32 %v33, 4294901760
  %v3422 = vsub.f32 %v33, %v3421
  %v3423 = vand.u32 %v3422, 4294901760
  %3424 = vmatpush1.msra.mxu0 %v3423
  %3425 = vmatprep.subr.mxu0 0.0
  %v3426 = vand.u32 %v32, 4294901760
  %v3427 = vsub.f32 %v32, %v3426
  %v3428 = vand.u32 %v3427, 4294901760
  %3429 = vmatpush1.msra.mxu0 %v3428
  %3430 = vmatprep.subr.mxu0 0.0
  %v3431 = vand.u32 %v31, 4294901760
  %v3432 = vsub.f32 %v31, %v3431
  %v3433 = vand.u32 %v3432, 4294901760
  %3434 = vmatpush1.msra.mxu0 %v3433
  %3435 = vmatprep.subr.mxu0 0.0
  %v3436 = vand.u32 %v30, 4294901760
  %v3437 = vsub.f32 %v30, %v3436
  %v3438 = vand.u32 %v3437, 4294901760
  %3439 = vmatpush1.msra.mxu0 %v3438
  %3440 = vmatprep.subr.mxu0 0.0
  %3441 = vmatpush2.msra.mxu0 0.0
  %3442 = vmatprep.subr.mxu0 0.0
  %3443 = vmatpush2.msra.mxu0 0.0
  %3444 = vmatprep.subr.mxu0 0.0
  %3445 = vmatpush2.msra.mxu0 0.0
  %3446 = vmatprep.subr.mxu0 0.0
  %3447 = vmatpush2.msra.mxu0 0.0
  %3448 = vmatprep.subr.mxu0 0.0
  %3449 = vmatpush2.msra.mxu0 0.0
  %3450 = vmatprep.subr.mxu0 0.0
  %3451 = vmatpush2.msra.mxu0 0.0
  %3452 = vmatprep.subr.mxu0 0.0
  %3453 = vmatpush2.msra.mxu0 0.0
  %3454 = vmatprep.subr.mxu0 0.0
  %3455 = vmatpush2.msra.mxu0 0.0
  %3456 = vmatprep.subr.mxu0 0.0
  %3457 = vmatpush2.msra.mxu0 0.0
  %3458 = vmatprep.subr.mxu0 0.0
  %3459 = vmatpush2.msra.mxu0 0.0
  %3460 = vmatprep.subr.mxu0 0.0
  %3461 = vmatpush2.msra.mxu0 0.0
  %3462 = vmatprep.subr.mxu0 0.0
  %3463 = vmatpush2.msra.mxu0 0.0
  %3464 = vmatprep.subr.mxu0 0.0
  %3465 = vmatpush2.msra.mxu0 0.0
  %3466 = vmatprep.subr.mxu0 0.0
  %3467 = vmatpush2.msra.mxu0 0.0
  %3468 = vmatprep.subr.mxu0 0.0
  %3469 = vmatpush2.msra.mxu0 0.0
  %3470 = vmatprep.subr.mxu0 0.0
  %3471 = vmatpush2.msra.mxu0 0.0
  %3472 = vmatprep.mubr.f32.mxu0 0.0
  %v3473 = vand.u32 %v3067, 4294901760
  %3474 = vmatmul.mubr.f32.gmra.mxu0 %v3473
  %v3475 = vpop.f32.mrf.mxu0
  %v3476 = vadd.f32 %v3393, %v3475
  %v3477 = vpop.f32.mrf.mxu0
  %3478 = vdwg.mxu0
  %3479 = vmatprep.subr.mxu0 0.0
  %3480 = vmatpush1.msra.mxu0 0.0
  %3481 = vmatprep.subr.mxu0 0.0
  %3482 = vmatpush1.msra.mxu0 0.0
  %3483 = vmatprep.subr.mxu0 0.0
  %3484 = vmatpush1.msra.mxu0 0.0
  %3485 = vmatprep.subr.mxu0 0.0
  %3486 = vmatpush1.msra.mxu0 0.0
  %3487 = vmatprep.subr.mxu0 0.0
  %3488 = vmatpush1.msra.mxu0 0.0
  %3489 = vmatprep.subr.mxu0 0.0
  %3490 = vmatpush1.msra.mxu0 0.0
  %3491 = vmatprep.subr.mxu0 0.0
  %3492 = vmatpush1.msra.mxu0 0.0
  %3493 = vmatprep.subr.mxu0 0.0
  %3494 = vmatpush1.msra.mxu0 0.0
  %3495 = vmatprep.subr.mxu0 0.0
  %3496 = vmatpush1.msra.mxu0 0.0
  %3497 = vmatprep.subr.mxu0 0.0
  %3498 = vmatpush1.msra.mxu0 0.0
  %3499 = vmatprep.subr.mxu0 0.0
  %3500 = vmatpush1.msra.mxu0 0.0
  %3501 = vmatprep.subr.mxu0 0.0
  %3502 = vmatpush1.msra.mxu0 0.0
  %3503 = vmatprep.subr.mxu0 0.0
  %v3504 = vand.u32 %v33, 4294901760
  %3505 = vmatpush1.msra.mxu0 %v3504
  %3506 = vmatprep.subr.mxu0 0.0
  %v3507 = vand.u32 %v32, 4294901760
  %3508 = vmatpush1.msra.mxu0 %v3507
  %3509 = vmatprep.subr.mxu0 0.0
  %v3510 = vand.u32 %v31, 4294901760
  %3511 = vmatpush1.msra.mxu0 %v3510
  %3512 = vmatprep.subr.mxu0 0.0
  %v3513 = vand.u32 %v30, 4294901760
  %3514 = vmatpush1.msra.mxu0 %v3513
  %3515 = vmatprep.subr.mxu0 0.0
  %3516 = vmatpush2.msra.mxu0 0.0
  %3517 = vmatprep.subr.mxu0 0.0
  %3518 = vmatpush2.msra.mxu0 0.0
  %3519 = vmatprep.subr.mxu0 0.0
  %3520 = vmatpush2.msra.mxu0 0.0
  %3521 = vmatprep.subr.mxu0 0.0
  %3522 = vmatpush2.msra.mxu0 0.0
  %3523 = vmatprep.subr.mxu0 0.0
  %3524 = vmatpush2.msra.mxu0 0.0
  %3525 = vmatprep.subr.mxu0 0.0
  %3526 = vmatpush2.msra.mxu0 0.0
  %3527 = vmatprep.subr.mxu0 0.0
  %3528 = vmatpush2.msra.mxu0 0.0
  %3529 = vmatprep.subr.mxu0 0.0
  %3530 = vmatpush2.msra.mxu0 0.0
  %3531 = vmatprep.subr.mxu0 0.0
  %3532 = vmatpush2.msra.mxu0 0.0
  %3533 = vmatprep.subr.mxu0 0.0
  %3534 = vmatpush2.msra.mxu0 0.0
  %3535 = vmatprep.subr.mxu0 0.0
  %3536 = vmatpush2.msra.mxu0 0.0
  %3537 = vmatprep.subr.mxu0 0.0
  %3538 = vmatpush2.msra.mxu0 0.0
  %3539 = vmatprep.subr.mxu0 0.0
  %3540 = vmatpush2.msra.mxu0 0.0
  %3541 = vmatprep.subr.mxu0 0.0
  %3542 = vmatpush2.msra.mxu0 0.0
  %3543 = vmatprep.subr.mxu0 0.0
  %3544 = vmatpush2.msra.mxu0 0.0
  %3545 = vmatprep.subr.mxu0 0.0
  %3546 = vmatpush2.msra.mxu0 0.0
  %3547 = vmatprep.mubr.f32.mxu0 0.0
  %v3548 = vand.u32 %v3067, 4294901760
  %3549 = vmatmul.mubr.f32.gmra.mxu0 %v3548
  %v3550 = vpop.f32.mrf.mxu0
  %v3551 = vadd.f32 %v3476, %v3550
  %v3552 = vpop.f32.mrf.mxu0
  %3553 = vdwg.mxu0
  %v3554 = vxor.u32 %v3551, 2147483648
  %v3555 = vmul.f32 %v3554, 1.442695
  %v3556 = vpow.pop %v3555
  %v3557 = vadd.f32 %v3556, 1.0
  %v3558 = vrcp.pop %v3557
  %v3559 = vmul.f32 1.0, %v3558
  %s3560 = scalar_lea.vmem %s0, 12
  %v3561 = vld [vmem:[%s3560] sm:$0x3]
  %v3562 = vsub.f32 %v3561, %v3063
  %v3563 = vmul.f32 %v3559, %v3562
  %v3564 = vadd.f32 %v3063, %v3563
  %3565 = vst.msk [vmem:[#allocation2] sm:$0x3] %vm535, %v3564
  %s3566 = scalar_lea.vmem %s4, 12
  %3567 = vst.msk [vmem:[%s3566] sm:$0x3] %vm535, %v3564
  %v3568 = vld [vmem:[#allocation2] sm:$0x3]
  %s3569 = scalar_lea.vmem %s1, 14
  %v3570 = vld [vmem:[%s3569] sm:$0x3]
  %v3572 = vsel %vm36, %v3568, 0
  %3574 = vmatprep.subr.mxu0 0.0
  %3575 = vmatpush1.msra.mxu0 0.0
  %3576 = vmatprep.subr.mxu0 0.0
  %3577 = vmatpush1.msra.mxu0 0.0
  %3578 = vmatprep.subr.mxu0 0.0
  %3579 = vmatpush1.msra.mxu0 0.0
  %3580 = vmatprep.subr.mxu0 0.0
  %3581 = vmatpush1.msra.mxu0 0.0
  %3582 = vmatprep.subr.mxu0 0.0
  %3583 = vmatpush1.msra.mxu0 0.0
  %3584 = vmatprep.subr.mxu0 0.0
  %3585 = vmatpush1.msra.mxu0 0.0
  %3586 = vmatprep.subr.mxu0 0.0
  %3587 = vmatpush1.msra.mxu0 0.0
  %3588 = vmatprep.subr.mxu0 0.0
  %3589 = vmatpush1.msra.mxu0 0.0
  %3590 = vmatprep.subr.mxu0 0.0
  %3591 = vmatpush1.msra.mxu0 0.0
  %3592 = vmatprep.subr.mxu0 0.0
  %3593 = vmatpush1.msra.mxu0 0.0
  %3594 = vmatprep.subr.mxu0 0.0
  %3595 = vmatpush1.msra.mxu0 0.0
  %3596 = vmatprep.subr.mxu0 0.0
  %3597 = vmatpush1.msra.mxu0 0.0
  %3598 = vmatprep.subr.mxu0 0.0
  %v3599 = vand.u32 %v33, 4294901760
  %3600 = vmatpush1.msra.mxu0 %v3599
  %3601 = vmatprep.subr.mxu0 0.0
  %v3602 = vand.u32 %v32, 4294901760
  %3603 = vmatpush1.msra.mxu0 %v3602
  %3604 = vmatprep.subr.mxu0 0.0
  %v3605 = vand.u32 %v31, 4294901760
  %3606 = vmatpush1.msra.mxu0 %v3605
  %3607 = vmatprep.subr.mxu0 0.0
  %v3608 = vand.u32 %v30, 4294901760
  %3609 = vmatpush1.msra.mxu0 %v3608
  %3610 = vmatprep.subr.mxu0 0.0
  %3611 = vmatpush2.msra.mxu0 0.0
  %3612 = vmatprep.subr.mxu0 0.0
  %3613 = vmatpush2.msra.mxu0 0.0
  %3614 = vmatprep.subr.mxu0 0.0
  %3615 = vmatpush2.msra.mxu0 0.0
  %3616 = vmatprep.subr.mxu0 0.0
  %3617 = vmatpush2.msra.mxu0 0.0
  %3618 = vmatprep.subr.mxu0 0.0
  %3619 = vmatpush2.msra.mxu0 0.0
  %3620 = vmatprep.subr.mxu0 0.0
  %3621 = vmatpush2.msra.mxu0 0.0
  %3622 = vmatprep.subr.mxu0 0.0
  %3623 = vmatpush2.msra.mxu0 0.0
  %3624 = vmatprep.subr.mxu0 0.0
  %3625 = vmatpush2.msra.mxu0 0.0
  %3626 = vmatprep.subr.mxu0 0.0
  %3627 = vmatpush2.msra.mxu0 0.0
  %3628 = vmatprep.subr.mxu0 0.0
  %3629 = vmatpush2.msra.mxu0 0.0
  %3630 = vmatprep.subr.mxu0 0.0
  %3631 = vmatpush2.msra.mxu0 0.0
  %3632 = vmatprep.subr.mxu0 0.0
  %3633 = vmatpush2.msra.mxu0 0.0
  %3634 = vmatprep.subr.mxu0 0.0
  %3635 = vmatpush2.msra.mxu0 0.0
  %3636 = vmatprep.subr.mxu0 0.0
  %3637 = vmatpush2.msra.mxu0 0.0
  %3638 = vmatprep.subr.mxu0 0.0
  %3639 = vmatpush2.msra.mxu0 0.0
  %3640 = vmatprep.subr.mxu0 0.0
  %3641 = vmatpush2.msra.mxu0 0.0
  %3642 = vmatprep.mubr.f32.mxu0 0.0
  %v3643 = vand.u32 %v3572, 4294901760
  %v3644 = vsub.f32 %v3572, %v3643
  %v3645 = vand.u32 %v3644, 4294901760
  %v3646 = vsub.f32 %v3644, %v3645
  %v3647 = vand.u32 %v3646, 4294901760
  %3648 = vmatmul.mubr.f32.gmra.mxu0 %v3647
  %v3649 = vpop.f32.mrf.mxu0
  %v3650 = vadd.f32 %v3570, %v3649
  %v3651 = vpop.f32.mrf.mxu0
  %3652 = vdwg.mxu0
  %3653 = vmatprep.subr.mxu0 0.0
  %3654 = vmatpush1.msra.mxu0 0.0
  %3655 = vmatprep.subr.mxu0 0.0
  %3656 = vmatpush1.msra.mxu0 0.0
  %3657 = vmatprep.subr.mxu0 0.0
  %3658 = vmatpush1.msra.mxu0 0.0
  %3659 = vmatprep.subr.mxu0 0.0
  %3660 = vmatpush1.msra.mxu0 0.0
  %3661 = vmatprep.subr.mxu0 0.0
  %3662 = vmatpush1.msra.mxu0 0.0
  %3663 = vmatprep.subr.mxu0 0.0
  %3664 = vmatpush1.msra.mxu0 0.0
  %3665 = vmatprep.subr.mxu0 0.0
  %3666 = vmatpush1.msra.mxu0 0.0
  %3667 = vmatprep.subr.mxu0 0.0
  %3668 = vmatpush1.msra.mxu0 0.0
  %3669 = vmatprep.subr.mxu0 0.0
  %3670 = vmatpush1.msra.mxu0 0.0
  %3671 = vmatprep.subr.mxu0 0.0
  %3672 = vmatpush1.msra.mxu0 0.0
  %3673 = vmatprep.subr.mxu0 0.0
  %3674 = vmatpush1.msra.mxu0 0.0
  %3675 = vmatprep.subr.mxu0 0.0
  %3676 = vmatpush1.msra.mxu0 0.0
  %3677 = vmatprep.subr.mxu0 0.0
  %v3678 = vand.u32 %v33, 4294901760
  %v3679 = vsub.f32 %v33, %v3678
  %v3680 = vand.u32 %v3679, 4294901760
  %v3681 = vsub.f32 %v3679, %v3680
  %v3682 = vand.u32 %v3681, 4294901760
  %3683 = vmatpush1.msra.mxu0 %v3682
  %3684 = vmatprep.subr.mxu0 0.0
  %v3685 = vand.u32 %v32, 4294901760
  %v3686 = vsub.f32 %v32, %v3685
  %v3687 = vand.u32 %v3686, 4294901760
  %v3688 = vsub.f32 %v3686, %v3687
  %v3689 = vand.u32 %v3688, 4294901760
  %3690 = vmatpush1.msra.mxu0 %v3689
  %3691 = vmatprep.subr.mxu0 0.0
  %v3692 = vand.u32 %v31, 4294901760
  %v3693 = vsub.f32 %v31, %v3692
  %v3694 = vand.u32 %v3693, 4294901760
  %v3695 = vsub.f32 %v3693, %v3694
  %v3696 = vand.u32 %v3695, 4294901760
  %3697 = vmatpush1.msra.mxu0 %v3696
  %3698 = vmatprep.subr.mxu0 0.0
  %v3699 = vand.u32 %v30, 4294901760
  %v3700 = vsub.f32 %v30, %v3699
  %v3701 = vand.u32 %v3700, 4294901760
  %v3702 = vsub.f32 %v3700, %v3701
  %v3703 = vand.u32 %v3702, 4294901760
  %3704 = vmatpush1.msra.mxu0 %v3703
  %3705 = vmatprep.subr.mxu0 0.0
  %3706 = vmatpush2.msra.mxu0 0.0
  %3707 = vmatprep.subr.mxu0 0.0
  %3708 = vmatpush2.msra.mxu0 0.0
  %3709 = vmatprep.subr.mxu0 0.0
  %3710 = vmatpush2.msra.mxu0 0.0
  %3711 = vmatprep.subr.mxu0 0.0
  %3712 = vmatpush2.msra.mxu0 0.0
  %3713 = vmatprep.subr.mxu0 0.0
  %3714 = vmatpush2.msra.mxu0 0.0
  %3715 = vmatprep.subr.mxu0 0.0
  %3716 = vmatpush2.msra.mxu0 0.0
  %3717 = vmatprep.subr.mxu0 0.0
  %3718 = vmatpush2.msra.mxu0 0.0
  %3719 = vmatprep.subr.mxu0 0.0
  %3720 = vmatpush2.msra.mxu0 0.0
  %3721 = vmatprep.subr.mxu0 0.0
  %3722 = vmatpush2.msra.mxu0 0.0
  %3723 = vmatprep.subr.mxu0 0.0
  %3724 = vmatpush2.msra.mxu0 0.0
  %3725 = vmatprep.subr.mxu0 0.0
  %3726 = vmatpush2.msra.mxu0 0.0
  %3727 = vmatprep.subr.mxu0 0.0
  %3728 = vmatpush2.msra.mxu0 0.0
  %3729 = vmatprep.subr.mxu0 0.0
  %3730 = vmatpush2.msra.mxu0 0.0
  %3731 = vmatprep.subr.mxu0 0.0
  %3732 = vmatpush2.msra.mxu0 0.0
  %3733 = vmatprep.subr.mxu0 0.0
  %3734 = vmatpush2.msra.mxu0 0.0
  %3735 = vmatprep.subr.mxu0 0.0
  %3736 = vmatpush2.msra.mxu0 0.0
  %3737 = vmatprep.mubr.f32.mxu0 0.0
  %v3738 = vand.u32 %v3572, 4294901760
  %3739 = vmatmul.mubr.f32.gmra.mxu0 %v3738
  %v3740 = vpop.f32.mrf.mxu0
  %v3741 = vadd.f32 %v3650, %v3740
  %v3742 = vpop.f32.mrf.mxu0
  %3743 = vdwg.mxu0
  %3744 = vmatprep.subr.mxu0 0.0
  %3745 = vmatpush1.msra.mxu0 0.0
  %3746 = vmatprep.subr.mxu0 0.0
  %3747 = vmatpush1.msra.mxu0 0.0
  %3748 = vmatprep.subr.mxu0 0.0
  %3749 = vmatpush1.msra.mxu0 0.0
  %3750 = vmatprep.subr.mxu0 0.0
  %3751 = vmatpush1.msra.mxu0 0.0
  %3752 = vmatprep.subr.mxu0 0.0
  %3753 = vmatpush1.msra.mxu0 0.0
  %3754 = vmatprep.subr.mxu0 0.0
  %3755 = vmatpush1.msra.mxu0 0.0
  %3756 = vmatprep.subr.mxu0 0.0
  %3757 = vmatpush1.msra.mxu0 0.0
  %3758 = vmatprep.subr.mxu0 0.0
  %3759 = vmatpush1.msra.mxu0 0.0
  %3760 = vmatprep.subr.mxu0 0.0
  %3761 = vmatpush1.msra.mxu0 0.0
  %3762 = vmatprep.subr.mxu0 0.0
  %3763 = vmatpush1.msra.mxu0 0.0
  %3764 = vmatprep.subr.mxu0 0.0
  %3765 = vmatpush1.msra.mxu0 0.0
  %3766 = vmatprep.subr.mxu0 0.0
  %3767 = vmatpush1.msra.mxu0 0.0
  %3768 = vmatprep.subr.mxu0 0.0
  %v3769 = vand.u32 %v33, 4294901760
  %v3770 = vsub.f32 %v33, %v3769
  %3771 = vmatpush1.msra.mxu0 %v3770
  %3772 = vmatprep.subr.mxu0 0.0
  %v3773 = vand.u32 %v32, 4294901760
  %v3774 = vsub.f32 %v32, %v3773
  %3775 = vmatpush1.msra.mxu0 %v3774
  %3776 = vmatprep.subr.mxu0 0.0
  %v3777 = vand.u32 %v31, 4294901760
  %v3778 = vsub.f32 %v31, %v3777
  %3779 = vmatpush1.msra.mxu0 %v3778
  %3780 = vmatprep.subr.mxu0 0.0
  %v3781 = vand.u32 %v30, 4294901760
  %v3782 = vsub.f32 %v30, %v3781
  %3783 = vmatpush1.msra.mxu0 %v3782
  %3784 = vmatprep.subr.mxu0 0.0
  %3785 = vmatpush2.msra.mxu0 0.0
  %3786 = vmatprep.subr.mxu0 0.0
  %3787 = vmatpush2.msra.mxu0 0.0
  %3788 = vmatprep.subr.mxu0 0.0
  %3789 = vmatpush2.msra.mxu0 0.0
  %3790 = vmatprep.subr.mxu0 0.0
  %3791 = vmatpush2.msra.mxu0 0.0
  %3792 = vmatprep.subr.mxu0 0.0
  %3793 = vmatpush2.msra.mxu0 0.0
  %3794 = vmatprep.subr.mxu0 0.0
  %3795 = vmatpush2.msra.mxu0 0.0
  %3796 = vmatprep.subr.mxu0 0.0
  %3797 = vmatpush2.msra.mxu0 0.0
  %3798 = vmatprep.subr.mxu0 0.0
  %3799 = vmatpush2.msra.mxu0 0.0
  %3800 = vmatprep.subr.mxu0 0.0
  %3801 = vmatpush2.msra.mxu0 0.0
  %3802 = vmatprep.subr.mxu0 0.0
  %3803 = vmatpush2.msra.mxu0 0.0
  %3804 = vmatprep.subr.mxu0 0.0
  %3805 = vmatpush2.msra.mxu0 0.0
  %3806 = vmatprep.subr.mxu0 0.0
  %3807 = vmatpush2.msra.mxu0 0.0
  %3808 = vmatprep.subr.mxu0 0.0
  %3809 = vmatpush2.msra.mxu0 0.0
  %3810 = vmatprep.subr.mxu0 0.0
  %3811 = vmatpush2.msra.mxu0 0.0
  %3812 = vmatprep.subr.mxu0 0.0
  %3813 = vmatpush2.msra.mxu0 0.0
  %3814 = vmatprep.subr.mxu0 0.0
  %3815 = vmatpush2.msra.mxu0 0.0
  %3816 = vmatprep.mubr.f32.mxu0 0.0
  %v3817 = vand.u32 %v3572, 4294901760
  %v3818 = vsub.f32 %v3572, %v3817
  %3819 = vmatmul.mubr.f32.gmra.mxu0 %v3818
  %v3820 = vpop.f32.mrf.mxu0
  %v3821 = vadd.f32 %v3741, %v3820
  %v3822 = vpop.f32.mrf.mxu0
  %3823 = vdwg.mxu0
  %3824 = vmatprep.subr.mxu0 0.0
  %3825 = vmatpush1.msra.mxu0 0.0
  %3826 = vmatprep.subr.mxu0 0.0
  %3827 = vmatpush1.msra.mxu0 0.0
  %3828 = vmatprep.subr.mxu0 0.0
  %3829 = vmatpush1.msra.mxu0 0.0
  %3830 = vmatprep.subr.mxu0 0.0
  %3831 = vmatpush1.msra.mxu0 0.0
  %3832 = vmatprep.subr.mxu0 0.0
  %3833 = vmatpush1.msra.mxu0 0.0
  %3834 = vmatprep.subr.mxu0 0.0
  %3835 = vmatpush1.msra.mxu0 0.0
  %3836 = vmatprep.subr.mxu0 0.0
  %3837 = vmatpush1.msra.mxu0 0.0
  %3838 = vmatprep.subr.mxu0 0.0
  %3839 = vmatpush1.msra.mxu0 0.0
  %3840 = vmatprep.subr.mxu0 0.0
  %3841 = vmatpush1.msra.mxu0 0.0
  %3842 = vmatprep.subr.mxu0 0.0
  %3843 = vmatpush1.msra.mxu0 0.0
  %3844 = vmatprep.subr.mxu0 0.0
  %3845 = vmatpush1.msra.mxu0 0.0
  %3846 = vmatprep.subr.mxu0 0.0
  %3847 = vmatpush1.msra.mxu0 0.0
  %3848 = vmatprep.subr.mxu0 0.0
  %v3849 = vand.u32 %v33, 4294901760
  %3850 = vmatpush1.msra.mxu0 %v3849
  %3851 = vmatprep.subr.mxu0 0.0
  %v3852 = vand.u32 %v32, 4294901760
  %3853 = vmatpush1.msra.mxu0 %v3852
  %3854 = vmatprep.subr.mxu0 0.0
  %v3855 = vand.u32 %v31, 4294901760
  %3856 = vmatpush1.msra.mxu0 %v3855
  %3857 = vmatprep.subr.mxu0 0.0
  %v3858 = vand.u32 %v30, 4294901760
  %3859 = vmatpush1.msra.mxu0 %v3858
  %3860 = vmatprep.subr.mxu0 0.0
  %3861 = vmatpush2.msra.mxu0 0.0
  %3862 = vmatprep.subr.mxu0 0.0
  %3863 = vmatpush2.msra.mxu0 0.0
  %3864 = vmatprep.subr.mxu0 0.0
  %3865 = vmatpush2.msra.mxu0 0.0
  %3866 = vmatprep.subr.mxu0 0.0
  %3867 = vmatpush2.msra.mxu0 0.0
  %3868 = vmatprep.subr.mxu0 0.0
  %3869 = vmatpush2.msra.mxu0 0.0
  %3870 = vmatprep.subr.mxu0 0.0
  %3871 = vmatpush2.msra.mxu0 0.0
  %3872 = vmatprep.subr.mxu0 0.0
  %3873 = vmatpush2.msra.mxu0 0.0
  %3874 = vmatprep.subr.mxu0 0.0
  %3875 = vmatpush2.msra.mxu0 0.0
  %3876 = vmatprep.subr.mxu0 0.0
  %3877 = vmatpush2.msra.mxu0 0.0
  %3878 = vmatprep.subr.mxu0 0.0
  %3879 = vmatpush2.msra.mxu0 0.0
  %3880 = vmatprep.subr.mxu0 0.0
  %3881 = vmatpush2.msra.mxu0 0.0
  %3882 = vmatprep.subr.mxu0 0.0
  %3883 = vmatpush2.msra.mxu0 0.0
  %3884 = vmatprep.subr.mxu0 0.0
  %3885 = vmatpush2.msra.mxu0 0.0
  %3886 = vmatprep.subr.mxu0 0.0
  %3887 = vmatpush2.msra.mxu0 0.0
  %3888 = vmatprep.subr.mxu0 0.0
  %3889 = vmatpush2.msra.mxu0 0.0
  %3890 = vmatprep.subr.mxu0 0.0
  %3891 = vmatpush2.msra.mxu0 0.0
  %3892 = vmatprep.mubr.f32.mxu0 0.0
  %v3893 = vand.u32 %v3572, 4294901760
  %v3894 = vsub.f32 %v3572, %v3893
  %v3895 = vand.u32 %v3894, 4294901760
  %3896 = vmatmul.mubr.f32.gmra.mxu0 %v3895
  %v3897 = vpop.f32.mrf.mxu0
  %v3898 = vadd.f32 %v3821, %v3897
  %v3899 = vpop.f32.mrf.mxu0
  %3900 = vdwg.mxu0
  %3901 = vmatprep.subr.mxu0 0.0
  %3902 = vmatpush1.msra.mxu0 0.0
  %3903 = vmatprep.subr.mxu0 0.0
  %3904 = vmatpush1.msra.mxu0 0.0
  %3905 = vmatprep.subr.mxu0 0.0
  %3906 = vmatpush1.msra.mxu0 0.0
  %3907 = vmatprep.subr.mxu0 0.0
  %3908 = vmatpush1.msra.mxu0 0.0
  %3909 = vmatprep.subr.mxu0 0.0
  %3910 = vmatpush1.msra.mxu0 0.0
  %3911 = vmatprep.subr.mxu0 0.0
  %3912 = vmatpush1.msra.mxu0 0.0
  %3913 = vmatprep.subr.mxu0 0.0
  %3914 = vmatpush1.msra.mxu0 0.0
  %3915 = vmatprep.subr.mxu0 0.0
  %3916 = vmatpush1.msra.mxu0 0.0
  %3917 = vmatprep.subr.mxu0 0.0
  %3918 = vmatpush1.msra.mxu0 0.0
  %3919 = vmatprep.subr.mxu0 0.0
  %3920 = vmatpush1.msra.mxu0 0.0
  %3921 = vmatprep.subr.mxu0 0.0
  %3922 = vmatpush1.msra.mxu0 0.0
  %3923 = vmatprep.subr.mxu0 0.0
  %3924 = vmatpush1.msra.mxu0 0.0
  %3925 = vmatprep.subr.mxu0 0.0
  %v3926 = vand.u32 %v33, 4294901760
  %v3927 = vsub.f32 %v33, %v3926
  %v3928 = vand.u32 %v3927, 4294901760
  %3929 = vmatpush1.msra.mxu0 %v3928
  %3930 = vmatprep.subr.mxu0 0.0
  %v3931 = vand.u32 %v32, 4294901760
  %v3932 = vsub.f32 %v32, %v3931
  %v3933 = vand.u32 %v3932, 4294901760
  %3934 = vmatpush1.msra.mxu0 %v3933
  %3935 = vmatprep.subr.mxu0 0.0
  %v3936 = vand.u32 %v31, 4294901760
  %v3937 = vsub.f32 %v31, %v3936
  %v3938 = vand.u32 %v3937, 4294901760
  %3939 = vmatpush1.msra.mxu0 %v3938
  %3940 = vmatprep.subr.mxu0 0.0
  %v3941 = vand.u32 %v30, 4294901760
  %v3942 = vsub.f32 %v30, %v3941
  %v3943 = vand.u32 %v3942, 4294901760
  %3944 = vmatpush1.msra.mxu0 %v3943
  %3945 = vmatprep.subr.mxu0 0.0
  %3946 = vmatpush2.msra.mxu0 0.0
  %3947 = vmatprep.subr.mxu0 0.0
  %3948 = vmatpush2.msra.mxu0 0.0
  %3949 = vmatprep.subr.mxu0 0.0
  %3950 = vmatpush2.msra.mxu0 0.0
  %3951 = vmatprep.subr.mxu0 0.0
  %3952 = vmatpush2.msra.mxu0 0.0
  %3953 = vmatprep.subr.mxu0 0.0
  %3954 = vmatpush2.msra.mxu0 0.0
  %3955 = vmatprep.subr.mxu0 0.0
  %3956 = vmatpush2.msra.mxu0 0.0
  %3957 = vmatprep.subr.mxu0 0.0
  %3958 = vmatpush2.msra.mxu0 0.0
  %3959 = vmatprep.subr.mxu0 0.0
  %3960 = vmatpush2.msra.mxu0 0.0
  %3961 = vmatprep.subr.mxu0 0.0
  %3962 = vmatpush2.msra.mxu0 0.0
  %3963 = vmatprep.subr.mxu0 0.0
  %3964 = vmatpush2.msra.mxu0 0.0
  %3965 = vmatprep.subr.mxu0 0.0
  %3966 = vmatpush2.msra.mxu0 0.0
  %3967 = vmatprep.subr.mxu0 0.0
  %3968 = vmatpush2.msra.mxu0 0.0
  %3969 = vmatprep.subr.mxu0 0.0
  %3970 = vmatpush2.msra.mxu0 0.0
  %3971 = vmatprep.subr.mxu0 0.0
  %3972 = vmatpush2.msra.mxu0 0.0
  %3973 = vmatprep.subr.mxu0 0.0
  %3974 = vmatpush2.msra.mxu0 0.0
  %3975 = vmatprep.subr.mxu0 0.0
  %3976 = vmatpush2.msra.mxu0 0.0
  %3977 = vmatprep.mubr.f32.mxu0 0.0
  %v3978 = vand.u32 %v3572, 4294901760
  %3979 = vmatmul.mubr.f32.gmra.mxu0 %v3978
  %v3980 = vpop.f32.mrf.mxu0
  %v3981 = vadd.f32 %v3898, %v3980
  %v3982 = vpop.f32.mrf.mxu0
  %3983 = vdwg.mxu0
  %3984 = vmatprep.subr.mxu0 0.0
  %3985 = vmatpush1.msra.mxu0 0.0
  %3986 = vmatprep.subr.mxu0 0.0
  %3987 = vmatpush1.msra.mxu0 0.0
  %3988 = vmatprep.subr.mxu0 0.0
  %3989 = vmatpush1.msra.mxu0 0.0
  %3990 = vmatprep.subr.mxu0 0.0
  %3991 = vmatpush1.msra.mxu0 0.0
  %3992 = vmatprep.subr.mxu0 0.0
  %3993 = vmatpush1.msra.mxu0 0.0
  %3994 = vmatprep.subr.mxu0 0.0
  %3995 = vmatpush1.msra.mxu0 0.0
  %3996 = vmatprep.subr.mxu0 0.0
  %3997 = vmatpush1.msra.mxu0 0.0
  %3998 = vmatprep.subr.mxu0 0.0
  %3999 = vmatpush1.msra.mxu0 0.0
  %4000 = vmatprep.subr.mxu0 0.0
  %4001 = vmatpush1.msra.mxu0 0.0
  %4002 = vmatprep.subr.mxu0 0.0
  %4003 = vmatpush1.msra.mxu0 0.0
  %4004 = vmatprep.subr.mxu0 0.0
  %4005 = vmatpush1.msra.mxu0 0.0
  %4006 = vmatprep.subr.mxu0 0.0
  %4007 = vmatpush1.msra.mxu0 0.0
  %4008 = vmatprep.subr.mxu0 0.0
  %v4009 = vand.u32 %v33, 4294901760
  %4010 = vmatpush1.msra.mxu0 %v4009
  %4011 = vmatprep.subr.mxu0 0.0
  %v4012 = vand.u32 %v32, 4294901760
  %4013 = vmatpush1.msra.mxu0 %v4012
  %4014 = vmatprep.subr.mxu0 0.0
  %v4015 = vand.u32 %v31, 4294901760
  %4016 = vmatpush1.msra.mxu0 %v4015
  %4017 = vmatprep.subr.mxu0 0.0
  %v4018 = vand.u32 %v30, 4294901760
  %4019 = vmatpush1.msra.mxu0 %v4018
  %4020 = vmatprep.subr.mxu0 0.0
  %4021 = vmatpush2.msra.mxu0 0.0
  %4022 = vmatprep.subr.mxu0 0.0
  %4023 = vmatpush2.msra.mxu0 0.0
  %4024 = vmatprep.subr.mxu0 0.0
  %4025 = vmatpush2.msra.mxu0 0.0
  %4026 = vmatprep.subr.mxu0 0.0
  %4027 = vmatpush2.msra.mxu0 0.0
  %4028 = vmatprep.subr.mxu0 0.0
  %4029 = vmatpush2.msra.mxu0 0.0
  %4030 = vmatprep.subr.mxu0 0.0
  %4031 = vmatpush2.msra.mxu0 0.0
  %4032 = vmatprep.subr.mxu0 0.0
  %4033 = vmatpush2.msra.mxu0 0.0
  %4034 = vmatprep.subr.mxu0 0.0
  %4035 = vmatpush2.msra.mxu0 0.0
  %4036 = vmatprep.subr.mxu0 0.0
  %4037 = vmatpush2.msra.mxu0 0.0
  %4038 = vmatprep.subr.mxu0 0.0
  %4039 = vmatpush2.msra.mxu0 0.0
  %4040 = vmatprep.subr.mxu0 0.0
  %4041 = vmatpush2.msra.mxu0 0.0
  %4042 = vmatprep.subr.mxu0 0.0
  %4043 = vmatpush2.msra.mxu0 0.0
  %4044 = vmatprep.subr.mxu0 0.0
  %4045 = vmatpush2.msra.mxu0 0.0
  %4046 = vmatprep.subr.mxu0 0.0
  %4047 = vmatpush2.msra.mxu0 0.0
  %4048 = vmatprep.subr.mxu0 0.0
  %4049 = vmatpush2.msra.mxu0 0.0
  %4050 = vmatprep.subr.mxu0 0.0
  %4051 = vmatpush2.msra.mxu0 0.0
  %4052 = vmatprep.mubr.f32.mxu0 0.0
  %v4053 = vand.u32 %v3572, 4294901760
  %4054 = vmatmul.mubr.f32.gmra.mxu0 %v4053
  %v4055 = vpop.f32.mrf.mxu0
  %v4056 = vadd.f32 %v3981, %v4055
  %v4057 = vpop.f32.mrf.mxu0
  %4058 = vdwg.mxu0
  %v4059 = vxor.u32 %v4056, 2147483648
  %v4060 = vmul.f32 %v4059, 1.442695
  %v4061 = vpow.pop %v4060
  %v4062 = vadd.f32 %v4061, 1.0
  %v4063 = vrcp.pop %v4062
  %v4064 = vmul.f32 1.0, %v4063
  %s4065 = scalar_lea.vmem %s0, 14
  %v4066 = vld [vmem:[%s4065] sm:$0x3]
  %v4067 = vsub.f32 %v4066, %v3568
  %v4068 = vmul.f32 %v4064, %v4067
  %v4069 = vadd.f32 %v3568, %v4068
  %4070 = vst.msk [vmem:[#allocation2] sm:$0x3] %vm535, %v4069
  %s4071 = scalar_lea.vmem %s4, 14
  %4072 = vst.msk [vmem:[%s4071] sm:$0x3] %vm535, %v4069
  // Predicated region
  $region22: #{light_recurrent_unit_block.6} parent=0 // pred_check
    _
  $region23: #{light_recurrent_unit_block.6} parent=0 // pred_check_branch
    %4074 = sbr.rel (0) target = $region25
  $region24: #{light_recurrent_unit_block.6} parent=0 // pred_region
    _
  $region25: #{light_recurrent_unit_block.6} parent=0 // pred_fallthru
    _
  // Predicated region
  $region26: #{light_recurrent_unit_block.6} parent=0 // pred_check
    _
  $region27: #{light_recurrent_unit_block.6} parent=0 // pred_check_branch
    %4076 = sbr.rel (0) target = $region29
  $region28: #{light_recurrent_unit_block.6} parent=0 // pred_region
    _
  $region29: #{light_recurrent_unit_block.6} parent=0 // pred_fallthru
    _

</llo_original>
